<compile_context>
chip_gen: v5e
topology: v5e:2x2
jax: 0.10.0
libtpu: 0.0.40
codegen_flags: <defaults>
</compile_context>

<pallas_src>
import math
import functools

import jax
import jax.numpy as jnp
from jax.experimental import pallas as pl
from jax.experimental.pallas import tpu as pltpu

F32 = jnp.float32
BF16 = jnp.bfloat16
_VMEM = pl.BlockSpec(memory_space=pltpu.MemorySpace.VMEM)


# ----------------------------------------------------------------------------
# In-kernel helpers
# ----------------------------------------------------------------------------
def _mm(x, w, b=None):
    """MXU matmul: bf16 operands (weights pre-stored bf16), f32 accumulation."""
    y = jnp.dot(x.astype(BF16), w, preferred_element_type=jnp.float32)
    if b is not None:
        y = y + b
    return y


def _layernorm(x, g, b, eps=1e-5):
    mean = jnp.mean(x, axis=-1, keepdims=True)
    var = jnp.mean((x - mean) ** 2, axis=-1, keepdims=True)
    return (x - mean) * jax.lax.rsqrt(var + eps) * g + b


# ----------------------------------------------------------------------------
# The single fused forward kernel
# ----------------------------------------------------------------------------
def _fused_forward_kernel(
    # data
    src_tok_ref, src_flat_ref, eps_ref,
    # VAE params (mu/logvar stage-1 fused into one matmul)
    w_mulv1_ref, b_mulv1_ref, wm2_ref, bm2_ref, wl2_ref, bl2_ref,
    wd1_ref, bd1_ref, wd2_ref, bd2_ref,
    # encoder params
    w_in_ref, b_in_ref, pe_ref,
    wqkv_ref, bqkv_ref, wo_ref, bo_ref,
    g1_ref, be1_ref, wf1_ref, bf1_ref, wf2_ref, bf2_ref, g2_ref, be2_ref,
    # head params (group 0 = prediction, group 1 = residual)
    w_h1_ref, b_h1_ref, w_h2_ref, b_h2_ref, w_h3_ref, b_h3_ref,
    # outputs
    pred_ref, recon_ref, mu_ref, logvar_ref,
    *, nhead, num_layers, batch, seq, feat, d_model, vae_hidden):
    B, T, Fi, D, H = batch, seq, feat, d_model, nhead
    Dh = D // H
    M = 2 * B * T
    VH = vae_hidden
    H1 = w_h1_ref.shape[3]

    # ------------------ VAE branch (mu / logvar / reparameterize / decode) -----
    src_flat = src_flat_ref[...]                                      # (B, T*Fi)
    hv = jnp.maximum(_mm(src_flat, w_mulv1_ref[...], b_mulv1_ref[...]), 0.0)
    mu = _mm(hv[:, :VH], wm2_ref[...], bm2_ref[...])                  # (B, latent)
    logvar = _mm(hv[:, VH:], wl2_ref[...], bl2_ref[...])              # (B, latent)
    z = mu + eps_ref[...] * jnp.exp(0.5 * logvar)                     # reparameterize
    hd = jnp.maximum(_mm(z, wd1_ref[...], bd1_ref[...]), 0.0)
    recon = _mm(hd, wd2_ref[...], bd2_ref[...])                       # (B, T*Fi)

    # ------------------ input projection + positional encoding -----------------
    # src branch comes in already token-major (B*T, Fi); recon is projected per
    # token so every in-kernel reshape is a leading-dims-only reshape.
    xs3 = _mm(src_tok_ref[...], w_in_ref[...]).reshape(B, T, D)
    xr_rows = [_mm(recon[:, t * Fi:(t + 1) * Fi], w_in_ref[...]) for t in range(T)]
    xr3 = jnp.stack(xr_rows, axis=1)                                  # (B, T, D)
    x = jnp.concatenate([xs3, xr3], axis=0)                           # (2B, T, D)
    x = (x + b_in_ref[...] + pe_ref[...][None]).reshape(M, D)         # (M, D) f32

    # ------------------ transformer encoder layers (post-norm, ReLU FFN) -------
    for l in range(num_layers):                     # statically unrolled
        qkv = _mm(x, wqkv_ref[l], bqkv_ref[l])      # (M, 3D); Q columns pre-scaled
        heads = []
        for h_i in range(H):                        # statically unrolled
            qh = qkv[:, h_i * Dh:(h_i + 1) * Dh].reshape(2 * B, T, Dh)
            kh = qkv[:, D + h_i * Dh:D + (h_i + 1) * Dh].reshape(2 * B, T, Dh)
            vh = qkv[:, 2 * D + h_i * Dh:2 * D + (h_i + 1) * Dh].reshape(2 * B, T, Dh)
            s = jnp.einsum('bqd,bkd->bqk', qh.astype(BF16), kh.astype(BF16),
                           preferred_element_type=jnp.float32)        # (2B, T, T)
            m = jnp.max(s, axis=-1, keepdims=True)
            pexp = jnp.exp(s - m)
            pexp = pexp * pl.reciprocal(jnp.sum(pexp, axis=-1, keepdims=True),
                                        approx=True)
            oh = jnp.einsum('bqk,bkd->bqd', pexp.astype(BF16), vh.astype(BF16),
                            preferred_element_type=jnp.float32)       # (2B, T, Dh)
            heads.append(oh.reshape(M, Dh))
        attn = _mm(jnp.concatenate(heads, axis=-1), wo_ref[l], bo_ref[l])

        x1 = _layernorm(x + attn, g1_ref[l], be1_ref[l])
        ff = jnp.maximum(_mm(x1, wf1_ref[l], bf1_ref[l]), 0.0)
        ff = _mm(ff, wf2_ref[l], bf2_ref[l])
        x = _layernorm(x1 + ff, g2_ref[l], be2_ref[l])

    # ------------------ prediction + residual heads (group-batched, g=2) -------
    x4 = x.reshape(2, B, T, D)                      # group 0 = src, group 1 = recon
    acc = jnp.zeros((2, B, H1), jnp.float32)
    for t in range(T):                              # flatten(T*D) as sum of per-token matmuls
        acc = acc + jnp.einsum('gbd,gdo->gbo',
                               x4[:, :, t, :].astype(BF16), w_h1_ref[:, t, :, :],
                               preferred_element_type=jnp.float32)
    h1 = jnp.maximum(acc + b_h1_ref[...], 0.0)
    h2 = jnp.maximum(jnp.einsum('gbi,gio->gbo', h1.astype(BF16), w_h2_ref[...],
                                preferred_element_type=jnp.float32) + b_h2_ref[...],
                     0.0)
    h3 = jnp.einsum('gbi,gio->gbo', h2.astype(BF16), w_h3_ref[...],
                    preferred_element_type=jnp.float32) + b_h3_ref[...]

    pred_ref[...] = (h3[0] + h3[1]).astype(pred_ref.dtype)   # prediction + residual
    recon_ref[...] = recon.astype(recon_ref.dtype)
    mu_ref[...] = mu.astype(mu_ref.dtype)
    logvar_ref[...] = logvar.astype(logvar_ref.dtype)


# ----------------------------------------------------------------------------
# Model forward: a single pallas_call (glue is only HBM-side reshapes)
# ----------------------------------------------------------------------------
def forward(params, src, eps, *, nhead):
    B, T, Fi = src.shape
    p = params
    D = p["w_in"].shape[1]
    L = p["wqkv"].shape[0]
    latent = p["wm2"].shape[1]
    out_days = p["w_h3"].shape[2]
    VH = p["wd1"].shape[1]

    kern = functools.partial(
        _fused_forward_kernel, nhead=nhead, num_layers=L,
        batch=B, seq=T, feat=Fi, d_model=D, vae_hidden=VH)

    args = (
        src.reshape(B * T, Fi), src.reshape(B, T * Fi), eps,
        p["w_mulv1"], p["b_mulv1"], p["wm2"], p["bm2"], p["wl2"], p["bl2"],
        p["wd1"], p["bd1"], p["wd2"], p["bd2"],
        p["w_in"], p["b_in"], p["pe"],
        p["wqkv"], p["bqkv"], p["wo"], p["bo"],
        p["g1"], p["be1"], p["wf1"], p["bf1"], p["wf2"], p["bf2"],
        p["g2"], p["be2"],
        p["w_h1"], p["b_h1"], p["w_h2"], p["b_h2"], p["w_h3"], p["b_h3"],
    )

    pred, recon_flat, mu, logvar = pl.pallas_call(
        kern,
        out_shape=(jax.ShapeDtypeStruct((B, out_days), F32),
                   jax.ShapeDtypeStruct((B, T * Fi), F32),
                   jax.ShapeDtypeStruct((B, latent), F32),
                   jax.ShapeDtypeStruct((B, latent), F32)),
        in_specs=[_VMEM] * len(args),
        out_specs=(_VMEM, _VMEM, _VMEM, _VMEM),
    )(*args)

    return pred, recon_flat.reshape(B, T, Fi), mu, logvar


# ----------------------------------------------------------------------------
# Deterministic parameter init (synthetic; shapes match the module __init__).
# Weights stored bf16; biases / LN params / PE stay f32.
# ----------------------------------------------------------------------------
def init_params(key, *, input_dim, d_model, nhead, num_layers, input_days,
                output_days, latent_dim, d_ff=512, vae_hidden=512,
                head_h1=512, head_h2=256):
    keys = iter(jax.random.split(key, 64))

    def dense(n_in, n_out, std=0.05):
        w = jax.random.normal(next(keys), (n_in, n_out), F32) * std
        b = jnp.zeros((1, n_out), F32)
        return w, b

    flat_in = input_dim * input_days
    p = {}

    # --- VAE: mu & logvar stage-1 fused into one (flat_in, 2*vae_hidden) matmul ---
    wm1, bm1 = dense(flat_in, vae_hidden)
    wl1, bl1 = dense(flat_in, vae_hidden)
    p["w_mulv1"] = jnp.concatenate([wm1, wl1], axis=1).astype(BF16)
    p["b_mulv1"] = jnp.concatenate([bm1, bl1], axis=1)
    for name, shp in (("wm2", (vae_hidden, latent_dim)),
                      ("wl2", (vae_hidden, latent_dim)),
                      ("wd1", (latent_dim, vae_hidden)),
                      ("wd2", (vae_hidden, flat_in))):
        w, b = dense(*shp)
        p[name] = w.astype(BF16)
        p["b" + name[1:]] = b

    # --- transformer encoder ---
    w_in, b_in = dense(input_dim, d_model)
    p["w_in"] = w_in.astype(BF16)
    p["b_in"] = b_in

    # sinusoidal positional encoding (PositionalEncoding buffer)
    pos = jnp.arange(input_days, dtype=F32)[:, None]
    div = jnp.exp(jnp.arange(0, d_model, 2, dtype=F32) * (-math.log(10000.0) / d_model))
    pe = jnp.zeros((input_days, d_model), F32)
    pe = pe.at[:, 0::2].set(jnp.sin(pos * div))
    pe = pe.at[:, 1::2].set(jnp.cos(pos * div))
    p["pe"] = pe

    q_scale = 1.0 / math.sqrt(d_model // nhead)
    stacks = {k: [] for k in ("wqkv", "bqkv", "wo", "bo", "wf1", "bf1", "wf2", "bf2")}
    for _ in range(num_layers):
        wq, bq = dense(d_model, 3 * d_model)
        # fold the 1/sqrt(Dh) attention scale into the Q third of the QKV projection
        wq = wq.at[:, :d_model].multiply(q_scale)
        bq = bq.at[:, :d_model].multiply(q_scale)
        wo_, bo_ = dense(d_model, d_model)
        wf1_, bf1_ = dense(d_model, d_ff)
        wf2_, bf2_ = dense(d_ff, d_model)
        for k, v in (("wqkv", wq), ("bqkv", bq), ("wo", wo_), ("bo", bo_),
                     ("wf1", wf1_), ("bf1", bf1_), ("wf2", wf2_), ("bf2", bf2_)):
            stacks[k].append(v)
    for k, lst in stacks.items():
        arr = jnp.stack(lst)
        p[k] = arr.astype(BF16) if k.startswith("w") else arr
    p["g1"] = jnp.ones((num_layers, 1, d_model), F32)
    p["be1"] = jnp.zeros((num_layers, 1, d_model), F32)
    p["g2"] = jnp.ones((num_layers, 1, d_model), F32)
    p["be2"] = jnp.zeros((num_layers, 1, d_model), F32)

    # --- heads: prediction (group 0) and residual (group 1), stacked ---
    flat_d = d_model * input_days
    wp1, bp1 = dense(flat_d, head_h1)
    wr1, br1 = dense(flat_d, head_h1)
    wp2, bp2 = dense(head_h1, head_h2)
    wr2, br2 = dense(head_h1, head_h2)
    wp3, bp3 = dense(head_h2, output_days)
    wr3, br3 = dense(head_h2, output_days)
    p["w_h1"] = jnp.stack([wp1, wr1]).reshape(2, input_days, d_model, head_h1).astype(BF16)
    p["b_h1"] = jnp.stack([bp1, br1])
    p["w_h2"] = jnp.stack([wp2, wr2]).astype(BF16)
    p["b_h2"] = jnp.stack([bp2, br2])
    p["w_h3"] = jnp.stack([wp3, wr3]).astype(BF16)
    p["b_h3"] = jnp.stack([bp3, br3])
    return p


# ----------------------------------------------------------------------------
if __name__ == "__main__":
    # small, module-consistent config
    B, INPUT_DIM, INPUT_DAYS = 2, 4, 8
    D_MODEL, NHEAD, NUM_LAYERS = 32, 4, 2
    OUTPUT_DAYS, LATENT_DIM = 8, 16

    root = jax.random.PRNGKey(0)
    k_params, k_src, k_eps = jax.random.split(root, 3)

    params = init_params(
        k_params,
        input_dim=INPUT_DIM, d_model=D_MODEL, nhead=NHEAD, num_layers=NUM_LAYERS,
        input_days=INPUT_DAYS, output_days=OUTPUT_DAYS, latent_dim=LATENT_DIM,
    )

    src = jax.random.normal(k_src, (B, INPUT_DAYS, INPUT_DIM), F32)
    # eps for the reparameterization trick (torch.randn_like equivalent, host-side)
    eps = jax.random.normal(k_eps, (B, LATENT_DIM), F32)

    fwd = jax.jit(functools.partial(forward, nhead=NHEAD))
    prediction, reconstruction_src, mu, logvar = fwd(params, src, eps)
    jax.block_until_ready((prediction, reconstruction_src, mu, logvar))

    assert prediction.shape == (B, OUTPUT_DAYS)
    assert reconstruction_src.shape == (B, INPUT_DAYS, INPUT_DIM)
    assert mu.shape == (B, LATENT_DIM) and logvar.shape == (B, LATENT_DIM)
    assert jnp.all(jnp.isfinite(prediction))
    assert jnp.all(jnp.isfinite(reconstruction_src))
    assert jnp.all(jnp.isfinite(mu)) and jnp.all(jnp.isfinite(logvar))

    print("KERNEL_OK")
</pallas_src>

<mosaic_0001>
module attributes {stable_mosaic.version = 11 : i64} {
  func.func @_fused_forward_kernel(%arg0: memref<16x4xf32, #tpu.memory_space<vmem>>, %arg1: memref<2x32xf32, #tpu.memory_space<vmem>>, %arg2: memref<2x16xf32, #tpu.memory_space<vmem>>, %arg3: memref<32x1024xbf16, #tpu.memory_space<vmem>>, %arg4: memref<1x1024xf32, #tpu.memory_space<vmem>>, %arg5: memref<512x16xbf16, #tpu.memory_space<vmem>>, %arg6: memref<1x16xf32, #tpu.memory_space<vmem>>, %arg7: memref<512x16xbf16, #tpu.memory_space<vmem>>, %arg8: memref<1x16xf32, #tpu.memory_space<vmem>>, %arg9: memref<16x512xbf16, #tpu.memory_space<vmem>>, %arg10: memref<1x512xf32, #tpu.memory_space<vmem>>, %arg11: memref<512x32xbf16, #tpu.memory_space<vmem>>, %arg12: memref<1x32xf32, #tpu.memory_space<vmem>>, %arg13: memref<4x32xbf16, #tpu.memory_space<vmem>>, %arg14: memref<1x32xf32, #tpu.memory_space<vmem>>, %arg15: memref<8x32xf32, #tpu.memory_space<vmem>>, %arg16: memref<2x32x96xbf16, #tpu.memory_space<vmem>>, %arg17: memref<2x1x96xf32, #tpu.memory_space<vmem>>, %arg18: memref<2x32x32xbf16, #tpu.memory_space<vmem>>, %arg19: memref<2x1x32xf32, #tpu.memory_space<vmem>>, %arg20: memref<2x1x32xf32, #tpu.memory_space<vmem>>, %arg21: memref<2x1x32xf32, #tpu.memory_space<vmem>>, %arg22: memref<2x32x512xbf16, #tpu.memory_space<vmem>>, %arg23: memref<2x1x512xf32, #tpu.memory_space<vmem>>, %arg24: memref<2x512x32xbf16, #tpu.memory_space<vmem>>, %arg25: memref<2x1x32xf32, #tpu.memory_space<vmem>>, %arg26: memref<2x1x32xf32, #tpu.memory_space<vmem>>, %arg27: memref<2x1x32xf32, #tpu.memory_space<vmem>>, %arg28: memref<2x8x32x512xbf16, #tpu.memory_space<vmem>>, %arg29: memref<2x1x512xf32, #tpu.memory_space<vmem>>, %arg30: memref<2x512x256xbf16, #tpu.memory_space<vmem>>, %arg31: memref<2x1x256xf32, #tpu.memory_space<vmem>>, %arg32: memref<2x256x8xbf16, #tpu.memory_space<vmem>>, %arg33: memref<2x1x8xf32, #tpu.memory_space<vmem>>, %arg34: memref<2x8xf32, #tpu.memory_space<vmem>>, %arg35: memref<2x32xf32, #tpu.memory_space<vmem>>, %arg36: memref<2x16xf32, #tpu.memory_space<vmem>>, %arg37: memref<2x16xf32, #tpu.memory_space<vmem>>) attributes {dimension_semantics = [], scalar_prefetch = 0 : i64, scratch_operands = 0 : i64, tpu.core_type = #tpu.core_type<tc>} {
    %c0 = arith.constant 0 : index
    %c0_0 = arith.constant 0 : index
    %0 = vector.load %arg1[%c0, %c0_0] : memref<2x32xf32, #tpu.memory_space<vmem>>, vector<2x32xf32>
    %c0_1 = arith.constant 0 : index
    %c0_2 = arith.constant 0 : index
    %1 = vector.load %arg3[%c0_1, %c0_2] : memref<32x1024xbf16, #tpu.memory_space<vmem>>, vector<32x1024xbf16>
    %c0_3 = arith.constant 0 : index
    %c0_4 = arith.constant 0 : index
    %2 = vector.load %arg4[%c0_3, %c0_4] : memref<1x1024xf32, #tpu.memory_space<vmem>>, vector<1x1024xf32>
    %3 = arith.truncf %0 : vector<2x32xf32> to vector<2x32xbf16>
    %cst = arith.constant dense<0.000000e+00> : vector<2x1024xf32>
    %4 = tpu.matmul %3, %1, %cst {dimension_numbers = #tpu.dot_dimension_numbers<[1], [0], [0], [1], [0, 0, 1, 1], [], []>} : vector<2x32xbf16>, vector<32x1024xbf16>, vector<2x1024xf32> -> vector<2x1024xf32>
    %5 = vector.broadcast %2 : vector<1x1024xf32> to vector<2x1024xf32>
    %6 = arith.addf %4, %5 : vector<2x1024xf32>
    %cst_5 = arith.constant 0.000000e+00 : f32
    %7 = vector.broadcast %cst_5 : f32 to vector<2x1024xf32>
    %8 = arith.maximumf %6, %7 : vector<2x1024xf32>
    %9 = vector.extract_strided_slice %8 {offsets = [0, 0], sizes = [2, 512], strides = [1, 1]} : vector<2x1024xf32> to vector<2x512xf32>
    %c0_6 = arith.constant 0 : index
    %c0_7 = arith.constant 0 : index
    %10 = vector.load %arg5[%c0_6, %c0_7] : memref<512x16xbf16, #tpu.memory_space<vmem>>, vector<512x16xbf16>
    %c0_8 = arith.constant 0 : index
    %c0_9 = arith.constant 0 : index
    %11 = vector.load %arg6[%c0_8, %c0_9] : memref<1x16xf32, #tpu.memory_space<vmem>>, vector<1x16xf32>
    %12 = arith.truncf %9 : vector<2x512xf32> to vector<2x512xbf16>
    %cst_10 = arith.constant dense<0.000000e+00> : vector<2x16xf32>
    %13 = tpu.matmul %12, %10, %cst_10 {dimension_numbers = #tpu.dot_dimension_numbers<[1], [0], [0], [1], [0, 0, 1, 1], [], []>} : vector<2x512xbf16>, vector<512x16xbf16>, vector<2x16xf32> -> vector<2x16xf32>
    %14 = vector.broadcast %11 : vector<1x16xf32> to vector<2x16xf32>
    %15 = arith.addf %13, %14 : vector<2x16xf32>
    %16 = vector.extract_strided_slice %8 {offsets = [0, 512], sizes = [2, 512], strides = [1, 1]} : vector<2x1024xf32> to vector<2x512xf32>
    %c0_11 = arith.constant 0 : index
    %c0_12 = arith.constant 0 : index
    %17 = vector.load %arg7[%c0_11, %c0_12] : memref<512x16xbf16, #tpu.memory_space<vmem>>, vector<512x16xbf16>
    %c0_13 = arith.constant 0 : index
    %c0_14 = arith.constant 0 : index
    %18 = vector.load %arg8[%c0_13, %c0_14] : memref<1x16xf32, #tpu.memory_space<vmem>>, vector<1x16xf32>
    %19 = arith.truncf %16 : vector<2x512xf32> to vector<2x512xbf16>
    %cst_15 = arith.constant dense<0.000000e+00> : vector<2x16xf32>
    %20 = tpu.matmul %19, %17, %cst_15 {dimension_numbers = #tpu.dot_dimension_numbers<[1], [0], [0], [1], [0, 0, 1, 1], [], []>} : vector<2x512xbf16>, vector<512x16xbf16>, vector<2x16xf32> -> vector<2x16xf32>
    %21 = vector.broadcast %18 : vector<1x16xf32> to vector<2x16xf32>
    %22 = arith.addf %20, %21 : vector<2x16xf32>
    %c0_16 = arith.constant 0 : index
    %c0_17 = arith.constant 0 : index
    %23 = vector.load %arg2[%c0_16, %c0_17] : memref<2x16xf32, #tpu.memory_space<vmem>>, vector<2x16xf32>
    %cst_18 = arith.constant 5.000000e-01 : f32
    %24 = vector.broadcast %cst_18 : f32 to vector<2x16xf32>
    %25 = arith.mulf %24, %22 : vector<2x16xf32>
    %26 = math.exp %25 : vector<2x16xf32>
    %27 = arith.mulf %23, %26 : vector<2x16xf32>
    %28 = arith.addf %15, %27 : vector<2x16xf32>
    %c0_19 = arith.constant 0 : index
    %c0_20 = arith.constant 0 : index
    %29 = vector.load %arg9[%c0_19, %c0_20] : memref<16x512xbf16, #tpu.memory_space<vmem>>, vector<16x512xbf16>
    %c0_21 = arith.constant 0 : index
    %c0_22 = arith.constant 0 : index
    %30 = vector.load %arg10[%c0_21, %c0_22] : memref<1x512xf32, #tpu.memory_space<vmem>>, vector<1x512xf32>
    %31 = arith.truncf %28 : vector<2x16xf32> to vector<2x16xbf16>
    %cst_23 = arith.constant dense<0.000000e+00> : vector<2x512xf32>
    %32 = tpu.matmul %31, %29, %cst_23 {dimension_numbers = #tpu.dot_dimension_numbers<[1], [0], [0], [1], [0, 0, 1, 1], [], []>} : vector<2x16xbf16>, vector<16x512xbf16>, vector<2x512xf32> -> vector<2x512xf32>
    %33 = vector.broadcast %30 : vector<1x512xf32> to vector<2x512xf32>
    %34 = arith.addf %32, %33 : vector<2x512xf32>
    %cst_24 = arith.constant 0.000000e+00 : f32
    %35 = vector.broadcast %cst_24 : f32 to vector<2x512xf32>
    %36 = arith.maximumf %34, %35 : vector<2x512xf32>
    %c0_25 = arith.constant 0 : index
    %c0_26 = arith.constant 0 : index
    %37 = vector.load %arg11[%c0_25, %c0_26] : memref<512x32xbf16, #tpu.memory_space<vmem>>, vector<512x32xbf16>
    %c0_27 = arith.constant 0 : index
    %c0_28 = arith.constant 0 : index
    %38 = vector.load %arg12[%c0_27, %c0_28] : memref<1x32xf32, #tpu.memory_space<vmem>>, vector<1x32xf32>
    %39 = arith.truncf %36 : vector<2x512xf32> to vector<2x512xbf16>
    %cst_29 = arith.constant dense<0.000000e+00> : vector<2x32xf32>
    %40 = tpu.matmul %39, %37, %cst_29 {dimension_numbers = #tpu.dot_dimension_numbers<[1], [0], [0], [1], [0, 0, 1, 1], [], []>} : vector<2x512xbf16>, vector<512x32xbf16>, vector<2x32xf32> -> vector<2x32xf32>
    %41 = vector.broadcast %38 : vector<1x32xf32> to vector<2x32xf32>
    %42 = arith.addf %40, %41 : vector<2x32xf32>
    %c0_30 = arith.constant 0 : index
    %c0_31 = arith.constant 0 : index
    %43 = vector.load %arg0[%c0_30, %c0_31] : memref<16x4xf32, #tpu.memory_space<vmem>>, vector<16x4xf32>
    %c0_32 = arith.constant 0 : index
    %c0_33 = arith.constant 0 : index
    %44 = vector.load %arg13[%c0_32, %c0_33] : memref<4x32xbf16, #tpu.memory_space<vmem>>, vector<4x32xbf16>
    %45 = arith.truncf %43 : vector<16x4xf32> to vector<16x4xbf16>
    %cst_34 = arith.constant dense<0.000000e+00> : vector<16x32xf32>
    %46 = tpu.matmul %45, %44, %cst_34 {dimension_numbers = #tpu.dot_dimension_numbers<[1], [0], [0], [1], [0, 0, 1, 1], [], []>} : vector<16x4xbf16>, vector<4x32xbf16>, vector<16x32xf32> -> vector<16x32xf32>
    %47 = vector.shape_cast %46 : vector<16x32xf32> to vector<2x8x32xf32>
    %48 = vector.extract_strided_slice %42 {offsets = [0, 0], sizes = [2, 4], strides = [1, 1]} : vector<2x32xf32> to vector<2x4xf32>
    %c0_35 = arith.constant 0 : index
    %c0_36 = arith.constant 0 : index
    %49 = vector.load %arg13[%c0_35, %c0_36] : memref<4x32xbf16, #tpu.memory_space<vmem>>, vector<4x32xbf16>
    %50 = arith.truncf %48 : vector<2x4xf32> to vector<2x4xbf16>
    %cst_37 = arith.constant dense<0.000000e+00> : vector<2x32xf32>
    %51 = tpu.matmul %50, %49, %cst_37 {dimension_numbers = #tpu.dot_dimension_numbers<[1], [0], [0], [1], [0, 0, 1, 1], [], []>} : vector<2x4xbf16>, vector<4x32xbf16>, vector<2x32xf32> -> vector<2x32xf32>
    %52 = vector.extract_strided_slice %42 {offsets = [0, 4], sizes = [2, 4], strides = [1, 1]} : vector<2x32xf32> to vector<2x4xf32>
    %c0_38 = arith.constant 0 : index
    %c0_39 = arith.constant 0 : index
    %53 = vector.load %arg13[%c0_38, %c0_39] : memref<4x32xbf16, #tpu.memory_space<vmem>>, vector<4x32xbf16>
    %54 = arith.truncf %52 : vector<2x4xf32> to vector<2x4xbf16>
    %cst_40 = arith.constant dense<0.000000e+00> : vector<2x32xf32>
    %55 = tpu.matmul %54, %53, %cst_40 {dimension_numbers = #tpu.dot_dimension_numbers<[1], [0], [0], [1], [0, 0, 1, 1], [], []>} : vector<2x4xbf16>, vector<4x32xbf16>, vector<2x32xf32> -> vector<2x32xf32>
    %56 = vector.extract_strided_slice %42 {offsets = [0, 8], sizes = [2, 4], strides = [1, 1]} : vector<2x32xf32> to vector<2x4xf32>
    %c0_41 = arith.constant 0 : index
    %c0_42 = arith.constant 0 : index
    %57 = vector.load %arg13[%c0_41, %c0_42] : memref<4x32xbf16, #tpu.memory_space<vmem>>, vector<4x32xbf16>
    %58 = arith.truncf %56 : vector<2x4xf32> to vector<2x4xbf16>
    %cst_43 = arith.constant dense<0.000000e+00> : vector<2x32xf32>
    %59 = tpu.matmul %58, %57, %cst_43 {dimension_numbers = #tpu.dot_dimension_numbers<[1], [0], [0], [1], [0, 0, 1, 1], [], []>} : vector<2x4xbf16>, vector<4x32xbf16>, vector<2x32xf32> -> vector<2x32xf32>
    %60 = vector.extract_strided_slice %42 {offsets = [0, 12], sizes = [2, 4], strides = [1, 1]} : vector<2x32xf32> to vector<2x4xf32>
    %c0_44 = arith.constant 0 : index
    %c0_45 = arith.constant 0 : index
    %61 = vector.load %arg13[%c0_44, %c0_45] : memref<4x32xbf16, #tpu.memory_space<vmem>>, vector<4x32xbf16>
    %62 = arith.truncf %60 : vector<2x4xf32> to vector<2x4xbf16>
    %cst_46 = arith.constant dense<0.000000e+00> : vector<2x32xf32>
    %63 = tpu.matmul %62, %61, %cst_46 {dimension_numbers = #tpu.dot_dimension_numbers<[1], [0], [0], [1], [0, 0, 1, 1], [], []>} : vector<2x4xbf16>, vector<4x32xbf16>, vector<2x32xf32> -> vector<2x32xf32>
    %64 = vector.extract_strided_slice %42 {offsets = [0, 16], sizes = [2, 4], strides = [1, 1]} : vector<2x32xf32> to vector<2x4xf32>
    %c0_47 = arith.constant 0 : index
    %c0_48 = arith.constant 0 : index
    %65 = vector.load %arg13[%c0_47, %c0_48] : memref<4x32xbf16, #tpu.memory_space<vmem>>, vector<4x32xbf16>
    %66 = arith.truncf %64 : vector<2x4xf32> to vector<2x4xbf16>
    %cst_49 = arith.constant dense<0.000000e+00> : vector<2x32xf32>
    %67 = tpu.matmul %66, %65, %cst_49 {dimension_numbers = #tpu.dot_dimension_numbers<[1], [0], [0], [1], [0, 0, 1, 1], [], []>} : vector<2x4xbf16>, vector<4x32xbf16>, vector<2x32xf32> -> vector<2x32xf32>
    %68 = vector.extract_strided_slice %42 {offsets = [0, 20], sizes = [2, 4], strides = [1, 1]} : vector<2x32xf32> to vector<2x4xf32>
    %c0_50 = arith.constant 0 : index
    %c0_51 = arith.constant 0 : index
    %69 = vector.load %arg13[%c0_50, %c0_51] : memref<4x32xbf16, #tpu.memory_space<vmem>>, vector<4x32xbf16>
    %70 = arith.truncf %68 : vector<2x4xf32> to vector<2x4xbf16>
    %cst_52 = arith.constant dense<0.000000e+00> : vector<2x32xf32>
    %71 = tpu.matmul %70, %69, %cst_52 {dimension_numbers = #tpu.dot_dimension_numbers<[1], [0], [0], [1], [0, 0, 1, 1], [], []>} : vector<2x4xbf16>, vector<4x32xbf16>, vector<2x32xf32> -> vector<2x32xf32>
    %72 = vector.extract_strided_slice %42 {offsets = [0, 24], sizes = [2, 4], strides = [1, 1]} : vector<2x32xf32> to vector<2x4xf32>
    %c0_53 = arith.constant 0 : index
    %c0_54 = arith.constant 0 : index
    %73 = vector.load %arg13[%c0_53, %c0_54] : memref<4x32xbf16, #tpu.memory_space<vmem>>, vector<4x32xbf16>
    %74 = arith.truncf %72 : vector<2x4xf32> to vector<2x4xbf16>
    %cst_55 = arith.constant dense<0.000000e+00> : vector<2x32xf32>
    %75 = tpu.matmul %74, %73, %cst_55 {dimension_numbers = #tpu.dot_dimension_numbers<[1], [0], [0], [1], [0, 0, 1, 1], [], []>} : vector<2x4xbf16>, vector<4x32xbf16>, vector<2x32xf32> -> vector<2x32xf32>
    %76 = vector.extract_strided_slice %42 {offsets = [0, 28], sizes = [2, 4], strides = [1, 1]} : vector<2x32xf32> to vector<2x4xf32>
    %c0_56 = arith.constant 0 : index
    %c0_57 = arith.constant 0 : index
    %77 = vector.load %arg13[%c0_56, %c0_57] : memref<4x32xbf16, #tpu.memory_space<vmem>>, vector<4x32xbf16>
    %78 = arith.truncf %76 : vector<2x4xf32> to vector<2x4xbf16>
    %cst_58 = arith.constant dense<0.000000e+00> : vector<2x32xf32>
    %79 = tpu.matmul %78, %77, %cst_58 {dimension_numbers = #tpu.dot_dimension_numbers<[1], [0], [0], [1], [0, 0, 1, 1], [], []>} : vector<2x4xbf16>, vector<4x32xbf16>, vector<2x32xf32> -> vector<2x32xf32>
    %80 = vector.shape_cast %51 : vector<2x32xf32> to vector<2x1x32xf32>
    %81 = vector.shape_cast %55 : vector<2x32xf32> to vector<2x1x32xf32>
    %82 = vector.shape_cast %59 : vector<2x32xf32> to vector<2x1x32xf32>
    %83 = vector.shape_cast %63 : vector<2x32xf32> to vector<2x1x32xf32>
    %84 = vector.shape_cast %67 : vector<2x32xf32> to vector<2x1x32xf32>
    %85 = vector.shape_cast %71 : vector<2x32xf32> to vector<2x1x32xf32>
    %86 = vector.shape_cast %75 : vector<2x32xf32> to vector<2x1x32xf32>
    %87 = vector.shape_cast %79 : vector<2x32xf32> to vector<2x1x32xf32>
    %88 = tpu.concatenate %80, %81, %82, %83, %84, %85, %86, %87 in 1 : vector<2x1x32xf32>, vector<2x1x32xf32>, vector<2x1x32xf32>, vector<2x1x32xf32>, vector<2x1x32xf32>, vector<2x1x32xf32>, vector<2x1x32xf32>, vector<2x1x32xf32> -> vector<2x8x32xf32>
    %89 = tpu.concatenate %47, %88 in 0 : vector<2x8x32xf32>, vector<2x8x32xf32> -> vector<4x8x32xf32>
    %c0_59 = arith.constant 0 : index
    %c0_60 = arith.constant 0 : index
    %90 = vector.load %arg14[%c0_59, %c0_60] : memref<1x32xf32, #tpu.memory_space<vmem>>, vector<1x32xf32>
    %91 = vector.shape_cast %90 : vector<1x32xf32> to vector<1x1x32xf32>
    %92 = vector.broadcast %91 : vector<1x1x32xf32> to vector<4x8x32xf32>
    %93 = arith.addf %89, %92 : vector<4x8x32xf32>
    %c0_61 = arith.constant 0 : index
    %c0_62 = arith.constant 0 : index
    %94 = vector.load %arg15[%c0_61, %c0_62] : memref<8x32xf32, #tpu.memory_space<vmem>>, vector<8x32xf32>
    %95 = vector.shape_cast %94 : vector<8x32xf32> to vector<1x8x32xf32>
    %96 = vector.broadcast %95 : vector<1x8x32xf32> to vector<4x8x32xf32>
    %97 = arith.addf %93, %96 : vector<4x8x32xf32>
    %98 = vector.shape_cast %97 : vector<4x8x32xf32> to vector<32x32xf32>
    %c0_63 = arith.constant 0 : index
    %c0_64 = arith.constant 0 : index
    %c0_65 = arith.constant 0 : index
    %99 = vector.load %arg16[%c0_63, %c0_64, %c0_65] : memref<2x32x96xbf16, #tpu.memory_space<vmem>>, vector<1x32x96xbf16>
    %100 = vector.shape_cast %99 : vector<1x32x96xbf16> to vector<32x96xbf16>
    %c0_66 = arith.constant 0 : index
    %c0_67 = arith.constant 0 : index
    %c0_68 = arith.constant 0 : index
    %101 = vector.load %arg17[%c0_66, %c0_67, %c0_68] : memref<2x1x96xf32, #tpu.memory_space<vmem>>, vector<1x1x96xf32>
    %102 = vector.shape_cast %101 : vector<1x1x96xf32> to vector<1x96xf32>
    %103 = arith.truncf %98 : vector<32x32xf32> to vector<32x32xbf16>
    %cst_69 = arith.constant dense<0.000000e+00> : vector<32x96xf32>
    %104 = tpu.matmul %103, %100, %cst_69 {dimension_numbers = #tpu.dot_dimension_numbers<[1], [0], [0], [1], [0, 0, 1, 1], [], []>} : vector<32x32xbf16>, vector<32x96xbf16>, vector<32x96xf32> -> vector<32x96xf32>
    %105 = vector.broadcast %102 : vector<1x96xf32> to vector<32x96xf32>
    %106 = arith.addf %104, %105 : vector<32x96xf32>
    %107 = vector.extract_strided_slice %106 {offsets = [0, 0], sizes = [32, 8], strides = [1, 1]} : vector<32x96xf32> to vector<32x8xf32>
    %108 = vector.shape_cast %107 : vector<32x8xf32> to vector<4x8x8xf32>
    %109 = vector.extract_strided_slice %106 {offsets = [0, 32], sizes = [32, 8], strides = [1, 1]} : vector<32x96xf32> to vector<32x8xf32>
    %110 = vector.shape_cast %109 : vector<32x8xf32> to vector<4x8x8xf32>
    %111 = vector.extract_strided_slice %106 {offsets = [0, 64], sizes = [32, 8], strides = [1, 1]} : vector<32x96xf32> to vector<32x8xf32>
    %112 = vector.shape_cast %111 : vector<32x8xf32> to vector<4x8x8xf32>
    %113 = arith.truncf %108 : vector<4x8x8xf32> to vector<4x8x8xbf16>
    %114 = arith.truncf %110 : vector<4x8x8xf32> to vector<4x8x8xbf16>
    "tpu.trace_start"() <{level = 10 : i32, message = "bqd,bkd->bqk"}> : () -> ()
    %cst_70 = arith.constant dense<0.000000e+00> : vector<4x8x8xf32>
    %115 = tpu.matmul %113, %114, %cst_70 {dimension_numbers = #tpu.dot_dimension_numbers<[2], [2], [1], [1], [0, 0, 0, 1, 1, 1], [0], [0]>} : vector<4x8x8xbf16>, vector<4x8x8xbf16>, vector<4x8x8xf32> -> vector<4x8x8xf32>
    "tpu.trace_stop"() : () -> ()
    %cst_71 = arith.constant dense<0xFF800000> : vector<4x8xf32>
    %116 = vector.multi_reduction <maximumf>, %115, %cst_71 [2] : vector<4x8x8xf32> to vector<4x8xf32>
    %117 = vector.shape_cast %116 : vector<4x8xf32> to vector<4x8x1xf32>
    %118 = vector.broadcast %117 : vector<4x8x1xf32> to vector<4x8x8xf32>
    %119 = arith.subf %115, %118 : vector<4x8x8xf32>
    %120 = math.exp %119 : vector<4x8x8xf32>
    %cst_72 = arith.constant dense<0.000000e+00> : vector<4x8xf32>
    %121 = vector.multi_reduction <add>, %120, %cst_72 [2] : vector<4x8x8xf32> to vector<4x8xf32>
    %122 = vector.shape_cast %121 : vector<4x8xf32> to vector<4x8x1xf32>
    %123 = tpu.reciprocal %122 {approx = true} : vector<4x8x1xf32> -> vector<4x8x1xf32>
    %124 = vector.broadcast %123 : vector<4x8x1xf32> to vector<4x8x8xf32>
    %125 = arith.mulf %120, %124 : vector<4x8x8xf32>
    %126 = arith.truncf %125 : vector<4x8x8xf32> to vector<4x8x8xbf16>
    %127 = arith.truncf %112 : vector<4x8x8xf32> to vector<4x8x8xbf16>
    "tpu.trace_start"() <{level = 10 : i32, message = "bqk,bkd->bqd"}> : () -> ()
    %cst_73 = arith.constant dense<0.000000e+00> : vector<4x8x8xf32>
    %128 = tpu.matmul %126, %127, %cst_73 {dimension_numbers = #tpu.dot_dimension_numbers<[2], [1], [1], [2], [0, 0, 0, 1, 1, 2], [0], [0]>} : vector<4x8x8xbf16>, vector<4x8x8xbf16>, vector<4x8x8xf32> -> vector<4x8x8xf32>
    "tpu.trace_stop"() : () -> ()
    %129 = vector.shape_cast %128 : vector<4x8x8xf32> to vector<32x8xf32>
    %130 = vector.extract_strided_slice %106 {offsets = [0, 8], sizes = [32, 8], strides = [1, 1]} : vector<32x96xf32> to vector<32x8xf32>
    %131 = vector.shape_cast %130 : vector<32x8xf32> to vector<4x8x8xf32>
    %132 = vector.extract_strided_slice %106 {offsets = [0, 40], sizes = [32, 8], strides = [1, 1]} : vector<32x96xf32> to vector<32x8xf32>
    %133 = vector.shape_cast %132 : vector<32x8xf32> to vector<4x8x8xf32>
    %134 = vector.extract_strided_slice %106 {offsets = [0, 72], sizes = [32, 8], strides = [1, 1]} : vector<32x96xf32> to vector<32x8xf32>
    %135 = vector.shape_cast %134 : vector<32x8xf32> to vector<4x8x8xf32>
    %136 = arith.truncf %131 : vector<4x8x8xf32> to vector<4x8x8xbf16>
    %137 = arith.truncf %133 : vector<4x8x8xf32> to vector<4x8x8xbf16>
    "tpu.trace_start"() <{level = 10 : i32, message = "bqd,bkd->bqk"}> : () -> ()
    %cst_74 = arith.constant dense<0.000000e+00> : vector<4x8x8xf32>
    %138 = tpu.matmul %136, %137, %cst_74 {dimension_numbers = #tpu.dot_dimension_numbers<[2], [2], [1], [1], [0, 0, 0, 1, 1, 1], [0], [0]>} : vector<4x8x8xbf16>, vector<4x8x8xbf16>, vector<4x8x8xf32> -> vector<4x8x8xf32>
    "tpu.trace_stop"() : () -> ()
    %cst_75 = arith.constant dense<0xFF800000> : vector<4x8xf32>
    %139 = vector.multi_reduction <maximumf>, %138, %cst_75 [2] : vector<4x8x8xf32> to vector<4x8xf32>
    %140 = vector.shape_cast %139 : vector<4x8xf32> to vector<4x8x1xf32>
    %141 = vector.broadcast %140 : vector<4x8x1xf32> to vector<4x8x8xf32>
    %142 = arith.subf %138, %141 : vector<4x8x8xf32>
    %143 = math.exp %142 : vector<4x8x8xf32>
    %cst_76 = arith.constant dense<0.000000e+00> : vector<4x8xf32>
    %144 = vector.multi_reduction <add>, %143, %cst_76 [2] : vector<4x8x8xf32> to vector<4x8xf32>
    %145 = vector.shape_cast %144 : vector<4x8xf32> to vector<4x8x1xf32>
    %146 = tpu.reciprocal %145 {approx = true} : vector<4x8x1xf32> -> vector<4x8x1xf32>
    %147 = vector.broadcast %146 : vector<4x8x1xf32> to vector<4x8x8xf32>
    %148 = arith.mulf %143, %147 : vector<4x8x8xf32>
    %149 = arith.truncf %148 : vector<4x8x8xf32> to vector<4x8x8xbf16>
    %150 = arith.truncf %135 : vector<4x8x8xf32> to vector<4x8x8xbf16>
    "tpu.trace_start"() <{level = 10 : i32, message = "bqk,bkd->bqd"}> : () -> ()
    %cst_77 = arith.constant dense<0.000000e+00> : vector<4x8x8xf32>
    %151 = tpu.matmul %149, %150, %cst_77 {dimension_numbers = #tpu.dot_dimension_numbers<[2], [1], [1], [2], [0, 0, 0, 1, 1, 2], [0], [0]>} : vector<4x8x8xbf16>, vector<4x8x8xbf16>, vector<4x8x8xf32> -> vector<4x8x8xf32>
    "tpu.trace_stop"() : () -> ()
    %152 = vector.shape_cast %151 : vector<4x8x8xf32> to vector<32x8xf32>
    %153 = vector.extract_strided_slice %106 {offsets = [0, 16], sizes = [32, 8], strides = [1, 1]} : vector<32x96xf32> to vector<32x8xf32>
    %154 = vector.shape_cast %153 : vector<32x8xf32> to vector<4x8x8xf32>
    %155 = vector.extract_strided_slice %106 {offsets = [0, 48], sizes = [32, 8], strides = [1, 1]} : vector<32x96xf32> to vector<32x8xf32>
    %156 = vector.shape_cast %155 : vector<32x8xf32> to vector<4x8x8xf32>
    %157 = vector.extract_strided_slice %106 {offsets = [0, 80], sizes = [32, 8], strides = [1, 1]} : vector<32x96xf32> to vector<32x8xf32>
    %158 = vector.shape_cast %157 : vector<32x8xf32> to vector<4x8x8xf32>
    %159 = arith.truncf %154 : vector<4x8x8xf32> to vector<4x8x8xbf16>
    %160 = arith.truncf %156 : vector<4x8x8xf32> to vector<4x8x8xbf16>
    "tpu.trace_start"() <{level = 10 : i32, message = "bqd,bkd->bqk"}> : () -> ()
    %cst_78 = arith.constant dense<0.000000e+00> : vector<4x8x8xf32>
    %161 = tpu.matmul %159, %160, %cst_78 {dimension_numbers = #tpu.dot_dimension_numbers<[2], [2], [1], [1], [0, 0, 0, 1, 1, 1], [0], [0]>} : vector<4x8x8xbf16>, vector<4x8x8xbf16>, vector<4x8x8xf32> -> vector<4x8x8xf32>
    "tpu.trace_stop"() : () -> ()
    %cst_79 = arith.constant dense<0xFF800000> : vector<4x8xf32>
    %162 = vector.multi_reduction <maximumf>, %161, %cst_79 [2] : vector<4x8x8xf32> to vector<4x8xf32>
    %163 = vector.shape_cast %162 : vector<4x8xf32> to vector<4x8x1xf32>
    %164 = vector.broadcast %163 : vector<4x8x1xf32> to vector<4x8x8xf32>
    %165 = arith.subf %161, %164 : vector<4x8x8xf32>
    %166 = math.exp %165 : vector<4x8x8xf32>
    %cst_80 = arith.constant dense<0.000000e+00> : vector<4x8xf32>
    %167 = vector.multi_reduction <add>, %166, %cst_80 [2] : vector<4x8x8xf32> to vector<4x8xf32>
    %168 = vector.shape_cast %167 : vector<4x8xf32> to vector<4x8x1xf32>
    %169 = tpu.reciprocal %168 {approx = true} : vector<4x8x1xf32> -> vector<4x8x1xf32>
    %170 = vector.broadcast %169 : vector<4x8x1xf32> to vector<4x8x8xf32>
    %171 = arith.mulf %166, %170 : vector<4x8x8xf32>
    %172 = arith.truncf %171 : vector<4x8x8xf32> to vector<4x8x8xbf16>
    %173 = arith.truncf %158 : vector<4x8x8xf32> to vector<4x8x8xbf16>
    "tpu.trace_start"() <{level = 10 : i32, message = "bqk,bkd->bqd"}> : () -> ()
    %cst_81 = arith.constant dense<0.000000e+00> : vector<4x8x8xf32>
    %174 = tpu.matmul %172, %173, %cst_81 {dimension_numbers = #tpu.dot_dimension_numbers<[2], [1], [1], [2], [0, 0, 0, 1, 1, 2], [0], [0]>} : vector<4x8x8xbf16>, vector<4x8x8xbf16>, vector<4x8x8xf32> -> vector<4x8x8xf32>
    "tpu.trace_stop"() : () -> ()
    %175 = vector.shape_cast %174 : vector<4x8x8xf32> to vector<32x8xf32>
    %176 = vector.extract_strided_slice %106 {offsets = [0, 24], sizes = [32, 8], strides = [1, 1]} : vector<32x96xf32> to vector<32x8xf32>
    %177 = vector.shape_cast %176 : vector<32x8xf32> to vector<4x8x8xf32>
    %178 = vector.extract_strided_slice %106 {offsets = [0, 56], sizes = [32, 8], strides = [1, 1]} : vector<32x96xf32> to vector<32x8xf32>
    %179 = vector.shape_cast %178 : vector<32x8xf32> to vector<4x8x8xf32>
    %180 = vector.extract_strided_slice %106 {offsets = [0, 88], sizes = [32, 8], strides = [1, 1]} : vector<32x96xf32> to vector<32x8xf32>
    %181 = vector.shape_cast %180 : vector<32x8xf32> to vector<4x8x8xf32>
    %182 = arith.truncf %177 : vector<4x8x8xf32> to vector<4x8x8xbf16>
    %183 = arith.truncf %179 : vector<4x8x8xf32> to vector<4x8x8xbf16>
    "tpu.trace_start"() <{level = 10 : i32, message = "bqd,bkd->bqk"}> : () -> ()
    %cst_82 = arith.constant dense<0.000000e+00> : vector<4x8x8xf32>
    %184 = tpu.matmul %182, %183, %cst_82 {dimension_numbers = #tpu.dot_dimension_numbers<[2], [2], [1], [1], [0, 0, 0, 1, 1, 1], [0], [0]>} : vector<4x8x8xbf16>, vector<4x8x8xbf16>, vector<4x8x8xf32> -> vector<4x8x8xf32>
    "tpu.trace_stop"() : () -> ()
    %cst_83 = arith.constant dense<0xFF800000> : vector<4x8xf32>
    %185 = vector.multi_reduction <maximumf>, %184, %cst_83 [2] : vector<4x8x8xf32> to vector<4x8xf32>
    %186 = vector.shape_cast %185 : vector<4x8xf32> to vector<4x8x1xf32>
    %187 = vector.broadcast %186 : vector<4x8x1xf32> to vector<4x8x8xf32>
    %188 = arith.subf %184, %187 : vector<4x8x8xf32>
    %189 = math.exp %188 : vector<4x8x8xf32>
    %cst_84 = arith.constant dense<0.000000e+00> : vector<4x8xf32>
    %190 = vector.multi_reduction <add>, %189, %cst_84 [2] : vector<4x8x8xf32> to vector<4x8xf32>
    %191 = vector.shape_cast %190 : vector<4x8xf32> to vector<4x8x1xf32>
    %192 = tpu.reciprocal %191 {approx = true} : vector<4x8x1xf32> -> vector<4x8x1xf32>
    %193 = vector.broadcast %192 : vector<4x8x1xf32> to vector<4x8x8xf32>
    %194 = arith.mulf %189, %193 : vector<4x8x8xf32>
    %195 = arith.truncf %194 : vector<4x8x8xf32> to vector<4x8x8xbf16>
    %196 = arith.truncf %181 : vector<4x8x8xf32> to vector<4x8x8xbf16>
    "tpu.trace_start"() <{level = 10 : i32, message = "bqk,bkd->bqd"}> : () -> ()
    %cst_85 = arith.constant dense<0.000000e+00> : vector<4x8x8xf32>
    %197 = tpu.matmul %195, %196, %cst_85 {dimension_numbers = #tpu.dot_dimension_numbers<[2], [1], [1], [2], [0, 0, 0, 1, 1, 2], [0], [0]>} : vector<4x8x8xbf16>, vector<4x8x8xbf16>, vector<4x8x8xf32> -> vector<4x8x8xf32>
    "tpu.trace_stop"() : () -> ()
    %198 = vector.shape_cast %197 : vector<4x8x8xf32> to vector<32x8xf32>
    %199 = tpu.concatenate %129, %152, %175, %198 in 1 : vector<32x8xf32>, vector<32x8xf32>, vector<32x8xf32>, vector<32x8xf32> -> vector<32x32xf32>
    %c0_86 = arith.constant 0 : index
    %c0_87 = arith.constant 0 : index
    %c0_88 = arith.constant 0 : index
    %200 = vector.load %arg18[%c0_86, %c0_87, %c0_88] : memref<2x32x32xbf16, #tpu.memory_space<vmem>>, vector<1x32x32xbf16>
    %201 = vector.shape_cast %200 : vector<1x32x32xbf16> to vector<32x32xbf16>
    %c0_89 = arith.constant 0 : index
    %c0_90 = arith.constant 0 : index
    %c0_91 = arith.constant 0 : index
    %202 = vector.load %arg19[%c0_89, %c0_90, %c0_91] : memref<2x1x32xf32, #tpu.memory_space<vmem>>, vector<1x1x32xf32>
    %203 = vector.shape_cast %202 : vector<1x1x32xf32> to vector<1x32xf32>
    %204 = arith.truncf %199 : vector<32x32xf32> to vector<32x32xbf16>
    %cst_92 = arith.constant dense<0.000000e+00> : vector<32x32xf32>
    %205 = tpu.matmul %204, %201, %cst_92 {dimension_numbers = #tpu.dot_dimension_numbers<[1], [0], [0], [1], [0, 0, 1, 1], [], []>} : vector<32x32xbf16>, vector<32x32xbf16>, vector<32x32xf32> -> vector<32x32xf32>
    %206 = vector.broadcast %203 : vector<1x32xf32> to vector<32x32xf32>
    %207 = arith.addf %205, %206 : vector<32x32xf32>
    %208 = arith.addf %98, %207 : vector<32x32xf32>
    %c0_93 = arith.constant 0 : index
    %c0_94 = arith.constant 0 : index
    %c0_95 = arith.constant 0 : index
    %209 = vector.load %arg20[%c0_93, %c0_94, %c0_95] : memref<2x1x32xf32, #tpu.memory_space<vmem>>, vector<1x1x32xf32>
    %210 = vector.shape_cast %209 : vector<1x1x32xf32> to vector<1x32xf32>
    %c0_96 = arith.constant 0 : index
    %c0_97 = arith.constant 0 : index
    %c0_98 = arith.constant 0 : index
    %211 = vector.load %arg21[%c0_96, %c0_97, %c0_98] : memref<2x1x32xf32, #tpu.memory_space<vmem>>, vector<1x1x32xf32>
    %212 = vector.shape_cast %211 : vector<1x1x32xf32> to vector<1x32xf32>
    %cst_99 = arith.constant dense<0.000000e+00> : vector<32xf32>
    %213 = vector.multi_reduction <add>, %208, %cst_99 [1] : vector<32x32xf32> to vector<32xf32>
    %214 = vector.shape_cast %213 : vector<32xf32> to vector<32x1xf32>
    %cst_100 = arith.constant 3.200000e+01 : f32
    %215 = vector.broadcast %cst_100 : f32 to vector<32x1xf32>
    %216 = arith.divf %214, %215 : vector<32x1xf32>
    %217 = vector.broadcast %216 : vector<32x1xf32> to vector<32x32xf32>
    %218 = arith.subf %208, %217 : vector<32x32xf32>
    %219 = arith.mulf %218, %218 : vector<32x32xf32>
    %cst_101 = arith.constant dense<0.000000e+00> : vector<32xf32>
    %220 = vector.multi_reduction <add>, %219, %cst_101 [1] : vector<32x32xf32> to vector<32xf32>
    %221 = vector.shape_cast %220 : vector<32xf32> to vector<32x1xf32>
    %cst_102 = arith.constant 3.200000e+01 : f32
    %222 = vector.broadcast %cst_102 : f32 to vector<32x1xf32>
    %223 = arith.divf %221, %222 : vector<32x1xf32>
    %224 = vector.broadcast %216 : vector<32x1xf32> to vector<32x32xf32>
    %225 = arith.subf %208, %224 : vector<32x32xf32>
    %cst_103 = arith.constant 9.99999974E-6 : f32
    %226 = vector.broadcast %cst_103 : f32 to vector<32x1xf32>
    %227 = arith.addf %223, %226 : vector<32x1xf32>
    %228 = math.rsqrt %227 : vector<32x1xf32>
    %229 = vector.broadcast %228 : vector<32x1xf32> to vector<32x32xf32>
    %230 = arith.mulf %225, %229 : vector<32x32xf32>
    %231 = vector.broadcast %210 : vector<1x32xf32> to vector<32x32xf32>
    %232 = arith.mulf %230, %231 : vector<32x32xf32>
    %233 = vector.broadcast %212 : vector<1x32xf32> to vector<32x32xf32>
    %234 = arith.addf %232, %233 : vector<32x32xf32>
    %c0_104 = arith.constant 0 : index
    %c0_105 = arith.constant 0 : index
    %c0_106 = arith.constant 0 : index
    %235 = vector.load %arg22[%c0_104, %c0_105, %c0_106] : memref<2x32x512xbf16, #tpu.memory_space<vmem>>, vector<1x32x512xbf16>
    %236 = vector.shape_cast %235 : vector<1x32x512xbf16> to vector<32x512xbf16>
    %c0_107 = arith.constant 0 : index
    %c0_108 = arith.constant 0 : index
    %c0_109 = arith.constant 0 : index
    %237 = vector.load %arg23[%c0_107, %c0_108, %c0_109] : memref<2x1x512xf32, #tpu.memory_space<vmem>>, vector<1x1x512xf32>
    %238 = vector.shape_cast %237 : vector<1x1x512xf32> to vector<1x512xf32>
    %239 = arith.truncf %234 : vector<32x32xf32> to vector<32x32xbf16>
    %cst_110 = arith.constant dense<0.000000e+00> : vector<32x512xf32>
    %240 = tpu.matmul %239, %236, %cst_110 {dimension_numbers = #tpu.dot_dimension_numbers<[1], [0], [0], [1], [0, 0, 1, 1], [], []>} : vector<32x32xbf16>, vector<32x512xbf16>, vector<32x512xf32> -> vector<32x512xf32>
    %241 = vector.broadcast %238 : vector<1x512xf32> to vector<32x512xf32>
    %242 = arith.addf %240, %241 : vector<32x512xf32>
    %cst_111 = arith.constant 0.000000e+00 : f32
    %243 = vector.broadcast %cst_111 : f32 to vector<32x512xf32>
    %244 = arith.maximumf %242, %243 : vector<32x512xf32>
    %c0_112 = arith.constant 0 : index
    %c0_113 = arith.constant 0 : index
    %c0_114 = arith.constant 0 : index
    %245 = vector.load %arg24[%c0_112, %c0_113, %c0_114] : memref<2x512x32xbf16, #tpu.memory_space<vmem>>, vector<1x512x32xbf16>
    %246 = vector.shape_cast %245 : vector<1x512x32xbf16> to vector<512x32xbf16>
    %c0_115 = arith.constant 0 : index
    %c0_116 = arith.constant 0 : index
    %c0_117 = arith.constant 0 : index
    %247 = vector.load %arg25[%c0_115, %c0_116, %c0_117] : memref<2x1x32xf32, #tpu.memory_space<vmem>>, vector<1x1x32xf32>
    %248 = vector.shape_cast %247 : vector<1x1x32xf32> to vector<1x32xf32>
    %249 = arith.truncf %244 : vector<32x512xf32> to vector<32x512xbf16>
    %cst_118 = arith.constant dense<0.000000e+00> : vector<32x32xf32>
    %250 = tpu.matmul %249, %246, %cst_118 {dimension_numbers = #tpu.dot_dimension_numbers<[1], [0], [0], [1], [0, 0, 1, 1], [], []>} : vector<32x512xbf16>, vector<512x32xbf16>, vector<32x32xf32> -> vector<32x32xf32>
    %251 = vector.broadcast %248 : vector<1x32xf32> to vector<32x32xf32>
    %252 = arith.addf %250, %251 : vector<32x32xf32>
    %253 = arith.addf %234, %252 : vector<32x32xf32>
    %c0_119 = arith.constant 0 : index
    %c0_120 = arith.constant 0 : index
    %c0_121 = arith.constant 0 : index
    %254 = vector.load %arg26[%c0_119, %c0_120, %c0_121] : memref<2x1x32xf32, #tpu.memory_space<vmem>>, vector<1x1x32xf32>
    %255 = vector.shape_cast %254 : vector<1x1x32xf32> to vector<1x32xf32>
    %c0_122 = arith.constant 0 : index
    %c0_123 = arith.constant 0 : index
    %c0_124 = arith.constant 0 : index
    %256 = vector.load %arg27[%c0_122, %c0_123, %c0_124] : memref<2x1x32xf32, #tpu.memory_space<vmem>>, vector<1x1x32xf32>
    %257 = vector.shape_cast %256 : vector<1x1x32xf32> to vector<1x32xf32>
    %cst_125 = arith.constant dense<0.000000e+00> : vector<32xf32>
    %258 = vector.multi_reduction <add>, %253, %cst_125 [1] : vector<32x32xf32> to vector<32xf32>
    %259 = vector.shape_cast %258 : vector<32xf32> to vector<32x1xf32>
    %cst_126 = arith.constant 3.200000e+01 : f32
    %260 = vector.broadcast %cst_126 : f32 to vector<32x1xf32>
    %261 = arith.divf %259, %260 : vector<32x1xf32>
    %262 = vector.broadcast %261 : vector<32x1xf32> to vector<32x32xf32>
    %263 = arith.subf %253, %262 : vector<32x32xf32>
    %264 = arith.mulf %263, %263 : vector<32x32xf32>
    %cst_127 = arith.constant dense<0.000000e+00> : vector<32xf32>
    %265 = vector.multi_reduction <add>, %264, %cst_127 [1] : vector<32x32xf32> to vector<32xf32>
    %266 = vector.shape_cast %265 : vector<32xf32> to vector<32x1xf32>
    %cst_128 = arith.constant 3.200000e+01 : f32
    %267 = vector.broadcast %cst_128 : f32 to vector<32x1xf32>
    %268 = arith.divf %266, %267 : vector<32x1xf32>
    %269 = vector.broadcast %261 : vector<32x1xf32> to vector<32x32xf32>
    %270 = arith.subf %253, %269 : vector<32x32xf32>
    %cst_129 = arith.constant 9.99999974E-6 : f32
    %271 = vector.broadcast %cst_129 : f32 to vector<32x1xf32>
    %272 = arith.addf %268, %271 : vector<32x1xf32>
    %273 = math.rsqrt %272 : vector<32x1xf32>
    %274 = vector.broadcast %273 : vector<32x1xf32> to vector<32x32xf32>
    %275 = arith.mulf %270, %274 : vector<32x32xf32>
    %276 = vector.broadcast %255 : vector<1x32xf32> to vector<32x32xf32>
    %277 = arith.mulf %275, %276 : vector<32x32xf32>
    %278 = vector.broadcast %257 : vector<1x32xf32> to vector<32x32xf32>
    %279 = arith.addf %277, %278 : vector<32x32xf32>
    %c1 = arith.constant 1 : index
    %c0_130 = arith.constant 0 : index
    %c0_131 = arith.constant 0 : index
    %280 = vector.load %arg16[%c1, %c0_130, %c0_131] : memref<2x32x96xbf16, #tpu.memory_space<vmem>>, vector<1x32x96xbf16>
    %281 = vector.shape_cast %280 : vector<1x32x96xbf16> to vector<32x96xbf16>
    %c1_132 = arith.constant 1 : index
    %c0_133 = arith.constant 0 : index
    %c0_134 = arith.constant 0 : index
    %282 = vector.load %arg17[%c1_132, %c0_133, %c0_134] : memref<2x1x96xf32, #tpu.memory_space<vmem>>, vector<1x1x96xf32>
    %283 = vector.shape_cast %282 : vector<1x1x96xf32> to vector<1x96xf32>
    %284 = arith.truncf %279 : vector<32x32xf32> to vector<32x32xbf16>
    %cst_135 = arith.constant dense<0.000000e+00> : vector<32x96xf32>
    %285 = tpu.matmul %284, %281, %cst_135 {dimension_numbers = #tpu.dot_dimension_numbers<[1], [0], [0], [1], [0, 0, 1, 1], [], []>} : vector<32x32xbf16>, vector<32x96xbf16>, vector<32x96xf32> -> vector<32x96xf32>
    %286 = vector.broadcast %283 : vector<1x96xf32> to vector<32x96xf32>
    %287 = arith.addf %285, %286 : vector<32x96xf32>
    %288 = vector.extract_strided_slice %287 {offsets = [0, 0], sizes = [32, 8], strides = [1, 1]} : vector<32x96xf32> to vector<32x8xf32>
    %289 = vector.shape_cast %288 : vector<32x8xf32> to vector<4x8x8xf32>
    %290 = vector.extract_strided_slice %287 {offsets = [0, 32], sizes = [32, 8], strides = [1, 1]} : vector<32x96xf32> to vector<32x8xf32>
    %291 = vector.shape_cast %290 : vector<32x8xf32> to vector<4x8x8xf32>
    %292 = vector.extract_strided_slice %287 {offsets = [0, 64], sizes = [32, 8], strides = [1, 1]} : vector<32x96xf32> to vector<32x8xf32>
    %293 = vector.shape_cast %292 : vector<32x8xf32> to vector<4x8x8xf32>
    %294 = arith.truncf %289 : vector<4x8x8xf32> to vector<4x8x8xbf16>
    %295 = arith.truncf %291 : vector<4x8x8xf32> to vector<4x8x8xbf16>
    "tpu.trace_start"() <{level = 10 : i32, message = "bqd,bkd->bqk"}> : () -> ()
    %cst_136 = arith.constant dense<0.000000e+00> : vector<4x8x8xf32>
    %296 = tpu.matmul %294, %295, %cst_136 {dimension_numbers = #tpu.dot_dimension_numbers<[2], [2], [1], [1], [0, 0, 0, 1, 1, 1], [0], [0]>} : vector<4x8x8xbf16>, vector<4x8x8xbf16>, vector<4x8x8xf32> -> vector<4x8x8xf32>
    "tpu.trace_stop"() : () -> ()
    %cst_137 = arith.constant dense<0xFF800000> : vector<4x8xf32>
    %297 = vector.multi_reduction <maximumf>, %296, %cst_137 [2] : vector<4x8x8xf32> to vector<4x8xf32>
    %298 = vector.shape_cast %297 : vector<4x8xf32> to vector<4x8x1xf32>
    %299 = vector.broadcast %298 : vector<4x8x1xf32> to vector<4x8x8xf32>
    %300 = arith.subf %296, %299 : vector<4x8x8xf32>
    %301 = math.exp %300 : vector<4x8x8xf32>
    %cst_138 = arith.constant dense<0.000000e+00> : vector<4x8xf32>
    %302 = vector.multi_reduction <add>, %301, %cst_138 [2] : vector<4x8x8xf32> to vector<4x8xf32>
    %303 = vector.shape_cast %302 : vector<4x8xf32> to vector<4x8x1xf32>
    %304 = tpu.reciprocal %303 {approx = true} : vector<4x8x1xf32> -> vector<4x8x1xf32>
    %305 = vector.broadcast %304 : vector<4x8x1xf32> to vector<4x8x8xf32>
    %306 = arith.mulf %301, %305 : vector<4x8x8xf32>
    %307 = arith.truncf %306 : vector<4x8x8xf32> to vector<4x8x8xbf16>
    %308 = arith.truncf %293 : vector<4x8x8xf32> to vector<4x8x8xbf16>
    "tpu.trace_start"() <{level = 10 : i32, message = "bqk,bkd->bqd"}> : () -> ()
    %cst_139 = arith.constant dense<0.000000e+00> : vector<4x8x8xf32>
    %309 = tpu.matmul %307, %308, %cst_139 {dimension_numbers = #tpu.dot_dimension_numbers<[2], [1], [1], [2], [0, 0, 0, 1, 1, 2], [0], [0]>} : vector<4x8x8xbf16>, vector<4x8x8xbf16>, vector<4x8x8xf32> -> vector<4x8x8xf32>
    "tpu.trace_stop"() : () -> ()
    %310 = vector.shape_cast %309 : vector<4x8x8xf32> to vector<32x8xf32>
    %311 = vector.extract_strided_slice %287 {offsets = [0, 8], sizes = [32, 8], strides = [1, 1]} : vector<32x96xf32> to vector<32x8xf32>
    %312 = vector.shape_cast %311 : vector<32x8xf32> to vector<4x8x8xf32>
    %313 = vector.extract_strided_slice %287 {offsets = [0, 40], sizes = [32, 8], strides = [1, 1]} : vector<32x96xf32> to vector<32x8xf32>
    %314 = vector.shape_cast %313 : vector<32x8xf32> to vector<4x8x8xf32>
    %315 = vector.extract_strided_slice %287 {offsets = [0, 72], sizes = [32, 8], strides = [1, 1]} : vector<32x96xf32> to vector<32x8xf32>
    %316 = vector.shape_cast %315 : vector<32x8xf32> to vector<4x8x8xf32>
    %317 = arith.truncf %312 : vector<4x8x8xf32> to vector<4x8x8xbf16>
    %318 = arith.truncf %314 : vector<4x8x8xf32> to vector<4x8x8xbf16>
    "tpu.trace_start"() <{level = 10 : i32, message = "bqd,bkd->bqk"}> : () -> ()
    %cst_140 = arith.constant dense<0.000000e+00> : vector<4x8x8xf32>
    %319 = tpu.matmul %317, %318, %cst_140 {dimension_numbers = #tpu.dot_dimension_numbers<[2], [2], [1], [1], [0, 0, 0, 1, 1, 1], [0], [0]>} : vector<4x8x8xbf16>, vector<4x8x8xbf16>, vector<4x8x8xf32> -> vector<4x8x8xf32>
    "tpu.trace_stop"() : () -> ()
    %cst_141 = arith.constant dense<0xFF800000> : vector<4x8xf32>
    %320 = vector.multi_reduction <maximumf>, %319, %cst_141 [2] : vector<4x8x8xf32> to vector<4x8xf32>
    %321 = vector.shape_cast %320 : vector<4x8xf32> to vector<4x8x1xf32>
    %322 = vector.broadcast %321 : vector<4x8x1xf32> to vector<4x8x8xf32>
    %323 = arith.subf %319, %322 : vector<4x8x8xf32>
    %324 = math.exp %323 : vector<4x8x8xf32>
    %cst_142 = arith.constant dense<0.000000e+00> : vector<4x8xf32>
    %325 = vector.multi_reduction <add>, %324, %cst_142 [2] : vector<4x8x8xf32> to vector<4x8xf32>
    %326 = vector.shape_cast %325 : vector<4x8xf32> to vector<4x8x1xf32>
    %327 = tpu.reciprocal %326 {approx = true} : vector<4x8x1xf32> -> vector<4x8x1xf32>
    %328 = vector.broadcast %327 : vector<4x8x1xf32> to vector<4x8x8xf32>
    %329 = arith.mulf %324, %328 : vector<4x8x8xf32>
    %330 = arith.truncf %329 : vector<4x8x8xf32> to vector<4x8x8xbf16>
    %331 = arith.truncf %316 : vector<4x8x8xf32> to vector<4x8x8xbf16>
    "tpu.trace_start"() <{level = 10 : i32, message = "bqk,bkd->bqd"}> : () -> ()
    %cst_143 = arith.constant dense<0.000000e+00> : vector<4x8x8xf32>
    %332 = tpu.matmul %330, %331, %cst_143 {dimension_numbers = #tpu.dot_dimension_numbers<[2], [1], [1], [2], [0, 0, 0, 1, 1, 2], [0], [0]>} : vector<4x8x8xbf16>, vector<4x8x8xbf16>, vector<4x8x8xf32> -> vector<4x8x8xf32>
    "tpu.trace_stop"() : () -> ()
    %333 = vector.shape_cast %332 : vector<4x8x8xf32> to vector<32x8xf32>
    %334 = vector.extract_strided_slice %287 {offsets = [0, 16], sizes = [32, 8], strides = [1, 1]} : vector<32x96xf32> to vector<32x8xf32>
    %335 = vector.shape_cast %334 : vector<32x8xf32> to vector<4x8x8xf32>
    %336 = vector.extract_strided_slice %287 {offsets = [0, 48], sizes = [32, 8], strides = [1, 1]} : vector<32x96xf32> to vector<32x8xf32>
    %337 = vector.shape_cast %336 : vector<32x8xf32> to vector<4x8x8xf32>
    %338 = vector.extract_strided_slice %287 {offsets = [0, 80], sizes = [32, 8], strides = [1, 1]} : vector<32x96xf32> to vector<32x8xf32>
    %339 = vector.shape_cast %338 : vector<32x8xf32> to vector<4x8x8xf32>
    %340 = arith.truncf %335 : vector<4x8x8xf32> to vector<4x8x8xbf16>
    %341 = arith.truncf %337 : vector<4x8x8xf32> to vector<4x8x8xbf16>
    "tpu.trace_start"() <{level = 10 : i32, message = "bqd,bkd->bqk"}> : () -> ()
    %cst_144 = arith.constant dense<0.000000e+00> : vector<4x8x8xf32>
    %342 = tpu.matmul %340, %341, %cst_144 {dimension_numbers = #tpu.dot_dimension_numbers<[2], [2], [1], [1], [0, 0, 0, 1, 1, 1], [0], [0]>} : vector<4x8x8xbf16>, vector<4x8x8xbf16>, vector<4x8x8xf32> -> vector<4x8x8xf32>
    "tpu.trace_stop"() : () -> ()
    %cst_145 = arith.constant dense<0xFF800000> : vector<4x8xf32>
    %343 = vector.multi_reduction <maximumf>, %342, %cst_145 [2] : vector<4x8x8xf32> to vector<4x8xf32>
    %344 = vector.shape_cast %343 : vector<4x8xf32> to vector<4x8x1xf32>
    %345 = vector.broadcast %344 : vector<4x8x1xf32> to vector<4x8x8xf32>
    %346 = arith.subf %342, %345 : vector<4x8x8xf32>
    %347 = math.exp %346 : vector<4x8x8xf32>
    %cst_146 = arith.constant dense<0.000000e+00> : vector<4x8xf32>
    %348 = vector.multi_reduction <add>, %347, %cst_146 [2] : vector<4x8x8xf32> to vector<4x8xf32>
    %349 = vector.shape_cast %348 : vector<4x8xf32> to vector<4x8x1xf32>
    %350 = tpu.reciprocal %349 {approx = true} : vector<4x8x1xf32> -> vector<4x8x1xf32>
    %351 = vector.broadcast %350 : vector<4x8x1xf32> to vector<4x8x8xf32>
    %352 = arith.mulf %347, %351 : vector<4x8x8xf32>
    %353 = arith.truncf %352 : vector<4x8x8xf32> to vector<4x8x8xbf16>
    %354 = arith.truncf %339 : vector<4x8x8xf32> to vector<4x8x8xbf16>
    "tpu.trace_start"() <{level = 10 : i32, message = "bqk,bkd->bqd"}> : () -> ()
    %cst_147 = arith.constant dense<0.000000e+00> : vector<4x8x8xf32>
    %355 = tpu.matmul %353, %354, %cst_147 {dimension_numbers = #tpu.dot_dimension_numbers<[2], [1], [1], [2], [0, 0, 0, 1, 1, 2], [0], [0]>} : vector<4x8x8xbf16>, vector<4x8x8xbf16>, vector<4x8x8xf32> -> vector<4x8x8xf32>
    "tpu.trace_stop"() : () -> ()
    %356 = vector.shape_cast %355 : vector<4x8x8xf32> to vector<32x8xf32>
    %357 = vector.extract_strided_slice %287 {offsets = [0, 24], sizes = [32, 8], strides = [1, 1]} : vector<32x96xf32> to vector<32x8xf32>
    %358 = vector.shape_cast %357 : vector<32x8xf32> to vector<4x8x8xf32>
    %359 = vector.extract_strided_slice %287 {offsets = [0, 56], sizes = [32, 8], strides = [1, 1]} : vector<32x96xf32> to vector<32x8xf32>
    %360 = vector.shape_cast %359 : vector<32x8xf32> to vector<4x8x8xf32>
    %361 = vector.extract_strided_slice %287 {offsets = [0, 88], sizes = [32, 8], strides = [1, 1]} : vector<32x96xf32> to vector<32x8xf32>
    %362 = vector.shape_cast %361 : vector<32x8xf32> to vector<4x8x8xf32>
    %363 = arith.truncf %358 : vector<4x8x8xf32> to vector<4x8x8xbf16>
    %364 = arith.truncf %360 : vector<4x8x8xf32> to vector<4x8x8xbf16>
    "tpu.trace_start"() <{level = 10 : i32, message = "bqd,bkd->bqk"}> : () -> ()
    %cst_148 = arith.constant dense<0.000000e+00> : vector<4x8x8xf32>
    %365 = tpu.matmul %363, %364, %cst_148 {dimension_numbers = #tpu.dot_dimension_numbers<[2], [2], [1], [1], [0, 0, 0, 1, 1, 1], [0], [0]>} : vector<4x8x8xbf16>, vector<4x8x8xbf16>, vector<4x8x8xf32> -> vector<4x8x8xf32>
    "tpu.trace_stop"() : () -> ()
    %cst_149 = arith.constant dense<0xFF800000> : vector<4x8xf32>
    %366 = vector.multi_reduction <maximumf>, %365, %cst_149 [2] : vector<4x8x8xf32> to vector<4x8xf32>
    %367 = vector.shape_cast %366 : vector<4x8xf32> to vector<4x8x1xf32>
    %368 = vector.broadcast %367 : vector<4x8x1xf32> to vector<4x8x8xf32>
    %369 = arith.subf %365, %368 : vector<4x8x8xf32>
    %370 = math.exp %369 : vector<4x8x8xf32>
    %cst_150 = arith.constant dense<0.000000e+00> : vector<4x8xf32>
    %371 = vector.multi_reduction <add>, %370, %cst_150 [2] : vector<4x8x8xf32> to vector<4x8xf32>
    %372 = vector.shape_cast %371 : vector<4x8xf32> to vector<4x8x1xf32>
    %373 = tpu.reciprocal %372 {approx = true} : vector<4x8x1xf32> -> vector<4x8x1xf32>
    %374 = vector.broadcast %373 : vector<4x8x1xf32> to vector<4x8x8xf32>
    %375 = arith.mulf %370, %374 : vector<4x8x8xf32>
    %376 = arith.truncf %375 : vector<4x8x8xf32> to vector<4x8x8xbf16>
    %377 = arith.truncf %362 : vector<4x8x8xf32> to vector<4x8x8xbf16>
    "tpu.trace_start"() <{level = 10 : i32, message = "bqk,bkd->bqd"}> : () -> ()
    %cst_151 = arith.constant dense<0.000000e+00> : vector<4x8x8xf32>
    %378 = tpu.matmul %376, %377, %cst_151 {dimension_numbers = #tpu.dot_dimension_numbers<[2], [1], [1], [2], [0, 0, 0, 1, 1, 2], [0], [0]>} : vector<4x8x8xbf16>, vector<4x8x8xbf16>, vector<4x8x8xf32> -> vector<4x8x8xf32>
    "tpu.trace_stop"() : () -> ()
    %379 = vector.shape_cast %378 : vector<4x8x8xf32> to vector<32x8xf32>
    %380 = tpu.concatenate %310, %333, %356, %379 in 1 : vector<32x8xf32>, vector<32x8xf32>, vector<32x8xf32>, vector<32x8xf32> -> vector<32x32xf32>
    %c1_152 = arith.constant 1 : index
    %c0_153 = arith.constant 0 : index
    %c0_154 = arith.constant 0 : index
    %381 = vector.load %arg18[%c1_152, %c0_153, %c0_154] : memref<2x32x32xbf16, #tpu.memory_space<vmem>>, vector<1x32x32xbf16>
    %382 = vector.shape_cast %381 : vector<1x32x32xbf16> to vector<32x32xbf16>
    %c1_155 = arith.constant 1 : index
    %c0_156 = arith.constant 0 : index
    %c0_157 = arith.constant 0 : index
    %383 = vector.load %arg19[%c1_155, %c0_156, %c0_157] : memref<2x1x32xf32, #tpu.memory_space<vmem>>, vector<1x1x32xf32>
    %384 = vector.shape_cast %383 : vector<1x1x32xf32> to vector<1x32xf32>
    %385 = arith.truncf %380 : vector<32x32xf32> to vector<32x32xbf16>
    %cst_158 = arith.constant dense<0.000000e+00> : vector<32x32xf32>
    %386 = tpu.matmul %385, %382, %cst_158 {dimension_numbers = #tpu.dot_dimension_numbers<[1], [0], [0], [1], [0, 0, 1, 1], [], []>} : vector<32x32xbf16>, vector<32x32xbf16>, vector<32x32xf32> -> vector<32x32xf32>
    %387 = vector.broadcast %384 : vector<1x32xf32> to vector<32x32xf32>
    %388 = arith.addf %386, %387 : vector<32x32xf32>
    %389 = arith.addf %279, %388 : vector<32x32xf32>
    %c1_159 = arith.constant 1 : index
    %c0_160 = arith.constant 0 : index
    %c0_161 = arith.constant 0 : index
    %390 = vector.load %arg20[%c1_159, %c0_160, %c0_161] : memref<2x1x32xf32, #tpu.memory_space<vmem>>, vector<1x1x32xf32>
    %391 = vector.shape_cast %390 : vector<1x1x32xf32> to vector<1x32xf32>
    %c1_162 = arith.constant 1 : index
    %c0_163 = arith.constant 0 : index
    %c0_164 = arith.constant 0 : index
    %392 = vector.load %arg21[%c1_162, %c0_163, %c0_164] : memref<2x1x32xf32, #tpu.memory_space<vmem>>, vector<1x1x32xf32>
    %393 = vector.shape_cast %392 : vector<1x1x32xf32> to vector<1x32xf32>
    %cst_165 = arith.constant dense<0.000000e+00> : vector<32xf32>
    %394 = vector.multi_reduction <add>, %389, %cst_165 [1] : vector<32x32xf32> to vector<32xf32>
    %395 = vector.shape_cast %394 : vector<32xf32> to vector<32x1xf32>
    %cst_166 = arith.constant 3.200000e+01 : f32
    %396 = vector.broadcast %cst_166 : f32 to vector<32x1xf32>
    %397 = arith.divf %395, %396 : vector<32x1xf32>
    %398 = vector.broadcast %397 : vector<32x1xf32> to vector<32x32xf32>
    %399 = arith.subf %389, %398 : vector<32x32xf32>
    %400 = arith.mulf %399, %399 : vector<32x32xf32>
    %cst_167 = arith.constant dense<0.000000e+00> : vector<32xf32>
    %401 = vector.multi_reduction <add>, %400, %cst_167 [1] : vector<32x32xf32> to vector<32xf32>
    %402 = vector.shape_cast %401 : vector<32xf32> to vector<32x1xf32>
    %cst_168 = arith.constant 3.200000e+01 : f32
    %403 = vector.broadcast %cst_168 : f32 to vector<32x1xf32>
    %404 = arith.divf %402, %403 : vector<32x1xf32>
    %405 = vector.broadcast %397 : vector<32x1xf32> to vector<32x32xf32>
    %406 = arith.subf %389, %405 : vector<32x32xf32>
    %cst_169 = arith.constant 9.99999974E-6 : f32
    %407 = vector.broadcast %cst_169 : f32 to vector<32x1xf32>
    %408 = arith.addf %404, %407 : vector<32x1xf32>
    %409 = math.rsqrt %408 : vector<32x1xf32>
    %410 = vector.broadcast %409 : vector<32x1xf32> to vector<32x32xf32>
    %411 = arith.mulf %406, %410 : vector<32x32xf32>
    %412 = vector.broadcast %391 : vector<1x32xf32> to vector<32x32xf32>
    %413 = arith.mulf %411, %412 : vector<32x32xf32>
    %414 = vector.broadcast %393 : vector<1x32xf32> to vector<32x32xf32>
    %415 = arith.addf %413, %414 : vector<32x32xf32>
    %c1_170 = arith.constant 1 : index
    %c0_171 = arith.constant 0 : index
    %c0_172 = arith.constant 0 : index
    %416 = vector.load %arg22[%c1_170, %c0_171, %c0_172] : memref<2x32x512xbf16, #tpu.memory_space<vmem>>, vector<1x32x512xbf16>
    %417 = vector.shape_cast %416 : vector<1x32x512xbf16> to vector<32x512xbf16>
    %c1_173 = arith.constant 1 : index
    %c0_174 = arith.constant 0 : index
    %c0_175 = arith.constant 0 : index
    %418 = vector.load %arg23[%c1_173, %c0_174, %c0_175] : memref<2x1x512xf32, #tpu.memory_space<vmem>>, vector<1x1x512xf32>
    %419 = vector.shape_cast %418 : vector<1x1x512xf32> to vector<1x512xf32>
    %420 = arith.truncf %415 : vector<32x32xf32> to vector<32x32xbf16>
    %cst_176 = arith.constant dense<0.000000e+00> : vector<32x512xf32>
    %421 = tpu.matmul %420, %417, %cst_176 {dimension_numbers = #tpu.dot_dimension_numbers<[1], [0], [0], [1], [0, 0, 1, 1], [], []>} : vector<32x32xbf16>, vector<32x512xbf16>, vector<32x512xf32> -> vector<32x512xf32>
    %422 = vector.broadcast %419 : vector<1x512xf32> to vector<32x512xf32>
    %423 = arith.addf %421, %422 : vector<32x512xf32>
    %cst_177 = arith.constant 0.000000e+00 : f32
    %424 = vector.broadcast %cst_177 : f32 to vector<32x512xf32>
    %425 = arith.maximumf %423, %424 : vector<32x512xf32>
    %c1_178 = arith.constant 1 : index
    %c0_179 = arith.constant 0 : index
    %c0_180 = arith.constant 0 : index
    %426 = vector.load %arg24[%c1_178, %c0_179, %c0_180] : memref<2x512x32xbf16, #tpu.memory_space<vmem>>, vector<1x512x32xbf16>
    %427 = vector.shape_cast %426 : vector<1x512x32xbf16> to vector<512x32xbf16>
    %c1_181 = arith.constant 1 : index
    %c0_182 = arith.constant 0 : index
    %c0_183 = arith.constant 0 : index
    %428 = vector.load %arg25[%c1_181, %c0_182, %c0_183] : memref<2x1x32xf32, #tpu.memory_space<vmem>>, vector<1x1x32xf32>
    %429 = vector.shape_cast %428 : vector<1x1x32xf32> to vector<1x32xf32>
    %430 = arith.truncf %425 : vector<32x512xf32> to vector<32x512xbf16>
    %cst_184 = arith.constant dense<0.000000e+00> : vector<32x32xf32>
    %431 = tpu.matmul %430, %427, %cst_184 {dimension_numbers = #tpu.dot_dimension_numbers<[1], [0], [0], [1], [0, 0, 1, 1], [], []>} : vector<32x512xbf16>, vector<512x32xbf16>, vector<32x32xf32> -> vector<32x32xf32>
    %432 = vector.broadcast %429 : vector<1x32xf32> to vector<32x32xf32>
    %433 = arith.addf %431, %432 : vector<32x32xf32>
    %434 = arith.addf %415, %433 : vector<32x32xf32>
    %c1_185 = arith.constant 1 : index
    %c0_186 = arith.constant 0 : index
    %c0_187 = arith.constant 0 : index
    %435 = vector.load %arg26[%c1_185, %c0_186, %c0_187] : memref<2x1x32xf32, #tpu.memory_space<vmem>>, vector<1x1x32xf32>
    %436 = vector.shape_cast %435 : vector<1x1x32xf32> to vector<1x32xf32>
    %c1_188 = arith.constant 1 : index
    %c0_189 = arith.constant 0 : index
    %c0_190 = arith.constant 0 : index
    %437 = vector.load %arg27[%c1_188, %c0_189, %c0_190] : memref<2x1x32xf32, #tpu.memory_space<vmem>>, vector<1x1x32xf32>
    %438 = vector.shape_cast %437 : vector<1x1x32xf32> to vector<1x32xf32>
    %cst_191 = arith.constant dense<0.000000e+00> : vector<32xf32>
    %439 = vector.multi_reduction <add>, %434, %cst_191 [1] : vector<32x32xf32> to vector<32xf32>
    %440 = vector.shape_cast %439 : vector<32xf32> to vector<32x1xf32>
    %cst_192 = arith.constant 3.200000e+01 : f32
    %441 = vector.broadcast %cst_192 : f32 to vector<32x1xf32>
    %442 = arith.divf %440, %441 : vector<32x1xf32>
    %443 = vector.broadcast %442 : vector<32x1xf32> to vector<32x32xf32>
    %444 = arith.subf %434, %443 : vector<32x32xf32>
    %445 = arith.mulf %444, %444 : vector<32x32xf32>
    %cst_193 = arith.constant dense<0.000000e+00> : vector<32xf32>
    %446 = vector.multi_reduction <add>, %445, %cst_193 [1] : vector<32x32xf32> to vector<32xf32>
    %447 = vector.shape_cast %446 : vector<32xf32> to vector<32x1xf32>
    %cst_194 = arith.constant 3.200000e+01 : f32
    %448 = vector.broadcast %cst_194 : f32 to vector<32x1xf32>
    %449 = arith.divf %447, %448 : vector<32x1xf32>
    %450 = vector.broadcast %442 : vector<32x1xf32> to vector<32x32xf32>
    %451 = arith.subf %434, %450 : vector<32x32xf32>
    %cst_195 = arith.constant 9.99999974E-6 : f32
    %452 = vector.broadcast %cst_195 : f32 to vector<32x1xf32>
    %453 = arith.addf %449, %452 : vector<32x1xf32>
    %454 = math.rsqrt %453 : vector<32x1xf32>
    %455 = vector.broadcast %454 : vector<32x1xf32> to vector<32x32xf32>
    %456 = arith.mulf %451, %455 : vector<32x32xf32>
    %457 = vector.broadcast %436 : vector<1x32xf32> to vector<32x32xf32>
    %458 = arith.mulf %456, %457 : vector<32x32xf32>
    %459 = vector.broadcast %438 : vector<1x32xf32> to vector<32x32xf32>
    %460 = arith.addf %458, %459 : vector<32x32xf32>
    %461 = vector.shape_cast %460 : vector<32x32xf32> to vector<2x2x8x32xf32>
    %cst_196 = arith.constant 0.000000e+00 : f32
    %462 = vector.broadcast %cst_196 : f32 to vector<2x2x512xf32>
    %463 = vector.extract_strided_slice %461 {offsets = [0, 0, 0, 0], sizes = [2, 2, 1, 32], strides = [1, 1, 1, 1]} : vector<2x2x8x32xf32> to vector<2x2x1x32xf32>
    %464 = vector.shape_cast %463 : vector<2x2x1x32xf32> to vector<2x2x32xf32>
    %465 = arith.truncf %464 : vector<2x2x32xf32> to vector<2x2x32xbf16>
    %c0_197 = arith.constant 0 : index
    %c0_198 = arith.constant 0 : index
    %c0_199 = arith.constant 0 : index
    %c0_200 = arith.constant 0 : index
    %466 = vector.load %arg28[%c0_197, %c0_198, %c0_199, %c0_200] : memref<2x8x32x512xbf16, #tpu.memory_space<vmem>>, vector<2x1x32x512xbf16>
    %467 = vector.shape_cast %466 : vector<2x1x32x512xbf16> to vector<2x32x512xbf16>
    "tpu.trace_start"() <{level = 10 : i32, message = "gbd,gdo->gbo"}> : () -> ()
    %cst_201 = arith.constant dense<0.000000e+00> : vector<2x2x512xf32>
    %468 = tpu.matmul %465, %467, %cst_201 {dimension_numbers = #tpu.dot_dimension_numbers<[2], [1], [1], [2], [0, 0, 0, 1, 1, 2], [0], [0]>} : vector<2x2x32xbf16>, vector<2x32x512xbf16>, vector<2x2x512xf32> -> vector<2x2x512xf32>
    "tpu.trace_stop"() : () -> ()
    %469 = arith.addf %462, %468 : vector<2x2x512xf32>
    %470 = vector.extract_strided_slice %461 {offsets = [0, 0, 1, 0], sizes = [2, 2, 1, 32], strides = [1, 1, 1, 1]} : vector<2x2x8x32xf32> to vector<2x2x1x32xf32>
    %471 = vector.shape_cast %470 : vector<2x2x1x32xf32> to vector<2x2x32xf32>
    %472 = arith.truncf %471 : vector<2x2x32xf32> to vector<2x2x32xbf16>
    %c0_202 = arith.constant 0 : index
    %c1_203 = arith.constant 1 : index
    %c0_204 = arith.constant 0 : index
    %c0_205 = arith.constant 0 : index
    %473 = vector.load %arg28[%c0_202, %c1_203, %c0_204, %c0_205] : memref<2x8x32x512xbf16, #tpu.memory_space<vmem>>, vector<2x1x32x512xbf16>
    %474 = vector.shape_cast %473 : vector<2x1x32x512xbf16> to vector<2x32x512xbf16>
    "tpu.trace_start"() <{level = 10 : i32, message = "gbd,gdo->gbo"}> : () -> ()
    %cst_206 = arith.constant dense<0.000000e+00> : vector<2x2x512xf32>
    %475 = tpu.matmul %472, %474, %cst_206 {dimension_numbers = #tpu.dot_dimension_numbers<[2], [1], [1], [2], [0, 0, 0, 1, 1, 2], [0], [0]>} : vector<2x2x32xbf16>, vector<2x32x512xbf16>, vector<2x2x512xf32> -> vector<2x2x512xf32>
    "tpu.trace_stop"() : () -> ()
    %476 = arith.addf %469, %475 : vector<2x2x512xf32>
    %477 = vector.extract_strided_slice %461 {offsets = [0, 0, 2, 0], sizes = [2, 2, 1, 32], strides = [1, 1, 1, 1]} : vector<2x2x8x32xf32> to vector<2x2x1x32xf32>
    %478 = vector.shape_cast %477 : vector<2x2x1x32xf32> to vector<2x2x32xf32>
    %479 = arith.truncf %478 : vector<2x2x32xf32> to vector<2x2x32xbf16>
    %c0_207 = arith.constant 0 : index
    %c2 = arith.constant 2 : index
    %c0_208 = arith.constant 0 : index
    %c0_209 = arith.constant 0 : index
    %480 = vector.load %arg28[%c0_207, %c2, %c0_208, %c0_209] : memref<2x8x32x512xbf16, #tpu.memory_space<vmem>>, vector<2x1x32x512xbf16>
    %481 = vector.shape_cast %480 : vector<2x1x32x512xbf16> to vector<2x32x512xbf16>
    "tpu.trace_start"() <{level = 10 : i32, message = "gbd,gdo->gbo"}> : () -> ()
    %cst_210 = arith.constant dense<0.000000e+00> : vector<2x2x512xf32>
    %482 = tpu.matmul %479, %481, %cst_210 {dimension_numbers = #tpu.dot_dimension_numbers<[2], [1], [1], [2], [0, 0, 0, 1, 1, 2], [0], [0]>} : vector<2x2x32xbf16>, vector<2x32x512xbf16>, vector<2x2x512xf32> -> vector<2x2x512xf32>
    "tpu.trace_stop"() : () -> ()
    %483 = arith.addf %476, %482 : vector<2x2x512xf32>
    %484 = vector.extract_strided_slice %461 {offsets = [0, 0, 3, 0], sizes = [2, 2, 1, 32], strides = [1, 1, 1, 1]} : vector<2x2x8x32xf32> to vector<2x2x1x32xf32>
    %485 = vector.shape_cast %484 : vector<2x2x1x32xf32> to vector<2x2x32xf32>
    %486 = arith.truncf %485 : vector<2x2x32xf32> to vector<2x2x32xbf16>
    %c0_211 = arith.constant 0 : index
    %c3 = arith.constant 3 : index
    %c0_212 = arith.constant 0 : index
    %c0_213 = arith.constant 0 : index
    %487 = vector.load %arg28[%c0_211, %c3, %c0_212, %c0_213] : memref<2x8x32x512xbf16, #tpu.memory_space<vmem>>, vector<2x1x32x512xbf16>
    %488 = vector.shape_cast %487 : vector<2x1x32x512xbf16> to vector<2x32x512xbf16>
    "tpu.trace_start"() <{level = 10 : i32, message = "gbd,gdo->gbo"}> : () -> ()
    %cst_214 = arith.constant dense<0.000000e+00> : vector<2x2x512xf32>
    %489 = tpu.matmul %486, %488, %cst_214 {dimension_numbers = #tpu.dot_dimension_numbers<[2], [1], [1], [2], [0, 0, 0, 1, 1, 2], [0], [0]>} : vector<2x2x32xbf16>, vector<2x32x512xbf16>, vector<2x2x512xf32> -> vector<2x2x512xf32>
    "tpu.trace_stop"() : () -> ()
    %490 = arith.addf %483, %489 : vector<2x2x512xf32>
    %491 = vector.extract_strided_slice %461 {offsets = [0, 0, 4, 0], sizes = [2, 2, 1, 32], strides = [1, 1, 1, 1]} : vector<2x2x8x32xf32> to vector<2x2x1x32xf32>
    %492 = vector.shape_cast %491 : vector<2x2x1x32xf32> to vector<2x2x32xf32>
    %493 = arith.truncf %492 : vector<2x2x32xf32> to vector<2x2x32xbf16>
    %c0_215 = arith.constant 0 : index
    %c4 = arith.constant 4 : index
    %c0_216 = arith.constant 0 : index
    %c0_217 = arith.constant 0 : index
    %494 = vector.load %arg28[%c0_215, %c4, %c0_216, %c0_217] : memref<2x8x32x512xbf16, #tpu.memory_space<vmem>>, vector<2x1x32x512xbf16>
    %495 = vector.shape_cast %494 : vector<2x1x32x512xbf16> to vector<2x32x512xbf16>
    "tpu.trace_start"() <{level = 10 : i32, message = "gbd,gdo->gbo"}> : () -> ()
    %cst_218 = arith.constant dense<0.000000e+00> : vector<2x2x512xf32>
    %496 = tpu.matmul %493, %495, %cst_218 {dimension_numbers = #tpu.dot_dimension_numbers<[2], [1], [1], [2], [0, 0, 0, 1, 1, 2], [0], [0]>} : vector<2x2x32xbf16>, vector<2x32x512xbf16>, vector<2x2x512xf32> -> vector<2x2x512xf32>
    "tpu.trace_stop"() : () -> ()
    %497 = arith.addf %490, %496 : vector<2x2x512xf32>
    %498 = vector.extract_strided_slice %461 {offsets = [0, 0, 5, 0], sizes = [2, 2, 1, 32], strides = [1, 1, 1, 1]} : vector<2x2x8x32xf32> to vector<2x2x1x32xf32>
    %499 = vector.shape_cast %498 : vector<2x2x1x32xf32> to vector<2x2x32xf32>
    %500 = arith.truncf %499 : vector<2x2x32xf32> to vector<2x2x32xbf16>
    %c0_219 = arith.constant 0 : index
    %c5 = arith.constant 5 : index
    %c0_220 = arith.constant 0 : index
    %c0_221 = arith.constant 0 : index
    %501 = vector.load %arg28[%c0_219, %c5, %c0_220, %c0_221] : memref<2x8x32x512xbf16, #tpu.memory_space<vmem>>, vector<2x1x32x512xbf16>
    %502 = vector.shape_cast %501 : vector<2x1x32x512xbf16> to vector<2x32x512xbf16>
    "tpu.trace_start"() <{level = 10 : i32, message = "gbd,gdo->gbo"}> : () -> ()
    %cst_222 = arith.constant dense<0.000000e+00> : vector<2x2x512xf32>
    %503 = tpu.matmul %500, %502, %cst_222 {dimension_numbers = #tpu.dot_dimension_numbers<[2], [1], [1], [2], [0, 0, 0, 1, 1, 2], [0], [0]>} : vector<2x2x32xbf16>, vector<2x32x512xbf16>, vector<2x2x512xf32> -> vector<2x2x512xf32>
    "tpu.trace_stop"() : () -> ()
    %504 = arith.addf %497, %503 : vector<2x2x512xf32>
    %505 = vector.extract_strided_slice %461 {offsets = [0, 0, 6, 0], sizes = [2, 2, 1, 32], strides = [1, 1, 1, 1]} : vector<2x2x8x32xf32> to vector<2x2x1x32xf32>
    %506 = vector.shape_cast %505 : vector<2x2x1x32xf32> to vector<2x2x32xf32>
    %507 = arith.truncf %506 : vector<2x2x32xf32> to vector<2x2x32xbf16>
    %c0_223 = arith.constant 0 : index
    %c6 = arith.constant 6 : index
    %c0_224 = arith.constant 0 : index
    %c0_225 = arith.constant 0 : index
    %508 = vector.load %arg28[%c0_223, %c6, %c0_224, %c0_225] : memref<2x8x32x512xbf16, #tpu.memory_space<vmem>>, vector<2x1x32x512xbf16>
    %509 = vector.shape_cast %508 : vector<2x1x32x512xbf16> to vector<2x32x512xbf16>
    "tpu.trace_start"() <{level = 10 : i32, message = "gbd,gdo->gbo"}> : () -> ()
    %cst_226 = arith.constant dense<0.000000e+00> : vector<2x2x512xf32>
    %510 = tpu.matmul %507, %509, %cst_226 {dimension_numbers = #tpu.dot_dimension_numbers<[2], [1], [1], [2], [0, 0, 0, 1, 1, 2], [0], [0]>} : vector<2x2x32xbf16>, vector<2x32x512xbf16>, vector<2x2x512xf32> -> vector<2x2x512xf32>
    "tpu.trace_stop"() : () -> ()
    %511 = arith.addf %504, %510 : vector<2x2x512xf32>
    %512 = vector.extract_strided_slice %461 {offsets = [0, 0, 7, 0], sizes = [2, 2, 1, 32], strides = [1, 1, 1, 1]} : vector<2x2x8x32xf32> to vector<2x2x1x32xf32>
    %513 = vector.shape_cast %512 : vector<2x2x1x32xf32> to vector<2x2x32xf32>
    %514 = arith.truncf %513 : vector<2x2x32xf32> to vector<2x2x32xbf16>
    %c0_227 = arith.constant 0 : index
    %c7 = arith.constant 7 : index
    %c0_228 = arith.constant 0 : index
    %c0_229 = arith.constant 0 : index
    %515 = vector.load %arg28[%c0_227, %c7, %c0_228, %c0_229] : memref<2x8x32x512xbf16, #tpu.memory_space<vmem>>, vector<2x1x32x512xbf16>
    %516 = vector.shape_cast %515 : vector<2x1x32x512xbf16> to vector<2x32x512xbf16>
    "tpu.trace_start"() <{level = 10 : i32, message = "gbd,gdo->gbo"}> : () -> ()
    %cst_230 = arith.constant dense<0.000000e+00> : vector<2x2x512xf32>
    %517 = tpu.matmul %514, %516, %cst_230 {dimension_numbers = #tpu.dot_dimension_numbers<[2], [1], [1], [2], [0, 0, 0, 1, 1, 2], [0], [0]>} : vector<2x2x32xbf16>, vector<2x32x512xbf16>, vector<2x2x512xf32> -> vector<2x2x512xf32>
    "tpu.trace_stop"() : () -> ()
    %518 = arith.addf %511, %517 : vector<2x2x512xf32>
    %c0_231 = arith.constant 0 : index
    %c0_232 = arith.constant 0 : index
    %c0_233 = arith.constant 0 : index
    %519 = vector.load %arg29[%c0_231, %c0_232, %c0_233] : memref<2x1x512xf32, #tpu.memory_space<vmem>>, vector<2x1x512xf32>
    %520 = vector.broadcast %519 : vector<2x1x512xf32> to vector<2x2x512xf32>
    %521 = arith.addf %518, %520 : vector<2x2x512xf32>
    %cst_234 = arith.constant 0.000000e+00 : f32
    %522 = vector.broadcast %cst_234 : f32 to vector<2x2x512xf32>
    %523 = arith.maximumf %521, %522 : vector<2x2x512xf32>
    %524 = arith.truncf %523 : vector<2x2x512xf32> to vector<2x2x512xbf16>
    %c0_235 = arith.constant 0 : index
    %c0_236 = arith.constant 0 : index
    %c0_237 = arith.constant 0 : index
    %525 = vector.load %arg30[%c0_235, %c0_236, %c0_237] : memref<2x512x256xbf16, #tpu.memory_space<vmem>>, vector<2x512x256xbf16>
    "tpu.trace_start"() <{level = 10 : i32, message = "gbi,gio->gbo"}> : () -> ()
    %cst_238 = arith.constant dense<0.000000e+00> : vector<2x2x256xf32>
    %526 = tpu.matmul %524, %525, %cst_238 {dimension_numbers = #tpu.dot_dimension_numbers<[2], [1], [1], [2], [0, 0, 0, 1, 1, 2], [0], [0]>} : vector<2x2x512xbf16>, vector<2x512x256xbf16>, vector<2x2x256xf32> -> vector<2x2x256xf32>
    "tpu.trace_stop"() : () -> ()
    %c0_239 = arith.constant 0 : index
    %c0_240 = arith.constant 0 : index
    %c0_241 = arith.constant 0 : index
    %527 = vector.load %arg31[%c0_239, %c0_240, %c0_241] : memref<2x1x256xf32, #tpu.memory_space<vmem>>, vector<2x1x256xf32>
    %528 = vector.broadcast %527 : vector<2x1x256xf32> to vector<2x2x256xf32>
    %529 = arith.addf %526, %528 : vector<2x2x256xf32>
    %cst_242 = arith.constant 0.000000e+00 : f32
    %530 = vector.broadcast %cst_242 : f32 to vector<2x2x256xf32>
    %531 = arith.maximumf %529, %530 : vector<2x2x256xf32>
    %532 = arith.truncf %531 : vector<2x2x256xf32> to vector<2x2x256xbf16>
    %c0_243 = arith.constant 0 : index
    %c0_244 = arith.constant 0 : index
    %c0_245 = arith.constant 0 : index
    %533 = vector.load %arg32[%c0_243, %c0_244, %c0_245] : memref<2x256x8xbf16, #tpu.memory_space<vmem>>, vector<2x256x8xbf16>
    "tpu.trace_start"() <{level = 10 : i32, message = "gbi,gio->gbo"}> : () -> ()
    %cst_246 = arith.constant dense<0.000000e+00> : vector<2x2x8xf32>
    %534 = tpu.matmul %532, %533, %cst_246 {dimension_numbers = #tpu.dot_dimension_numbers<[2], [1], [1], [2], [0, 0, 0, 1, 1, 2], [0], [0]>} : vector<2x2x256xbf16>, vector<2x256x8xbf16>, vector<2x2x8xf32> -> vector<2x2x8xf32>
    "tpu.trace_stop"() : () -> ()
    %c0_247 = arith.constant 0 : index
    %c0_248 = arith.constant 0 : index
    %c0_249 = arith.constant 0 : index
    %535 = vector.load %arg33[%c0_247, %c0_248, %c0_249] : memref<2x1x8xf32, #tpu.memory_space<vmem>>, vector<2x1x8xf32>
    %536 = vector.broadcast %535 : vector<2x1x8xf32> to vector<2x2x8xf32>
    %537 = arith.addf %534, %536 : vector<2x2x8xf32>
    %538 = vector.extract_strided_slice %537 {offsets = [0, 0, 0], sizes = [1, 2, 8], strides = [1, 1, 1]} : vector<2x2x8xf32> to vector<1x2x8xf32>
    %539 = vector.shape_cast %538 : vector<1x2x8xf32> to vector<2x8xf32>
    %540 = vector.extract_strided_slice %537 {offsets = [1, 0, 0], sizes = [1, 2, 8], strides = [1, 1, 1]} : vector<2x2x8xf32> to vector<1x2x8xf32>
    %541 = vector.shape_cast %540 : vector<1x2x8xf32> to vector<2x8xf32>
    %542 = arith.addf %539, %541 : vector<2x8xf32>
    %c0_250 = arith.constant 0 : index
    %c0_251 = arith.constant 0 : index
    %543 = vector.load %arg34[%c0_250, %c0_251] : memref<2x8xf32, #tpu.memory_space<vmem>>, vector<2x8xf32>
    tpu.vector_store %arg34[%c0_250, %c0_251], %542 {strides = array<i32>} : memref<2x8xf32, #tpu.memory_space<vmem>>, vector<2x8xf32>,
    %c0_252 = arith.constant 0 : index
    %c0_253 = arith.constant 0 : index
    %544 = vector.load %arg35[%c0_252, %c0_253] : memref<2x32xf32, #tpu.memory_space<vmem>>, vector<2x32xf32>
    tpu.vector_store %arg35[%c0_252, %c0_253], %42 {strides = array<i32>} : memref<2x32xf32, #tpu.memory_space<vmem>>, vector<2x32xf32>,
    %c0_254 = arith.constant 0 : index
    %c0_255 = arith.constant 0 : index
    %545 = vector.load %arg36[%c0_254, %c0_255] : memref<2x16xf32, #tpu.memory_space<vmem>>, vector<2x16xf32>
    tpu.vector_store %arg36[%c0_254, %c0_255], %15 {strides = array<i32>} : memref<2x16xf32, #tpu.memory_space<vmem>>, vector<2x16xf32>,
    %c0_256 = arith.constant 0 : index
    %c0_257 = arith.constant 0 : index
    %546 = vector.load %arg37[%c0_256, %c0_257] : memref<2x16xf32, #tpu.memory_space<vmem>>, vector<2x16xf32>
    tpu.vector_store %arg37[%c0_256, %c0_257], %22 {strides = array<i32>} : memref<2x16xf32, #tpu.memory_space<vmem>>, vector<2x16xf32>,
    return
  }
}

</mosaic_0001>

<llo_original>
// kernel: forward.1
$region0: #{forward.1}
  #allocation0 [shape = 'u32[]', space=smem, size = 0x4, offset = 0x4, fixed_abs, tag = 'smem constant byte address 0x4 - core index']
  #allocation1 [shape = 'u32[72,128]{1,0:T(1,128)}', space=vmem, size = 0x9000, scoped, tag = 'internal scratch']
  %s0 = inlined_call_operand.smem [shape: u32[38], index: -1, kind: input, shape index: {}]
  %s1 = sld [smem:[%s0]]
  %s2 = scalar_lea.smem %s0, 1
  %s3 = sld [smem:[%s2]]
  %s4 = scalar_lea.smem %s0, 2
  %s5 = sld [smem:[%s4]]
  %s6 = scalar_lea.smem %s0, 3
  %s7 = sld [smem:[%s6]]
  %s8 = scalar_lea.smem %s0, 4
  %s9 = sld [smem:[%s8]]
  %s10 = scalar_lea.smem %s0, 5
  %s11 = sld [smem:[%s10]]
  %s12 = scalar_lea.smem %s0, 6
  %s13 = sld [smem:[%s12]]
  %s14 = scalar_lea.smem %s0, 7
  %s15 = sld [smem:[%s14]]
  %s16 = scalar_lea.smem %s0, 8
  %s17 = sld [smem:[%s16]]
  %s18 = scalar_lea.smem %s0, 9
  %s19 = sld [smem:[%s18]]
  %s20 = scalar_lea.smem %s0, 10
  %s21 = sld [smem:[%s20]]
  %s22 = scalar_lea.smem %s0, 11
  %s23 = sld [smem:[%s22]]
  %s24 = scalar_lea.smem %s0, 12
  %s25 = sld [smem:[%s24]]
  %s26 = scalar_lea.smem %s0, 13
  %s27 = sld [smem:[%s26]]
  %s28 = scalar_lea.smem %s0, 14
  %s29 = sld [smem:[%s28]]
  %s30 = scalar_lea.smem %s0, 15
  %s31 = sld [smem:[%s30]]
  %s32 = scalar_lea.smem %s0, 16
  %s33 = sld [smem:[%s32]]
  %s34 = scalar_lea.smem %s0, 17
  %s35 = sld [smem:[%s34]]
  %s36 = scalar_lea.smem %s0, 18
  %s37 = sld [smem:[%s36]]
  %s38 = scalar_lea.smem %s0, 19
  %s39 = sld [smem:[%s38]]
  %s40 = scalar_lea.smem %s0, 20
  %s41 = sld [smem:[%s40]]
  %s42 = scalar_lea.smem %s0, 21
  %s43 = sld [smem:[%s42]]
  %s44 = scalar_lea.smem %s0, 22
  %s45 = sld [smem:[%s44]]
  %s46 = scalar_lea.smem %s0, 23
  %s47 = sld [smem:[%s46]]
  %s48 = scalar_lea.smem %s0, 24
  %s49 = sld [smem:[%s48]]
  %s50 = scalar_lea.smem %s0, 25
  %s51 = sld [smem:[%s50]]
  %s52 = scalar_lea.smem %s0, 26
  %s53 = sld [smem:[%s52]]
  %s54 = scalar_lea.smem %s0, 27
  %s55 = sld [smem:[%s54]]
  %s56 = scalar_lea.smem %s0, 28
  %s57 = sld [smem:[%s56]]
  %s58 = scalar_lea.smem %s0, 29
  %s59 = sld [smem:[%s58]]
  %s60 = scalar_lea.smem %s0, 30
  %s61 = sld [smem:[%s60]]
  %s62 = scalar_lea.smem %s0, 31
  %s63 = sld [smem:[%s62]]
  %s64 = scalar_lea.smem %s0, 32
  %s65 = sld [smem:[%s64]]
  %s66 = scalar_lea.smem %s0, 33
  %s67 = sld [smem:[%s66]]
  %s68 = scalar_lea.smem %s0, 34
  %s69 = sld [smem:[%s68]]
  %s70 = scalar_lea.smem %s0, 35
  %s71 = sld [smem:[%s70]]
  %s72 = scalar_lea.smem %s0, 36
  %s73 = sld [smem:[%s72]]
  %s74 = scalar_lea.smem %s0, 37
  %s75 = sld [smem:[%s74]]
  %76 = xla_tuple %s69, %s71, %s73, %s75
  %s77 = sld [smem:[#allocation0]]
  $region178: #{forward.1} parent=0
    _
  %s79 = ssub.s32 1, %s77
  %s80 = scalar_select 0, %s79, %s77
  $region1: #{forward.1} parent=0
    #allocation2 [shape = 'u8[524288]{0}', space=vmem, size = 0x80000, scoped, tag = 'input window, operand 28, single buffered']
    #allocation3 [shape = 's32[1]{0}', space=sflag, size = 0x4, scoped, tag = 'scoped memory for forward.1']
    #allocation4 [shape = 's32[1]{0}', space=sflag, size = 0x4, scoped, tag = 'scoped memory for forward.1']
    #allocation5 [shape = 'u8[524288]{0}', space=vmem, size = 0x80000, scoped, tag = 'input window, operand 30, single buffered']
    #allocation6 [shape = 's32[1]{0}', space=sflag, size = 0x4, scoped, tag = 'scoped memory for forward.1']
    #allocation7 [shape = 'u8[1024]{0}', space=vmem, size = 0x400, scoped, tag = 'output window, operand 0, single buffered']
    #allocation8 [shape = 'u8[1024]{0}', space=vmem, size = 0x400, scoped, tag = 'output window, operand 2, single buffered']
    #allocation9 [shape = 's32[1]{0}', space=sflag, size = 0x4, scoped, tag = 'scoped memory for forward.1']
    #allocation10 [shape = 'u8[1024]{0}', space=vmem, size = 0x400, scoped, tag = 'output window, operand 3, single buffered']
    %81 = vsyncpa [#allocation3], 0
    %82 = vsyncpa [#allocation6], 0
    %83 = vsyncpa [#allocation4], 0
    %84 = vsyncpa [#allocation9], 0
    // Predicated region
    $region2: #{forward.1} parent=1 // pred_check
      _
    $region3: #{forward.1} parent=1 // pred_check_branch
      %86 = sbr.rel (0) target = $region5
    $region4: #{forward.1} parent=1 // pred_region
      _
    $region5: #{forward.1} parent=1 // pred_fallthru
      _
    // Predicated region
    $region6: #{forward.1} parent=1 // pred_check
      _
    $region7: #{forward.1} parent=1 // pred_check_branch
      %88 = sbr.rel (0) target = $region9
    $region8: #{forward.1} parent=1 // pred_region
      _
    $region9: #{forward.1} parent=1 // pred_fallthru
      _
    // Predicated region
    $region10: #{forward.1} parent=1 // pred_check
      _
    $region11: #{forward.1} parent=1 // pred_check_branch
      %90 = sbr.rel (0) target = $region13
    $region12: #{forward.1} parent=1 // pred_region
      _
    $region13: #{forward.1} parent=1 // pred_fallthru
      _
    // Predicated region
    $region14: #{forward.1} parent=1 // pred_check
      _
    $region15: #{forward.1} parent=1 // pred_check_branch
      %92 = sbr.rel (0) target = $region17
    $region16: #{forward.1} parent=1 // pred_region
      _
    $region17: #{forward.1} parent=1 // pred_fallthru
      _
    // Predicated region
    $region18: #{forward.1} parent=1 // pred_check
      _
    $region19: #{forward.1} parent=1 // pred_check_branch
      %94 = sbr.rel (0) target = $region21
    $region20: #{forward.1} parent=1 // pred_region
      _
    $region21: #{forward.1} parent=1 // pred_fallthru
      _
    // Predicated region
    $region22: #{forward.1} parent=1 // pred_check
      _
    $region23: #{forward.1} parent=1 // pred_check_branch
      %96 = sbr.rel (0) target = $region25
    $region24: #{forward.1} parent=1 // pred_region
      _
    $region25: #{forward.1} parent=1 // pred_fallthru
      _
    // Predicated region
    $region26: #{forward.1} parent=1 // pred_check
      _
    $region27: #{forward.1} parent=1 // pred_check_branch
      %98 = sbr.rel (0) target = $region29
    $region28: #{forward.1} parent=1 // pred_region
      _
    $region29: #{forward.1} parent=1 // pred_fallthru
      _
    // Predicated region
    $region30: #{forward.1} parent=1 // pred_check
      _
    $region31: #{forward.1} parent=1 // pred_check_branch
      %100 = sbr.rel (0) target = $region33
    $region32: #{forward.1} parent=1 // pred_region
      _
    $region33: #{forward.1} parent=1 // pred_fallthru
      _
    // Predicated region
    $region34: #{forward.1} parent=1 // pred_check
      _
    $region35: #{forward.1} parent=1 // pred_check_branch
      %102 = sbr.rel (0) target = $region37
    $region36: #{forward.1} parent=1 // pred_region
      _
    $region37: #{forward.1} parent=1 // pred_fallthru
      _
    // Predicated region
    $region38: #{forward.1} parent=1 // pred_check
      _
    $region39: #{forward.1} parent=1 // pred_check_branch
      %104 = sbr.rel (0) target = $region41
    $region40: #{forward.1} parent=1 // pred_region
      _
    $region41: #{forward.1} parent=1 // pred_fallthru
      _
    // Predicated region
    $region42: #{forward.1} parent=1 // pred_check
      _
    $region43: #{forward.1} parent=1 // pred_check_branch
      %106 = sbr.rel (0) target = $region45
    $region44: #{forward.1} parent=1 // pred_region
      _
    $region45: #{forward.1} parent=1 // pred_fallthru
      _
    // Predicated region
    $region46: #{forward.1} parent=1 // pred_check
      _
    $region47: #{forward.1} parent=1 // pred_check_branch
      %108 = sbr.rel (0) target = $region49
    $region48: #{forward.1} parent=1 // pred_region
      _
    $region49: #{forward.1} parent=1 // pred_fallthru
      _
    // Predicated region
    $region50: #{forward.1} parent=1 // pred_check
      _
    $region51: #{forward.1} parent=1 // pred_check_branch
      %110 = sbr.rel (0) target = $region53
    $region52: #{forward.1} parent=1 // pred_region
      _
    $region53: #{forward.1} parent=1 // pred_fallthru
      _
    // Predicated region
    $region54: #{forward.1} parent=1 // pred_check
      _
    $region55: #{forward.1} parent=1 // pred_check_branch
      %112 = sbr.rel (0) target = $region57
    $region56: #{forward.1} parent=1 // pred_region
      _
    $region57: #{forward.1} parent=1 // pred_fallthru
      _
    // Predicated region
    $region58: #{forward.1} parent=1 // pred_check
      _
    $region59: #{forward.1} parent=1 // pred_check_branch
      %114 = sbr.rel (0) target = $region61
    $region60: #{forward.1} parent=1 // pred_region
      _
    $region61: #{forward.1} parent=1 // pred_fallthru
      _
    // Predicated region
    $region62: #{forward.1} parent=1 // pred_check
      _
    $region63: #{forward.1} parent=1 // pred_check_branch
      %116 = sbr.rel (0) target = $region65
    $region64: #{forward.1} parent=1 // pred_region
      _
    $region65: #{forward.1} parent=1 // pred_fallthru
      _
    // Predicated region
    $region66: #{forward.1} parent=1 // pred_check
      _
    $region67: #{forward.1} parent=1 // pred_check_branch
      %118 = sbr.rel (0) target = $region69
    $region68: #{forward.1} parent=1 // pred_region
      _
    $region69: #{forward.1} parent=1 // pred_fallthru
      _
    // Predicated region
    $region70: #{forward.1} parent=1 // pred_check
      _
    $region71: #{forward.1} parent=1 // pred_check_branch
      %120 = sbr.rel (0) target = $region73
    $region72: #{forward.1} parent=1 // pred_region
      _
    $region73: #{forward.1} parent=1 // pred_fallthru
      _
    // Predicated region
    $region74: #{forward.1} parent=1 // pred_check
      _
    $region75: #{forward.1} parent=1 // pred_check_branch
      %122 = sbr.rel (0) target = $region77
    $region76: #{forward.1} parent=1 // pred_region
      _
    $region77: #{forward.1} parent=1 // pred_fallthru
      _
    // Predicated region
    $region78: #{forward.1} parent=1 // pred_check
      _
    $region79: #{forward.1} parent=1 // pred_check_branch
      %124 = sbr.rel (0) target = $region81
    $region80: #{forward.1} parent=1 // pred_region
      _
    $region81: #{forward.1} parent=1 // pred_fallthru
      _
    // Predicated region
    $region82: #{forward.1} parent=1 // pred_check
      _
    $region83: #{forward.1} parent=1 // pred_check_branch
      %126 = sbr.rel (0) target = $region85
    $region84: #{forward.1} parent=1 // pred_region
      _
    $region85: #{forward.1} parent=1 // pred_fallthru
      _
    // Predicated region
    $region86: #{forward.1} parent=1 // pred_check
      _
    $region87: #{forward.1} parent=1 // pred_check_branch
      %128 = sbr.rel (0) target = $region89
    $region88: #{forward.1} parent=1 // pred_region
      _
    $region89: #{forward.1} parent=1 // pred_fallthru
      _
    // Predicated region
    $region90: #{forward.1} parent=1 // pred_check
      _
    $region91: #{forward.1} parent=1 // pred_check_branch
      %130 = sbr.rel (0) target = $region93
    $region92: #{forward.1} parent=1 // pred_region
      _
    $region93: #{forward.1} parent=1 // pred_fallthru
      _
    // Predicated region
    $region94: #{forward.1} parent=1 // pred_check
      _
    $region95: #{forward.1} parent=1 // pred_check_branch
      %132 = sbr.rel (0) target = $region97
    $region96: #{forward.1} parent=1 // pred_region
      _
    $region97: #{forward.1} parent=1 // pred_fallthru
      _
    // Predicated region
    $region98: #{forward.1} parent=1 // pred_check
      _
    $region99: #{forward.1} parent=1 // pred_check_branch
      %134 = sbr.rel (0) target = $region101
    $region100: #{forward.1} parent=1 // pred_region
      _
    $region101: #{forward.1} parent=1 // pred_fallthru
      _
    // Predicated region
    $region102: #{forward.1} parent=1 // pred_check
      _
    $region103: #{forward.1} parent=1 // pred_check_branch
      %136 = sbr.rel (0) target = $region105
    $region104: #{forward.1} parent=1 // pred_region
      _
    $region105: #{forward.1} parent=1 // pred_fallthru
      _
    // Predicated region
    $region106: #{forward.1} parent=1 // pred_check
      _
    $region107: #{forward.1} parent=1 // pred_check_branch
      %138 = sbr.rel (0) target = $region109
    $region108: #{forward.1} parent=1 // pred_region
      _
    $region109: #{forward.1} parent=1 // pred_fallthru
      _
    // Predicated region
    $region110: #{forward.1} parent=1 // pred_check
      _
    $region111: #{forward.1} parent=1 // pred_check_branch
      %140 = sbr.rel (0) target = $region113
    $region112: #{forward.1} parent=1 // pred_region
      _
    $region113: #{forward.1} parent=1 // pred_fallthru
      _
    // Predicated region
    $region114: #{forward.1} parent=1 // pred_check
      _
    $region115: #{forward.1} parent=1 // pred_check_branch
      %142 = sbr.rel (0) target = $region117
    $region116: #{forward.1} parent=1 // pred_region
      %144 = vsyncadd [#allocation3], 0
      %s145 = sshll.u32 %s57, 4
      %s146 = int_to_ptr.hbm [resolvable:$true] %s145
      %s147 = sshll.u32 [#allocation2], 4
      %s148 = int_to_ptr.vmem [resolvable:$true] %s147
      %153 = dma.hbm_to_vmem [thread:$0]  %s146, 16384, %s148, [#allocation3], 256, 256, 16
    $region117: #{forward.1} parent=1 // pred_fallthru
      _
    // Predicated region
    $region118: #{forward.1} parent=1 // pred_check
      _
    $region119: #{forward.1} parent=1 // pred_check_branch
      %155 = sbr.rel (0) target = $region121
    $region120: #{forward.1} parent=1 // pred_region
      _
    $region121: #{forward.1} parent=1 // pred_fallthru
      _
    // Predicated region
    $region122: #{forward.1} parent=1 // pred_check
      _
    $region123: #{forward.1} parent=1 // pred_check_branch
      %157 = sbr.rel (0) target = $region125
    $region124: #{forward.1} parent=1 // pred_region
      %159 = vsyncadd [#allocation6], 0
      %s160 = sshll.u32 %s61, 4
      %s161 = int_to_ptr.hbm [resolvable:$true] %s160
      %s162 = sshll.u32 [#allocation5], 4
      %s163 = int_to_ptr.vmem [resolvable:$true] %s162
      %168 = dma.hbm_to_vmem [thread:$0]  %s161, 16384, %s163, [#allocation6], 128, 128, 8
    $region125: #{forward.1} parent=1 // pred_fallthru
      _
    // Predicated region
    $region126: #{forward.1} parent=1 // pred_check
      _
    $region127: #{forward.1} parent=1 // pred_check_branch
      %170 = sbr.rel (0) target = $region129
    $region128: #{forward.1} parent=1 // pred_region
      _
    $region129: #{forward.1} parent=1 // pred_fallthru
      _
    // Predicated region
    $region130: #{forward.1} parent=1 // pred_check
      _
    $region131: #{forward.1} parent=1 // pred_check_branch
      %172 = sbr.rel (0) target = $region133
    $region132: #{forward.1} parent=1 // pred_region
      _
    $region133: #{forward.1} parent=1 // pred_fallthru
      _
    // Predicated region
    $region134: #{forward.1} parent=1 // pred_check
      _
    $region135: #{forward.1} parent=1 // pred_check_branch
      %174 = sbr.rel (0) target = $region137
    $region136: #{forward.1} parent=1 // pred_region
      _
    $region137: #{forward.1} parent=1 // pred_fallthru
      _
    // Predicated region
    $region138: #{forward.1} parent=1 // pred_check
      _
    $region139: #{forward.1} parent=1 // pred_check_branch
      %176 = sbr.rel (0) target = $region141
    $region140: #{forward.1} parent=1 // pred_region
      %178 = dma.done [#allocation3], 16384
    $region141: #{forward.1} parent=1 // pred_fallthru
      _
    // Predicated region
    $region142: #{forward.1} parent=1 // pred_check
      _
    $region143: #{forward.1} parent=1 // pred_check_branch
      %180 = sbr.rel (0) target = $region145
    $region144: #{forward.1} parent=1 // pred_region
      %182 = dma.done [#allocation6], 16384
    $region145: #{forward.1} parent=1 // pred_fallthru
      _
    %v184 = vld [vmem:[%s3] sm:$0x3]
    %v185 = vld [vmem:[%s7] sm:$0xff]
    %v186 = vld [vmem:[%s7 + $0x8] sm:$0xff]
    %v187 = vld [vmem:[%s7 + $0x10] sm:$0xff]
    %v188 = vld [vmem:[%s7 + $0x18] sm:$0xff]
    %v189 = vld [vmem:[%s7 + $0x20] sm:$0xff]
    %v190 = vld [vmem:[%s7 + $0x28] sm:$0xff]
    %v191 = vld [vmem:[%s7 + $0x30] sm:$0xff]
    %v192 = vld [vmem:[%s7 + $0x38] sm:$0xff]
    %v193 = vld [vmem:[%s7 + $0x40] sm:$0xff]
    %v194 = vld [vmem:[%s7 + $0x48] sm:$0xff]
    %v195 = vld [vmem:[%s7 + $0x50] sm:$0xff]
    %v196 = vld [vmem:[%s7 + $0x58] sm:$0xff]
    %v197 = vld [vmem:[%s7 + $0x60] sm:$0xff]
    %v198 = vld [vmem:[%s7 + $0x68] sm:$0xff]
    %v199 = vld [vmem:[%s7 + $0x70] sm:$0xff]
    %v200 = vld [vmem:[%s7 + $0x78] sm:$0xff]
    %v201 = vld [vmem:[%s9] sm:$0xff]
    %v202 = vpack.c.bf16 %v184, %v184
    %v204 = vperm.slane %v201, 0
    %v205 = vperm.slane %v201, 1
    %v206 = vperm.slane %v201, 2
    %v207 = vperm.slane %v201, 3
    %v208 = vperm.slane %v201, 4
    %v209 = vperm.slane %v201, 5
    %v210 = vperm.slane %v201, 6
    %v211 = vperm.slane %v201, 7
    %v236 = vunpack.c.l.b16 %v185
    %v237 = vunpack.c.h.b16 %v185
    %v238 = vunpack.c.l.b16 %v186
    %v239 = vunpack.c.h.b16 %v186
    %v240 = vunpack.c.l.b16 %v187
    %v241 = vunpack.c.h.b16 %v187
    %v242 = vunpack.c.l.b16 %v188
    %v243 = vunpack.c.h.b16 %v188
    %v244 = vunpack.c.l.b16 %v189
    %v245 = vunpack.c.h.b16 %v189
    %v246 = vunpack.c.l.b16 %v190
    %v247 = vunpack.c.h.b16 %v190
    %v248 = vunpack.c.l.b16 %v191
    %v249 = vunpack.c.h.b16 %v191
    %v250 = vunpack.c.l.b16 %v192
    %v251 = vunpack.c.h.b16 %v192
    %v252 = vunpack.c.l.b16 %v193
    %v253 = vunpack.c.h.b16 %v193
    %v254 = vunpack.c.l.b16 %v194
    %v255 = vunpack.c.h.b16 %v194
    %v256 = vunpack.c.l.b16 %v195
    %v257 = vunpack.c.h.b16 %v195
    %v258 = vunpack.c.l.b16 %v196
    %v259 = vunpack.c.h.b16 %v196
    %v260 = vunpack.c.l.b16 %v197
    %v261 = vunpack.c.h.b16 %v197
    %v262 = vunpack.c.l.b16 %v198
    %v263 = vunpack.c.h.b16 %v198
    %v264 = vunpack.c.l.b16 %v199
    %v265 = vunpack.c.h.b16 %v199
    %v266 = vunpack.c.l.b16 %v200
    %v267 = vunpack.c.h.b16 %v200
    %v268 = vpack.c.b16 %v244, %v236
    %v269 = vpack.c.b16 %v245, %v237
    %v270 = vpack.c.b16 %v246, %v238
    %v271 = vpack.c.b16 %v247, %v239
    %v272 = vpack.c.b16 %v248, %v240
    %v273 = vpack.c.b16 %v249, %v241
    %v274 = vpack.c.b16 %v250, %v242
    %v275 = vpack.c.b16 %v251, %v243
    %v276 = vpack.c.b16 %v260, %v252
    %v277 = vpack.c.b16 %v261, %v253
    %v278 = vpack.c.b16 %v262, %v254
    %v279 = vpack.c.b16 %v263, %v255
    %v280 = vpack.c.b16 %v264, %v256
    %v281 = vpack.c.b16 %v265, %v257
    %v282 = vpack.c.b16 %v266, %v258
    %v283 = vpack.c.b16 %v267, %v259
    %vm300 = vcmask 261120
    %v302 = vsel %vm300, %v202, 0
    %304 = vmatpush.bf16.msra.mxu0 0
    %305 = vmatpush.bf16.msra.mxu0 0
    %306 = vmatpush.bf16.msra.mxu0 0
    %307 = vmatpush.bf16.msra.mxu0 0
    %308 = vmatpush.bf16.msra.mxu0 0
    %309 = vmatpush.bf16.msra.mxu0 0
    %310 = vmatpush.bf16.msra.mxu0 %v276
    %311 = vmatpush.bf16.msra.mxu0 %v268
    %312 = vmatmul.bf16.gmra.mxu0 %v302
    %v313 = vpop.f32.mrf.mxu0
    %v314 = vadd.f32 %v204, %v313
    %v315 = vpop.f32.mrf.mxu0
    %316 = vdwg.mxu0
    %317 = vmatpush.bf16.msra.mxu0 0
    %318 = vmatpush.bf16.msra.mxu0 0
    %319 = vmatpush.bf16.msra.mxu0 0
    %320 = vmatpush.bf16.msra.mxu0 0
    %321 = vmatpush.bf16.msra.mxu0 0
    %322 = vmatpush.bf16.msra.mxu0 0
    %323 = vmatpush.bf16.msra.mxu0 %v277
    %324 = vmatpush.bf16.msra.mxu0 %v269
    %325 = vmatmul.bf16.gmra.mxu0 %v302
    %v326 = vpop.f32.mrf.mxu0
    %v327 = vadd.f32 %v205, %v326
    %v328 = vpop.f32.mrf.mxu0
    %329 = vdwg.mxu0
    %330 = vmatpush.bf16.msra.mxu0 0
    %331 = vmatpush.bf16.msra.mxu0 0
    %332 = vmatpush.bf16.msra.mxu0 0
    %333 = vmatpush.bf16.msra.mxu0 0
    %334 = vmatpush.bf16.msra.mxu0 0
    %335 = vmatpush.bf16.msra.mxu0 0
    %336 = vmatpush.bf16.msra.mxu0 %v278
    %337 = vmatpush.bf16.msra.mxu0 %v270
    %338 = vmatmul.bf16.gmra.mxu0 %v302
    %v339 = vpop.f32.mrf.mxu0
    %v340 = vadd.f32 %v206, %v339
    %v341 = vpop.f32.mrf.mxu0
    %342 = vdwg.mxu0
    %343 = vmatpush.bf16.msra.mxu0 0
    %344 = vmatpush.bf16.msra.mxu0 0
    %345 = vmatpush.bf16.msra.mxu0 0
    %346 = vmatpush.bf16.msra.mxu0 0
    %347 = vmatpush.bf16.msra.mxu0 0
    %348 = vmatpush.bf16.msra.mxu0 0
    %349 = vmatpush.bf16.msra.mxu0 %v279
    %350 = vmatpush.bf16.msra.mxu0 %v271
    %351 = vmatmul.bf16.gmra.mxu0 %v302
    %v352 = vpop.f32.mrf.mxu0
    %v353 = vadd.f32 %v207, %v352
    %v354 = vpop.f32.mrf.mxu0
    %355 = vdwg.mxu0
    %356 = vmatpush.bf16.msra.mxu0 0
    %357 = vmatpush.bf16.msra.mxu0 0
    %358 = vmatpush.bf16.msra.mxu0 0
    %359 = vmatpush.bf16.msra.mxu0 0
    %360 = vmatpush.bf16.msra.mxu0 0
    %361 = vmatpush.bf16.msra.mxu0 0
    %362 = vmatpush.bf16.msra.mxu0 %v280
    %363 = vmatpush.bf16.msra.mxu0 %v272
    %364 = vmatmul.bf16.gmra.mxu0 %v302
    %v365 = vpop.f32.mrf.mxu0
    %v366 = vadd.f32 %v208, %v365
    %v367 = vpop.f32.mrf.mxu0
    %368 = vdwg.mxu0
    %369 = vmatpush.bf16.msra.mxu0 0
    %370 = vmatpush.bf16.msra.mxu0 0
    %371 = vmatpush.bf16.msra.mxu0 0
    %372 = vmatpush.bf16.msra.mxu0 0
    %373 = vmatpush.bf16.msra.mxu0 0
    %374 = vmatpush.bf16.msra.mxu0 0
    %375 = vmatpush.bf16.msra.mxu0 %v281
    %376 = vmatpush.bf16.msra.mxu0 %v273
    %377 = vmatmul.bf16.gmra.mxu0 %v302
    %v378 = vpop.f32.mrf.mxu0
    %v379 = vadd.f32 %v209, %v378
    %v380 = vpop.f32.mrf.mxu0
    %381 = vdwg.mxu0
    %382 = vmatpush.bf16.msra.mxu0 0
    %383 = vmatpush.bf16.msra.mxu0 0
    %384 = vmatpush.bf16.msra.mxu0 0
    %385 = vmatpush.bf16.msra.mxu0 0
    %386 = vmatpush.bf16.msra.mxu0 0
    %387 = vmatpush.bf16.msra.mxu0 0
    %388 = vmatpush.bf16.msra.mxu0 %v282
    %389 = vmatpush.bf16.msra.mxu0 %v274
    %390 = vmatmul.bf16.gmra.mxu0 %v302
    %v391 = vpop.f32.mrf.mxu0
    %v392 = vadd.f32 %v210, %v391
    %v393 = vpop.f32.mrf.mxu0
    %394 = vdwg.mxu0
    %395 = vmatpush.bf16.msra.mxu0 0
    %396 = vmatpush.bf16.msra.mxu0 0
    %397 = vmatpush.bf16.msra.mxu0 0
    %398 = vmatpush.bf16.msra.mxu0 0
    %399 = vmatpush.bf16.msra.mxu0 0
    %400 = vmatpush.bf16.msra.mxu0 0
    %401 = vmatpush.bf16.msra.mxu0 %v283
    %402 = vmatpush.bf16.msra.mxu0 %v275
    %403 = vmatmul.bf16.gmra.mxu0 %v302
    %v404 = vpop.f32.mrf.mxu0
    %v405 = vadd.f32 %v211, %v404
    %v406 = vpop.f32.mrf.mxu0
    %407 = vdwg.mxu0
    %v408 = vmax.f32 %v314, 0.0
    %v409 = vmax.f32 %v327, 0.0
    %v410 = vmax.f32 %v340, 0.0
    %v411 = vmax.f32 %v353, 0.0
    %v412 = vmax.f32 %v366, 0.0
    %v413 = vmax.f32 %v379, 0.0
    %v414 = vmax.f32 %v392, 0.0
    %v415 = vmax.f32 %v405, 0.0
    %v416 = vld [vmem:[%s11] sm:$0xf]
    %v417 = vld [vmem:[%s11 + $0x4] sm:$0xf]
    %v418 = vld [vmem:[%s11 + $0x8] sm:$0xf]
    %v419 = vld [vmem:[%s11 + $0xc] sm:$0xf]
    %v420 = vld [vmem:[%s11 + $0x10] sm:$0xf]
    %v421 = vld [vmem:[%s11 + $0x14] sm:$0xf]
    %v422 = vld [vmem:[%s11 + $0x18] sm:$0xf]
    %v423 = vld [vmem:[%s11 + $0x1c] sm:$0xf]
    %v424 = vld [vmem:[%s11 + $0x20] sm:$0xf]
    %v425 = vld [vmem:[%s11 + $0x24] sm:$0xf]
    %v426 = vld [vmem:[%s11 + $0x28] sm:$0xf]
    %v427 = vld [vmem:[%s11 + $0x2c] sm:$0xf]
    %v428 = vld [vmem:[%s11 + $0x30] sm:$0xf]
    %v429 = vld [vmem:[%s11 + $0x34] sm:$0xf]
    %v430 = vld [vmem:[%s11 + $0x38] sm:$0xf]
    %v431 = vld [vmem:[%s11 + $0x3c] sm:$0xf]
    %v432 = vld [vmem:[%s11 + $0x40] sm:$0xf]
    %v433 = vld [vmem:[%s11 + $0x44] sm:$0xf]
    %v434 = vld [vmem:[%s11 + $0x48] sm:$0xf]
    %v435 = vld [vmem:[%s11 + $0x4c] sm:$0xf]
    %v436 = vld [vmem:[%s11 + $0x50] sm:$0xf]
    %v437 = vld [vmem:[%s11 + $0x54] sm:$0xf]
    %v438 = vld [vmem:[%s11 + $0x58] sm:$0xf]
    %v439 = vld [vmem:[%s11 + $0x5c] sm:$0xf]
    %v440 = vld [vmem:[%s11 + $0x60] sm:$0xf]
    %v441 = vld [vmem:[%s11 + $0x64] sm:$0xf]
    %v442 = vld [vmem:[%s11 + $0x68] sm:$0xf]
    %v443 = vld [vmem:[%s11 + $0x6c] sm:$0xf]
    %v444 = vld [vmem:[%s11 + $0x70] sm:$0xf]
    %v445 = vld [vmem:[%s11 + $0x74] sm:$0xf]
    %v446 = vld [vmem:[%s11 + $0x78] sm:$0xf]
    %v447 = vld [vmem:[%s11 + $0x7c] sm:$0xf]
    %v448 = vld [vmem:[%s11 + $0x80] sm:$0xf]
    %v449 = vld [vmem:[%s11 + $0x84] sm:$0xf]
    %v450 = vld [vmem:[%s11 + $0x88] sm:$0xf]
    %v451 = vld [vmem:[%s11 + $0x8c] sm:$0xf]
    %v452 = vld [vmem:[%s11 + $0x90] sm:$0xf]
    %v453 = vld [vmem:[%s11 + $0x94] sm:$0xf]
    %v454 = vld [vmem:[%s11 + $0x98] sm:$0xf]
    %v455 = vld [vmem:[%s11 + $0x9c] sm:$0xf]
    %v456 = vld [vmem:[%s11 + $0xa0] sm:$0xf]
    %v457 = vld [vmem:[%s11 + $0xa4] sm:$0xf]
    %v458 = vld [vmem:[%s11 + $0xa8] sm:$0xf]
    %v459 = vld [vmem:[%s11 + $0xac] sm:$0xf]
    %v460 = vld [vmem:[%s11 + $0xb0] sm:$0xf]
    %v461 = vld [vmem:[%s11 + $0xb4] sm:$0xf]
    %v462 = vld [vmem:[%s11 + $0xb8] sm:$0xf]
    %v463 = vld [vmem:[%s11 + $0xbc] sm:$0xf]
    %v464 = vld [vmem:[%s11 + $0xc0] sm:$0xf]
    %v465 = vld [vmem:[%s11 + $0xc4] sm:$0xf]
    %v466 = vld [vmem:[%s11 + $0xc8] sm:$0xf]
    %v467 = vld [vmem:[%s11 + $0xcc] sm:$0xf]
    %v468 = vld [vmem:[%s11 + $0xd0] sm:$0xf]
    %v469 = vld [vmem:[%s11 + $0xd4] sm:$0xf]
    %v470 = vld [vmem:[%s11 + $0xd8] sm:$0xf]
    %v471 = vld [vmem:[%s11 + $0xdc] sm:$0xf]
    %v472 = vld [vmem:[%s11 + $0xe0] sm:$0xf]
    %v473 = vld [vmem:[%s11 + $0xe4] sm:$0xf]
    %v474 = vld [vmem:[%s11 + $0xe8] sm:$0xf]
    %v475 = vld [vmem:[%s11 + $0xec] sm:$0xf]
    %v476 = vld [vmem:[%s11 + $0xf0] sm:$0xf]
    %v477 = vld [vmem:[%s11 + $0xf4] sm:$0xf]
    %v478 = vld [vmem:[%s11 + $0xf8] sm:$0xf]
    %v479 = vld [vmem:[%s11 + $0xfc] sm:$0xf]
    %v480 = vld [vmem:[%s13] sm:$0x1]
    %v481 = vpack.c.bf16 %v408, %v408
    %v482 = vpack.c.bf16 %v409, %v409
    %v483 = vpack.c.bf16 %v410, %v410
    %v484 = vpack.c.bf16 %v411, %v411
    %v486 = vperm.slane %v480, 0
    %v552 = vunpack.c.l.b16 %v416
    %v553 = vunpack.c.l.b16 %v417
    %v554 = vunpack.c.l.b16 %v418
    %v555 = vunpack.c.l.b16 %v419
    %v556 = vunpack.c.l.b16 %v420
    %v557 = vunpack.c.l.b16 %v421
    %v558 = vunpack.c.l.b16 %v422
    %v559 = vunpack.c.l.b16 %v423
    %v560 = vunpack.c.l.b16 %v424
    %v561 = vunpack.c.l.b16 %v425
    %v562 = vunpack.c.l.b16 %v426
    %v563 = vunpack.c.l.b16 %v427
    %v564 = vunpack.c.l.b16 %v428
    %v565 = vunpack.c.l.b16 %v429
    %v566 = vunpack.c.l.b16 %v430
    %v567 = vunpack.c.l.b16 %v431
    %v568 = vunpack.c.l.b16 %v432
    %v569 = vunpack.c.l.b16 %v433
    %v570 = vunpack.c.l.b16 %v434
    %v571 = vunpack.c.l.b16 %v435
    %v572 = vunpack.c.l.b16 %v436
    %v573 = vunpack.c.l.b16 %v437
    %v574 = vunpack.c.l.b16 %v438
    %v575 = vunpack.c.l.b16 %v439
    %v576 = vunpack.c.l.b16 %v440
    %v577 = vunpack.c.l.b16 %v441
    %v578 = vunpack.c.l.b16 %v442
    %v579 = vunpack.c.l.b16 %v443
    %v580 = vunpack.c.l.b16 %v444
    %v581 = vunpack.c.l.b16 %v445
    %v582 = vunpack.c.l.b16 %v446
    %v583 = vunpack.c.l.b16 %v447
    %v584 = vunpack.c.l.b16 %v448
    %v585 = vunpack.c.l.b16 %v449
    %v586 = vunpack.c.l.b16 %v450
    %v587 = vunpack.c.l.b16 %v451
    %v588 = vunpack.c.l.b16 %v452
    %v589 = vunpack.c.l.b16 %v453
    %v590 = vunpack.c.l.b16 %v454
    %v591 = vunpack.c.l.b16 %v455
    %v592 = vunpack.c.l.b16 %v456
    %v593 = vunpack.c.l.b16 %v457
    %v594 = vunpack.c.l.b16 %v458
    %v595 = vunpack.c.l.b16 %v459
    %v596 = vunpack.c.l.b16 %v460
    %v597 = vunpack.c.l.b16 %v461
    %v598 = vunpack.c.l.b16 %v462
    %v599 = vunpack.c.l.b16 %v463
    %v600 = vunpack.c.l.b16 %v464
    %v601 = vunpack.c.l.b16 %v465
    %v602 = vunpack.c.l.b16 %v466
    %v603 = vunpack.c.l.b16 %v467
    %v604 = vunpack.c.l.b16 %v468
    %v605 = vunpack.c.l.b16 %v469
    %v606 = vunpack.c.l.b16 %v470
    %v607 = vunpack.c.l.b16 %v471
    %v608 = vunpack.c.l.b16 %v472
    %v609 = vunpack.c.l.b16 %v473
    %v610 = vunpack.c.l.b16 %v474
    %v611 = vunpack.c.l.b16 %v475
    %v612 = vunpack.c.l.b16 %v476
    %v613 = vunpack.c.l.b16 %v477
    %v614 = vunpack.c.l.b16 %v478
    %v615 = vunpack.c.l.b16 %v479
    %v616 = vpack.c.b16 %v553, %v552
    %v617 = vpack.c.b16 %v555, %v554
    %v618 = vpack.c.b16 %v557, %v556
    %v619 = vpack.c.b16 %v559, %v558
    %v620 = vpack.c.b16 %v561, %v560
    %v621 = vpack.c.b16 %v563, %v562
    %v622 = vpack.c.b16 %v565, %v564
    %v623 = vpack.c.b16 %v567, %v566
    %v624 = vpack.c.b16 %v569, %v568
    %v625 = vpack.c.b16 %v571, %v570
    %v626 = vpack.c.b16 %v573, %v572
    %v627 = vpack.c.b16 %v575, %v574
    %v628 = vpack.c.b16 %v577, %v576
    %v629 = vpack.c.b16 %v579, %v578
    %v630 = vpack.c.b16 %v581, %v580
    %v631 = vpack.c.b16 %v583, %v582
    %v632 = vpack.c.b16 %v585, %v584
    %v633 = vpack.c.b16 %v587, %v586
    %v634 = vpack.c.b16 %v589, %v588
    %v635 = vpack.c.b16 %v591, %v590
    %v636 = vpack.c.b16 %v593, %v592
    %v637 = vpack.c.b16 %v595, %v594
    %v638 = vpack.c.b16 %v597, %v596
    %v639 = vpack.c.b16 %v599, %v598
    %v640 = vpack.c.b16 %v601, %v600
    %v641 = vpack.c.b16 %v603, %v602
    %v642 = vpack.c.b16 %v605, %v604
    %v643 = vpack.c.b16 %v607, %v606
    %v644 = vpack.c.b16 %v609, %v608
    %v645 = vpack.c.b16 %v611, %v610
    %v646 = vpack.c.b16 %v613, %v612
    %v647 = vpack.c.b16 %v615, %v614
    %680 = vmatpush.bf16.msra.mxu0 %v623
    %681 = vmatpush.bf16.msra.mxu0 %v622
    %682 = vmatpush.bf16.msra.mxu0 %v621
    %683 = vmatpush.bf16.msra.mxu0 %v620
    %684 = vmatpush.bf16.msra.mxu0 %v619
    %685 = vmatpush.bf16.msra.mxu0 %v618
    %686 = vmatpush.bf16.msra.mxu0 %v617
    %687 = vmatpush.bf16.msra.mxu0 %v616
    %688 = vmatmul.bf16.gmra.mxu0 %v481
    %v689 = vpop.f32.mrf.mxu0
    %v690 = vadd.f32 %v486, %v689
    %v691 = vpop.f32.mrf.mxu0
    %692 = vdwg.mxu0
    %693 = vmatpush.bf16.msra.mxu0 %v631
    %694 = vmatpush.bf16.msra.mxu0 %v630
    %695 = vmatpush.bf16.msra.mxu0 %v629
    %696 = vmatpush.bf16.msra.mxu0 %v628
    %697 = vmatpush.bf16.msra.mxu0 %v627
    %698 = vmatpush.bf16.msra.mxu0 %v626
    %699 = vmatpush.bf16.msra.mxu0 %v625
    %700 = vmatpush.bf16.msra.mxu0 %v624
    %701 = vmatmul.bf16.gmra.mxu0 %v482
    %v702 = vpop.f32.mrf.mxu0
    %v703 = vadd.f32 %v690, %v702
    %v704 = vpop.f32.mrf.mxu0
    %705 = vdwg.mxu0
    %706 = vmatpush.bf16.msra.mxu0 %v639
    %707 = vmatpush.bf16.msra.mxu0 %v638
    %708 = vmatpush.bf16.msra.mxu0 %v637
    %709 = vmatpush.bf16.msra.mxu0 %v636
    %710 = vmatpush.bf16.msra.mxu0 %v635
    %711 = vmatpush.bf16.msra.mxu0 %v634
    %712 = vmatpush.bf16.msra.mxu0 %v633
    %713 = vmatpush.bf16.msra.mxu0 %v632
    %714 = vmatmul.bf16.gmra.mxu0 %v483
    %v715 = vpop.f32.mrf.mxu0
    %v716 = vadd.f32 %v703, %v715
    %v717 = vpop.f32.mrf.mxu0
    %718 = vdwg.mxu0
    %719 = vmatpush.bf16.msra.mxu0 %v647
    %720 = vmatpush.bf16.msra.mxu0 %v646
    %721 = vmatpush.bf16.msra.mxu0 %v645
    %722 = vmatpush.bf16.msra.mxu0 %v644
    %723 = vmatpush.bf16.msra.mxu0 %v643
    %724 = vmatpush.bf16.msra.mxu0 %v642
    %725 = vmatpush.bf16.msra.mxu0 %v641
    %726 = vmatpush.bf16.msra.mxu0 %v640
    %727 = vmatmul.bf16.gmra.mxu0 %v484
    %v728 = vpop.f32.mrf.mxu0
    %v729 = vadd.f32 %v716, %v728
    %v730 = vpop.f32.mrf.mxu0
    %731 = vdwg.mxu0
    %v732 = vld [vmem:[%s15] sm:$0xf]
    %v733 = vld [vmem:[%s15 + $0x4] sm:$0xf]
    %v734 = vld [vmem:[%s15 + $0x8] sm:$0xf]
    %v735 = vld [vmem:[%s15 + $0xc] sm:$0xf]
    %v736 = vld [vmem:[%s15 + $0x10] sm:$0xf]
    %v737 = vld [vmem:[%s15 + $0x14] sm:$0xf]
    %v738 = vld [vmem:[%s15 + $0x18] sm:$0xf]
    %v739 = vld [vmem:[%s15 + $0x1c] sm:$0xf]
    %v740 = vld [vmem:[%s15 + $0x20] sm:$0xf]
    %v741 = vld [vmem:[%s15 + $0x24] sm:$0xf]
    %v742 = vld [vmem:[%s15 + $0x28] sm:$0xf]
    %v743 = vld [vmem:[%s15 + $0x2c] sm:$0xf]
    %v744 = vld [vmem:[%s15 + $0x30] sm:$0xf]
    %v745 = vld [vmem:[%s15 + $0x34] sm:$0xf]
    %v746 = vld [vmem:[%s15 + $0x38] sm:$0xf]
    %v747 = vld [vmem:[%s15 + $0x3c] sm:$0xf]
    %v748 = vld [vmem:[%s15 + $0x40] sm:$0xf]
    %v749 = vld [vmem:[%s15 + $0x44] sm:$0xf]
    %v750 = vld [vmem:[%s15 + $0x48] sm:$0xf]
    %v751 = vld [vmem:[%s15 + $0x4c] sm:$0xf]
    %v752 = vld [vmem:[%s15 + $0x50] sm:$0xf]
    %v753 = vld [vmem:[%s15 + $0x54] sm:$0xf]
    %v754 = vld [vmem:[%s15 + $0x58] sm:$0xf]
    %v755 = vld [vmem:[%s15 + $0x5c] sm:$0xf]
    %v756 = vld [vmem:[%s15 + $0x60] sm:$0xf]
    %v757 = vld [vmem:[%s15 + $0x64] sm:$0xf]
    %v758 = vld [vmem:[%s15 + $0x68] sm:$0xf]
    %v759 = vld [vmem:[%s15 + $0x6c] sm:$0xf]
    %v760 = vld [vmem:[%s15 + $0x70] sm:$0xf]
    %v761 = vld [vmem:[%s15 + $0x74] sm:$0xf]
    %v762 = vld [vmem:[%s15 + $0x78] sm:$0xf]
    %v763 = vld [vmem:[%s15 + $0x7c] sm:$0xf]
    %v764 = vld [vmem:[%s15 + $0x80] sm:$0xf]
    %v765 = vld [vmem:[%s15 + $0x84] sm:$0xf]
    %v766 = vld [vmem:[%s15 + $0x88] sm:$0xf]
    %v767 = vld [vmem:[%s15 + $0x8c] sm:$0xf]
    %v768 = vld [vmem:[%s15 + $0x90] sm:$0xf]
    %v769 = vld [vmem:[%s15 + $0x94] sm:$0xf]
    %v770 = vld [vmem:[%s15 + $0x98] sm:$0xf]
    %v771 = vld [vmem:[%s15 + $0x9c] sm:$0xf]
    %v772 = vld [vmem:[%s15 + $0xa0] sm:$0xf]
    %v773 = vld [vmem:[%s15 + $0xa4] sm:$0xf]
    %v774 = vld [vmem:[%s15 + $0xa8] sm:$0xf]
    %v775 = vld [vmem:[%s15 + $0xac] sm:$0xf]
    %v776 = vld [vmem:[%s15 + $0xb0] sm:$0xf]
    %v777 = vld [vmem:[%s15 + $0xb4] sm:$0xf]
    %v778 = vld [vmem:[%s15 + $0xb8] sm:$0xf]
    %v779 = vld [vmem:[%s15 + $0xbc] sm:$0xf]
    %v780 = vld [vmem:[%s15 + $0xc0] sm:$0xf]
    %v781 = vld [vmem:[%s15 + $0xc4] sm:$0xf]
    %v782 = vld [vmem:[%s15 + $0xc8] sm:$0xf]
    %v783 = vld [vmem:[%s15 + $0xcc] sm:$0xf]
    %v784 = vld [vmem:[%s15 + $0xd0] sm:$0xf]
    %v785 = vld [vmem:[%s15 + $0xd4] sm:$0xf]
    %v786 = vld [vmem:[%s15 + $0xd8] sm:$0xf]
    %v787 = vld [vmem:[%s15 + $0xdc] sm:$0xf]
    %v788 = vld [vmem:[%s15 + $0xe0] sm:$0xf]
    %v789 = vld [vmem:[%s15 + $0xe4] sm:$0xf]
    %v790 = vld [vmem:[%s15 + $0xe8] sm:$0xf]
    %v791 = vld [vmem:[%s15 + $0xec] sm:$0xf]
    %v792 = vld [vmem:[%s15 + $0xf0] sm:$0xf]
    %v793 = vld [vmem:[%s15 + $0xf4] sm:$0xf]
    %v794 = vld [vmem:[%s15 + $0xf8] sm:$0xf]
    %v795 = vld [vmem:[%s15 + $0xfc] sm:$0xf]
    %v796 = vld [vmem:[%s17] sm:$0x1]
    %v797 = vpack.c.bf16 %v412, %v412
    %v798 = vpack.c.bf16 %v413, %v413
    %v799 = vpack.c.bf16 %v414, %v414
    %v800 = vpack.c.bf16 %v415, %v415
    %v802 = vperm.slane %v796, 0
    %v868 = vunpack.c.l.b16 %v732
    %v869 = vunpack.c.l.b16 %v733
    %v870 = vunpack.c.l.b16 %v734
    %v871 = vunpack.c.l.b16 %v735
    %v872 = vunpack.c.l.b16 %v736
    %v873 = vunpack.c.l.b16 %v737
    %v874 = vunpack.c.l.b16 %v738
    %v875 = vunpack.c.l.b16 %v739
    %v876 = vunpack.c.l.b16 %v740
    %v877 = vunpack.c.l.b16 %v741
    %v878 = vunpack.c.l.b16 %v742
    %v879 = vunpack.c.l.b16 %v743
    %v880 = vunpack.c.l.b16 %v744
    %v881 = vunpack.c.l.b16 %v745
    %v882 = vunpack.c.l.b16 %v746
    %v883 = vunpack.c.l.b16 %v747
    %v884 = vunpack.c.l.b16 %v748
    %v885 = vunpack.c.l.b16 %v749
    %v886 = vunpack.c.l.b16 %v750
    %v887 = vunpack.c.l.b16 %v751
    %v888 = vunpack.c.l.b16 %v752
    %v889 = vunpack.c.l.b16 %v753
    %v890 = vunpack.c.l.b16 %v754
    %v891 = vunpack.c.l.b16 %v755
    %v892 = vunpack.c.l.b16 %v756
    %v893 = vunpack.c.l.b16 %v757
    %v894 = vunpack.c.l.b16 %v758
    %v895 = vunpack.c.l.b16 %v759
    %v896 = vunpack.c.l.b16 %v760
    %v897 = vunpack.c.l.b16 %v761
    %v898 = vunpack.c.l.b16 %v762
    %v899 = vunpack.c.l.b16 %v763
    %v900 = vunpack.c.l.b16 %v764
    %v901 = vunpack.c.l.b16 %v765
    %v902 = vunpack.c.l.b16 %v766
    %v903 = vunpack.c.l.b16 %v767
    %v904 = vunpack.c.l.b16 %v768
    %v905 = vunpack.c.l.b16 %v769
    %v906 = vunpack.c.l.b16 %v770
    %v907 = vunpack.c.l.b16 %v771
    %v908 = vunpack.c.l.b16 %v772
    %v909 = vunpack.c.l.b16 %v773
    %v910 = vunpack.c.l.b16 %v774
    %v911 = vunpack.c.l.b16 %v775
    %v912 = vunpack.c.l.b16 %v776
    %v913 = vunpack.c.l.b16 %v777
    %v914 = vunpack.c.l.b16 %v778
    %v915 = vunpack.c.l.b16 %v779
    %v916 = vunpack.c.l.b16 %v780
    %v917 = vunpack.c.l.b16 %v781
    %v918 = vunpack.c.l.b16 %v782
    %v919 = vunpack.c.l.b16 %v783
    %v920 = vunpack.c.l.b16 %v784
    %v921 = vunpack.c.l.b16 %v785
    %v922 = vunpack.c.l.b16 %v786
    %v923 = vunpack.c.l.b16 %v787
    %v924 = vunpack.c.l.b16 %v788
    %v925 = vunpack.c.l.b16 %v789
    %v926 = vunpack.c.l.b16 %v790
    %v927 = vunpack.c.l.b16 %v791
    %v928 = vunpack.c.l.b16 %v792
    %v929 = vunpack.c.l.b16 %v793
    %v930 = vunpack.c.l.b16 %v794
    %v931 = vunpack.c.l.b16 %v795
    %v932 = vpack.c.b16 %v869, %v868
    %v933 = vpack.c.b16 %v871, %v870
    %v934 = vpack.c.b16 %v873, %v872
    %v935 = vpack.c.b16 %v875, %v874
    %v936 = vpack.c.b16 %v877, %v876
    %v937 = vpack.c.b16 %v879, %v878
    %v938 = vpack.c.b16 %v881, %v880
    %v939 = vpack.c.b16 %v883, %v882
    %v940 = vpack.c.b16 %v885, %v884
    %v941 = vpack.c.b16 %v887, %v886
    %v942 = vpack.c.b16 %v889, %v888
    %v943 = vpack.c.b16 %v891, %v890
    %v944 = vpack.c.b16 %v893, %v892
    %v945 = vpack.c.b16 %v895, %v894
    %v946 = vpack.c.b16 %v897, %v896
    %v947 = vpack.c.b16 %v899, %v898
    %v948 = vpack.c.b16 %v901, %v900
    %v949 = vpack.c.b16 %v903, %v902
    %v950 = vpack.c.b16 %v905, %v904
    %v951 = vpack.c.b16 %v907, %v906
    %v952 = vpack.c.b16 %v909, %v908
    %v953 = vpack.c.b16 %v911, %v910
    %v954 = vpack.c.b16 %v913, %v912
    %v955 = vpack.c.b16 %v915, %v914
    %v956 = vpack.c.b16 %v917, %v916
    %v957 = vpack.c.b16 %v919, %v918
    %v958 = vpack.c.b16 %v921, %v920
    %v959 = vpack.c.b16 %v923, %v922
    %v960 = vpack.c.b16 %v925, %v924
    %v961 = vpack.c.b16 %v927, %v926
    %v962 = vpack.c.b16 %v929, %v928
    %v963 = vpack.c.b16 %v931, %v930
    %996 = vmatpush.bf16.msra.mxu0 %v939
    %997 = vmatpush.bf16.msra.mxu0 %v938
    %998 = vmatpush.bf16.msra.mxu0 %v937
    %999 = vmatpush.bf16.msra.mxu0 %v936
    %1000 = vmatpush.bf16.msra.mxu0 %v935
    %1001 = vmatpush.bf16.msra.mxu0 %v934
    %1002 = vmatpush.bf16.msra.mxu0 %v933
    %1003 = vmatpush.bf16.msra.mxu0 %v932
    %1004 = vmatmul.bf16.gmra.mxu0 %v797
    %v1005 = vpop.f32.mrf.mxu0
    %v1006 = vadd.f32 %v802, %v1005
    %v1007 = vpop.f32.mrf.mxu0
    %1008 = vdwg.mxu0
    %1009 = vmatpush.bf16.msra.mxu0 %v947
    %1010 = vmatpush.bf16.msra.mxu0 %v946
    %1011 = vmatpush.bf16.msra.mxu0 %v945
    %1012 = vmatpush.bf16.msra.mxu0 %v944
    %1013 = vmatpush.bf16.msra.mxu0 %v943
    %1014 = vmatpush.bf16.msra.mxu0 %v942
    %1015 = vmatpush.bf16.msra.mxu0 %v941
    %1016 = vmatpush.bf16.msra.mxu0 %v940
    %1017 = vmatmul.bf16.gmra.mxu0 %v798
    %v1018 = vpop.f32.mrf.mxu0
    %v1019 = vadd.f32 %v1006, %v1018
    %v1020 = vpop.f32.mrf.mxu0
    %1021 = vdwg.mxu0
    %1022 = vmatpush.bf16.msra.mxu0 %v955
    %1023 = vmatpush.bf16.msra.mxu0 %v954
    %1024 = vmatpush.bf16.msra.mxu0 %v953
    %1025 = vmatpush.bf16.msra.mxu0 %v952
    %1026 = vmatpush.bf16.msra.mxu0 %v951
    %1027 = vmatpush.bf16.msra.mxu0 %v950
    %1028 = vmatpush.bf16.msra.mxu0 %v949
    %1029 = vmatpush.bf16.msra.mxu0 %v948
    %1030 = vmatmul.bf16.gmra.mxu0 %v799
    %v1031 = vpop.f32.mrf.mxu0
    %v1032 = vadd.f32 %v1019, %v1031
    %v1033 = vpop.f32.mrf.mxu0
    %1034 = vdwg.mxu0
    %1035 = vmatpush.bf16.msra.mxu0 %v963
    %1036 = vmatpush.bf16.msra.mxu0 %v962
    %1037 = vmatpush.bf16.msra.mxu0 %v961
    %1038 = vmatpush.bf16.msra.mxu0 %v960
    %1039 = vmatpush.bf16.msra.mxu0 %v959
    %1040 = vmatpush.bf16.msra.mxu0 %v958
    %1041 = vmatpush.bf16.msra.mxu0 %v957
    %1042 = vmatpush.bf16.msra.mxu0 %v956
    %1043 = vmatmul.bf16.gmra.mxu0 %v800
    %v1044 = vpop.f32.mrf.mxu0
    %v1045 = vadd.f32 %v1032, %v1044
    %v1046 = vpop.f32.mrf.mxu0
    %1047 = vdwg.mxu0
    %v1048 = vld [vmem:[%s5] sm:$0x3]
    %v1049 = vmul.f32 %v1045, 0.5
    %v1050 = vmul.f32 %v1049, 1.442695
    %v1051 = vpow.pop %v1050
    %v1052 = vmul.f32 %v1048, %v1051
    %v1053 = vadd.f32 %v729, %v1052
    %v1054 = vld [vmem:[%s19] sm:$0xff]
    %v1055 = vld [vmem:[%s19 + $0x8] sm:$0xff]
    %v1056 = vld [vmem:[%s19 + $0x10] sm:$0xff]
    %v1057 = vld [vmem:[%s19 + $0x18] sm:$0xff]
    %v1058 = vld [vmem:[%s21] sm:$0xf]
    %v1059 = vpack.c.bf16 %v1053, %v1053
    %v1061 = vperm.slane %v1058, 0
    %v1062 = vperm.slane %v1058, 1
    %v1063 = vperm.slane %v1058, 2
    %v1064 = vperm.slane %v1058, 3
    %v1073 = vunpack.c.l.b16 %v1054
    %v1074 = vunpack.c.h.b16 %v1054
    %v1075 = vunpack.c.l.b16 %v1055
    %v1076 = vunpack.c.h.b16 %v1055
    %v1077 = vunpack.c.l.b16 %v1056
    %v1078 = vunpack.c.h.b16 %v1056
    %v1079 = vunpack.c.l.b16 %v1057
    %v1080 = vunpack.c.h.b16 %v1057
    %v1081 = vpack.c.b16 %v1077, %v1073
    %v1082 = vpack.c.b16 %v1078, %v1074
    %v1083 = vpack.c.b16 %v1079, %v1075
    %v1084 = vpack.c.b16 %v1080, %v1076
    %vm1089 = vcmask 130048
    %v1091 = vsel %vm1089, %v1059, 0
    %1093 = vmatpush.bf16.msra.mxu0 0
    %1094 = vmatpush.bf16.msra.mxu0 0
    %1095 = vmatpush.bf16.msra.mxu0 0
    %1096 = vmatpush.bf16.msra.mxu0 0
    %1097 = vmatpush.bf16.msra.mxu0 0
    %1098 = vmatpush.bf16.msra.mxu0 0
    %1099 = vmatpush.bf16.msra.mxu0 0
    %1100 = vmatpush.bf16.msra.mxu0 %v1081
    %1101 = vmatmul.bf16.gmra.mxu0 %v1091
    %v1102 = vpop.f32.mrf.mxu0
    %v1103 = vadd.f32 %v1061, %v1102
    %v1104 = vpop.f32.mrf.mxu0
    %1105 = vdwg.mxu0
    %1106 = vmatpush.bf16.msra.mxu0 0
    %1107 = vmatpush.bf16.msra.mxu0 0
    %1108 = vmatpush.bf16.msra.mxu0 0
    %1109 = vmatpush.bf16.msra.mxu0 0
    %1110 = vmatpush.bf16.msra.mxu0 0
    %1111 = vmatpush.bf16.msra.mxu0 0
    %1112 = vmatpush.bf16.msra.mxu0 0
    %1113 = vmatpush.bf16.msra.mxu0 %v1082
    %1114 = vmatmul.bf16.gmra.mxu0 %v1091
    %v1115 = vpop.f32.mrf.mxu0
    %v1116 = vadd.f32 %v1062, %v1115
    %v1117 = vpop.f32.mrf.mxu0
    %1118 = vdwg.mxu0
    %1119 = vmatpush.bf16.msra.mxu0 0
    %1120 = vmatpush.bf16.msra.mxu0 0
    %1121 = vmatpush.bf16.msra.mxu0 0
    %1122 = vmatpush.bf16.msra.mxu0 0
    %1123 = vmatpush.bf16.msra.mxu0 0
    %1124 = vmatpush.bf16.msra.mxu0 0
    %1125 = vmatpush.bf16.msra.mxu0 0
    %1126 = vmatpush.bf16.msra.mxu0 %v1083
    %1127 = vmatmul.bf16.gmra.mxu0 %v1091
    %v1128 = vpop.f32.mrf.mxu0
    %v1129 = vadd.f32 %v1063, %v1128
    %v1130 = vpop.f32.mrf.mxu0
    %1131 = vdwg.mxu0
    %1132 = vmatpush.bf16.msra.mxu0 0
    %1133 = vmatpush.bf16.msra.mxu0 0
    %1134 = vmatpush.bf16.msra.mxu0 0
    %1135 = vmatpush.bf16.msra.mxu0 0
    %1136 = vmatpush.bf16.msra.mxu0 0
    %1137 = vmatpush.bf16.msra.mxu0 0
    %1138 = vmatpush.bf16.msra.mxu0 0
    %1139 = vmatpush.bf16.msra.mxu0 %v1084
    %1140 = vmatmul.bf16.gmra.mxu0 %v1091
    %v1141 = vpop.f32.mrf.mxu0
    %v1142 = vadd.f32 %v1064, %v1141
    %v1143 = vpop.f32.mrf.mxu0
    %1144 = vdwg.mxu0
    %v1145 = vmax.f32 %v1103, 0.0
    %v1146 = vmax.f32 %v1116, 0.0
    %v1147 = vmax.f32 %v1129, 0.0
    %v1148 = vmax.f32 %v1142, 0.0
    %v1149 = vld [vmem:[%s23] sm:$0xf]
    %v1150 = vld [vmem:[%s23 + $0x4] sm:$0xf]
    %v1151 = vld [vmem:[%s23 + $0x8] sm:$0xf]
    %v1152 = vld [vmem:[%s23 + $0xc] sm:$0xf]
    %v1153 = vld [vmem:[%s23 + $0x10] sm:$0xf]
    %v1154 = vld [vmem:[%s23 + $0x14] sm:$0xf]
    %v1155 = vld [vmem:[%s23 + $0x18] sm:$0xf]
    %v1156 = vld [vmem:[%s23 + $0x1c] sm:$0xf]
    %v1157 = vld [vmem:[%s23 + $0x20] sm:$0xf]
    %v1158 = vld [vmem:[%s23 + $0x24] sm:$0xf]
    %v1159 = vld [vmem:[%s23 + $0x28] sm:$0xf]
    %v1160 = vld [vmem:[%s23 + $0x2c] sm:$0xf]
    %v1161 = vld [vmem:[%s23 + $0x30] sm:$0xf]
    %v1162 = vld [vmem:[%s23 + $0x34] sm:$0xf]
    %v1163 = vld [vmem:[%s23 + $0x38] sm:$0xf]
    %v1164 = vld [vmem:[%s23 + $0x3c] sm:$0xf]
    %v1165 = vld [vmem:[%s23 + $0x40] sm:$0xf]
    %v1166 = vld [vmem:[%s23 + $0x44] sm:$0xf]
    %v1167 = vld [vmem:[%s23 + $0x48] sm:$0xf]
    %v1168 = vld [vmem:[%s23 + $0x4c] sm:$0xf]
    %v1169 = vld [vmem:[%s23 + $0x50] sm:$0xf]
    %v1170 = vld [vmem:[%s23 + $0x54] sm:$0xf]
    %v1171 = vld [vmem:[%s23 + $0x58] sm:$0xf]
    %v1172 = vld [vmem:[%s23 + $0x5c] sm:$0xf]
    %v1173 = vld [vmem:[%s23 + $0x60] sm:$0xf]
    %v1174 = vld [vmem:[%s23 + $0x64] sm:$0xf]
    %v1175 = vld [vmem:[%s23 + $0x68] sm:$0xf]
    %v1176 = vld [vmem:[%s23 + $0x6c] sm:$0xf]
    %v1177 = vld [vmem:[%s23 + $0x70] sm:$0xf]
    %v1178 = vld [vmem:[%s23 + $0x74] sm:$0xf]
    %v1179 = vld [vmem:[%s23 + $0x78] sm:$0xf]
    %v1180 = vld [vmem:[%s23 + $0x7c] sm:$0xf]
    %v1181 = vld [vmem:[%s23 + $0x80] sm:$0xf]
    %v1182 = vld [vmem:[%s23 + $0x84] sm:$0xf]
    %v1183 = vld [vmem:[%s23 + $0x88] sm:$0xf]
    %v1184 = vld [vmem:[%s23 + $0x8c] sm:$0xf]
    %v1185 = vld [vmem:[%s23 + $0x90] sm:$0xf]
    %v1186 = vld [vmem:[%s23 + $0x94] sm:$0xf]
    %v1187 = vld [vmem:[%s23 + $0x98] sm:$0xf]
    %v1188 = vld [vmem:[%s23 + $0x9c] sm:$0xf]
    %v1189 = vld [vmem:[%s23 + $0xa0] sm:$0xf]
    %v1190 = vld [vmem:[%s23 + $0xa4] sm:$0xf]
    %v1191 = vld [vmem:[%s23 + $0xa8] sm:$0xf]
    %v1192 = vld [vmem:[%s23 + $0xac] sm:$0xf]
    %v1193 = vld [vmem:[%s23 + $0xb0] sm:$0xf]
    %v1194 = vld [vmem:[%s23 + $0xb4] sm:$0xf]
    %v1195 = vld [vmem:[%s23 + $0xb8] sm:$0xf]
    %v1196 = vld [vmem:[%s23 + $0xbc] sm:$0xf]
    %v1197 = vld [vmem:[%s23 + $0xc0] sm:$0xf]
    %v1198 = vld [vmem:[%s23 + $0xc4] sm:$0xf]
    %v1199 = vld [vmem:[%s23 + $0xc8] sm:$0xf]
    %v1200 = vld [vmem:[%s23 + $0xcc] sm:$0xf]
    %v1201 = vld [vmem:[%s23 + $0xd0] sm:$0xf]
    %v1202 = vld [vmem:[%s23 + $0xd4] sm:$0xf]
    %v1203 = vld [vmem:[%s23 + $0xd8] sm:$0xf]
    %v1204 = vld [vmem:[%s23 + $0xdc] sm:$0xf]
    %v1205 = vld [vmem:[%s23 + $0xe0] sm:$0xf]
    %v1206 = vld [vmem:[%s23 + $0xe4] sm:$0xf]
    %v1207 = vld [vmem:[%s23 + $0xe8] sm:$0xf]
    %v1208 = vld [vmem:[%s23 + $0xec] sm:$0xf]
    %v1209 = vld [vmem:[%s23 + $0xf0] sm:$0xf]
    %v1210 = vld [vmem:[%s23 + $0xf4] sm:$0xf]
    %v1211 = vld [vmem:[%s23 + $0xf8] sm:$0xf]
    %v1212 = vld [vmem:[%s23 + $0xfc] sm:$0xf]
    %v1213 = vld [vmem:[%s25] sm:$0x1]
    %v1214 = vpack.c.bf16 %v1145, %v1145
    %v1215 = vpack.c.bf16 %v1146, %v1146
    %v1216 = vpack.c.bf16 %v1147, %v1147
    %v1217 = vpack.c.bf16 %v1148, %v1148
    %v1219 = vperm.slane %v1213, 0
    %v1285 = vunpack.c.l.b16 %v1149
    %v1286 = vunpack.c.l.b16 %v1150
    %v1287 = vunpack.c.l.b16 %v1151
    %v1288 = vunpack.c.l.b16 %v1152
    %v1289 = vunpack.c.l.b16 %v1153
    %v1290 = vunpack.c.l.b16 %v1154
    %v1291 = vunpack.c.l.b16 %v1155
    %v1292 = vunpack.c.l.b16 %v1156
    %v1293 = vunpack.c.l.b16 %v1157
    %v1294 = vunpack.c.l.b16 %v1158
    %v1295 = vunpack.c.l.b16 %v1159
    %v1296 = vunpack.c.l.b16 %v1160
    %v1297 = vunpack.c.l.b16 %v1161
    %v1298 = vunpack.c.l.b16 %v1162
    %v1299 = vunpack.c.l.b16 %v1163
    %v1300 = vunpack.c.l.b16 %v1164
    %v1301 = vunpack.c.l.b16 %v1165
    %v1302 = vunpack.c.l.b16 %v1166
    %v1303 = vunpack.c.l.b16 %v1167
    %v1304 = vunpack.c.l.b16 %v1168
    %v1305 = vunpack.c.l.b16 %v1169
    %v1306 = vunpack.c.l.b16 %v1170
    %v1307 = vunpack.c.l.b16 %v1171
    %v1308 = vunpack.c.l.b16 %v1172
    %v1309 = vunpack.c.l.b16 %v1173
    %v1310 = vunpack.c.l.b16 %v1174
    %v1311 = vunpack.c.l.b16 %v1175
    %v1312 = vunpack.c.l.b16 %v1176
    %v1313 = vunpack.c.l.b16 %v1177
    %v1314 = vunpack.c.l.b16 %v1178
    %v1315 = vunpack.c.l.b16 %v1179
    %v1316 = vunpack.c.l.b16 %v1180
    %v1317 = vunpack.c.l.b16 %v1181
    %v1318 = vunpack.c.l.b16 %v1182
    %v1319 = vunpack.c.l.b16 %v1183
    %v1320 = vunpack.c.l.b16 %v1184
    %v1321 = vunpack.c.l.b16 %v1185
    %v1322 = vunpack.c.l.b16 %v1186
    %v1323 = vunpack.c.l.b16 %v1187
    %v1324 = vunpack.c.l.b16 %v1188
    %v1325 = vunpack.c.l.b16 %v1189
    %v1326 = vunpack.c.l.b16 %v1190
    %v1327 = vunpack.c.l.b16 %v1191
    %v1328 = vunpack.c.l.b16 %v1192
    %v1329 = vunpack.c.l.b16 %v1193
    %v1330 = vunpack.c.l.b16 %v1194
    %v1331 = vunpack.c.l.b16 %v1195
    %v1332 = vunpack.c.l.b16 %v1196
    %v1333 = vunpack.c.l.b16 %v1197
    %v1334 = vunpack.c.l.b16 %v1198
    %v1335 = vunpack.c.l.b16 %v1199
    %v1336 = vunpack.c.l.b16 %v1200
    %v1337 = vunpack.c.l.b16 %v1201
    %v1338 = vunpack.c.l.b16 %v1202
    %v1339 = vunpack.c.l.b16 %v1203
    %v1340 = vunpack.c.l.b16 %v1204
    %v1341 = vunpack.c.l.b16 %v1205
    %v1342 = vunpack.c.l.b16 %v1206
    %v1343 = vunpack.c.l.b16 %v1207
    %v1344 = vunpack.c.l.b16 %v1208
    %v1345 = vunpack.c.l.b16 %v1209
    %v1346 = vunpack.c.l.b16 %v1210
    %v1347 = vunpack.c.l.b16 %v1211
    %v1348 = vunpack.c.l.b16 %v1212
    %v1349 = vpack.c.b16 %v1286, %v1285
    %v1350 = vpack.c.b16 %v1288, %v1287
    %v1351 = vpack.c.b16 %v1290, %v1289
    %v1352 = vpack.c.b16 %v1292, %v1291
    %v1353 = vpack.c.b16 %v1294, %v1293
    %v1354 = vpack.c.b16 %v1296, %v1295
    %v1355 = vpack.c.b16 %v1298, %v1297
    %v1356 = vpack.c.b16 %v1300, %v1299
    %v1357 = vpack.c.b16 %v1302, %v1301
    %v1358 = vpack.c.b16 %v1304, %v1303
    %v1359 = vpack.c.b16 %v1306, %v1305
    %v1360 = vpack.c.b16 %v1308, %v1307
    %v1361 = vpack.c.b16 %v1310, %v1309
    %v1362 = vpack.c.b16 %v1312, %v1311
    %v1363 = vpack.c.b16 %v1314, %v1313
    %v1364 = vpack.c.b16 %v1316, %v1315
    %v1365 = vpack.c.b16 %v1318, %v1317
    %v1366 = vpack.c.b16 %v1320, %v1319
    %v1367 = vpack.c.b16 %v1322, %v1321
    %v1368 = vpack.c.b16 %v1324, %v1323
    %v1369 = vpack.c.b16 %v1326, %v1325
    %v1370 = vpack.c.b16 %v1328, %v1327
    %v1371 = vpack.c.b16 %v1330, %v1329
    %v1372 = vpack.c.b16 %v1332, %v1331
    %v1373 = vpack.c.b16 %v1334, %v1333
    %v1374 = vpack.c.b16 %v1336, %v1335
    %v1375 = vpack.c.b16 %v1338, %v1337
    %v1376 = vpack.c.b16 %v1340, %v1339
    %v1377 = vpack.c.b16 %v1342, %v1341
    %v1378 = vpack.c.b16 %v1344, %v1343
    %v1379 = vpack.c.b16 %v1346, %v1345
    %v1380 = vpack.c.b16 %v1348, %v1347
    %1413 = vmatpush.bf16.msra.mxu0 %v1356
    %1414 = vmatpush.bf16.msra.mxu0 %v1355
    %1415 = vmatpush.bf16.msra.mxu0 %v1354
    %1416 = vmatpush.bf16.msra.mxu0 %v1353
    %1417 = vmatpush.bf16.msra.mxu0 %v1352
    %1418 = vmatpush.bf16.msra.mxu0 %v1351
    %1419 = vmatpush.bf16.msra.mxu0 %v1350
    %1420 = vmatpush.bf16.msra.mxu0 %v1349
    %1421 = vmatmul.bf16.gmra.mxu0 %v1214
    %v1422 = vpop.f32.mrf.mxu0
    %v1423 = vadd.f32 %v1219, %v1422
    %v1424 = vpop.f32.mrf.mxu0
    %1425 = vdwg.mxu0
    %1426 = vmatpush.bf16.msra.mxu0 %v1364
    %1427 = vmatpush.bf16.msra.mxu0 %v1363
    %1428 = vmatpush.bf16.msra.mxu0 %v1362
    %1429 = vmatpush.bf16.msra.mxu0 %v1361
    %1430 = vmatpush.bf16.msra.mxu0 %v1360
    %1431 = vmatpush.bf16.msra.mxu0 %v1359
    %1432 = vmatpush.bf16.msra.mxu0 %v1358
    %1433 = vmatpush.bf16.msra.mxu0 %v1357
    %1434 = vmatmul.bf16.gmra.mxu0 %v1215
    %v1435 = vpop.f32.mrf.mxu0
    %v1436 = vadd.f32 %v1423, %v1435
    %v1437 = vpop.f32.mrf.mxu0
    %1438 = vdwg.mxu0
    %1439 = vmatpush.bf16.msra.mxu0 %v1372
    %1440 = vmatpush.bf16.msra.mxu0 %v1371
    %1441 = vmatpush.bf16.msra.mxu0 %v1370
    %1442 = vmatpush.bf16.msra.mxu0 %v1369
    %1443 = vmatpush.bf16.msra.mxu0 %v1368
    %1444 = vmatpush.bf16.msra.mxu0 %v1367
    %1445 = vmatpush.bf16.msra.mxu0 %v1366
    %1446 = vmatpush.bf16.msra.mxu0 %v1365
    %1447 = vmatmul.bf16.gmra.mxu0 %v1216
    %v1448 = vpop.f32.mrf.mxu0
    %v1449 = vadd.f32 %v1436, %v1448
    %v1450 = vpop.f32.mrf.mxu0
    %1451 = vdwg.mxu0
    %1452 = vmatpush.bf16.msra.mxu0 %v1380
    %1453 = vmatpush.bf16.msra.mxu0 %v1379
    %1454 = vmatpush.bf16.msra.mxu0 %v1378
    %1455 = vmatpush.bf16.msra.mxu0 %v1377
    %1456 = vmatpush.bf16.msra.mxu0 %v1376
    %1457 = vmatpush.bf16.msra.mxu0 %v1375
    %1458 = vmatpush.bf16.msra.mxu0 %v1374
    %1459 = vmatpush.bf16.msra.mxu0 %v1373
    %1460 = vmatmul.bf16.gmra.mxu0 %v1217
    %v1461 = vpop.f32.mrf.mxu0
    %v1462 = vadd.f32 %v1449, %v1461
    %v1463 = vpop.f32.mrf.mxu0
    %1464 = vdwg.mxu0
    %v1465 = vld [vmem:[%s1] sm:$0xff]
    %v1466 = vld [vmem:[%s1 + $0x8] sm:$0xff]
    %v1467 = vld [vmem:[%s27] sm:$0x3]
    %v1468 = vpack.c.bf16 %v1466, %v1465
    %vm1469 = vcmask 31744
    %v1471 = vsel %vm1469, %v1468, 0
    %vm1473 = vcmask 1041408
    %v1475 = vsel %vm1473, %v1467, 0
    %1477 = vmatpush.bf16.msra.mxu0 0
    %1478 = vmatpush.bf16.msra.mxu0 0
    %1479 = vmatpush.bf16.msra.mxu0 0
    %1480 = vmatpush.bf16.msra.mxu0 0
    %1481 = vmatpush.bf16.msra.mxu0 0
    %1482 = vmatpush.bf16.msra.mxu0 0
    %1483 = vmatpush.bf16.msra.mxu0 0
    %1484 = vmatpush.bf16.msra.mxu0 %v1475
    %1485 = vmatmul.bf16.gmra.mxu0 %v1471
    %v1486 = vpop.f32.mrf.mxu0
    %v1487 = vadd.f32 0.0, %v1486
    %v1488 = vpop.f32.mrf.mxu0
    %v1489 = vadd.f32 0.0, %v1488
    %1490 = vdwg.mxu0
    %v1491 = vpack.c.bf16 %v1462, %v1462
    %v1493 = vsel %vm1469, %v1491, 0
    %1495 = vmatpush.bf16.msra.mxu0 0
    %1496 = vmatpush.bf16.msra.mxu0 0
    %1497 = vmatpush.bf16.msra.mxu0 0
    %1498 = vmatpush.bf16.msra.mxu0 0
    %1499 = vmatpush.bf16.msra.mxu0 0
    %1500 = vmatpush.bf16.msra.mxu0 0
    %1501 = vmatpush.bf16.msra.mxu0 0
    %1502 = vmatpush.bf16.msra.mxu0 %v1475
    %1503 = vmatmul.bf16.gmra.mxu0 %v1493
    %v1504 = vpop.f32.mrf.mxu0
    %v1505 = vadd.f32 0.0, %v1504
    %v1506 = vpop.f32.mrf.mxu0
    %1507 = vdwg.mxu0
    %1509 = vrot.lane.b32.xlu0 %v1491, 124
    %v1510 = vpop.permute.xlu0 %1509
    %v1512 = vsel %vm1469, %v1510, 0
    %1514 = vmatpush.bf16.msra.mxu0 0
    %1515 = vmatpush.bf16.msra.mxu0 0
    %1516 = vmatpush.bf16.msra.mxu0 0
    %1517 = vmatpush.bf16.msra.mxu0 0
    %1518 = vmatpush.bf16.msra.mxu0 0
    %1519 = vmatpush.bf16.msra.mxu0 0
    %1520 = vmatpush.bf16.msra.mxu0 0
    %1521 = vmatpush.bf16.msra.mxu0 %v1475
    %1522 = vmatmul.bf16.gmra.mxu0 %v1512
    %v1523 = vpop.f32.mrf.mxu0
    %v1524 = vadd.f32 0.0, %v1523
    %v1525 = vpop.f32.mrf.mxu0
    %1526 = vdwg.mxu0
    %1527 = vrot.lane.b32.xlu0 %v1491, 120
    %v1528 = vpop.permute.xlu0 %1527
    %v1530 = vsel %vm1469, %v1528, 0
    %1532 = vmatpush.bf16.msra.mxu0 0
    %1533 = vmatpush.bf16.msra.mxu0 0
    %1534 = vmatpush.bf16.msra.mxu0 0
    %1535 = vmatpush.bf16.msra.mxu0 0
    %1536 = vmatpush.bf16.msra.mxu0 0
    %1537 = vmatpush.bf16.msra.mxu0 0
    %1538 = vmatpush.bf16.msra.mxu0 0
    %1539 = vmatpush.bf16.msra.mxu0 %v1475
    %1540 = vmatmul.bf16.gmra.mxu0 %v1530
    %v1541 = vpop.f32.mrf.mxu0
    %v1542 = vadd.f32 0.0, %v1541
    %v1543 = vpop.f32.mrf.mxu0
    %1544 = vdwg.mxu0
    %1545 = vrot.lane.b32.xlu0 %v1491, 116
    %v1546 = vpop.permute.xlu0 %1545
    %v1548 = vsel %vm1469, %v1546, 0
    %1550 = vmatpush.bf16.msra.mxu0 0
    %1551 = vmatpush.bf16.msra.mxu0 0
    %1552 = vmatpush.bf16.msra.mxu0 0
    %1553 = vmatpush.bf16.msra.mxu0 0
    %1554 = vmatpush.bf16.msra.mxu0 0
    %1555 = vmatpush.bf16.msra.mxu0 0
    %1556 = vmatpush.bf16.msra.mxu0 0
    %1557 = vmatpush.bf16.msra.mxu0 %v1475
    %1558 = vmatmul.bf16.gmra.mxu0 %v1548
    %v1559 = vpop.f32.mrf.mxu0
    %v1560 = vadd.f32 0.0, %v1559
    %v1561 = vpop.f32.mrf.mxu0
    %1562 = vdwg.mxu0
    %1563 = vrot.lane.b32.xlu0 %v1491, 112
    %v1564 = vpop.permute.xlu0 %1563
    %v1566 = vsel %vm1469, %v1564, 0
    %1568 = vmatpush.bf16.msra.mxu0 0
    %1569 = vmatpush.bf16.msra.mxu0 0
    %1570 = vmatpush.bf16.msra.mxu0 0
    %1571 = vmatpush.bf16.msra.mxu0 0
    %1572 = vmatpush.bf16.msra.mxu0 0
    %1573 = vmatpush.bf16.msra.mxu0 0
    %1574 = vmatpush.bf16.msra.mxu0 0
    %1575 = vmatpush.bf16.msra.mxu0 %v1475
    %1576 = vmatmul.bf16.gmra.mxu0 %v1566
    %v1577 = vpop.f32.mrf.mxu0
    %v1578 = vadd.f32 0.0, %v1577
    %v1579 = vpop.f32.mrf.mxu0
    %1580 = vdwg.mxu0
    %1581 = vrot.lane.b32.xlu0 %v1491, 108
    %v1582 = vpop.permute.xlu0 %1581
    %v1584 = vsel %vm1469, %v1582, 0
    %1586 = vmatpush.bf16.msra.mxu0 0
    %1587 = vmatpush.bf16.msra.mxu0 0
    %1588 = vmatpush.bf16.msra.mxu0 0
    %1589 = vmatpush.bf16.msra.mxu0 0
    %1590 = vmatpush.bf16.msra.mxu0 0
    %1591 = vmatpush.bf16.msra.mxu0 0
    %1592 = vmatpush.bf16.msra.mxu0 0
    %1593 = vmatpush.bf16.msra.mxu0 %v1475
    %1594 = vmatmul.bf16.gmra.mxu0 %v1584
    %v1595 = vpop.f32.mrf.mxu0
    %v1596 = vadd.f32 0.0, %v1595
    %v1597 = vpop.f32.mrf.mxu0
    %1598 = vdwg.mxu0
    %1599 = vrot.lane.b32.xlu0 %v1491, 104
    %v1600 = vpop.permute.xlu0 %1599
    %v1602 = vsel %vm1469, %v1600, 0
    %1604 = vmatpush.bf16.msra.mxu0 0
    %1605 = vmatpush.bf16.msra.mxu0 0
    %1606 = vmatpush.bf16.msra.mxu0 0
    %1607 = vmatpush.bf16.msra.mxu0 0
    %1608 = vmatpush.bf16.msra.mxu0 0
    %1609 = vmatpush.bf16.msra.mxu0 0
    %1610 = vmatpush.bf16.msra.mxu0 0
    %1611 = vmatpush.bf16.msra.mxu0 %v1475
    %1612 = vmatmul.bf16.gmra.mxu0 %v1602
    %v1613 = vpop.f32.mrf.mxu0
    %v1614 = vadd.f32 0.0, %v1613
    %v1615 = vpop.f32.mrf.mxu0
    %1616 = vdwg.mxu0
    %1617 = vrot.lane.b32.xlu0 %v1491, 100
    %v1618 = vpop.permute.xlu0 %1617
    %v1620 = vsel %vm1469, %v1618, 0
    %1622 = vmatpush.bf16.msra.mxu0 0
    %1623 = vmatpush.bf16.msra.mxu0 0
    %1624 = vmatpush.bf16.msra.mxu0 0
    %1625 = vmatpush.bf16.msra.mxu0 0
    %1626 = vmatpush.bf16.msra.mxu0 0
    %1627 = vmatpush.bf16.msra.mxu0 0
    %1628 = vmatpush.bf16.msra.mxu0 0
    %1629 = vmatpush.bf16.msra.mxu0 %v1475
    %1630 = vmatmul.bf16.gmra.mxu0 %v1620
    %v1631 = vpop.f32.mrf.mxu0
    %v1632 = vadd.f32 0.0, %v1631
    %v1633 = vpop.f32.mrf.mxu0
    %1634 = vdwg.mxu0
    %v1636 = vrot.slane %v1505, 1
    %v1639 = vrot.slane %v1524, 1
    %v1641 = vrot.slane %v1542, 1
    %v1643 = vrot.slane %v1560, 1
    %v1645 = vrot.slane %v1578, 1
    %v1647 = vrot.slane %v1596, 1
    %v1649 = vrot.slane %v1614, 1
    %v1651 = vrot.slane %v1632, 1
    %v1652 = vperm.slane %v1524, 0
    %v1653 = vperm.slane %v1639, 0
    %v1656 = vperm.slane %v1542, 0
    %v1657 = vperm.slane %v1641, 0
    %v1660 = vperm.slane %v1560, 0
    %v1661 = vperm.slane %v1643, 0
    %v1664 = vperm.slane %v1578, 0
    %v1665 = vperm.slane %v1645, 0
    %v1668 = vperm.slane %v1596, 0
    %v1669 = vperm.slane %v1647, 0
    %v1672 = vperm.slane %v1614, 0
    %v1673 = vperm.slane %v1649, 0
    %v1676 = vperm.slane %v1632, 0
    %v1677 = vperm.slane %v1651, 0
    %vm1680 = vcmask 1040384
    %v1681 = vsel %vm1680, %v1505, %v1652
    %v1682 = vsel %vm1680, %v1636, %v1653
    %v1683 = vsel %vm1473, %v1681, %v1656
    %v1684 = vsel %vm1473, %v1682, %v1657
    %vm1685 = vcmask 1042432
    %v1686 = vsel %vm1685, %v1683, %v1660
    %v1687 = vsel %vm1685, %v1684, %v1661
    %vm1688 = vcmask 1043456
    %v1689 = vsel %vm1688, %v1686, %v1664
    %v1690 = vsel %vm1688, %v1687, %v1665
    %vm1691 = vcmask 1044480
    %v1692 = vsel %vm1691, %v1689, %v1668
    %v1693 = vsel %vm1691, %v1690, %v1669
    %vm1694 = vcmask 1045504
    %v1695 = vsel %vm1694, %v1692, %v1672
    %v1696 = vsel %vm1694, %v1693, %v1673
    %vm1697 = vcmask 1046528
    %v1698 = vsel %vm1697, %v1695, %v1676
    %v1699 = vsel %vm1697, %v1696, %v1677
    %v1700 = vld [vmem:[%s29] sm:$0x1]
    %v1702 = vperm.slane %v1700, 0
    %v1704 = vadd.f32 %v1487, %v1702
    %v1705 = vadd.f32 %v1489, %v1702
    %v1706 = vadd.f32 %v1698, %v1702
    %v1707 = vadd.f32 %v1699, %v1702
    %v1708 = vld [vmem:[%s31] sm:$0xff]
    %v1709 = vadd.f32 %v1704, %v1708
    %v1710 = vadd.f32 %v1705, %v1708
    %v1711 = vadd.f32 %v1706, %v1708
    %v1712 = vadd.f32 %v1707, %v1708
    %v1713 = vld [vmem:[%s33] sm:$0xf]
    %v1714 = vld [vmem:[%s33 + $0x4] sm:$0xf]
    %v1715 = vld [vmem:[%s33 + $0x8] sm:$0xf]
    %v1716 = vld [vmem:[%s33 + $0xc] sm:$0xf]
    %v1717 = vld [vmem:[%s35] sm:$0x1]
    %v1718 = vpack.c.bf16 %v1710, %v1709
    %v1719 = vpack.c.bf16 %v1712, %v1711
    %v1721 = vperm.slane %v1717, 0
    %v1727 = vunpack.c.l.b16 %v1713
    %v1728 = vunpack.c.l.b16 %v1714
    %v1729 = vunpack.c.l.b16 %v1715
    %v1730 = vunpack.c.l.b16 %v1716
    %v1731 = vpack.c.b16 %v1728, %v1727
    %v1732 = vpack.c.b16 %v1730, %v1729
    %v1736 = vsel %vm300, %v1718, 0
    %v1739 = vsel %vm300, %v1719, 0
    %1741 = vmatpush.bf16.msra.mxu0 0
    %1742 = vmatpush.bf16.msra.mxu0 0
    %1743 = vmatpush.bf16.msra.mxu0 0
    %1744 = vmatpush.bf16.msra.mxu0 0
    %1745 = vmatpush.bf16.msra.mxu0 0
    %1746 = vmatpush.bf16.msra.mxu0 0
    %1747 = vmatpush.bf16.msra.mxu0 %v1732
    %1748 = vmatpush.bf16.msra.mxu0 %v1731
    %1749 = vmatmul.bf16.gmra.mxu0 %v1736
    %v1750 = vpop.f32.mrf.mxu0
    %v1751 = vadd.f32 %v1721, %v1750
    %v1752 = vpop.f32.mrf.mxu0
    %v1753 = vadd.f32 %v1721, %v1752
    %1754 = vmatmul.bf16.gmra.mxu0 %v1739
    %v1755 = vpop.f32.mrf.mxu0
    %v1756 = vadd.f32 %v1721, %v1755
    %v1757 = vpop.f32.mrf.mxu0
    %v1758 = vadd.f32 %v1721, %v1757
    %1759 = vdwg.mxu0
    %v1760 = vpack.c.bf16 %v1751, %v1751
    %v1761 = vpack.c.bf16 %v1753, %v1753
    %v1762 = vpack.c.bf16 %v1756, %v1756
    %v1763 = vpack.c.bf16 %v1758, %v1758
    %v1765 = vunpack.c.l.b16 %v1760
    %v1766 = vpack.c.b16 %v1765, %v1765
    %1767 = vrot.lane.b32.xlu0 %v1766, 96
    %v1768 = vpop.permute.xlu0 %1767
    %vm1769 = vcmask 64512
    %v1771 = vsel %vm1769, %v1760, 0
    %v1774 = vsel %vm1769, %v1768, 0
    %1776 = vmatpush.bf16.xpose.msra.mxu0 0
    %1777 = vmatpush.bf16.xpose.msra.mxu0 0
    %1778 = vmatpush.bf16.xpose.msra.mxu0 0
    %1779 = vmatpush.bf16.xpose.msra.mxu0 0
    %1780 = vmatpush.bf16.xpose.msra.mxu0 0
    %1781 = vmatpush.bf16.xpose.msra.mxu0 0
    %1782 = vmatpush.bf16.xpose.msra.mxu0 0
    %1783 = vmatpush.bf16.xpose.msra.mxu0 %v1774
    %1784 = vmatmul.bf16.gmra.mxu0 %v1771
    %v1785 = vpop.f32.mrf.mxu0
    %v1786 = vadd.f32 0.0, %v1785
    %v1787 = vpop.f32.mrf.mxu0
    %1788 = vdwg.mxu0
    %v1790 = vunpack.c.l.b16 %v1761
    %v1791 = vpack.c.b16 %v1790, %v1790
    %1792 = vrot.lane.b32.xlu0 %v1791, 96
    %v1793 = vpop.permute.xlu0 %1792
    %v1795 = vsel %vm1769, %v1761, 0
    %v1798 = vsel %vm1769, %v1793, 0
    %1800 = vmatpush.bf16.xpose.msra.mxu0 0
    %1801 = vmatpush.bf16.xpose.msra.mxu0 0
    %1802 = vmatpush.bf16.xpose.msra.mxu0 0
    %1803 = vmatpush.bf16.xpose.msra.mxu0 0
    %1804 = vmatpush.bf16.xpose.msra.mxu0 0
    %1805 = vmatpush.bf16.xpose.msra.mxu0 0
    %1806 = vmatpush.bf16.xpose.msra.mxu0 0
    %1807 = vmatpush.bf16.xpose.msra.mxu0 %v1798
    %1808 = vmatmul.bf16.gmra.mxu0 %v1795
    %v1809 = vpop.f32.mrf.mxu0
    %v1810 = vadd.f32 0.0, %v1809
    %v1811 = vpop.f32.mrf.mxu0
    %1812 = vdwg.mxu0
    %v1814 = vunpack.c.l.b16 %v1762
    %v1815 = vpack.c.b16 %v1814, %v1814
    %1816 = vrot.lane.b32.xlu0 %v1815, 96
    %v1817 = vpop.permute.xlu0 %1816
    %v1819 = vsel %vm1769, %v1762, 0
    %v1822 = vsel %vm1769, %v1817, 0
    %1824 = vmatpush.bf16.xpose.msra.mxu0 0
    %1825 = vmatpush.bf16.xpose.msra.mxu0 0
    %1826 = vmatpush.bf16.xpose.msra.mxu0 0
    %1827 = vmatpush.bf16.xpose.msra.mxu0 0
    %1828 = vmatpush.bf16.xpose.msra.mxu0 0
    %1829 = vmatpush.bf16.xpose.msra.mxu0 0
    %1830 = vmatpush.bf16.xpose.msra.mxu0 0
    %1831 = vmatpush.bf16.xpose.msra.mxu0 %v1822
    %1832 = vmatmul.bf16.gmra.mxu0 %v1819
    %v1833 = vpop.f32.mrf.mxu0
    %v1834 = vadd.f32 0.0, %v1833
    %v1835 = vpop.f32.mrf.mxu0
    %1836 = vdwg.mxu0
    %v1838 = vunpack.c.l.b16 %v1763
    %v1839 = vpack.c.b16 %v1838, %v1838
    %1840 = vrot.lane.b32.xlu0 %v1839, 96
    %v1841 = vpop.permute.xlu0 %1840
    %v1843 = vsel %vm1769, %v1763, 0
    %v1846 = vsel %vm1769, %v1841, 0
    %1848 = vmatpush.bf16.xpose.msra.mxu0 0
    %1849 = vmatpush.bf16.xpose.msra.mxu0 0
    %1850 = vmatpush.bf16.xpose.msra.mxu0 0
    %1851 = vmatpush.bf16.xpose.msra.mxu0 0
    %1852 = vmatpush.bf16.xpose.msra.mxu0 0
    %1853 = vmatpush.bf16.xpose.msra.mxu0 0
    %1854 = vmatpush.bf16.xpose.msra.mxu0 0
    %1855 = vmatpush.bf16.xpose.msra.mxu0 %v1846
    %1856 = vmatmul.bf16.gmra.mxu0 %v1843
    %v1857 = vpop.f32.mrf.mxu0
    %v1858 = vadd.f32 0.0, %v1857
    %v1859 = vpop.f32.mrf.mxu0
    %1860 = vdwg.mxu0
    %v1861 = vsel %vm1769, %v1786, -inf
    %1862 = vmax.xlane.f32.xlu0 %v1861
    %v1863 = vpop.xlane.xlu0 %1862
    %v1864 = vsel %vm1769, %v1810, -inf
    %1865 = vmax.xlane.f32.xlu0 %v1864
    %v1866 = vpop.xlane.xlu0 %1865
    %v1867 = vsel %vm1769, %v1834, -inf
    %1868 = vmax.xlane.f32.xlu0 %v1867
    %v1869 = vpop.xlane.xlu0 %1868
    %v1870 = vsel %vm1769, %v1858, -inf
    %1871 = vmax.xlane.f32.xlu0 %v1870
    %v1872 = vpop.xlane.xlu0 %1871
    %v1873 = vsub.f32 %v1786, %v1863
    %v1874 = vsub.f32 %v1810, %v1866
    %v1875 = vsub.f32 %v1834, %v1869
    %v1876 = vsub.f32 %v1858, %v1872
    %v1877 = vmul.f32 %v1873, 1.442695
    %v1878 = vpow.pop %v1877
    %v1879 = vmul.f32 %v1874, 1.442695
    %v1880 = vpow.pop %v1879
    %v1881 = vmul.f32 %v1875, 1.442695
    %v1882 = vpow.pop %v1881
    %v1883 = vmul.f32 %v1876, 1.442695
    %v1884 = vpow.pop %v1883
    %v1885 = vsel %vm1769, %v1878, 0.0
    %1886 = vadd.xlane.f32.xlu0 %v1885
    %v1887 = vpop.xlane.xlu0 %1886
    %v1888 = vsel %vm1769, %v1880, 0.0
    %1889 = vadd.xlane.f32.xlu0 %v1888
    %v1890 = vpop.xlane.xlu0 %1889
    %v1891 = vsel %vm1769, %v1882, 0.0
    %1892 = vadd.xlane.f32.xlu0 %v1891
    %v1893 = vpop.xlane.xlu0 %1892
    %v1894 = vsel %vm1769, %v1884, 0.0
    %1895 = vadd.xlane.f32.xlu0 %v1894
    %v1896 = vpop.xlane.xlu0 %1895
    %v1897 = vrcp.pop %v1887
    %v1898 = vrcp.pop %v1890
    %v1899 = vrcp.pop %v1893
    %v1900 = vrcp.pop %v1896
    %v1901 = vmul.f32 %v1878, %v1897
    %v1902 = vmul.f32 %v1880, %v1898
    %v1903 = vmul.f32 %v1882, %v1899
    %v1904 = vmul.f32 %v1884, %v1900
    %v1905 = vpack.c.bf16 %v1901, %v1901
    %v1906 = vpack.c.bf16 %v1902, %v1902
    %v1907 = vpack.c.bf16 %v1903, %v1903
    %v1908 = vpack.c.bf16 %v1904, %v1904
    %1909 = vrot.lane.b32.xlu0 %v1766, 64
    %v1910 = vpop.permute.xlu0 %1909
    %v1912 = vsel %vm1769, %v1905, 0
    %v1915 = vsel %vm1688, %v1910, 0
    %1917 = vmatpush.bf16.msra.mxu0 0
    %1918 = vmatpush.bf16.msra.mxu0 0
    %1919 = vmatpush.bf16.msra.mxu0 0
    %1920 = vmatpush.bf16.msra.mxu0 0
    %1921 = vmatpush.bf16.msra.mxu0 0
    %1922 = vmatpush.bf16.msra.mxu0 0
    %1923 = vmatpush.bf16.msra.mxu0 0
    %1924 = vmatpush.bf16.msra.mxu0 %v1915
    %1925 = vmatmul.bf16.gmra.mxu0 %v1912
    %v1926 = vpop.f32.mrf.mxu0
    %v1927 = vadd.f32 0.0, %v1926
    %v1928 = vpop.f32.mrf.mxu0
    %1929 = vdwg.mxu0
    %1930 = vrot.lane.b32.xlu0 %v1791, 64
    %v1931 = vpop.permute.xlu0 %1930
    %v1933 = vsel %vm1769, %v1906, 0
    %v1936 = vsel %vm1688, %v1931, 0
    %1938 = vmatpush.bf16.msra.mxu0 0
    %1939 = vmatpush.bf16.msra.mxu0 0
    %1940 = vmatpush.bf16.msra.mxu0 0
    %1941 = vmatpush.bf16.msra.mxu0 0
    %1942 = vmatpush.bf16.msra.mxu0 0
    %1943 = vmatpush.bf16.msra.mxu0 0
    %1944 = vmatpush.bf16.msra.mxu0 0
    %1945 = vmatpush.bf16.msra.mxu0 %v1936
    %1946 = vmatmul.bf16.gmra.mxu0 %v1933
    %v1947 = vpop.f32.mrf.mxu0
    %v1948 = vadd.f32 0.0, %v1947
    %v1949 = vpop.f32.mrf.mxu0
    %1950 = vdwg.mxu0
    %1951 = vrot.lane.b32.xlu0 %v1815, 64
    %v1952 = vpop.permute.xlu0 %1951
    %v1954 = vsel %vm1769, %v1907, 0
    %v1957 = vsel %vm1688, %v1952, 0
    %1959 = vmatpush.bf16.msra.mxu0 0
    %1960 = vmatpush.bf16.msra.mxu0 0
    %1961 = vmatpush.bf16.msra.mxu0 0
    %1962 = vmatpush.bf16.msra.mxu0 0
    %1963 = vmatpush.bf16.msra.mxu0 0
    %1964 = vmatpush.bf16.msra.mxu0 0
    %1965 = vmatpush.bf16.msra.mxu0 0
    %1966 = vmatpush.bf16.msra.mxu0 %v1957
    %1967 = vmatmul.bf16.gmra.mxu0 %v1954
    %v1968 = vpop.f32.mrf.mxu0
    %v1969 = vadd.f32 0.0, %v1968
    %v1970 = vpop.f32.mrf.mxu0
    %1971 = vdwg.mxu0
    %1972 = vrot.lane.b32.xlu0 %v1839, 64
    %v1973 = vpop.permute.xlu0 %1972
    %v1975 = vsel %vm1769, %v1908, 0
    %v1978 = vsel %vm1688, %v1973, 0
    %1980 = vmatpush.bf16.msra.mxu0 0
    %1981 = vmatpush.bf16.msra.mxu0 0
    %1982 = vmatpush.bf16.msra.mxu0 0
    %1983 = vmatpush.bf16.msra.mxu0 0
    %1984 = vmatpush.bf16.msra.mxu0 0
    %1985 = vmatpush.bf16.msra.mxu0 0
    %1986 = vmatpush.bf16.msra.mxu0 0
    %1987 = vmatpush.bf16.msra.mxu0 %v1978
    %1988 = vmatmul.bf16.gmra.mxu0 %v1975
    %v1989 = vpop.f32.mrf.mxu0
    %v1990 = vadd.f32 0.0, %v1989
    %v1991 = vpop.f32.mrf.mxu0
    %1992 = vdwg.mxu0
    %1993 = vrot.lane.b32.xlu0 %v1766, 120
    %v1994 = vpop.permute.xlu0 %1993
    %1995 = vrot.lane.b32.xlu0 %v1766, 88
    %v1996 = vpop.permute.xlu0 %1995
    %v1998 = vsel %vm1769, %v1994, 0
    %v2001 = vsel %vm1769, %v1996, 0
    %2003 = vmatpush.bf16.xpose.msra.mxu0 0
    %2004 = vmatpush.bf16.xpose.msra.mxu0 0
    %2005 = vmatpush.bf16.xpose.msra.mxu0 0
    %2006 = vmatpush.bf16.xpose.msra.mxu0 0
    %2007 = vmatpush.bf16.xpose.msra.mxu0 0
    %2008 = vmatpush.bf16.xpose.msra.mxu0 0
    %2009 = vmatpush.bf16.xpose.msra.mxu0 0
    %2010 = vmatpush.bf16.xpose.msra.mxu0 %v2001
    %2011 = vmatmul.bf16.gmra.mxu0 %v1998
    %v2012 = vpop.f32.mrf.mxu0
    %v2013 = vadd.f32 0.0, %v2012
    %v2014 = vpop.f32.mrf.mxu0
    %2015 = vdwg.mxu0
    %2016 = vrot.lane.b32.xlu0 %v1791, 120
    %v2017 = vpop.permute.xlu0 %2016
    %2018 = vrot.lane.b32.xlu0 %v1791, 88
    %v2019 = vpop.permute.xlu0 %2018
    %v2021 = vsel %vm1769, %v2017, 0
    %v2024 = vsel %vm1769, %v2019, 0
    %2026 = vmatpush.bf16.xpose.msra.mxu0 0
    %2027 = vmatpush.bf16.xpose.msra.mxu0 0
    %2028 = vmatpush.bf16.xpose.msra.mxu0 0
    %2029 = vmatpush.bf16.xpose.msra.mxu0 0
    %2030 = vmatpush.bf16.xpose.msra.mxu0 0
    %2031 = vmatpush.bf16.xpose.msra.mxu0 0
    %2032 = vmatpush.bf16.xpose.msra.mxu0 0
    %2033 = vmatpush.bf16.xpose.msra.mxu0 %v2024
    %2034 = vmatmul.bf16.gmra.mxu0 %v2021
    %v2035 = vpop.f32.mrf.mxu0
    %v2036 = vadd.f32 0.0, %v2035
    %v2037 = vpop.f32.mrf.mxu0
    %2038 = vdwg.mxu0
    %2039 = vrot.lane.b32.xlu0 %v1815, 120
    %v2040 = vpop.permute.xlu0 %2039
    %2041 = vrot.lane.b32.xlu0 %v1815, 88
    %v2042 = vpop.permute.xlu0 %2041
    %v2044 = vsel %vm1769, %v2040, 0
    %v2047 = vsel %vm1769, %v2042, 0
    %2049 = vmatpush.bf16.xpose.msra.mxu0 0
    %2050 = vmatpush.bf16.xpose.msra.mxu0 0
    %2051 = vmatpush.bf16.xpose.msra.mxu0 0
    %2052 = vmatpush.bf16.xpose.msra.mxu0 0
    %2053 = vmatpush.bf16.xpose.msra.mxu0 0
    %2054 = vmatpush.bf16.xpose.msra.mxu0 0
    %2055 = vmatpush.bf16.xpose.msra.mxu0 0
    %2056 = vmatpush.bf16.xpose.msra.mxu0 %v2047
    %2057 = vmatmul.bf16.gmra.mxu0 %v2044
    %v2058 = vpop.f32.mrf.mxu0
    %v2059 = vadd.f32 0.0, %v2058
    %v2060 = vpop.f32.mrf.mxu0
    %2061 = vdwg.mxu0
    %2062 = vrot.lane.b32.xlu0 %v1839, 120
    %v2063 = vpop.permute.xlu0 %2062
    %2064 = vrot.lane.b32.xlu0 %v1839, 88
    %v2065 = vpop.permute.xlu0 %2064
    %v2067 = vsel %vm1769, %v2063, 0
    %v2070 = vsel %vm1769, %v2065, 0
    %2072 = vmatpush.bf16.xpose.msra.mxu0 0
    %2073 = vmatpush.bf16.xpose.msra.mxu0 0
    %2074 = vmatpush.bf16.xpose.msra.mxu0 0
    %2075 = vmatpush.bf16.xpose.msra.mxu0 0
    %2076 = vmatpush.bf16.xpose.msra.mxu0 0
    %2077 = vmatpush.bf16.xpose.msra.mxu0 0
    %2078 = vmatpush.bf16.xpose.msra.mxu0 0
    %2079 = vmatpush.bf16.xpose.msra.mxu0 %v2070
    %2080 = vmatmul.bf16.gmra.mxu0 %v2067
    %v2081 = vpop.f32.mrf.mxu0
    %v2082 = vadd.f32 0.0, %v2081
    %v2083 = vpop.f32.mrf.mxu0
    %2084 = vdwg.mxu0
    %v2085 = vsel %vm1769, %v2013, -inf
    %2086 = vmax.xlane.f32.xlu0 %v2085
    %v2087 = vpop.xlane.xlu0 %2086
    %v2088 = vsel %vm1769, %v2036, -inf
    %2089 = vmax.xlane.f32.xlu0 %v2088
    %v2090 = vpop.xlane.xlu0 %2089
    %v2091 = vsel %vm1769, %v2059, -inf
    %2092 = vmax.xlane.f32.xlu0 %v2091
    %v2093 = vpop.xlane.xlu0 %2092
    %v2094 = vsel %vm1769, %v2082, -inf
    %2095 = vmax.xlane.f32.xlu0 %v2094
    %v2096 = vpop.xlane.xlu0 %2095
    %v2097 = vsub.f32 %v2013, %v2087
    %v2098 = vsub.f32 %v2036, %v2090
    %v2099 = vsub.f32 %v2059, %v2093
    %v2100 = vsub.f32 %v2082, %v2096
    %v2101 = vmul.f32 %v2097, 1.442695
    %v2102 = vpow.pop %v2101
    %v2103 = vmul.f32 %v2098, 1.442695
    %v2104 = vpow.pop %v2103
    %v2105 = vmul.f32 %v2099, 1.442695
    %v2106 = vpow.pop %v2105
    %v2107 = vmul.f32 %v2100, 1.442695
    %v2108 = vpow.pop %v2107
    %v2109 = vsel %vm1769, %v2102, 0.0
    %2110 = vadd.xlane.f32.xlu0 %v2109
    %v2111 = vpop.xlane.xlu0 %2110
    %v2112 = vsel %vm1769, %v2104, 0.0
    %2113 = vadd.xlane.f32.xlu0 %v2112
    %v2114 = vpop.xlane.xlu0 %2113
    %v2115 = vsel %vm1769, %v2106, 0.0
    %2116 = vadd.xlane.f32.xlu0 %v2115
    %v2117 = vpop.xlane.xlu0 %2116
    %v2118 = vsel %vm1769, %v2108, 0.0
    %2119 = vadd.xlane.f32.xlu0 %v2118
    %v2120 = vpop.xlane.xlu0 %2119
    %v2121 = vrcp.pop %v2111
    %v2122 = vrcp.pop %v2114
    %v2123 = vrcp.pop %v2117
    %v2124 = vrcp.pop %v2120
    %v2125 = vmul.f32 %v2102, %v2121
    %v2126 = vmul.f32 %v2104, %v2122
    %v2127 = vmul.f32 %v2106, %v2123
    %v2128 = vmul.f32 %v2108, %v2124
    %v2129 = vpack.c.bf16 %v2125, %v2125
    %v2130 = vpack.c.bf16 %v2126, %v2126
    %v2131 = vpack.c.bf16 %v2127, %v2127
    %v2132 = vpack.c.bf16 %v2128, %v2128
    %2133 = vrot.lane.b32.xlu0 %v1766, 56
    %v2134 = vpop.permute.xlu0 %2133
    %v2136 = vsel %vm1769, %v2129, 0
    %v2139 = vsel %vm1688, %v2134, 0
    %2141 = vmatpush.bf16.msra.mxu0 0
    %2142 = vmatpush.bf16.msra.mxu0 0
    %2143 = vmatpush.bf16.msra.mxu0 0
    %2144 = vmatpush.bf16.msra.mxu0 0
    %2145 = vmatpush.bf16.msra.mxu0 0
    %2146 = vmatpush.bf16.msra.mxu0 0
    %2147 = vmatpush.bf16.msra.mxu0 0
    %2148 = vmatpush.bf16.msra.mxu0 %v2139
    %2149 = vmatmul.bf16.gmra.mxu0 %v2136
    %v2150 = vpop.f32.mrf.mxu0
    %v2151 = vadd.f32 0.0, %v2150
    %v2152 = vpop.f32.mrf.mxu0
    %2153 = vdwg.mxu0
    %2154 = vrot.lane.b32.xlu0 %v1791, 56
    %v2155 = vpop.permute.xlu0 %2154
    %v2157 = vsel %vm1769, %v2130, 0
    %v2160 = vsel %vm1688, %v2155, 0
    %2162 = vmatpush.bf16.msra.mxu0 0
    %2163 = vmatpush.bf16.msra.mxu0 0
    %2164 = vmatpush.bf16.msra.mxu0 0
    %2165 = vmatpush.bf16.msra.mxu0 0
    %2166 = vmatpush.bf16.msra.mxu0 0
    %2167 = vmatpush.bf16.msra.mxu0 0
    %2168 = vmatpush.bf16.msra.mxu0 0
    %2169 = vmatpush.bf16.msra.mxu0 %v2160
    %2170 = vmatmul.bf16.gmra.mxu0 %v2157
    %v2171 = vpop.f32.mrf.mxu0
    %v2172 = vadd.f32 0.0, %v2171
    %v2173 = vpop.f32.mrf.mxu0
    %2174 = vdwg.mxu0
    %2175 = vrot.lane.b32.xlu0 %v1815, 56
    %v2176 = vpop.permute.xlu0 %2175
    %v2178 = vsel %vm1769, %v2131, 0
    %v2181 = vsel %vm1688, %v2176, 0
    %2183 = vmatpush.bf16.msra.mxu0 0
    %2184 = vmatpush.bf16.msra.mxu0 0
    %2185 = vmatpush.bf16.msra.mxu0 0
    %2186 = vmatpush.bf16.msra.mxu0 0
    %2187 = vmatpush.bf16.msra.mxu0 0
    %2188 = vmatpush.bf16.msra.mxu0 0
    %2189 = vmatpush.bf16.msra.mxu0 0
    %2190 = vmatpush.bf16.msra.mxu0 %v2181
    %2191 = vmatmul.bf16.gmra.mxu0 %v2178
    %v2192 = vpop.f32.mrf.mxu0
    %v2193 = vadd.f32 0.0, %v2192
    %v2194 = vpop.f32.mrf.mxu0
    %2195 = vdwg.mxu0
    %2196 = vrot.lane.b32.xlu0 %v1839, 56
    %v2197 = vpop.permute.xlu0 %2196
    %v2199 = vsel %vm1769, %v2132, 0
    %v2202 = vsel %vm1688, %v2197, 0
    %2204 = vmatpush.bf16.msra.mxu0 0
    %2205 = vmatpush.bf16.msra.mxu0 0
    %2206 = vmatpush.bf16.msra.mxu0 0
    %2207 = vmatpush.bf16.msra.mxu0 0
    %2208 = vmatpush.bf16.msra.mxu0 0
    %2209 = vmatpush.bf16.msra.mxu0 0
    %2210 = vmatpush.bf16.msra.mxu0 0
    %2211 = vmatpush.bf16.msra.mxu0 %v2202
    %2212 = vmatmul.bf16.gmra.mxu0 %v2199
    %v2213 = vpop.f32.mrf.mxu0
    %v2214 = vadd.f32 0.0, %v2213
    %v2215 = vpop.f32.mrf.mxu0
    %2216 = vdwg.mxu0
    %2217 = vrot.lane.b32.xlu0 %v1766, 112
    %v2218 = vpop.permute.xlu0 %2217
    %2219 = vrot.lane.b32.xlu0 %v1766, 80
    %v2220 = vpop.permute.xlu0 %2219
    %v2222 = vsel %vm1769, %v2218, 0
    %v2225 = vsel %vm1769, %v2220, 0
    %2227 = vmatpush.bf16.xpose.msra.mxu0 0
    %2228 = vmatpush.bf16.xpose.msra.mxu0 0
    %2229 = vmatpush.bf16.xpose.msra.mxu0 0
    %2230 = vmatpush.bf16.xpose.msra.mxu0 0
    %2231 = vmatpush.bf16.xpose.msra.mxu0 0
    %2232 = vmatpush.bf16.xpose.msra.mxu0 0
    %2233 = vmatpush.bf16.xpose.msra.mxu0 0
    %2234 = vmatpush.bf16.xpose.msra.mxu0 %v2225
    %2235 = vmatmul.bf16.gmra.mxu0 %v2222
    %v2236 = vpop.f32.mrf.mxu0
    %v2237 = vadd.f32 0.0, %v2236
    %v2238 = vpop.f32.mrf.mxu0
    %2239 = vdwg.mxu0
    %2240 = vrot.lane.b32.xlu0 %v1791, 112
    %v2241 = vpop.permute.xlu0 %2240
    %2242 = vrot.lane.b32.xlu0 %v1791, 80
    %v2243 = vpop.permute.xlu0 %2242
    %v2245 = vsel %vm1769, %v2241, 0
    %v2248 = vsel %vm1769, %v2243, 0
    %2250 = vmatpush.bf16.xpose.msra.mxu0 0
    %2251 = vmatpush.bf16.xpose.msra.mxu0 0
    %2252 = vmatpush.bf16.xpose.msra.mxu0 0
    %2253 = vmatpush.bf16.xpose.msra.mxu0 0
    %2254 = vmatpush.bf16.xpose.msra.mxu0 0
    %2255 = vmatpush.bf16.xpose.msra.mxu0 0
    %2256 = vmatpush.bf16.xpose.msra.mxu0 0
    %2257 = vmatpush.bf16.xpose.msra.mxu0 %v2248
    %2258 = vmatmul.bf16.gmra.mxu0 %v2245
    %v2259 = vpop.f32.mrf.mxu0
    %v2260 = vadd.f32 0.0, %v2259
    %v2261 = vpop.f32.mrf.mxu0
    %2262 = vdwg.mxu0
    %2263 = vrot.lane.b32.xlu0 %v1815, 112
    %v2264 = vpop.permute.xlu0 %2263
    %2265 = vrot.lane.b32.xlu0 %v1815, 80
    %v2266 = vpop.permute.xlu0 %2265
    %v2268 = vsel %vm1769, %v2264, 0
    %v2271 = vsel %vm1769, %v2266, 0
    %2273 = vmatpush.bf16.xpose.msra.mxu0 0
    %2274 = vmatpush.bf16.xpose.msra.mxu0 0
    %2275 = vmatpush.bf16.xpose.msra.mxu0 0
    %2276 = vmatpush.bf16.xpose.msra.mxu0 0
    %2277 = vmatpush.bf16.xpose.msra.mxu0 0
    %2278 = vmatpush.bf16.xpose.msra.mxu0 0
    %2279 = vmatpush.bf16.xpose.msra.mxu0 0
    %2280 = vmatpush.bf16.xpose.msra.mxu0 %v2271
    %2281 = vmatmul.bf16.gmra.mxu0 %v2268
    %v2282 = vpop.f32.mrf.mxu0
    %v2283 = vadd.f32 0.0, %v2282
    %v2284 = vpop.f32.mrf.mxu0
    %2285 = vdwg.mxu0
    %2286 = vrot.lane.b32.xlu0 %v1839, 112
    %v2287 = vpop.permute.xlu0 %2286
    %2288 = vrot.lane.b32.xlu0 %v1839, 80
    %v2289 = vpop.permute.xlu0 %2288
    %v2291 = vsel %vm1769, %v2287, 0
    %v2294 = vsel %vm1769, %v2289, 0
    %2296 = vmatpush.bf16.xpose.msra.mxu0 0
    %2297 = vmatpush.bf16.xpose.msra.mxu0 0
    %2298 = vmatpush.bf16.xpose.msra.mxu0 0
    %2299 = vmatpush.bf16.xpose.msra.mxu0 0
    %2300 = vmatpush.bf16.xpose.msra.mxu0 0
    %2301 = vmatpush.bf16.xpose.msra.mxu0 0
    %2302 = vmatpush.bf16.xpose.msra.mxu0 0
    %2303 = vmatpush.bf16.xpose.msra.mxu0 %v2294
    %2304 = vmatmul.bf16.gmra.mxu0 %v2291
    %v2305 = vpop.f32.mrf.mxu0
    %v2306 = vadd.f32 0.0, %v2305
    %v2307 = vpop.f32.mrf.mxu0
    %2308 = vdwg.mxu0
    %v2309 = vsel %vm1769, %v2237, -inf
    %2310 = vmax.xlane.f32.xlu0 %v2309
    %v2311 = vpop.xlane.xlu0 %2310
    %v2312 = vsel %vm1769, %v2260, -inf
    %2313 = vmax.xlane.f32.xlu0 %v2312
    %v2314 = vpop.xlane.xlu0 %2313
    %v2315 = vsel %vm1769, %v2283, -inf
    %2316 = vmax.xlane.f32.xlu0 %v2315
    %v2317 = vpop.xlane.xlu0 %2316
    %v2318 = vsel %vm1769, %v2306, -inf
    %2319 = vmax.xlane.f32.xlu0 %v2318
    %v2320 = vpop.xlane.xlu0 %2319
    %v2321 = vsub.f32 %v2237, %v2311
    %v2322 = vsub.f32 %v2260, %v2314
    %v2323 = vsub.f32 %v2283, %v2317
    %v2324 = vsub.f32 %v2306, %v2320
    %v2325 = vmul.f32 %v2321, 1.442695
    %v2326 = vpow.pop %v2325
    %v2327 = vmul.f32 %v2322, 1.442695
    %v2328 = vpow.pop %v2327
    %v2329 = vmul.f32 %v2323, 1.442695
    %v2330 = vpow.pop %v2329
    %v2331 = vmul.f32 %v2324, 1.442695
    %v2332 = vpow.pop %v2331
    %v2333 = vsel %vm1769, %v2326, 0.0
    %2334 = vadd.xlane.f32.xlu0 %v2333
    %v2335 = vpop.xlane.xlu0 %2334
    %v2336 = vsel %vm1769, %v2328, 0.0
    %2337 = vadd.xlane.f32.xlu0 %v2336
    %v2338 = vpop.xlane.xlu0 %2337
    %v2339 = vsel %vm1769, %v2330, 0.0
    %2340 = vadd.xlane.f32.xlu0 %v2339
    %v2341 = vpop.xlane.xlu0 %2340
    %v2342 = vsel %vm1769, %v2332, 0.0
    %2343 = vadd.xlane.f32.xlu0 %v2342
    %v2344 = vpop.xlane.xlu0 %2343
    %v2345 = vrcp.pop %v2335
    %v2346 = vrcp.pop %v2338
    %v2347 = vrcp.pop %v2341
    %v2348 = vrcp.pop %v2344
    %v2349 = vmul.f32 %v2326, %v2345
    %v2350 = vmul.f32 %v2328, %v2346
    %v2351 = vmul.f32 %v2330, %v2347
    %v2352 = vmul.f32 %v2332, %v2348
    %v2353 = vpack.c.bf16 %v2349, %v2349
    %v2354 = vpack.c.bf16 %v2350, %v2350
    %v2355 = vpack.c.bf16 %v2351, %v2351
    %v2356 = vpack.c.bf16 %v2352, %v2352
    %2357 = vrot.lane.b32.xlu0 %v1766, 48
    %v2358 = vpop.permute.xlu0 %2357
    %v2360 = vsel %vm1769, %v2353, 0
    %v2363 = vsel %vm1688, %v2358, 0
    %2365 = vmatpush.bf16.msra.mxu0 0
    %2366 = vmatpush.bf16.msra.mxu0 0
    %2367 = vmatpush.bf16.msra.mxu0 0
    %2368 = vmatpush.bf16.msra.mxu0 0
    %2369 = vmatpush.bf16.msra.mxu0 0
    %2370 = vmatpush.bf16.msra.mxu0 0
    %2371 = vmatpush.bf16.msra.mxu0 0
    %2372 = vmatpush.bf16.msra.mxu0 %v2363
    %2373 = vmatmul.bf16.gmra.mxu0 %v2360
    %v2374 = vpop.f32.mrf.mxu0
    %v2375 = vadd.f32 0.0, %v2374
    %v2376 = vpop.f32.mrf.mxu0
    %2377 = vdwg.mxu0
    %2378 = vrot.lane.b32.xlu0 %v1791, 48
    %v2379 = vpop.permute.xlu0 %2378
    %v2381 = vsel %vm1769, %v2354, 0
    %v2384 = vsel %vm1688, %v2379, 0
    %2386 = vmatpush.bf16.msra.mxu0 0
    %2387 = vmatpush.bf16.msra.mxu0 0
    %2388 = vmatpush.bf16.msra.mxu0 0
    %2389 = vmatpush.bf16.msra.mxu0 0
    %2390 = vmatpush.bf16.msra.mxu0 0
    %2391 = vmatpush.bf16.msra.mxu0 0
    %2392 = vmatpush.bf16.msra.mxu0 0
    %2393 = vmatpush.bf16.msra.mxu0 %v2384
    %2394 = vmatmul.bf16.gmra.mxu0 %v2381
    %v2395 = vpop.f32.mrf.mxu0
    %v2396 = vadd.f32 0.0, %v2395
    %v2397 = vpop.f32.mrf.mxu0
    %2398 = vdwg.mxu0
    %2399 = vrot.lane.b32.xlu0 %v1815, 48
    %v2400 = vpop.permute.xlu0 %2399
    %v2402 = vsel %vm1769, %v2355, 0
    %v2405 = vsel %vm1688, %v2400, 0
    %2407 = vmatpush.bf16.msra.mxu0 0
    %2408 = vmatpush.bf16.msra.mxu0 0
    %2409 = vmatpush.bf16.msra.mxu0 0
    %2410 = vmatpush.bf16.msra.mxu0 0
    %2411 = vmatpush.bf16.msra.mxu0 0
    %2412 = vmatpush.bf16.msra.mxu0 0
    %2413 = vmatpush.bf16.msra.mxu0 0
    %2414 = vmatpush.bf16.msra.mxu0 %v2405
    %2415 = vmatmul.bf16.gmra.mxu0 %v2402
    %v2416 = vpop.f32.mrf.mxu0
    %v2417 = vadd.f32 0.0, %v2416
    %v2418 = vpop.f32.mrf.mxu0
    %2419 = vdwg.mxu0
    %2420 = vrot.lane.b32.xlu0 %v1839, 48
    %v2421 = vpop.permute.xlu0 %2420
    %v2423 = vsel %vm1769, %v2356, 0
    %v2426 = vsel %vm1688, %v2421, 0
    %2428 = vmatpush.bf16.msra.mxu0 0
    %2429 = vmatpush.bf16.msra.mxu0 0
    %2430 = vmatpush.bf16.msra.mxu0 0
    %2431 = vmatpush.bf16.msra.mxu0 0
    %2432 = vmatpush.bf16.msra.mxu0 0
    %2433 = vmatpush.bf16.msra.mxu0 0
    %2434 = vmatpush.bf16.msra.mxu0 0
    %2435 = vmatpush.bf16.msra.mxu0 %v2426
    %2436 = vmatmul.bf16.gmra.mxu0 %v2423
    %v2437 = vpop.f32.mrf.mxu0
    %v2438 = vadd.f32 0.0, %v2437
    %v2439 = vpop.f32.mrf.mxu0
    %2440 = vdwg.mxu0
    %2441 = vrot.lane.b32.xlu0 %v1766, 104
    %v2442 = vpop.permute.xlu0 %2441
    %2443 = vrot.lane.b32.xlu0 %v1766, 72
    %v2444 = vpop.permute.xlu0 %2443
    %v2446 = vsel %vm1769, %v2442, 0
    %v2449 = vsel %vm1769, %v2444, 0
    %2451 = vmatpush.bf16.xpose.msra.mxu0 0
    %2452 = vmatpush.bf16.xpose.msra.mxu0 0
    %2453 = vmatpush.bf16.xpose.msra.mxu0 0
    %2454 = vmatpush.bf16.xpose.msra.mxu0 0
    %2455 = vmatpush.bf16.xpose.msra.mxu0 0
    %2456 = vmatpush.bf16.xpose.msra.mxu0 0
    %2457 = vmatpush.bf16.xpose.msra.mxu0 0
    %2458 = vmatpush.bf16.xpose.msra.mxu0 %v2449
    %2459 = vmatmul.bf16.gmra.mxu0 %v2446
    %v2460 = vpop.f32.mrf.mxu0
    %v2461 = vadd.f32 0.0, %v2460
    %v2462 = vpop.f32.mrf.mxu0
    %2463 = vdwg.mxu0
    %2464 = vrot.lane.b32.xlu0 %v1791, 104
    %v2465 = vpop.permute.xlu0 %2464
    %2466 = vrot.lane.b32.xlu0 %v1791, 72
    %v2467 = vpop.permute.xlu0 %2466
    %v2469 = vsel %vm1769, %v2465, 0
    %v2472 = vsel %vm1769, %v2467, 0
    %2474 = vmatpush.bf16.xpose.msra.mxu0 0
    %2475 = vmatpush.bf16.xpose.msra.mxu0 0
    %2476 = vmatpush.bf16.xpose.msra.mxu0 0
    %2477 = vmatpush.bf16.xpose.msra.mxu0 0
    %2478 = vmatpush.bf16.xpose.msra.mxu0 0
    %2479 = vmatpush.bf16.xpose.msra.mxu0 0
    %2480 = vmatpush.bf16.xpose.msra.mxu0 0
    %2481 = vmatpush.bf16.xpose.msra.mxu0 %v2472
    %2482 = vmatmul.bf16.gmra.mxu0 %v2469
    %v2483 = vpop.f32.mrf.mxu0
    %v2484 = vadd.f32 0.0, %v2483
    %v2485 = vpop.f32.mrf.mxu0
    %2486 = vdwg.mxu0
    %2487 = vrot.lane.b32.xlu0 %v1815, 104
    %v2488 = vpop.permute.xlu0 %2487
    %2489 = vrot.lane.b32.xlu0 %v1815, 72
    %v2490 = vpop.permute.xlu0 %2489
    %v2492 = vsel %vm1769, %v2488, 0
    %v2495 = vsel %vm1769, %v2490, 0
    %2497 = vmatpush.bf16.xpose.msra.mxu0 0
    %2498 = vmatpush.bf16.xpose.msra.mxu0 0
    %2499 = vmatpush.bf16.xpose.msra.mxu0 0
    %2500 = vmatpush.bf16.xpose.msra.mxu0 0
    %2501 = vmatpush.bf16.xpose.msra.mxu0 0
    %2502 = vmatpush.bf16.xpose.msra.mxu0 0
    %2503 = vmatpush.bf16.xpose.msra.mxu0 0
    %2504 = vmatpush.bf16.xpose.msra.mxu0 %v2495
    %2505 = vmatmul.bf16.gmra.mxu0 %v2492
    %v2506 = vpop.f32.mrf.mxu0
    %v2507 = vadd.f32 0.0, %v2506
    %v2508 = vpop.f32.mrf.mxu0
    %2509 = vdwg.mxu0
    %2510 = vrot.lane.b32.xlu0 %v1839, 104
    %v2511 = vpop.permute.xlu0 %2510
    %2512 = vrot.lane.b32.xlu0 %v1839, 72
    %v2513 = vpop.permute.xlu0 %2512
    %v2515 = vsel %vm1769, %v2511, 0
    %v2518 = vsel %vm1769, %v2513, 0
    %2520 = vmatpush.bf16.xpose.msra.mxu0 0
    %2521 = vmatpush.bf16.xpose.msra.mxu0 0
    %2522 = vmatpush.bf16.xpose.msra.mxu0 0
    %2523 = vmatpush.bf16.xpose.msra.mxu0 0
    %2524 = vmatpush.bf16.xpose.msra.mxu0 0
    %2525 = vmatpush.bf16.xpose.msra.mxu0 0
    %2526 = vmatpush.bf16.xpose.msra.mxu0 0
    %2527 = vmatpush.bf16.xpose.msra.mxu0 %v2518
    %2528 = vmatmul.bf16.gmra.mxu0 %v2515
    %v2529 = vpop.f32.mrf.mxu0
    %v2530 = vadd.f32 0.0, %v2529
    %v2531 = vpop.f32.mrf.mxu0
    %2532 = vdwg.mxu0
    %v2533 = vsel %vm1769, %v2461, -inf
    %2534 = vmax.xlane.f32.xlu0 %v2533
    %v2535 = vpop.xlane.xlu0 %2534
    %v2536 = vsel %vm1769, %v2484, -inf
    %2537 = vmax.xlane.f32.xlu0 %v2536
    %v2538 = vpop.xlane.xlu0 %2537
    %v2539 = vsel %vm1769, %v2507, -inf
    %2540 = vmax.xlane.f32.xlu0 %v2539
    %v2541 = vpop.xlane.xlu0 %2540
    %v2542 = vsel %vm1769, %v2530, -inf
    %2543 = vmax.xlane.f32.xlu0 %v2542
    %v2544 = vpop.xlane.xlu0 %2543
    %v2545 = vsub.f32 %v2461, %v2535
    %v2546 = vsub.f32 %v2484, %v2538
    %v2547 = vsub.f32 %v2507, %v2541
    %v2548 = vsub.f32 %v2530, %v2544
    %v2549 = vmul.f32 %v2545, 1.442695
    %v2550 = vpow.pop %v2549
    %v2551 = vmul.f32 %v2546, 1.442695
    %v2552 = vpow.pop %v2551
    %v2553 = vmul.f32 %v2547, 1.442695
    %v2554 = vpow.pop %v2553
    %v2555 = vmul.f32 %v2548, 1.442695
    %v2556 = vpow.pop %v2555
    %v2557 = vsel %vm1769, %v2550, 0.0
    %2558 = vadd.xlane.f32.xlu0 %v2557
    %v2559 = vpop.xlane.xlu0 %2558
    %v2560 = vsel %vm1769, %v2552, 0.0
    %2561 = vadd.xlane.f32.xlu0 %v2560
    %v2562 = vpop.xlane.xlu0 %2561
    %v2563 = vsel %vm1769, %v2554, 0.0
    %2564 = vadd.xlane.f32.xlu0 %v2563
    %v2565 = vpop.xlane.xlu0 %2564
    %v2566 = vsel %vm1769, %v2556, 0.0
    %2567 = vadd.xlane.f32.xlu0 %v2566
    %v2568 = vpop.xlane.xlu0 %2567
    %v2569 = vrcp.pop %v2559
    %v2570 = vrcp.pop %v2562
    %v2571 = vrcp.pop %v2565
    %v2572 = vrcp.pop %v2568
    %v2573 = vmul.f32 %v2550, %v2569
    %v2574 = vmul.f32 %v2552, %v2570
    %v2575 = vmul.f32 %v2554, %v2571
    %v2576 = vmul.f32 %v2556, %v2572
    %v2577 = vpack.c.bf16 %v2573, %v2573
    %v2578 = vpack.c.bf16 %v2574, %v2574
    %v2579 = vpack.c.bf16 %v2575, %v2575
    %v2580 = vpack.c.bf16 %v2576, %v2576
    %2581 = vrot.lane.b32.xlu0 %v1766, 40
    %v2582 = vpop.permute.xlu0 %2581
    %v2584 = vsel %vm1769, %v2577, 0
    %v2587 = vsel %vm1688, %v2582, 0
    %2589 = vmatpush.bf16.msra.mxu0 0
    %2590 = vmatpush.bf16.msra.mxu0 0
    %2591 = vmatpush.bf16.msra.mxu0 0
    %2592 = vmatpush.bf16.msra.mxu0 0
    %2593 = vmatpush.bf16.msra.mxu0 0
    %2594 = vmatpush.bf16.msra.mxu0 0
    %2595 = vmatpush.bf16.msra.mxu0 0
    %2596 = vmatpush.bf16.msra.mxu0 %v2587
    %2597 = vmatmul.bf16.gmra.mxu0 %v2584
    %v2598 = vpop.f32.mrf.mxu0
    %v2599 = vadd.f32 0.0, %v2598
    %v2600 = vpop.f32.mrf.mxu0
    %2601 = vdwg.mxu0
    %2602 = vrot.lane.b32.xlu0 %v1791, 40
    %v2603 = vpop.permute.xlu0 %2602
    %v2605 = vsel %vm1769, %v2578, 0
    %v2608 = vsel %vm1688, %v2603, 0
    %2610 = vmatpush.bf16.msra.mxu0 0
    %2611 = vmatpush.bf16.msra.mxu0 0
    %2612 = vmatpush.bf16.msra.mxu0 0
    %2613 = vmatpush.bf16.msra.mxu0 0
    %2614 = vmatpush.bf16.msra.mxu0 0
    %2615 = vmatpush.bf16.msra.mxu0 0
    %2616 = vmatpush.bf16.msra.mxu0 0
    %2617 = vmatpush.bf16.msra.mxu0 %v2608
    %2618 = vmatmul.bf16.gmra.mxu0 %v2605
    %v2619 = vpop.f32.mrf.mxu0
    %v2620 = vadd.f32 0.0, %v2619
    %v2621 = vpop.f32.mrf.mxu0
    %2622 = vdwg.mxu0
    %2623 = vrot.lane.b32.xlu0 %v1815, 40
    %v2624 = vpop.permute.xlu0 %2623
    %v2626 = vsel %vm1769, %v2579, 0
    %v2629 = vsel %vm1688, %v2624, 0
    %2631 = vmatpush.bf16.msra.mxu0 0
    %2632 = vmatpush.bf16.msra.mxu0 0
    %2633 = vmatpush.bf16.msra.mxu0 0
    %2634 = vmatpush.bf16.msra.mxu0 0
    %2635 = vmatpush.bf16.msra.mxu0 0
    %2636 = vmatpush.bf16.msra.mxu0 0
    %2637 = vmatpush.bf16.msra.mxu0 0
    %2638 = vmatpush.bf16.msra.mxu0 %v2629
    %2639 = vmatmul.bf16.gmra.mxu0 %v2626
    %v2640 = vpop.f32.mrf.mxu0
    %v2641 = vadd.f32 0.0, %v2640
    %v2642 = vpop.f32.mrf.mxu0
    %2643 = vdwg.mxu0
    %2644 = vrot.lane.b32.xlu0 %v1839, 40
    %v2645 = vpop.permute.xlu0 %2644
    %v2647 = vsel %vm1769, %v2580, 0
    %v2650 = vsel %vm1688, %v2645, 0
    %2652 = vmatpush.bf16.msra.mxu0 0
    %2653 = vmatpush.bf16.msra.mxu0 0
    %2654 = vmatpush.bf16.msra.mxu0 0
    %2655 = vmatpush.bf16.msra.mxu0 0
    %2656 = vmatpush.bf16.msra.mxu0 0
    %2657 = vmatpush.bf16.msra.mxu0 0
    %2658 = vmatpush.bf16.msra.mxu0 0
    %2659 = vmatpush.bf16.msra.mxu0 %v2650
    %2660 = vmatmul.bf16.gmra.mxu0 %v2647
    %v2661 = vpop.f32.mrf.mxu0
    %v2662 = vadd.f32 0.0, %v2661
    %v2663 = vpop.f32.mrf.mxu0
    %2664 = vdwg.mxu0
    %2669 = vrot.lane.b32.xlu0 %v2151, 8
    %v2670 = vpop.permute.xlu0 %2669
    %2671 = vrot.lane.b32.xlu0 %v2172, 8
    %v2672 = vpop.permute.xlu0 %2671
    %2673 = vrot.lane.b32.xlu0 %v2193, 8
    %v2674 = vpop.permute.xlu0 %2673
    %2675 = vrot.lane.b32.xlu0 %v2214, 8
    %v2676 = vpop.permute.xlu0 %2675
    %2685 = vrot.lane.b32.xlu0 %v2375, 16
    %v2686 = vpop.permute.xlu0 %2685
    %2687 = vrot.lane.b32.xlu0 %v2396, 16
    %v2688 = vpop.permute.xlu0 %2687
    %2689 = vrot.lane.b32.xlu0 %v2417, 16
    %v2690 = vpop.permute.xlu0 %2689
    %2691 = vrot.lane.b32.xlu0 %v2438, 16
    %v2692 = vpop.permute.xlu0 %2691
    %2701 = vrot.lane.b32.xlu0 %v2599, 24
    %v2702 = vpop.permute.xlu0 %2701
    %2703 = vrot.lane.b32.xlu0 %v2620, 24
    %v2704 = vpop.permute.xlu0 %2703
    %2705 = vrot.lane.b32.xlu0 %v2641, 24
    %v2706 = vpop.permute.xlu0 %2705
    %2707 = vrot.lane.b32.xlu0 %v2662, 24
    %v2708 = vpop.permute.xlu0 %2707
    %v2713 = vsel %vm1769, %v1927, %v2670
    %v2714 = vsel %vm1769, %v1948, %v2672
    %v2715 = vsel %vm1769, %v1969, %v2674
    %v2716 = vsel %vm1769, %v1990, %v2676
    %v2717 = vsel %vm1089, %v2713, %v2686
    %v2718 = vsel %vm1089, %v2714, %v2688
    %v2719 = vsel %vm1089, %v2715, %v2690
    %v2720 = vsel %vm1089, %v2716, %v2692
    %vm2721 = vcmask 195584
    %v2722 = vsel %vm2721, %v2717, %v2702
    %v2723 = vsel %vm2721, %v2718, %v2704
    %v2724 = vsel %vm2721, %v2719, %v2706
    %v2725 = vsel %vm2721, %v2720, %v2708
    %v2726 = vld [vmem:[%s37] sm:$0xf]
    %v2727 = vld [vmem:[%s37 + $0x4] sm:$0xf]
    %v2728 = vld [vmem:[%s37 + $0x8] sm:$0xf]
    %v2729 = vld [vmem:[%s37 + $0xc] sm:$0xf]
    %v2730 = vld [vmem:[%s39] sm:$0x1]
    %v2731 = vpack.c.bf16 %v2723, %v2722
    %v2732 = vpack.c.bf16 %v2725, %v2724
    %v2734 = vperm.slane %v2730, 0
    %v2740 = vunpack.c.l.b16 %v2726
    %v2741 = vunpack.c.l.b16 %v2727
    %v2742 = vunpack.c.l.b16 %v2728
    %v2743 = vunpack.c.l.b16 %v2729
    %v2744 = vpack.c.b16 %v2741, %v2740
    %v2745 = vpack.c.b16 %v2743, %v2742
    %v2749 = vsel %vm300, %v2731, 0
    %v2752 = vsel %vm300, %v2732, 0
    %2754 = vmatpush.bf16.msra.mxu0 0
    %2755 = vmatpush.bf16.msra.mxu0 0
    %2756 = vmatpush.bf16.msra.mxu0 0
    %2757 = vmatpush.bf16.msra.mxu0 0
    %2758 = vmatpush.bf16.msra.mxu0 0
    %2759 = vmatpush.bf16.msra.mxu0 0
    %2760 = vmatpush.bf16.msra.mxu0 %v2745
    %2761 = vmatpush.bf16.msra.mxu0 %v2744
    %2762 = vmatmul.bf16.gmra.mxu0 %v2749
    %v2763 = vpop.f32.mrf.mxu0
    %v2764 = vadd.f32 %v2734, %v2763
    %v2765 = vpop.f32.mrf.mxu0
    %v2766 = vadd.f32 %v2734, %v2765
    %2767 = vmatmul.bf16.gmra.mxu0 %v2752
    %v2768 = vpop.f32.mrf.mxu0
    %v2769 = vadd.f32 %v2734, %v2768
    %v2770 = vpop.f32.mrf.mxu0
    %v2771 = vadd.f32 %v2734, %v2770
    %2772 = vdwg.mxu0
    %v2773 = vadd.f32 %v1709, %v2764
    %v2774 = vadd.f32 %v1710, %v2766
    %v2775 = vadd.f32 %v1711, %v2769
    %v2776 = vadd.f32 %v1712, %v2771
    %v2777 = vld [vmem:[%s41] sm:$0x1]
    %v2778 = vld [vmem:[%s43] sm:$0x1]
    %v2779 = vsel %vm300, %v2773, 0.0
    %2780 = vadd.xlane.f32.xlu0 %v2779
    %v2781 = vpop.xlane.xlu0 %2780
    %v2782 = vsel %vm300, %v2774, 0.0
    %2783 = vadd.xlane.f32.xlu0 %v2782
    %v2784 = vpop.xlane.xlu0 %2783
    %v2785 = vsel %vm300, %v2775, 0.0
    %2786 = vadd.xlane.f32.xlu0 %v2785
    %v2787 = vpop.xlane.xlu0 %2786
    %v2788 = vsel %vm300, %v2776, 0.0
    %2789 = vadd.xlane.f32.xlu0 %v2788
    %v2790 = vpop.xlane.xlu0 %2789
    %v2791 = vrcp.pop 32.0
    %v2792 = vmul.f32 32.0, %v2791
    %v2793 = vsub.f32 1.0, %v2792
    %v2794 = vmul.f32 %v2791, %v2793
    %v2795 = vadd.f32 %v2791, %v2794
    %vm2796 = vweird.f32 %v2791
    %v2797 = vsel %vm2796, %v2791, %v2795
    %v2798 = vmul.f32 %v2781, %v2797
    %v2799 = vmul.f32 %v2784, %v2797
    %v2800 = vmul.f32 %v2787, %v2797
    %v2801 = vmul.f32 %v2790, %v2797
    %v2802 = vsub.f32 %v2773, %v2798
    %v2803 = vsub.f32 %v2774, %v2799
    %v2804 = vsub.f32 %v2775, %v2800
    %v2805 = vsub.f32 %v2776, %v2801
    %v2806 = vmul.f32 %v2802, %v2802
    %v2807 = vmul.f32 %v2803, %v2803
    %v2808 = vmul.f32 %v2804, %v2804
    %v2809 = vmul.f32 %v2805, %v2805
    %v2810 = vsel %vm300, %v2806, 0.0
    %2811 = vadd.xlane.f32.xlu0 %v2810
    %v2812 = vpop.xlane.xlu0 %2811
    %v2813 = vsel %vm300, %v2807, 0.0
    %2814 = vadd.xlane.f32.xlu0 %v2813
    %v2815 = vpop.xlane.xlu0 %2814
    %v2816 = vsel %vm300, %v2808, 0.0
    %2817 = vadd.xlane.f32.xlu0 %v2816
    %v2818 = vpop.xlane.xlu0 %2817
    %v2819 = vsel %vm300, %v2809, 0.0
    %2820 = vadd.xlane.f32.xlu0 %v2819
    %v2821 = vpop.xlane.xlu0 %2820
    %v2822 = vmul.f32 %v2812, %v2797
    %v2823 = vmul.f32 %v2815, %v2797
    %v2824 = vmul.f32 %v2818, %v2797
    %v2825 = vmul.f32 %v2821, %v2797
    %v2826 = vadd.f32 %v2822, 1e-05
    %v2827 = vadd.f32 %v2823, 1e-05
    %v2828 = vadd.f32 %v2824, 1e-05
    %v2829 = vadd.f32 %v2825, 1e-05
    %v2830 = vrsqrt.pop %v2826
    %v2831 = vmul.f32 %v2830, %v2826
    %v2832 = vmul.f32 %v2831, %v2830
    %v2833 = vmul.f32 0.5, %v2832
    %v2834 = vsub.f32 1.5, %v2833
    %v2835 = vmul.f32 %v2830, %v2834
    %vm2836 = vweird.f32 %v2826
    %vm2837 = vweird.f32 %v2830
    %vm2838 = vmor %vm2836, %vm2837
    %v2839 = vsel %vm2838, %v2830, %v2835
    %v2840 = vrsqrt.pop %v2827
    %v2841 = vmul.f32 %v2840, %v2827
    %v2842 = vmul.f32 %v2841, %v2840
    %v2843 = vmul.f32 0.5, %v2842
    %v2844 = vsub.f32 1.5, %v2843
    %v2845 = vmul.f32 %v2840, %v2844
    %vm2846 = vweird.f32 %v2827
    %vm2847 = vweird.f32 %v2840
    %vm2848 = vmor %vm2846, %vm2847
    %v2849 = vsel %vm2848, %v2840, %v2845
    %v2850 = vrsqrt.pop %v2828
    %v2851 = vmul.f32 %v2850, %v2828
    %v2852 = vmul.f32 %v2851, %v2850
    %v2853 = vmul.f32 0.5, %v2852
    %v2854 = vsub.f32 1.5, %v2853
    %v2855 = vmul.f32 %v2850, %v2854
    %vm2856 = vweird.f32 %v2828
    %vm2857 = vweird.f32 %v2850
    %vm2858 = vmor %vm2856, %vm2857
    %v2859 = vsel %vm2858, %v2850, %v2855
    %v2860 = vrsqrt.pop %v2829
    %v2861 = vmul.f32 %v2860, %v2829
    %v2862 = vmul.f32 %v2861, %v2860
    %v2863 = vmul.f32 0.5, %v2862
    %v2864 = vsub.f32 1.5, %v2863
    %v2865 = vmul.f32 %v2860, %v2864
    %vm2866 = vweird.f32 %v2829
    %vm2867 = vweird.f32 %v2860
    %vm2868 = vmor %vm2866, %vm2867
    %v2869 = vsel %vm2868, %v2860, %v2865
    %v2870 = vmul.f32 %v2802, %v2839
    %v2871 = vmul.f32 %v2803, %v2849
    %v2872 = vmul.f32 %v2804, %v2859
    %v2873 = vmul.f32 %v2805, %v2869
    %v2875 = vperm.slane %v2777, 0
    %v2877 = vmul.f32 %v2870, %v2875
    %v2878 = vmul.f32 %v2871, %v2875
    %v2879 = vmul.f32 %v2872, %v2875
    %v2880 = vmul.f32 %v2873, %v2875
    %v2882 = vperm.slane %v2778, 0
    %v2884 = vadd.f32 %v2877, %v2882
    %v2885 = vadd.f32 %v2878, %v2882
    %v2886 = vadd.f32 %v2879, %v2882
    %v2887 = vadd.f32 %v2880, %v2882
    %v2888 = vld [vmem:[%s45] sm:$0xff]
    %v2889 = vld [vmem:[%s45 + $0x8] sm:$0xff]
    %v2890 = vld [vmem:[%s45 + $0x10] sm:$0xff]
    %v2891 = vld [vmem:[%s45 + $0x18] sm:$0xff]
    %v2892 = vld [vmem:[%s45 + $0x20] sm:$0xff]
    %v2893 = vld [vmem:[%s45 + $0x28] sm:$0xff]
    %v2894 = vld [vmem:[%s45 + $0x30] sm:$0xff]
    %v2895 = vld [vmem:[%s45 + $0x38] sm:$0xff]
    %v2896 = vld [vmem:[%s47] sm:$0xf]
    %v2897 = vpack.c.bf16 %v2885, %v2884
    %v2898 = vpack.c.bf16 %v2887, %v2886
    %v2900 = vperm.slane %v2896, 0
    %v2901 = vperm.slane %v2896, 1
    %v2902 = vperm.slane %v2896, 2
    %v2903 = vperm.slane %v2896, 3
    %v2916 = vunpack.c.l.b16 %v2888
    %v2917 = vunpack.c.h.b16 %v2888
    %v2918 = vunpack.c.l.b16 %v2889
    %v2919 = vunpack.c.h.b16 %v2889
    %v2920 = vunpack.c.l.b16 %v2890
    %v2921 = vunpack.c.h.b16 %v2890
    %v2922 = vunpack.c.l.b16 %v2891
    %v2923 = vunpack.c.h.b16 %v2891
    %v2924 = vunpack.c.l.b16 %v2892
    %v2925 = vunpack.c.h.b16 %v2892
    %v2926 = vunpack.c.l.b16 %v2893
    %v2927 = vunpack.c.h.b16 %v2893
    %v2928 = vunpack.c.l.b16 %v2894
    %v2929 = vunpack.c.h.b16 %v2894
    %v2930 = vunpack.c.l.b16 %v2895
    %v2931 = vunpack.c.h.b16 %v2895
    %v2932 = vpack.c.b16 %v2920, %v2916
    %v2933 = vpack.c.b16 %v2921, %v2917
    %v2934 = vpack.c.b16 %v2922, %v2918
    %v2935 = vpack.c.b16 %v2923, %v2919
    %v2936 = vpack.c.b16 %v2928, %v2924
    %v2937 = vpack.c.b16 %v2929, %v2925
    %v2938 = vpack.c.b16 %v2930, %v2926
    %v2939 = vpack.c.b16 %v2931, %v2927
    %v2949 = vsel %vm300, %v2897, 0
    %v2952 = vsel %vm300, %v2898, 0
    %2954 = vmatpush.bf16.msra.mxu0 0
    %2955 = vmatpush.bf16.msra.mxu0 0
    %2956 = vmatpush.bf16.msra.mxu0 0
    %2957 = vmatpush.bf16.msra.mxu0 0
    %2958 = vmatpush.bf16.msra.mxu0 0
    %2959 = vmatpush.bf16.msra.mxu0 0
    %2960 = vmatpush.bf16.msra.mxu0 %v2936
    %2961 = vmatpush.bf16.msra.mxu0 %v2932
    %2962 = vmatmul.bf16.gmra.mxu0 %v2949
    %v2963 = vpop.f32.mrf.mxu0
    %v2964 = vadd.f32 %v2900, %v2963
    %v2965 = vpop.f32.mrf.mxu0
    %v2966 = vadd.f32 %v2900, %v2965
    %2967 = vmatmul.bf16.gmra.mxu0 %v2952
    %v2968 = vpop.f32.mrf.mxu0
    %v2969 = vadd.f32 %v2900, %v2968
    %v2970 = vpop.f32.mrf.mxu0
    %v2971 = vadd.f32 %v2900, %v2970
    %2972 = vdwg.mxu0
    %2973 = vmatpush.bf16.msra.mxu0 0
    %2974 = vmatpush.bf16.msra.mxu0 0
    %2975 = vmatpush.bf16.msra.mxu0 0
    %2976 = vmatpush.bf16.msra.mxu0 0
    %2977 = vmatpush.bf16.msra.mxu0 0
    %2978 = vmatpush.bf16.msra.mxu0 0
    %2979 = vmatpush.bf16.msra.mxu0 %v2937
    %2980 = vmatpush.bf16.msra.mxu0 %v2933
    %2981 = vmatmul.bf16.gmra.mxu0 %v2949
    %v2982 = vpop.f32.mrf.mxu0
    %v2983 = vadd.f32 %v2901, %v2982
    %v2984 = vpop.f32.mrf.mxu0
    %v2985 = vadd.f32 %v2901, %v2984
    %2986 = vmatmul.bf16.gmra.mxu0 %v2952
    %v2987 = vpop.f32.mrf.mxu0
    %v2988 = vadd.f32 %v2901, %v2987
    %v2989 = vpop.f32.mrf.mxu0
    %v2990 = vadd.f32 %v2901, %v2989
    %2991 = vdwg.mxu0
    %2992 = vmatpush.bf16.msra.mxu0 0
    %2993 = vmatpush.bf16.msra.mxu0 0
    %2994 = vmatpush.bf16.msra.mxu0 0
    %2995 = vmatpush.bf16.msra.mxu0 0
    %2996 = vmatpush.bf16.msra.mxu0 0
    %2997 = vmatpush.bf16.msra.mxu0 0
    %2998 = vmatpush.bf16.msra.mxu0 %v2938
    %2999 = vmatpush.bf16.msra.mxu0 %v2934
    %3000 = vmatmul.bf16.gmra.mxu0 %v2949
    %v3001 = vpop.f32.mrf.mxu0
    %v3002 = vadd.f32 %v2902, %v3001
    %v3003 = vpop.f32.mrf.mxu0
    %v3004 = vadd.f32 %v2902, %v3003
    %3005 = vmatmul.bf16.gmra.mxu0 %v2952
    %v3006 = vpop.f32.mrf.mxu0
    %v3007 = vadd.f32 %v2902, %v3006
    %v3008 = vpop.f32.mrf.mxu0
    %v3009 = vadd.f32 %v2902, %v3008
    %3010 = vdwg.mxu0
    %3011 = vmatpush.bf16.msra.mxu0 0
    %3012 = vmatpush.bf16.msra.mxu0 0
    %3013 = vmatpush.bf16.msra.mxu0 0
    %3014 = vmatpush.bf16.msra.mxu0 0
    %3015 = vmatpush.bf16.msra.mxu0 0
    %3016 = vmatpush.bf16.msra.mxu0 0
    %3017 = vmatpush.bf16.msra.mxu0 %v2939
    %3018 = vmatpush.bf16.msra.mxu0 %v2935
    %3019 = vmatmul.bf16.gmra.mxu0 %v2949
    %v3020 = vpop.f32.mrf.mxu0
    %v3021 = vadd.f32 %v2903, %v3020
    %v3022 = vpop.f32.mrf.mxu0
    %v3023 = vadd.f32 %v2903, %v3022
    %3024 = vmatmul.bf16.gmra.mxu0 %v2952
    %v3025 = vpop.f32.mrf.mxu0
    %v3026 = vadd.f32 %v2903, %v3025
    %v3027 = vpop.f32.mrf.mxu0
    %v3028 = vadd.f32 %v2903, %v3027
    %3029 = vdwg.mxu0
    %v3030 = vmax.f32 %v2964, 0.0
    %v3031 = vmax.f32 %v2983, 0.0
    %v3032 = vmax.f32 %v3002, 0.0
    %v3033 = vmax.f32 %v3021, 0.0
    %v3034 = vmax.f32 %v2966, 0.0
    %v3035 = vmax.f32 %v2985, 0.0
    %v3036 = vmax.f32 %v3004, 0.0
    %v3037 = vmax.f32 %v3023, 0.0
    %v3038 = vmax.f32 %v2969, 0.0
    %v3039 = vmax.f32 %v2988, 0.0
    %v3040 = vmax.f32 %v3007, 0.0
    %v3041 = vmax.f32 %v3026, 0.0
    %v3042 = vmax.f32 %v2971, 0.0
    %v3043 = vmax.f32 %v2990, 0.0
    %v3044 = vmax.f32 %v3009, 0.0
    %v3045 = vmax.f32 %v3028, 0.0
    %v3046 = vld [vmem:[%s49] sm:$0xf]
    %v3047 = vld [vmem:[%s49 + $0x4] sm:$0xf]
    %v3048 = vld [vmem:[%s49 + $0x8] sm:$0xf]
    %v3049 = vld [vmem:[%s49 + $0xc] sm:$0xf]
    %v3050 = vld [vmem:[%s49 + $0x10] sm:$0xf]
    %v3051 = vld [vmem:[%s49 + $0x14] sm:$0xf]
    %v3052 = vld [vmem:[%s49 + $0x18] sm:$0xf]
    %v3053 = vld [vmem:[%s49 + $0x1c] sm:$0xf]
    %v3054 = vld [vmem:[%s49 + $0x20] sm:$0xf]
    %v3055 = vld [vmem:[%s49 + $0x24] sm:$0xf]
    %v3056 = vld [vmem:[%s49 + $0x28] sm:$0xf]
    %v3057 = vld [vmem:[%s49 + $0x2c] sm:$0xf]
    %v3058 = vld [vmem:[%s49 + $0x30] sm:$0xf]
    %v3059 = vld [vmem:[%s49 + $0x34] sm:$0xf]
    %v3060 = vld [vmem:[%s49 + $0x38] sm:$0xf]
    %v3061 = vld [vmem:[%s49 + $0x3c] sm:$0xf]
    %v3062 = vld [vmem:[%s49 + $0x40] sm:$0xf]
    %v3063 = vld [vmem:[%s49 + $0x44] sm:$0xf]
    %v3064 = vld [vmem:[%s49 + $0x48] sm:$0xf]
    %v3065 = vld [vmem:[%s49 + $0x4c] sm:$0xf]
    %v3066 = vld [vmem:[%s49 + $0x50] sm:$0xf]
    %v3067 = vld [vmem:[%s49 + $0x54] sm:$0xf]
    %v3068 = vld [vmem:[%s49 + $0x58] sm:$0xf]
    %v3069 = vld [vmem:[%s49 + $0x5c] sm:$0xf]
    %v3070 = vld [vmem:[%s49 + $0x60] sm:$0xf]
    %v3071 = vld [vmem:[%s49 + $0x64] sm:$0xf]
    %v3072 = vld [vmem:[%s49 + $0x68] sm:$0xf]
    %v3073 = vld [vmem:[%s49 + $0x6c] sm:$0xf]
    %v3074 = vld [vmem:[%s49 + $0x70] sm:$0xf]
    %v3075 = vld [vmem:[%s49 + $0x74] sm:$0xf]
    %v3076 = vld [vmem:[%s49 + $0x78] sm:$0xf]
    %v3077 = vld [vmem:[%s49 + $0x7c] sm:$0xf]
    %v3078 = vld [vmem:[%s49 + $0x80] sm:$0xf]
    %v3079 = vld [vmem:[%s49 + $0x84] sm:$0xf]
    %v3080 = vld [vmem:[%s49 + $0x88] sm:$0xf]
    %v3081 = vld [vmem:[%s49 + $0x8c] sm:$0xf]
    %v3082 = vld [vmem:[%s49 + $0x90] sm:$0xf]
    %v3083 = vld [vmem:[%s49 + $0x94] sm:$0xf]
    %v3084 = vld [vmem:[%s49 + $0x98] sm:$0xf]
    %v3085 = vld [vmem:[%s49 + $0x9c] sm:$0xf]
    %v3086 = vld [vmem:[%s49 + $0xa0] sm:$0xf]
    %v3087 = vld [vmem:[%s49 + $0xa4] sm:$0xf]
    %v3088 = vld [vmem:[%s49 + $0xa8] sm:$0xf]
    %v3089 = vld [vmem:[%s49 + $0xac] sm:$0xf]
    %v3090 = vld [vmem:[%s49 + $0xb0] sm:$0xf]
    %v3091 = vld [vmem:[%s49 + $0xb4] sm:$0xf]
    %v3092 = vld [vmem:[%s49 + $0xb8] sm:$0xf]
    %v3093 = vld [vmem:[%s49 + $0xbc] sm:$0xf]
    %v3094 = vld [vmem:[%s49 + $0xc0] sm:$0xf]
    %v3095 = vld [vmem:[%s49 + $0xc4] sm:$0xf]
    %v3096 = vld [vmem:[%s49 + $0xc8] sm:$0xf]
    %v3097 = vld [vmem:[%s49 + $0xcc] sm:$0xf]
    %v3098 = vld [vmem:[%s49 + $0xd0] sm:$0xf]
    %v3099 = vld [vmem:[%s49 + $0xd4] sm:$0xf]
    %v3100 = vld [vmem:[%s49 + $0xd8] sm:$0xf]
    %v3101 = vld [vmem:[%s49 + $0xdc] sm:$0xf]
    %v3102 = vld [vmem:[%s49 + $0xe0] sm:$0xf]
    %v3103 = vld [vmem:[%s49 + $0xe4] sm:$0xf]
    %v3104 = vld [vmem:[%s49 + $0xe8] sm:$0xf]
    %v3105 = vld [vmem:[%s49 + $0xec] sm:$0xf]
    %v3106 = vld [vmem:[%s49 + $0xf0] sm:$0xf]
    %v3107 = vld [vmem:[%s49 + $0xf4] sm:$0xf]
    %v3108 = vld [vmem:[%s49 + $0xf8] sm:$0xf]
    %v3109 = vld [vmem:[%s49 + $0xfc] sm:$0xf]
    %v3110 = vld [vmem:[%s51] sm:$0x1]
    %v3111 = vpack.c.bf16 %v3034, %v3030
    %v3112 = vpack.c.bf16 %v3035, %v3031
    %v3113 = vpack.c.bf16 %v3036, %v3032
    %v3114 = vpack.c.bf16 %v3037, %v3033
    %v3115 = vpack.c.bf16 %v3042, %v3038
    %v3116 = vpack.c.bf16 %v3043, %v3039
    %v3117 = vpack.c.bf16 %v3044, %v3040
    %v3118 = vpack.c.bf16 %v3045, %v3041
    %v3120 = vperm.slane %v3110, 0
    %v3186 = vunpack.c.l.b16 %v3046
    %v3187 = vunpack.c.l.b16 %v3047
    %v3188 = vunpack.c.l.b16 %v3048
    %v3189 = vunpack.c.l.b16 %v3049
    %v3190 = vunpack.c.l.b16 %v3050
    %v3191 = vunpack.c.l.b16 %v3051
    %v3192 = vunpack.c.l.b16 %v3052
    %v3193 = vunpack.c.l.b16 %v3053
    %v3194 = vunpack.c.l.b16 %v3054
    %v3195 = vunpack.c.l.b16 %v3055
    %v3196 = vunpack.c.l.b16 %v3056
    %v3197 = vunpack.c.l.b16 %v3057
    %v3198 = vunpack.c.l.b16 %v3058
    %v3199 = vunpack.c.l.b16 %v3059
    %v3200 = vunpack.c.l.b16 %v3060
    %v3201 = vunpack.c.l.b16 %v3061
    %v3202 = vunpack.c.l.b16 %v3062
    %v3203 = vunpack.c.l.b16 %v3063
    %v3204 = vunpack.c.l.b16 %v3064
    %v3205 = vunpack.c.l.b16 %v3065
    %v3206 = vunpack.c.l.b16 %v3066
    %v3207 = vunpack.c.l.b16 %v3067
    %v3208 = vunpack.c.l.b16 %v3068
    %v3209 = vunpack.c.l.b16 %v3069
    %v3210 = vunpack.c.l.b16 %v3070
    %v3211 = vunpack.c.l.b16 %v3071
    %v3212 = vunpack.c.l.b16 %v3072
    %v3213 = vunpack.c.l.b16 %v3073
    %v3214 = vunpack.c.l.b16 %v3074
    %v3215 = vunpack.c.l.b16 %v3075
    %v3216 = vunpack.c.l.b16 %v3076
    %v3217 = vunpack.c.l.b16 %v3077
    %v3218 = vunpack.c.l.b16 %v3078
    %v3219 = vunpack.c.l.b16 %v3079
    %v3220 = vunpack.c.l.b16 %v3080
    %v3221 = vunpack.c.l.b16 %v3081
    %v3222 = vunpack.c.l.b16 %v3082
    %v3223 = vunpack.c.l.b16 %v3083
    %v3224 = vunpack.c.l.b16 %v3084
    %v3225 = vunpack.c.l.b16 %v3085
    %v3226 = vunpack.c.l.b16 %v3086
    %v3227 = vunpack.c.l.b16 %v3087
    %v3228 = vunpack.c.l.b16 %v3088
    %v3229 = vunpack.c.l.b16 %v3089
    %v3230 = vunpack.c.l.b16 %v3090
    %v3231 = vunpack.c.l.b16 %v3091
    %v3232 = vunpack.c.l.b16 %v3092
    %v3233 = vunpack.c.l.b16 %v3093
    %v3234 = vunpack.c.l.b16 %v3094
    %v3235 = vunpack.c.l.b16 %v3095
    %v3236 = vunpack.c.l.b16 %v3096
    %v3237 = vunpack.c.l.b16 %v3097
    %v3238 = vunpack.c.l.b16 %v3098
    %v3239 = vunpack.c.l.b16 %v3099
    %v3240 = vunpack.c.l.b16 %v3100
    %v3241 = vunpack.c.l.b16 %v3101
    %v3242 = vunpack.c.l.b16 %v3102
    %v3243 = vunpack.c.l.b16 %v3103
    %v3244 = vunpack.c.l.b16 %v3104
    %v3245 = vunpack.c.l.b16 %v3105
    %v3246 = vunpack.c.l.b16 %v3106
    %v3247 = vunpack.c.l.b16 %v3107
    %v3248 = vunpack.c.l.b16 %v3108
    %v3249 = vunpack.c.l.b16 %v3109
    %v3250 = vpack.c.b16 %v3187, %v3186
    %v3251 = vpack.c.b16 %v3189, %v3188
    %v3252 = vpack.c.b16 %v3191, %v3190
    %v3253 = vpack.c.b16 %v3193, %v3192
    %v3254 = vpack.c.b16 %v3195, %v3194
    %v3255 = vpack.c.b16 %v3197, %v3196
    %v3256 = vpack.c.b16 %v3199, %v3198
    %v3257 = vpack.c.b16 %v3201, %v3200
    %v3258 = vpack.c.b16 %v3203, %v3202
    %v3259 = vpack.c.b16 %v3205, %v3204
    %v3260 = vpack.c.b16 %v3207, %v3206
    %v3261 = vpack.c.b16 %v3209, %v3208
    %v3262 = vpack.c.b16 %v3211, %v3210
    %v3263 = vpack.c.b16 %v3213, %v3212
    %v3264 = vpack.c.b16 %v3215, %v3214
    %v3265 = vpack.c.b16 %v3217, %v3216
    %v3266 = vpack.c.b16 %v3219, %v3218
    %v3267 = vpack.c.b16 %v3221, %v3220
    %v3268 = vpack.c.b16 %v3223, %v3222
    %v3269 = vpack.c.b16 %v3225, %v3224
    %v3270 = vpack.c.b16 %v3227, %v3226
    %v3271 = vpack.c.b16 %v3229, %v3228
    %v3272 = vpack.c.b16 %v3231, %v3230
    %v3273 = vpack.c.b16 %v3233, %v3232
    %v3274 = vpack.c.b16 %v3235, %v3234
    %v3275 = vpack.c.b16 %v3237, %v3236
    %v3276 = vpack.c.b16 %v3239, %v3238
    %v3277 = vpack.c.b16 %v3241, %v3240
    %v3278 = vpack.c.b16 %v3243, %v3242
    %v3279 = vpack.c.b16 %v3245, %v3244
    %v3280 = vpack.c.b16 %v3247, %v3246
    %v3281 = vpack.c.b16 %v3249, %v3248
    %3314 = vmatpush.bf16.msra.mxu0 %v3257
    %3315 = vmatpush.bf16.msra.mxu0 %v3256
    %3316 = vmatpush.bf16.msra.mxu0 %v3255
    %3317 = vmatpush.bf16.msra.mxu0 %v3254
    %3318 = vmatpush.bf16.msra.mxu0 %v3253
    %3319 = vmatpush.bf16.msra.mxu0 %v3252
    %3320 = vmatpush.bf16.msra.mxu0 %v3251
    %3321 = vmatpush.bf16.msra.mxu0 %v3250
    %3322 = vmatmul.bf16.gmra.mxu0 %v3111
    %v3323 = vpop.f32.mrf.mxu0
    %v3324 = vadd.f32 %v3120, %v3323
    %v3325 = vpop.f32.mrf.mxu0
    %v3326 = vadd.f32 %v3120, %v3325
    %3327 = vmatmul.bf16.gmra.mxu0 %v3115
    %v3328 = vpop.f32.mrf.mxu0
    %v3329 = vadd.f32 %v3120, %v3328
    %v3330 = vpop.f32.mrf.mxu0
    %v3331 = vadd.f32 %v3120, %v3330
    %3332 = vdwg.mxu0
    %3333 = vmatpush.bf16.msra.mxu0 %v3265
    %3334 = vmatpush.bf16.msra.mxu0 %v3264
    %3335 = vmatpush.bf16.msra.mxu0 %v3263
    %3336 = vmatpush.bf16.msra.mxu0 %v3262
    %3337 = vmatpush.bf16.msra.mxu0 %v3261
    %3338 = vmatpush.bf16.msra.mxu0 %v3260
    %3339 = vmatpush.bf16.msra.mxu0 %v3259
    %3340 = vmatpush.bf16.msra.mxu0 %v3258
    %3341 = vmatmul.bf16.gmra.mxu0 %v3112
    %v3342 = vpop.f32.mrf.mxu0
    %v3343 = vadd.f32 %v3324, %v3342
    %v3344 = vpop.f32.mrf.mxu0
    %v3345 = vadd.f32 %v3326, %v3344
    %3346 = vmatmul.bf16.gmra.mxu0 %v3116
    %v3347 = vpop.f32.mrf.mxu0
    %v3348 = vadd.f32 %v3329, %v3347
    %v3349 = vpop.f32.mrf.mxu0
    %v3350 = vadd.f32 %v3331, %v3349
    %3351 = vdwg.mxu0
    %3352 = vmatpush.bf16.msra.mxu0 %v3273
    %3353 = vmatpush.bf16.msra.mxu0 %v3272
    %3354 = vmatpush.bf16.msra.mxu0 %v3271
    %3355 = vmatpush.bf16.msra.mxu0 %v3270
    %3356 = vmatpush.bf16.msra.mxu0 %v3269
    %3357 = vmatpush.bf16.msra.mxu0 %v3268
    %3358 = vmatpush.bf16.msra.mxu0 %v3267
    %3359 = vmatpush.bf16.msra.mxu0 %v3266
    %3360 = vmatmul.bf16.gmra.mxu0 %v3113
    %v3361 = vpop.f32.mrf.mxu0
    %v3362 = vadd.f32 %v3343, %v3361
    %v3363 = vpop.f32.mrf.mxu0
    %v3364 = vadd.f32 %v3345, %v3363
    %3365 = vmatmul.bf16.gmra.mxu0 %v3117
    %v3366 = vpop.f32.mrf.mxu0
    %v3367 = vadd.f32 %v3348, %v3366
    %v3368 = vpop.f32.mrf.mxu0
    %v3369 = vadd.f32 %v3350, %v3368
    %3370 = vdwg.mxu0
    %3371 = vmatpush.bf16.msra.mxu0 %v3281
    %3372 = vmatpush.bf16.msra.mxu0 %v3280
    %3373 = vmatpush.bf16.msra.mxu0 %v3279
    %3374 = vmatpush.bf16.msra.mxu0 %v3278
    %3375 = vmatpush.bf16.msra.mxu0 %v3277
    %3376 = vmatpush.bf16.msra.mxu0 %v3276
    %3377 = vmatpush.bf16.msra.mxu0 %v3275
    %3378 = vmatpush.bf16.msra.mxu0 %v3274
    %3379 = vmatmul.bf16.gmra.mxu0 %v3114
    %v3380 = vpop.f32.mrf.mxu0
    %v3381 = vadd.f32 %v3362, %v3380
    %v3382 = vpop.f32.mrf.mxu0
    %v3383 = vadd.f32 %v3364, %v3382
    %3384 = vmatmul.bf16.gmra.mxu0 %v3118
    %v3385 = vpop.f32.mrf.mxu0
    %v3386 = vadd.f32 %v3367, %v3385
    %v3387 = vpop.f32.mrf.mxu0
    %v3388 = vadd.f32 %v3369, %v3387
    %3389 = vdwg.mxu0
    %v3390 = vadd.f32 %v2884, %v3381
    %v3391 = vadd.f32 %v2885, %v3383
    %v3392 = vadd.f32 %v2886, %v3386
    %v3393 = vadd.f32 %v2887, %v3388
    %v3394 = vld [vmem:[%s53] sm:$0x1]
    %v3395 = vld [vmem:[%s55] sm:$0x1]
    %v3396 = vsel %vm300, %v3390, 0.0
    %3397 = vadd.xlane.f32.xlu0 %v3396
    %v3398 = vpop.xlane.xlu0 %3397
    %v3399 = vsel %vm300, %v3391, 0.0
    %3400 = vadd.xlane.f32.xlu0 %v3399
    %v3401 = vpop.xlane.xlu0 %3400
    %v3402 = vsel %vm300, %v3392, 0.0
    %3403 = vadd.xlane.f32.xlu0 %v3402
    %v3404 = vpop.xlane.xlu0 %3403
    %v3405 = vsel %vm300, %v3393, 0.0
    %3406 = vadd.xlane.f32.xlu0 %v3405
    %v3407 = vpop.xlane.xlu0 %3406
    %v3408 = vmul.f32 %v3398, %v2797
    %v3409 = vmul.f32 %v3401, %v2797
    %v3410 = vmul.f32 %v3404, %v2797
    %v3411 = vmul.f32 %v3407, %v2797
    %v3412 = vsub.f32 %v3390, %v3408
    %v3413 = vsub.f32 %v3391, %v3409
    %v3414 = vsub.f32 %v3392, %v3410
    %v3415 = vsub.f32 %v3393, %v3411
    %v3416 = vmul.f32 %v3412, %v3412
    %v3417 = vmul.f32 %v3413, %v3413
    %v3418 = vmul.f32 %v3414, %v3414
    %v3419 = vmul.f32 %v3415, %v3415
    %v3420 = vsel %vm300, %v3416, 0.0
    %3421 = vadd.xlane.f32.xlu0 %v3420
    %v3422 = vpop.xlane.xlu0 %3421
    %v3423 = vsel %vm300, %v3417, 0.0
    %3424 = vadd.xlane.f32.xlu0 %v3423
    %v3425 = vpop.xlane.xlu0 %3424
    %v3426 = vsel %vm300, %v3418, 0.0
    %3427 = vadd.xlane.f32.xlu0 %v3426
    %v3428 = vpop.xlane.xlu0 %3427
    %v3429 = vsel %vm300, %v3419, 0.0
    %3430 = vadd.xlane.f32.xlu0 %v3429
    %v3431 = vpop.xlane.xlu0 %3430
    %v3432 = vmul.f32 %v3422, %v2797
    %v3433 = vmul.f32 %v3425, %v2797
    %v3434 = vmul.f32 %v3428, %v2797
    %v3435 = vmul.f32 %v3431, %v2797
    %v3436 = vadd.f32 %v3432, 1e-05
    %v3437 = vadd.f32 %v3433, 1e-05
    %v3438 = vadd.f32 %v3434, 1e-05
    %v3439 = vadd.f32 %v3435, 1e-05
    %v3440 = vrsqrt.pop %v3436
    %v3441 = vmul.f32 %v3440, %v3436
    %v3442 = vmul.f32 %v3441, %v3440
    %v3443 = vmul.f32 0.5, %v3442
    %v3444 = vsub.f32 1.5, %v3443
    %v3445 = vmul.f32 %v3440, %v3444
    %vm3446 = vweird.f32 %v3436
    %vm3447 = vweird.f32 %v3440
    %vm3448 = vmor %vm3446, %vm3447
    %v3449 = vsel %vm3448, %v3440, %v3445
    %v3450 = vrsqrt.pop %v3437
    %v3451 = vmul.f32 %v3450, %v3437
    %v3452 = vmul.f32 %v3451, %v3450
    %v3453 = vmul.f32 0.5, %v3452
    %v3454 = vsub.f32 1.5, %v3453
    %v3455 = vmul.f32 %v3450, %v3454
    %vm3456 = vweird.f32 %v3437
    %vm3457 = vweird.f32 %v3450
    %vm3458 = vmor %vm3456, %vm3457
    %v3459 = vsel %vm3458, %v3450, %v3455
    %v3460 = vrsqrt.pop %v3438
    %v3461 = vmul.f32 %v3460, %v3438
    %v3462 = vmul.f32 %v3461, %v3460
    %v3463 = vmul.f32 0.5, %v3462
    %v3464 = vsub.f32 1.5, %v3463
    %v3465 = vmul.f32 %v3460, %v3464
    %vm3466 = vweird.f32 %v3438
    %vm3467 = vweird.f32 %v3460
    %vm3468 = vmor %vm3466, %vm3467
    %v3469 = vsel %vm3468, %v3460, %v3465
    %v3470 = vrsqrt.pop %v3439
    %v3471 = vmul.f32 %v3470, %v3439
    %v3472 = vmul.f32 %v3471, %v3470
    %v3473 = vmul.f32 0.5, %v3472
    %v3474 = vsub.f32 1.5, %v3473
    %v3475 = vmul.f32 %v3470, %v3474
    %vm3476 = vweird.f32 %v3439
    %vm3477 = vweird.f32 %v3470
    %vm3478 = vmor %vm3476, %vm3477
    %v3479 = vsel %vm3478, %v3470, %v3475
    %v3480 = vmul.f32 %v3412, %v3449
    %v3481 = vmul.f32 %v3413, %v3459
    %v3482 = vmul.f32 %v3414, %v3469
    %v3483 = vmul.f32 %v3415, %v3479
    %v3485 = vperm.slane %v3394, 0
    %v3487 = vmul.f32 %v3480, %v3485
    %v3488 = vmul.f32 %v3481, %v3485
    %v3489 = vmul.f32 %v3482, %v3485
    %v3490 = vmul.f32 %v3483, %v3485
    %v3492 = vperm.slane %v3395, 0
    %v3494 = vadd.f32 %v3487, %v3492
    %v3495 = vadd.f32 %v3488, %v3492
    %v3496 = vadd.f32 %v3489, %v3492
    %v3497 = vadd.f32 %v3490, %v3492
    %s3498 = scalar_lea.vmem %s33, 16
    %v3499 = vld [vmem:[%s3498] sm:$0xf]
    %v3500 = vld [vmem:[%s3498 + $0x4] sm:$0xf]
    %v3501 = vld [vmem:[%s3498 + $0x8] sm:$0xf]
    %v3502 = vld [vmem:[%s3498 + $0xc] sm:$0xf]
    %s3503 = scalar_lea.vmem %s35, 1
    %v3504 = vld [vmem:[%s3503] sm:$0x1]
    %v3505 = vpack.c.bf16 %v3495, %v3494
    %v3506 = vpack.c.bf16 %v3497, %v3496
    %v3508 = vperm.slane %v3504, 0
    %v3514 = vunpack.c.l.b16 %v3499
    %v3515 = vunpack.c.l.b16 %v3500
    %v3516 = vunpack.c.l.b16 %v3501
    %v3517 = vunpack.c.l.b16 %v3502
    %v3518 = vpack.c.b16 %v3515, %v3514
    %v3519 = vpack.c.b16 %v3517, %v3516
    %v3523 = vsel %vm300, %v3505, 0
    %v3526 = vsel %vm300, %v3506, 0
    %3528 = vmatpush.bf16.msra.mxu0 0
    %3529 = vmatpush.bf16.msra.mxu0 0
    %3530 = vmatpush.bf16.msra.mxu0 0
    %3531 = vmatpush.bf16.msra.mxu0 0
    %3532 = vmatpush.bf16.msra.mxu0 0
    %3533 = vmatpush.bf16.msra.mxu0 0
    %3534 = vmatpush.bf16.msra.mxu0 %v3519
    %3535 = vmatpush.bf16.msra.mxu0 %v3518
    %3536 = vmatmul.bf16.gmra.mxu0 %v3523
    %v3537 = vpop.f32.mrf.mxu0
    %v3538 = vadd.f32 %v3508, %v3537
    %v3539 = vpop.f32.mrf.mxu0
    %v3540 = vadd.f32 %v3508, %v3539
    %3541 = vmatmul.bf16.gmra.mxu0 %v3526
    %v3542 = vpop.f32.mrf.mxu0
    %v3543 = vadd.f32 %v3508, %v3542
    %v3544 = vpop.f32.mrf.mxu0
    %v3545 = vadd.f32 %v3508, %v3544
    %3546 = vdwg.mxu0
    %v3547 = vpack.c.bf16 %v3538, %v3538
    %v3548 = vpack.c.bf16 %v3540, %v3540
    %v3549 = vpack.c.bf16 %v3543, %v3543
    %v3550 = vpack.c.bf16 %v3545, %v3545
    %v3552 = vunpack.c.l.b16 %v3547
    %v3553 = vpack.c.b16 %v3552, %v3552
    %3554 = vrot.lane.b32.xlu0 %v3553, 96
    %v3555 = vpop.permute.xlu0 %3554
    %v3557 = vsel %vm1769, %v3547, 0
    %v3560 = vsel %vm1769, %v3555, 0
    %3562 = vmatpush.bf16.xpose.msra.mxu0 0
    %3563 = vmatpush.bf16.xpose.msra.mxu0 0
    %3564 = vmatpush.bf16.xpose.msra.mxu0 0
    %3565 = vmatpush.bf16.xpose.msra.mxu0 0
    %3566 = vmatpush.bf16.xpose.msra.mxu0 0
    %3567 = vmatpush.bf16.xpose.msra.mxu0 0
    %3568 = vmatpush.bf16.xpose.msra.mxu0 0
    %3569 = vmatpush.bf16.xpose.msra.mxu0 %v3560
    %3570 = vmatmul.bf16.gmra.mxu0 %v3557
    %v3571 = vpop.f32.mrf.mxu0
    %v3572 = vadd.f32 0.0, %v3571
    %v3573 = vpop.f32.mrf.mxu0
    %3574 = vdwg.mxu0
    %v3576 = vunpack.c.l.b16 %v3548
    %v3577 = vpack.c.b16 %v3576, %v3576
    %3578 = vrot.lane.b32.xlu0 %v3577, 96
    %v3579 = vpop.permute.xlu0 %3578
    %v3581 = vsel %vm1769, %v3548, 0
    %v3584 = vsel %vm1769, %v3579, 0
    %3586 = vmatpush.bf16.xpose.msra.mxu0 0
    %3587 = vmatpush.bf16.xpose.msra.mxu0 0
    %3588 = vmatpush.bf16.xpose.msra.mxu0 0
    %3589 = vmatpush.bf16.xpose.msra.mxu0 0
    %3590 = vmatpush.bf16.xpose.msra.mxu0 0
    %3591 = vmatpush.bf16.xpose.msra.mxu0 0
    %3592 = vmatpush.bf16.xpose.msra.mxu0 0
    %3593 = vmatpush.bf16.xpose.msra.mxu0 %v3584
    %3594 = vmatmul.bf16.gmra.mxu0 %v3581
    %v3595 = vpop.f32.mrf.mxu0
    %v3596 = vadd.f32 0.0, %v3595
    %v3597 = vpop.f32.mrf.mxu0
    %3598 = vdwg.mxu0
    %v3600 = vunpack.c.l.b16 %v3549
    %v3601 = vpack.c.b16 %v3600, %v3600
    %3602 = vrot.lane.b32.xlu0 %v3601, 96
    %v3603 = vpop.permute.xlu0 %3602
    %v3605 = vsel %vm1769, %v3549, 0
    %v3608 = vsel %vm1769, %v3603, 0
    %3610 = vmatpush.bf16.xpose.msra.mxu0 0
    %3611 = vmatpush.bf16.xpose.msra.mxu0 0
    %3612 = vmatpush.bf16.xpose.msra.mxu0 0
    %3613 = vmatpush.bf16.xpose.msra.mxu0 0
    %3614 = vmatpush.bf16.xpose.msra.mxu0 0
    %3615 = vmatpush.bf16.xpose.msra.mxu0 0
    %3616 = vmatpush.bf16.xpose.msra.mxu0 0
    %3617 = vmatpush.bf16.xpose.msra.mxu0 %v3608
    %3618 = vmatmul.bf16.gmra.mxu0 %v3605
    %v3619 = vpop.f32.mrf.mxu0
    %v3620 = vadd.f32 0.0, %v3619
    %v3621 = vpop.f32.mrf.mxu0
    %3622 = vdwg.mxu0
    %v3624 = vunpack.c.l.b16 %v3550
    %v3625 = vpack.c.b16 %v3624, %v3624
    %3626 = vrot.lane.b32.xlu0 %v3625, 96
    %v3627 = vpop.permute.xlu0 %3626
    %v3629 = vsel %vm1769, %v3550, 0
    %v3632 = vsel %vm1769, %v3627, 0
    %3634 = vmatpush.bf16.xpose.msra.mxu0 0
    %3635 = vmatpush.bf16.xpose.msra.mxu0 0
    %3636 = vmatpush.bf16.xpose.msra.mxu0 0
    %3637 = vmatpush.bf16.xpose.msra.mxu0 0
    %3638 = vmatpush.bf16.xpose.msra.mxu0 0
    %3639 = vmatpush.bf16.xpose.msra.mxu0 0
    %3640 = vmatpush.bf16.xpose.msra.mxu0 0
    %3641 = vmatpush.bf16.xpose.msra.mxu0 %v3632
    %3642 = vmatmul.bf16.gmra.mxu0 %v3629
    %v3643 = vpop.f32.mrf.mxu0
    %v3644 = vadd.f32 0.0, %v3643
    %v3645 = vpop.f32.mrf.mxu0
    %3646 = vdwg.mxu0
    %v3647 = vsel %vm1769, %v3572, -inf
    %3648 = vmax.xlane.f32.xlu0 %v3647
    %v3649 = vpop.xlane.xlu0 %3648
    %v3650 = vsel %vm1769, %v3596, -inf
    %3651 = vmax.xlane.f32.xlu0 %v3650
    %v3652 = vpop.xlane.xlu0 %3651
    %v3653 = vsel %vm1769, %v3620, -inf
    %3654 = vmax.xlane.f32.xlu0 %v3653
    %v3655 = vpop.xlane.xlu0 %3654
    %v3656 = vsel %vm1769, %v3644, -inf
    %3657 = vmax.xlane.f32.xlu0 %v3656
    %v3658 = vpop.xlane.xlu0 %3657
    %v3659 = vsub.f32 %v3572, %v3649
    %v3660 = vsub.f32 %v3596, %v3652
    %v3661 = vsub.f32 %v3620, %v3655
    %v3662 = vsub.f32 %v3644, %v3658
    %v3663 = vmul.f32 %v3659, 1.442695
    %v3664 = vpow.pop %v3663
    %v3665 = vmul.f32 %v3660, 1.442695
    %v3666 = vpow.pop %v3665
    %v3667 = vmul.f32 %v3661, 1.442695
    %v3668 = vpow.pop %v3667
    %v3669 = vmul.f32 %v3662, 1.442695
    %v3670 = vpow.pop %v3669
    %v3671 = vsel %vm1769, %v3664, 0.0
    %3672 = vadd.xlane.f32.xlu0 %v3671
    %v3673 = vpop.xlane.xlu0 %3672
    %v3674 = vsel %vm1769, %v3666, 0.0
    %3675 = vadd.xlane.f32.xlu0 %v3674
    %v3676 = vpop.xlane.xlu0 %3675
    %v3677 = vsel %vm1769, %v3668, 0.0
    %3678 = vadd.xlane.f32.xlu0 %v3677
    %v3679 = vpop.xlane.xlu0 %3678
    %v3680 = vsel %vm1769, %v3670, 0.0
    %3681 = vadd.xlane.f32.xlu0 %v3680
    %v3682 = vpop.xlane.xlu0 %3681
    %v3683 = vrcp.pop %v3673
    %v3684 = vrcp.pop %v3676
    %v3685 = vrcp.pop %v3679
    %v3686 = vrcp.pop %v3682
    %v3687 = vmul.f32 %v3664, %v3683
    %v3688 = vmul.f32 %v3666, %v3684
    %v3689 = vmul.f32 %v3668, %v3685
    %v3690 = vmul.f32 %v3670, %v3686
    %v3691 = vpack.c.bf16 %v3687, %v3687
    %v3692 = vpack.c.bf16 %v3688, %v3688
    %v3693 = vpack.c.bf16 %v3689, %v3689
    %v3694 = vpack.c.bf16 %v3690, %v3690
    %3695 = vrot.lane.b32.xlu0 %v3553, 64
    %v3696 = vpop.permute.xlu0 %3695
    %v3698 = vsel %vm1769, %v3691, 0
    %v3701 = vsel %vm1688, %v3696, 0
    %3703 = vmatpush.bf16.msra.mxu0 0
    %3704 = vmatpush.bf16.msra.mxu0 0
    %3705 = vmatpush.bf16.msra.mxu0 0
    %3706 = vmatpush.bf16.msra.mxu0 0
    %3707 = vmatpush.bf16.msra.mxu0 0
    %3708 = vmatpush.bf16.msra.mxu0 0
    %3709 = vmatpush.bf16.msra.mxu0 0
    %3710 = vmatpush.bf16.msra.mxu0 %v3701
    %3711 = vmatmul.bf16.gmra.mxu0 %v3698
    %v3712 = vpop.f32.mrf.mxu0
    %v3713 = vadd.f32 0.0, %v3712
    %v3714 = vpop.f32.mrf.mxu0
    %3715 = vdwg.mxu0
    %3716 = vrot.lane.b32.xlu0 %v3577, 64
    %v3717 = vpop.permute.xlu0 %3716
    %v3719 = vsel %vm1769, %v3692, 0
    %v3722 = vsel %vm1688, %v3717, 0
    %3724 = vmatpush.bf16.msra.mxu0 0
    %3725 = vmatpush.bf16.msra.mxu0 0
    %3726 = vmatpush.bf16.msra.mxu0 0
    %3727 = vmatpush.bf16.msra.mxu0 0
    %3728 = vmatpush.bf16.msra.mxu0 0
    %3729 = vmatpush.bf16.msra.mxu0 0
    %3730 = vmatpush.bf16.msra.mxu0 0
    %3731 = vmatpush.bf16.msra.mxu0 %v3722
    %3732 = vmatmul.bf16.gmra.mxu0 %v3719
    %v3733 = vpop.f32.mrf.mxu0
    %v3734 = vadd.f32 0.0, %v3733
    %v3735 = vpop.f32.mrf.mxu0
    %3736 = vdwg.mxu0
    %3737 = vrot.lane.b32.xlu0 %v3601, 64
    %v3738 = vpop.permute.xlu0 %3737
    %v3740 = vsel %vm1769, %v3693, 0
    %v3743 = vsel %vm1688, %v3738, 0
    %3745 = vmatpush.bf16.msra.mxu0 0
    %3746 = vmatpush.bf16.msra.mxu0 0
    %3747 = vmatpush.bf16.msra.mxu0 0
    %3748 = vmatpush.bf16.msra.mxu0 0
    %3749 = vmatpush.bf16.msra.mxu0 0
    %3750 = vmatpush.bf16.msra.mxu0 0
    %3751 = vmatpush.bf16.msra.mxu0 0
    %3752 = vmatpush.bf16.msra.mxu0 %v3743
    %3753 = vmatmul.bf16.gmra.mxu0 %v3740
    %v3754 = vpop.f32.mrf.mxu0
    %v3755 = vadd.f32 0.0, %v3754
    %v3756 = vpop.f32.mrf.mxu0
    %3757 = vdwg.mxu0
    %3758 = vrot.lane.b32.xlu0 %v3625, 64
    %v3759 = vpop.permute.xlu0 %3758
    %v3761 = vsel %vm1769, %v3694, 0
    %v3764 = vsel %vm1688, %v3759, 0
    %3766 = vmatpush.bf16.msra.mxu0 0
    %3767 = vmatpush.bf16.msra.mxu0 0
    %3768 = vmatpush.bf16.msra.mxu0 0
    %3769 = vmatpush.bf16.msra.mxu0 0
    %3770 = vmatpush.bf16.msra.mxu0 0
    %3771 = vmatpush.bf16.msra.mxu0 0
    %3772 = vmatpush.bf16.msra.mxu0 0
    %3773 = vmatpush.bf16.msra.mxu0 %v3764
    %3774 = vmatmul.bf16.gmra.mxu0 %v3761
    %v3775 = vpop.f32.mrf.mxu0
    %v3776 = vadd.f32 0.0, %v3775
    %v3777 = vpop.f32.mrf.mxu0
    %3778 = vdwg.mxu0
    %3779 = vrot.lane.b32.xlu0 %v3553, 120
    %v3780 = vpop.permute.xlu0 %3779
    %3781 = vrot.lane.b32.xlu0 %v3553, 88
    %v3782 = vpop.permute.xlu0 %3781
    %v3784 = vsel %vm1769, %v3780, 0
    %v3787 = vsel %vm1769, %v3782, 0
    %3789 = vmatpush.bf16.xpose.msra.mxu0 0
    %3790 = vmatpush.bf16.xpose.msra.mxu0 0
    %3791 = vmatpush.bf16.xpose.msra.mxu0 0
    %3792 = vmatpush.bf16.xpose.msra.mxu0 0
    %3793 = vmatpush.bf16.xpose.msra.mxu0 0
    %3794 = vmatpush.bf16.xpose.msra.mxu0 0
    %3795 = vmatpush.bf16.xpose.msra.mxu0 0
    %3796 = vmatpush.bf16.xpose.msra.mxu0 %v3787
    %3797 = vmatmul.bf16.gmra.mxu0 %v3784
    %v3798 = vpop.f32.mrf.mxu0
    %v3799 = vadd.f32 0.0, %v3798
    %v3800 = vpop.f32.mrf.mxu0
    %3801 = vdwg.mxu0
    %3802 = vrot.lane.b32.xlu0 %v3577, 120
    %v3803 = vpop.permute.xlu0 %3802
    %3804 = vrot.lane.b32.xlu0 %v3577, 88
    %v3805 = vpop.permute.xlu0 %3804
    %v3807 = vsel %vm1769, %v3803, 0
    %v3810 = vsel %vm1769, %v3805, 0
    %3812 = vmatpush.bf16.xpose.msra.mxu0 0
    %3813 = vmatpush.bf16.xpose.msra.mxu0 0
    %3814 = vmatpush.bf16.xpose.msra.mxu0 0
    %3815 = vmatpush.bf16.xpose.msra.mxu0 0
    %3816 = vmatpush.bf16.xpose.msra.mxu0 0
    %3817 = vmatpush.bf16.xpose.msra.mxu0 0
    %3818 = vmatpush.bf16.xpose.msra.mxu0 0
    %3819 = vmatpush.bf16.xpose.msra.mxu0 %v3810
    %3820 = vmatmul.bf16.gmra.mxu0 %v3807
    %v3821 = vpop.f32.mrf.mxu0
    %v3822 = vadd.f32 0.0, %v3821
    %v3823 = vpop.f32.mrf.mxu0
    %3824 = vdwg.mxu0
    %3825 = vrot.lane.b32.xlu0 %v3601, 120
    %v3826 = vpop.permute.xlu0 %3825
    %3827 = vrot.lane.b32.xlu0 %v3601, 88
    %v3828 = vpop.permute.xlu0 %3827
    %v3830 = vsel %vm1769, %v3826, 0
    %v3833 = vsel %vm1769, %v3828, 0
    %3835 = vmatpush.bf16.xpose.msra.mxu0 0
    %3836 = vmatpush.bf16.xpose.msra.mxu0 0
    %3837 = vmatpush.bf16.xpose.msra.mxu0 0
    %3838 = vmatpush.bf16.xpose.msra.mxu0 0
    %3839 = vmatpush.bf16.xpose.msra.mxu0 0
    %3840 = vmatpush.bf16.xpose.msra.mxu0 0
    %3841 = vmatpush.bf16.xpose.msra.mxu0 0
    %3842 = vmatpush.bf16.xpose.msra.mxu0 %v3833
    %3843 = vmatmul.bf16.gmra.mxu0 %v3830
    %v3844 = vpop.f32.mrf.mxu0
    %v3845 = vadd.f32 0.0, %v3844
    %v3846 = vpop.f32.mrf.mxu0
    %3847 = vdwg.mxu0
    %3848 = vrot.lane.b32.xlu0 %v3625, 120
    %v3849 = vpop.permute.xlu0 %3848
    %3850 = vrot.lane.b32.xlu0 %v3625, 88
    %v3851 = vpop.permute.xlu0 %3850
    %v3853 = vsel %vm1769, %v3849, 0
    %v3856 = vsel %vm1769, %v3851, 0
    %3858 = vmatpush.bf16.xpose.msra.mxu0 0
    %3859 = vmatpush.bf16.xpose.msra.mxu0 0
    %3860 = vmatpush.bf16.xpose.msra.mxu0 0
    %3861 = vmatpush.bf16.xpose.msra.mxu0 0
    %3862 = vmatpush.bf16.xpose.msra.mxu0 0
    %3863 = vmatpush.bf16.xpose.msra.mxu0 0
    %3864 = vmatpush.bf16.xpose.msra.mxu0 0
    %3865 = vmatpush.bf16.xpose.msra.mxu0 %v3856
    %3866 = vmatmul.bf16.gmra.mxu0 %v3853
    %v3867 = vpop.f32.mrf.mxu0
    %v3868 = vadd.f32 0.0, %v3867
    %v3869 = vpop.f32.mrf.mxu0
    %3870 = vdwg.mxu0
    %v3871 = vsel %vm1769, %v3799, -inf
    %3872 = vmax.xlane.f32.xlu0 %v3871
    %v3873 = vpop.xlane.xlu0 %3872
    %v3874 = vsel %vm1769, %v3822, -inf
    %3875 = vmax.xlane.f32.xlu0 %v3874
    %v3876 = vpop.xlane.xlu0 %3875
    %v3877 = vsel %vm1769, %v3845, -inf
    %3878 = vmax.xlane.f32.xlu0 %v3877
    %v3879 = vpop.xlane.xlu0 %3878
    %v3880 = vsel %vm1769, %v3868, -inf
    %3881 = vmax.xlane.f32.xlu0 %v3880
    %v3882 = vpop.xlane.xlu0 %3881
    %v3883 = vsub.f32 %v3799, %v3873
    %v3884 = vsub.f32 %v3822, %v3876
    %v3885 = vsub.f32 %v3845, %v3879
    %v3886 = vsub.f32 %v3868, %v3882
    %v3887 = vmul.f32 %v3883, 1.442695
    %v3888 = vpow.pop %v3887
    %v3889 = vmul.f32 %v3884, 1.442695
    %v3890 = vpow.pop %v3889
    %v3891 = vmul.f32 %v3885, 1.442695
    %v3892 = vpow.pop %v3891
    %v3893 = vmul.f32 %v3886, 1.442695
    %v3894 = vpow.pop %v3893
    %v3895 = vsel %vm1769, %v3888, 0.0
    %3896 = vadd.xlane.f32.xlu0 %v3895
    %v3897 = vpop.xlane.xlu0 %3896
    %v3898 = vsel %vm1769, %v3890, 0.0
    %3899 = vadd.xlane.f32.xlu0 %v3898
    %v3900 = vpop.xlane.xlu0 %3899
    %v3901 = vsel %vm1769, %v3892, 0.0
    %3902 = vadd.xlane.f32.xlu0 %v3901
    %v3903 = vpop.xlane.xlu0 %3902
    %v3904 = vsel %vm1769, %v3894, 0.0
    %3905 = vadd.xlane.f32.xlu0 %v3904
    %v3906 = vpop.xlane.xlu0 %3905
    %v3907 = vrcp.pop %v3897
    %v3908 = vrcp.pop %v3900
    %v3909 = vrcp.pop %v3903
    %v3910 = vrcp.pop %v3906
    %v3911 = vmul.f32 %v3888, %v3907
    %v3912 = vmul.f32 %v3890, %v3908
    %v3913 = vmul.f32 %v3892, %v3909
    %v3914 = vmul.f32 %v3894, %v3910
    %v3915 = vpack.c.bf16 %v3911, %v3911
    %v3916 = vpack.c.bf16 %v3912, %v3912
    %v3917 = vpack.c.bf16 %v3913, %v3913
    %v3918 = vpack.c.bf16 %v3914, %v3914
    %3919 = vrot.lane.b32.xlu0 %v3553, 56
    %v3920 = vpop.permute.xlu0 %3919
    %v3922 = vsel %vm1769, %v3915, 0
    %v3925 = vsel %vm1688, %v3920, 0
    %3927 = vmatpush.bf16.msra.mxu0 0
    %3928 = vmatpush.bf16.msra.mxu0 0
    %3929 = vmatpush.bf16.msra.mxu0 0
    %3930 = vmatpush.bf16.msra.mxu0 0
    %3931 = vmatpush.bf16.msra.mxu0 0
    %3932 = vmatpush.bf16.msra.mxu0 0
    %3933 = vmatpush.bf16.msra.mxu0 0
    %3934 = vmatpush.bf16.msra.mxu0 %v3925
    %3935 = vmatmul.bf16.gmra.mxu0 %v3922
    %v3936 = vpop.f32.mrf.mxu0
    %v3937 = vadd.f32 0.0, %v3936
    %v3938 = vpop.f32.mrf.mxu0
    %3939 = vdwg.mxu0
    %3940 = vrot.lane.b32.xlu0 %v3577, 56
    %v3941 = vpop.permute.xlu0 %3940
    %v3943 = vsel %vm1769, %v3916, 0
    %v3946 = vsel %vm1688, %v3941, 0
    %3948 = vmatpush.bf16.msra.mxu0 0
    %3949 = vmatpush.bf16.msra.mxu0 0
    %3950 = vmatpush.bf16.msra.mxu0 0
    %3951 = vmatpush.bf16.msra.mxu0 0
    %3952 = vmatpush.bf16.msra.mxu0 0
    %3953 = vmatpush.bf16.msra.mxu0 0
    %3954 = vmatpush.bf16.msra.mxu0 0
    %3955 = vmatpush.bf16.msra.mxu0 %v3946
    %3956 = vmatmul.bf16.gmra.mxu0 %v3943
    %v3957 = vpop.f32.mrf.mxu0
    %v3958 = vadd.f32 0.0, %v3957
    %v3959 = vpop.f32.mrf.mxu0
    %3960 = vdwg.mxu0
    %3961 = vrot.lane.b32.xlu0 %v3601, 56
    %v3962 = vpop.permute.xlu0 %3961
    %v3964 = vsel %vm1769, %v3917, 0
    %v3967 = vsel %vm1688, %v3962, 0
    %3969 = vmatpush.bf16.msra.mxu0 0
    %3970 = vmatpush.bf16.msra.mxu0 0
    %3971 = vmatpush.bf16.msra.mxu0 0
    %3972 = vmatpush.bf16.msra.mxu0 0
    %3973 = vmatpush.bf16.msra.mxu0 0
    %3974 = vmatpush.bf16.msra.mxu0 0
    %3975 = vmatpush.bf16.msra.mxu0 0
    %3976 = vmatpush.bf16.msra.mxu0 %v3967
    %3977 = vmatmul.bf16.gmra.mxu0 %v3964
    %v3978 = vpop.f32.mrf.mxu0
    %v3979 = vadd.f32 0.0, %v3978
    %v3980 = vpop.f32.mrf.mxu0
    %3981 = vdwg.mxu0
    %3982 = vrot.lane.b32.xlu0 %v3625, 56
    %v3983 = vpop.permute.xlu0 %3982
    %v3985 = vsel %vm1769, %v3918, 0
    %v3988 = vsel %vm1688, %v3983, 0
    %3990 = vmatpush.bf16.msra.mxu0 0
    %3991 = vmatpush.bf16.msra.mxu0 0
    %3992 = vmatpush.bf16.msra.mxu0 0
    %3993 = vmatpush.bf16.msra.mxu0 0
    %3994 = vmatpush.bf16.msra.mxu0 0
    %3995 = vmatpush.bf16.msra.mxu0 0
    %3996 = vmatpush.bf16.msra.mxu0 0
    %3997 = vmatpush.bf16.msra.mxu0 %v3988
    %3998 = vmatmul.bf16.gmra.mxu0 %v3985
    %v3999 = vpop.f32.mrf.mxu0
    %v4000 = vadd.f32 0.0, %v3999
    %v4001 = vpop.f32.mrf.mxu0
    %4002 = vdwg.mxu0
    %4003 = vrot.lane.b32.xlu0 %v3553, 112
    %v4004 = vpop.permute.xlu0 %4003
    %4005 = vrot.lane.b32.xlu0 %v3553, 80
    %v4006 = vpop.permute.xlu0 %4005
    %v4008 = vsel %vm1769, %v4004, 0
    %v4011 = vsel %vm1769, %v4006, 0
    %4013 = vmatpush.bf16.xpose.msra.mxu0 0
    %4014 = vmatpush.bf16.xpose.msra.mxu0 0
    %4015 = vmatpush.bf16.xpose.msra.mxu0 0
    %4016 = vmatpush.bf16.xpose.msra.mxu0 0
    %4017 = vmatpush.bf16.xpose.msra.mxu0 0
    %4018 = vmatpush.bf16.xpose.msra.mxu0 0
    %4019 = vmatpush.bf16.xpose.msra.mxu0 0
    %4020 = vmatpush.bf16.xpose.msra.mxu0 %v4011
    %4021 = vmatmul.bf16.gmra.mxu0 %v4008
    %v4022 = vpop.f32.mrf.mxu0
    %v4023 = vadd.f32 0.0, %v4022
    %v4024 = vpop.f32.mrf.mxu0
    %4025 = vdwg.mxu0
    %4026 = vrot.lane.b32.xlu0 %v3577, 112
    %v4027 = vpop.permute.xlu0 %4026
    %4028 = vrot.lane.b32.xlu0 %v3577, 80
    %v4029 = vpop.permute.xlu0 %4028
    %v4031 = vsel %vm1769, %v4027, 0
    %v4034 = vsel %vm1769, %v4029, 0
    %4036 = vmatpush.bf16.xpose.msra.mxu0 0
    %4037 = vmatpush.bf16.xpose.msra.mxu0 0
    %4038 = vmatpush.bf16.xpose.msra.mxu0 0
    %4039 = vmatpush.bf16.xpose.msra.mxu0 0
    %4040 = vmatpush.bf16.xpose.msra.mxu0 0
    %4041 = vmatpush.bf16.xpose.msra.mxu0 0
    %4042 = vmatpush.bf16.xpose.msra.mxu0 0
    %4043 = vmatpush.bf16.xpose.msra.mxu0 %v4034
    %4044 = vmatmul.bf16.gmra.mxu0 %v4031
    %v4045 = vpop.f32.mrf.mxu0
    %v4046 = vadd.f32 0.0, %v4045
    %v4047 = vpop.f32.mrf.mxu0
    %4048 = vdwg.mxu0
    %4049 = vrot.lane.b32.xlu0 %v3601, 112
    %v4050 = vpop.permute.xlu0 %4049
    %4051 = vrot.lane.b32.xlu0 %v3601, 80
    %v4052 = vpop.permute.xlu0 %4051
    %v4054 = vsel %vm1769, %v4050, 0
    %v4057 = vsel %vm1769, %v4052, 0
    %4059 = vmatpush.bf16.xpose.msra.mxu0 0
    %4060 = vmatpush.bf16.xpose.msra.mxu0 0
    %4061 = vmatpush.bf16.xpose.msra.mxu0 0
    %4062 = vmatpush.bf16.xpose.msra.mxu0 0
    %4063 = vmatpush.bf16.xpose.msra.mxu0 0
    %4064 = vmatpush.bf16.xpose.msra.mxu0 0
    %4065 = vmatpush.bf16.xpose.msra.mxu0 0
    %4066 = vmatpush.bf16.xpose.msra.mxu0 %v4057
    %4067 = vmatmul.bf16.gmra.mxu0 %v4054
    %v4068 = vpop.f32.mrf.mxu0
    %v4069 = vadd.f32 0.0, %v4068
    %v4070 = vpop.f32.mrf.mxu0
    %4071 = vdwg.mxu0
    %4072 = vrot.lane.b32.xlu0 %v3625, 112
    %v4073 = vpop.permute.xlu0 %4072
    %4074 = vrot.lane.b32.xlu0 %v3625, 80
    %v4075 = vpop.permute.xlu0 %4074
    %v4077 = vsel %vm1769, %v4073, 0
    %v4080 = vsel %vm1769, %v4075, 0
    %4082 = vmatpush.bf16.xpose.msra.mxu0 0
    %4083 = vmatpush.bf16.xpose.msra.mxu0 0
    %4084 = vmatpush.bf16.xpose.msra.mxu0 0
    %4085 = vmatpush.bf16.xpose.msra.mxu0 0
    %4086 = vmatpush.bf16.xpose.msra.mxu0 0
    %4087 = vmatpush.bf16.xpose.msra.mxu0 0
    %4088 = vmatpush.bf16.xpose.msra.mxu0 0
    %4089 = vmatpush.bf16.xpose.msra.mxu0 %v4080
    %4090 = vmatmul.bf16.gmra.mxu0 %v4077
    %v4091 = vpop.f32.mrf.mxu0
    %v4092 = vadd.f32 0.0, %v4091
    %v4093 = vpop.f32.mrf.mxu0
    %4094 = vdwg.mxu0
    %v4095 = vsel %vm1769, %v4023, -inf
    %4096 = vmax.xlane.f32.xlu0 %v4095
    %v4097 = vpop.xlane.xlu0 %4096
    %v4098 = vsel %vm1769, %v4046, -inf
    %4099 = vmax.xlane.f32.xlu0 %v4098
    %v4100 = vpop.xlane.xlu0 %4099
    %v4101 = vsel %vm1769, %v4069, -inf
    %4102 = vmax.xlane.f32.xlu0 %v4101
    %v4103 = vpop.xlane.xlu0 %4102
    %v4104 = vsel %vm1769, %v4092, -inf
    %4105 = vmax.xlane.f32.xlu0 %v4104
    %v4106 = vpop.xlane.xlu0 %4105
    %v4107 = vsub.f32 %v4023, %v4097
    %v4108 = vsub.f32 %v4046, %v4100
    %v4109 = vsub.f32 %v4069, %v4103
    %v4110 = vsub.f32 %v4092, %v4106
    %v4111 = vmul.f32 %v4107, 1.442695
    %v4112 = vpow.pop %v4111
    %v4113 = vmul.f32 %v4108, 1.442695
    %v4114 = vpow.pop %v4113
    %v4115 = vmul.f32 %v4109, 1.442695
    %v4116 = vpow.pop %v4115
    %v4117 = vmul.f32 %v4110, 1.442695
    %v4118 = vpow.pop %v4117
    %v4119 = vsel %vm1769, %v4112, 0.0
    %4120 = vadd.xlane.f32.xlu0 %v4119
    %v4121 = vpop.xlane.xlu0 %4120
    %v4122 = vsel %vm1769, %v4114, 0.0
    %4123 = vadd.xlane.f32.xlu0 %v4122
    %v4124 = vpop.xlane.xlu0 %4123
    %v4125 = vsel %vm1769, %v4116, 0.0
    %4126 = vadd.xlane.f32.xlu0 %v4125
    %v4127 = vpop.xlane.xlu0 %4126
    %v4128 = vsel %vm1769, %v4118, 0.0
    %4129 = vadd.xlane.f32.xlu0 %v4128
    %v4130 = vpop.xlane.xlu0 %4129
    %v4131 = vrcp.pop %v4121
    %v4132 = vrcp.pop %v4124
    %v4133 = vrcp.pop %v4127
    %v4134 = vrcp.pop %v4130
    %v4135 = vmul.f32 %v4112, %v4131
    %v4136 = vmul.f32 %v4114, %v4132
    %v4137 = vmul.f32 %v4116, %v4133
    %v4138 = vmul.f32 %v4118, %v4134
    %v4139 = vpack.c.bf16 %v4135, %v4135
    %v4140 = vpack.c.bf16 %v4136, %v4136
    %v4141 = vpack.c.bf16 %v4137, %v4137
    %v4142 = vpack.c.bf16 %v4138, %v4138
    %4143 = vrot.lane.b32.xlu0 %v3553, 48
    %v4144 = vpop.permute.xlu0 %4143
    %v4146 = vsel %vm1769, %v4139, 0
    %v4149 = vsel %vm1688, %v4144, 0
    %4151 = vmatpush.bf16.msra.mxu0 0
    %4152 = vmatpush.bf16.msra.mxu0 0
    %4153 = vmatpush.bf16.msra.mxu0 0
    %4154 = vmatpush.bf16.msra.mxu0 0
    %4155 = vmatpush.bf16.msra.mxu0 0
    %4156 = vmatpush.bf16.msra.mxu0 0
    %4157 = vmatpush.bf16.msra.mxu0 0
    %4158 = vmatpush.bf16.msra.mxu0 %v4149
    %4159 = vmatmul.bf16.gmra.mxu0 %v4146
    %v4160 = vpop.f32.mrf.mxu0
    %v4161 = vadd.f32 0.0, %v4160
    %v4162 = vpop.f32.mrf.mxu0
    %4163 = vdwg.mxu0
    %4164 = vrot.lane.b32.xlu0 %v3577, 48
    %v4165 = vpop.permute.xlu0 %4164
    %v4167 = vsel %vm1769, %v4140, 0
    %v4170 = vsel %vm1688, %v4165, 0
    %4172 = vmatpush.bf16.msra.mxu0 0
    %4173 = vmatpush.bf16.msra.mxu0 0
    %4174 = vmatpush.bf16.msra.mxu0 0
    %4175 = vmatpush.bf16.msra.mxu0 0
    %4176 = vmatpush.bf16.msra.mxu0 0
    %4177 = vmatpush.bf16.msra.mxu0 0
    %4178 = vmatpush.bf16.msra.mxu0 0
    %4179 = vmatpush.bf16.msra.mxu0 %v4170
    %4180 = vmatmul.bf16.gmra.mxu0 %v4167
    %v4181 = vpop.f32.mrf.mxu0
    %v4182 = vadd.f32 0.0, %v4181
    %v4183 = vpop.f32.mrf.mxu0
    %4184 = vdwg.mxu0
    %4185 = vrot.lane.b32.xlu0 %v3601, 48
    %v4186 = vpop.permute.xlu0 %4185
    %v4188 = vsel %vm1769, %v4141, 0
    %v4191 = vsel %vm1688, %v4186, 0
    %4193 = vmatpush.bf16.msra.mxu0 0
    %4194 = vmatpush.bf16.msra.mxu0 0
    %4195 = vmatpush.bf16.msra.mxu0 0
    %4196 = vmatpush.bf16.msra.mxu0 0
    %4197 = vmatpush.bf16.msra.mxu0 0
    %4198 = vmatpush.bf16.msra.mxu0 0
    %4199 = vmatpush.bf16.msra.mxu0 0
    %4200 = vmatpush.bf16.msra.mxu0 %v4191
    %4201 = vmatmul.bf16.gmra.mxu0 %v4188
    %v4202 = vpop.f32.mrf.mxu0
    %v4203 = vadd.f32 0.0, %v4202
    %v4204 = vpop.f32.mrf.mxu0
    %4205 = vdwg.mxu0
    %4206 = vrot.lane.b32.xlu0 %v3625, 48
    %v4207 = vpop.permute.xlu0 %4206
    %v4209 = vsel %vm1769, %v4142, 0
    %v4212 = vsel %vm1688, %v4207, 0
    %4214 = vmatpush.bf16.msra.mxu0 0
    %4215 = vmatpush.bf16.msra.mxu0 0
    %4216 = vmatpush.bf16.msra.mxu0 0
    %4217 = vmatpush.bf16.msra.mxu0 0
    %4218 = vmatpush.bf16.msra.mxu0 0
    %4219 = vmatpush.bf16.msra.mxu0 0
    %4220 = vmatpush.bf16.msra.mxu0 0
    %4221 = vmatpush.bf16.msra.mxu0 %v4212
    %4222 = vmatmul.bf16.gmra.mxu0 %v4209
    %v4223 = vpop.f32.mrf.mxu0
    %v4224 = vadd.f32 0.0, %v4223
    %v4225 = vpop.f32.mrf.mxu0
    %4226 = vdwg.mxu0
    %4227 = vrot.lane.b32.xlu0 %v3553, 104
    %v4228 = vpop.permute.xlu0 %4227
    %4229 = vrot.lane.b32.xlu0 %v3553, 72
    %v4230 = vpop.permute.xlu0 %4229
    %v4232 = vsel %vm1769, %v4228, 0
    %v4235 = vsel %vm1769, %v4230, 0
    %4237 = vmatpush.bf16.xpose.msra.mxu0 0
    %4238 = vmatpush.bf16.xpose.msra.mxu0 0
    %4239 = vmatpush.bf16.xpose.msra.mxu0 0
    %4240 = vmatpush.bf16.xpose.msra.mxu0 0
    %4241 = vmatpush.bf16.xpose.msra.mxu0 0
    %4242 = vmatpush.bf16.xpose.msra.mxu0 0
    %4243 = vmatpush.bf16.xpose.msra.mxu0 0
    %4244 = vmatpush.bf16.xpose.msra.mxu0 %v4235
    %4245 = vmatmul.bf16.gmra.mxu0 %v4232
    %v4246 = vpop.f32.mrf.mxu0
    %v4247 = vadd.f32 0.0, %v4246
    %v4248 = vpop.f32.mrf.mxu0
    %4249 = vdwg.mxu0
    %4250 = vrot.lane.b32.xlu0 %v3577, 104
    %v4251 = vpop.permute.xlu0 %4250
    %4252 = vrot.lane.b32.xlu0 %v3577, 72
    %v4253 = vpop.permute.xlu0 %4252
    %v4255 = vsel %vm1769, %v4251, 0
    %v4258 = vsel %vm1769, %v4253, 0
    %4260 = vmatpush.bf16.xpose.msra.mxu0 0
    %4261 = vmatpush.bf16.xpose.msra.mxu0 0
    %4262 = vmatpush.bf16.xpose.msra.mxu0 0
    %4263 = vmatpush.bf16.xpose.msra.mxu0 0
    %4264 = vmatpush.bf16.xpose.msra.mxu0 0
    %4265 = vmatpush.bf16.xpose.msra.mxu0 0
    %4266 = vmatpush.bf16.xpose.msra.mxu0 0
    %4267 = vmatpush.bf16.xpose.msra.mxu0 %v4258
    %4268 = vmatmul.bf16.gmra.mxu0 %v4255
    %v4269 = vpop.f32.mrf.mxu0
    %v4270 = vadd.f32 0.0, %v4269
    %v4271 = vpop.f32.mrf.mxu0
    %4272 = vdwg.mxu0
    %4273 = vrot.lane.b32.xlu0 %v3601, 104
    %v4274 = vpop.permute.xlu0 %4273
    %4275 = vrot.lane.b32.xlu0 %v3601, 72
    %v4276 = vpop.permute.xlu0 %4275
    %v4278 = vsel %vm1769, %v4274, 0
    %v4281 = vsel %vm1769, %v4276, 0
    %4283 = vmatpush.bf16.xpose.msra.mxu0 0
    %4284 = vmatpush.bf16.xpose.msra.mxu0 0
    %4285 = vmatpush.bf16.xpose.msra.mxu0 0
    %4286 = vmatpush.bf16.xpose.msra.mxu0 0
    %4287 = vmatpush.bf16.xpose.msra.mxu0 0
    %4288 = vmatpush.bf16.xpose.msra.mxu0 0
    %4289 = vmatpush.bf16.xpose.msra.mxu0 0
    %4290 = vmatpush.bf16.xpose.msra.mxu0 %v4281
    %4291 = vmatmul.bf16.gmra.mxu0 %v4278
    %v4292 = vpop.f32.mrf.mxu0
    %v4293 = vadd.f32 0.0, %v4292
    %v4294 = vpop.f32.mrf.mxu0
    %4295 = vdwg.mxu0
    %4296 = vrot.lane.b32.xlu0 %v3625, 104
    %v4297 = vpop.permute.xlu0 %4296
    %4298 = vrot.lane.b32.xlu0 %v3625, 72
    %v4299 = vpop.permute.xlu0 %4298
    %v4301 = vsel %vm1769, %v4297, 0
    %v4304 = vsel %vm1769, %v4299, 0
    %4306 = vmatpush.bf16.xpose.msra.mxu0 0
    %4307 = vmatpush.bf16.xpose.msra.mxu0 0
    %4308 = vmatpush.bf16.xpose.msra.mxu0 0
    %4309 = vmatpush.bf16.xpose.msra.mxu0 0
    %4310 = vmatpush.bf16.xpose.msra.mxu0 0
    %4311 = vmatpush.bf16.xpose.msra.mxu0 0
    %4312 = vmatpush.bf16.xpose.msra.mxu0 0
    %4313 = vmatpush.bf16.xpose.msra.mxu0 %v4304
    %4314 = vmatmul.bf16.gmra.mxu0 %v4301
    %v4315 = vpop.f32.mrf.mxu0
    %v4316 = vadd.f32 0.0, %v4315
    %v4317 = vpop.f32.mrf.mxu0
    %4318 = vdwg.mxu0
    %v4319 = vsel %vm1769, %v4247, -inf
    %4320 = vmax.xlane.f32.xlu0 %v4319
    %v4321 = vpop.xlane.xlu0 %4320
    %v4322 = vsel %vm1769, %v4270, -inf
    %4323 = vmax.xlane.f32.xlu0 %v4322
    %v4324 = vpop.xlane.xlu0 %4323
    %v4325 = vsel %vm1769, %v4293, -inf
    %4326 = vmax.xlane.f32.xlu0 %v4325
    %v4327 = vpop.xlane.xlu0 %4326
    %v4328 = vsel %vm1769, %v4316, -inf
    %4329 = vmax.xlane.f32.xlu0 %v4328
    %v4330 = vpop.xlane.xlu0 %4329
    %v4331 = vsub.f32 %v4247, %v4321
    %v4332 = vsub.f32 %v4270, %v4324
    %v4333 = vsub.f32 %v4293, %v4327
    %v4334 = vsub.f32 %v4316, %v4330
    %v4335 = vmul.f32 %v4331, 1.442695
    %v4336 = vpow.pop %v4335
    %v4337 = vmul.f32 %v4332, 1.442695
    %v4338 = vpow.pop %v4337
    %v4339 = vmul.f32 %v4333, 1.442695
    %v4340 = vpow.pop %v4339
    %v4341 = vmul.f32 %v4334, 1.442695
    %v4342 = vpow.pop %v4341
    %v4343 = vsel %vm1769, %v4336, 0.0
    %4344 = vadd.xlane.f32.xlu0 %v4343
    %v4345 = vpop.xlane.xlu0 %4344
    %v4346 = vsel %vm1769, %v4338, 0.0
    %4347 = vadd.xlane.f32.xlu0 %v4346
    %v4348 = vpop.xlane.xlu0 %4347
    %v4349 = vsel %vm1769, %v4340, 0.0
    %4350 = vadd.xlane.f32.xlu0 %v4349
    %v4351 = vpop.xlane.xlu0 %4350
    %v4352 = vsel %vm1769, %v4342, 0.0
    %4353 = vadd.xlane.f32.xlu0 %v4352
    %v4354 = vpop.xlane.xlu0 %4353
    %v4355 = vrcp.pop %v4345
    %v4356 = vrcp.pop %v4348
    %v4357 = vrcp.pop %v4351
    %v4358 = vrcp.pop %v4354
    %v4359 = vmul.f32 %v4336, %v4355
    %v4360 = vmul.f32 %v4338, %v4356
    %v4361 = vmul.f32 %v4340, %v4357
    %v4362 = vmul.f32 %v4342, %v4358
    %v4363 = vpack.c.bf16 %v4359, %v4359
    %v4364 = vpack.c.bf16 %v4360, %v4360
    %v4365 = vpack.c.bf16 %v4361, %v4361
    %v4366 = vpack.c.bf16 %v4362, %v4362
    %4367 = vrot.lane.b32.xlu0 %v3553, 40
    %v4368 = vpop.permute.xlu0 %4367
    %v4370 = vsel %vm1769, %v4363, 0
    %v4373 = vsel %vm1688, %v4368, 0
    %4375 = vmatpush.bf16.msra.mxu0 0
    %4376 = vmatpush.bf16.msra.mxu0 0
    %4377 = vmatpush.bf16.msra.mxu0 0
    %4378 = vmatpush.bf16.msra.mxu0 0
    %4379 = vmatpush.bf16.msra.mxu0 0
    %4380 = vmatpush.bf16.msra.mxu0 0
    %4381 = vmatpush.bf16.msra.mxu0 0
    %4382 = vmatpush.bf16.msra.mxu0 %v4373
    %4383 = vmatmul.bf16.gmra.mxu0 %v4370
    %v4384 = vpop.f32.mrf.mxu0
    %v4385 = vadd.f32 0.0, %v4384
    %v4386 = vpop.f32.mrf.mxu0
    %4387 = vdwg.mxu0
    %4388 = vrot.lane.b32.xlu0 %v3577, 40
    %v4389 = vpop.permute.xlu0 %4388
    %v4391 = vsel %vm1769, %v4364, 0
    %v4394 = vsel %vm1688, %v4389, 0
    %4396 = vmatpush.bf16.msra.mxu0 0
    %4397 = vmatpush.bf16.msra.mxu0 0
    %4398 = vmatpush.bf16.msra.mxu0 0
    %4399 = vmatpush.bf16.msra.mxu0 0
    %4400 = vmatpush.bf16.msra.mxu0 0
    %4401 = vmatpush.bf16.msra.mxu0 0
    %4402 = vmatpush.bf16.msra.mxu0 0
    %4403 = vmatpush.bf16.msra.mxu0 %v4394
    %4404 = vmatmul.bf16.gmra.mxu0 %v4391
    %v4405 = vpop.f32.mrf.mxu0
    %v4406 = vadd.f32 0.0, %v4405
    %v4407 = vpop.f32.mrf.mxu0
    %4408 = vdwg.mxu0
    %4409 = vrot.lane.b32.xlu0 %v3601, 40
    %v4410 = vpop.permute.xlu0 %4409
    %v4412 = vsel %vm1769, %v4365, 0
    %v4415 = vsel %vm1688, %v4410, 0
    %4417 = vmatpush.bf16.msra.mxu0 0
    %4418 = vmatpush.bf16.msra.mxu0 0
    %4419 = vmatpush.bf16.msra.mxu0 0
    %4420 = vmatpush.bf16.msra.mxu0 0
    %4421 = vmatpush.bf16.msra.mxu0 0
    %4422 = vmatpush.bf16.msra.mxu0 0
    %4423 = vmatpush.bf16.msra.mxu0 0
    %4424 = vmatpush.bf16.msra.mxu0 %v4415
    %4425 = vmatmul.bf16.gmra.mxu0 %v4412
    %v4426 = vpop.f32.mrf.mxu0
    %v4427 = vadd.f32 0.0, %v4426
    %v4428 = vpop.f32.mrf.mxu0
    %4429 = vdwg.mxu0
    %4430 = vrot.lane.b32.xlu0 %v3625, 40
    %v4431 = vpop.permute.xlu0 %4430
    %v4433 = vsel %vm1769, %v4366, 0
    %v4436 = vsel %vm1688, %v4431, 0
    %4438 = vmatpush.bf16.msra.mxu0 0
    %4439 = vmatpush.bf16.msra.mxu0 0
    %4440 = vmatpush.bf16.msra.mxu0 0
    %4441 = vmatpush.bf16.msra.mxu0 0
    %4442 = vmatpush.bf16.msra.mxu0 0
    %4443 = vmatpush.bf16.msra.mxu0 0
    %4444 = vmatpush.bf16.msra.mxu0 0
    %4445 = vmatpush.bf16.msra.mxu0 %v4436
    %4446 = vmatmul.bf16.gmra.mxu0 %v4433
    %v4447 = vpop.f32.mrf.mxu0
    %v4448 = vadd.f32 0.0, %v4447
    %v4449 = vpop.f32.mrf.mxu0
    %4450 = vdwg.mxu0
    %4455 = vrot.lane.b32.xlu0 %v3937, 8
    %v4456 = vpop.permute.xlu0 %4455
    %4457 = vrot.lane.b32.xlu0 %v3958, 8
    %v4458 = vpop.permute.xlu0 %4457
    %4459 = vrot.lane.b32.xlu0 %v3979, 8
    %v4460 = vpop.permute.xlu0 %4459
    %4461 = vrot.lane.b32.xlu0 %v4000, 8
    %v4462 = vpop.permute.xlu0 %4461
    %4471 = vrot.lane.b32.xlu0 %v4161, 16
    %v4472 = vpop.permute.xlu0 %4471
    %4473 = vrot.lane.b32.xlu0 %v4182, 16
    %v4474 = vpop.permute.xlu0 %4473
    %4475 = vrot.lane.b32.xlu0 %v4203, 16
    %v4476 = vpop.permute.xlu0 %4475
    %4477 = vrot.lane.b32.xlu0 %v4224, 16
    %v4478 = vpop.permute.xlu0 %4477
    %4487 = vrot.lane.b32.xlu0 %v4385, 24
    %v4488 = vpop.permute.xlu0 %4487
    %4489 = vrot.lane.b32.xlu0 %v4406, 24
    %v4490 = vpop.permute.xlu0 %4489
    %4491 = vrot.lane.b32.xlu0 %v4427, 24
    %v4492 = vpop.permute.xlu0 %4491
    %4493 = vrot.lane.b32.xlu0 %v4448, 24
    %v4494 = vpop.permute.xlu0 %4493
    %v4499 = vsel %vm1769, %v3713, %v4456
    %v4500 = vsel %vm1769, %v3734, %v4458
    %v4501 = vsel %vm1769, %v3755, %v4460
    %v4502 = vsel %vm1769, %v3776, %v4462
    %v4503 = vsel %vm1089, %v4499, %v4472
    %v4504 = vsel %vm1089, %v4500, %v4474
    %v4505 = vsel %vm1089, %v4501, %v4476
    %v4506 = vsel %vm1089, %v4502, %v4478
    %v4507 = vsel %vm2721, %v4503, %v4488
    %v4508 = vsel %vm2721, %v4504, %v4490
    %v4509 = vsel %vm2721, %v4505, %v4492
    %v4510 = vsel %vm2721, %v4506, %v4494
    %s4511 = scalar_lea.vmem %s37, 16
    %v4512 = vld [vmem:[%s4511] sm:$0xf]
    %v4513 = vld [vmem:[%s4511 + $0x4] sm:$0xf]
    %v4514 = vld [vmem:[%s4511 + $0x8] sm:$0xf]
    %v4515 = vld [vmem:[%s4511 + $0xc] sm:$0xf]
    %s4516 = scalar_lea.vmem %s39, 1
    %v4517 = vld [vmem:[%s4516] sm:$0x1]
    %v4518 = vpack.c.bf16 %v4508, %v4507
    %v4519 = vpack.c.bf16 %v4510, %v4509
    %v4521 = vperm.slane %v4517, 0
    %v4527 = vunpack.c.l.b16 %v4512
    %v4528 = vunpack.c.l.b16 %v4513
    %v4529 = vunpack.c.l.b16 %v4514
    %v4530 = vunpack.c.l.b16 %v4515
    %v4531 = vpack.c.b16 %v4528, %v4527
    %v4532 = vpack.c.b16 %v4530, %v4529
    %v4536 = vsel %vm300, %v4518, 0
    %v4539 = vsel %vm300, %v4519, 0
    %4541 = vmatpush.bf16.msra.mxu0 0
    %4542 = vmatpush.bf16.msra.mxu0 0
    %4543 = vmatpush.bf16.msra.mxu0 0
    %4544 = vmatpush.bf16.msra.mxu0 0
    %4545 = vmatpush.bf16.msra.mxu0 0
    %4546 = vmatpush.bf16.msra.mxu0 0
    %4547 = vmatpush.bf16.msra.mxu0 %v4532
    %4548 = vmatpush.bf16.msra.mxu0 %v4531
    %4549 = vmatmul.bf16.gmra.mxu0 %v4536
    %v4550 = vpop.f32.mrf.mxu0
    %v4551 = vadd.f32 %v4521, %v4550
    %v4552 = vpop.f32.mrf.mxu0
    %v4553 = vadd.f32 %v4521, %v4552
    %4554 = vmatmul.bf16.gmra.mxu0 %v4539
    %v4555 = vpop.f32.mrf.mxu0
    %v4556 = vadd.f32 %v4521, %v4555
    %v4557 = vpop.f32.mrf.mxu0
    %v4558 = vadd.f32 %v4521, %v4557
    %4559 = vdwg.mxu0
    %v4560 = vadd.f32 %v3494, %v4551
    %v4561 = vadd.f32 %v3495, %v4553
    %v4562 = vadd.f32 %v3496, %v4556
    %v4563 = vadd.f32 %v3497, %v4558
    %s4564 = scalar_lea.vmem %s41, 1
    %v4565 = vld [vmem:[%s4564] sm:$0x1]
    %s4566 = scalar_lea.vmem %s43, 1
    %v4567 = vld [vmem:[%s4566] sm:$0x1]
    %v4568 = vsel %vm300, %v4560, 0.0
    %4569 = vadd.xlane.f32.xlu0 %v4568
    %v4570 = vpop.xlane.xlu0 %4569
    %v4571 = vsel %vm300, %v4561, 0.0
    %4572 = vadd.xlane.f32.xlu0 %v4571
    %v4573 = vpop.xlane.xlu0 %4572
    %v4574 = vsel %vm300, %v4562, 0.0
    %4575 = vadd.xlane.f32.xlu0 %v4574
    %v4576 = vpop.xlane.xlu0 %4575
    %v4577 = vsel %vm300, %v4563, 0.0
    %4578 = vadd.xlane.f32.xlu0 %v4577
    %v4579 = vpop.xlane.xlu0 %4578
    %v4580 = vmul.f32 %v4570, %v2797
    %v4581 = vmul.f32 %v4573, %v2797
    %v4582 = vmul.f32 %v4576, %v2797
    %v4583 = vmul.f32 %v4579, %v2797
    %v4584 = vsub.f32 %v4560, %v4580
    %v4585 = vsub.f32 %v4561, %v4581
    %v4586 = vsub.f32 %v4562, %v4582
    %v4587 = vsub.f32 %v4563, %v4583
    %v4588 = vmul.f32 %v4584, %v4584
    %v4589 = vmul.f32 %v4585, %v4585
    %v4590 = vmul.f32 %v4586, %v4586
    %v4591 = vmul.f32 %v4587, %v4587
    %v4592 = vsel %vm300, %v4588, 0.0
    %4593 = vadd.xlane.f32.xlu0 %v4592
    %v4594 = vpop.xlane.xlu0 %4593
    %v4595 = vsel %vm300, %v4589, 0.0
    %4596 = vadd.xlane.f32.xlu0 %v4595
    %v4597 = vpop.xlane.xlu0 %4596
    %v4598 = vsel %vm300, %v4590, 0.0
    %4599 = vadd.xlane.f32.xlu0 %v4598
    %v4600 = vpop.xlane.xlu0 %4599
    %v4601 = vsel %vm300, %v4591, 0.0
    %4602 = vadd.xlane.f32.xlu0 %v4601
    %v4603 = vpop.xlane.xlu0 %4602
    %v4604 = vmul.f32 %v4594, %v2797
    %v4605 = vmul.f32 %v4597, %v2797
    %v4606 = vmul.f32 %v4600, %v2797
    %v4607 = vmul.f32 %v4603, %v2797
    %v4608 = vadd.f32 %v4604, 1e-05
    %v4609 = vadd.f32 %v4605, 1e-05
    %v4610 = vadd.f32 %v4606, 1e-05
    %v4611 = vadd.f32 %v4607, 1e-05
    %v4612 = vrsqrt.pop %v4608
    %v4613 = vmul.f32 %v4612, %v4608
    %v4614 = vmul.f32 %v4613, %v4612
    %v4615 = vmul.f32 0.5, %v4614
    %v4616 = vsub.f32 1.5, %v4615
    %v4617 = vmul.f32 %v4612, %v4616
    %vm4618 = vweird.f32 %v4608
    %vm4619 = vweird.f32 %v4612
    %vm4620 = vmor %vm4618, %vm4619
    %v4621 = vsel %vm4620, %v4612, %v4617
    %v4622 = vrsqrt.pop %v4609
    %v4623 = vmul.f32 %v4622, %v4609
    %v4624 = vmul.f32 %v4623, %v4622
    %v4625 = vmul.f32 0.5, %v4624
    %v4626 = vsub.f32 1.5, %v4625
    %v4627 = vmul.f32 %v4622, %v4626
    %vm4628 = vweird.f32 %v4609
    %vm4629 = vweird.f32 %v4622
    %vm4630 = vmor %vm4628, %vm4629
    %v4631 = vsel %vm4630, %v4622, %v4627
    %v4632 = vrsqrt.pop %v4610
    %v4633 = vmul.f32 %v4632, %v4610
    %v4634 = vmul.f32 %v4633, %v4632
    %v4635 = vmul.f32 0.5, %v4634
    %v4636 = vsub.f32 1.5, %v4635
    %v4637 = vmul.f32 %v4632, %v4636
    %vm4638 = vweird.f32 %v4610
    %vm4639 = vweird.f32 %v4632
    %vm4640 = vmor %vm4638, %vm4639
    %v4641 = vsel %vm4640, %v4632, %v4637
    %v4642 = vrsqrt.pop %v4611
    %v4643 = vmul.f32 %v4642, %v4611
    %v4644 = vmul.f32 %v4643, %v4642
    %v4645 = vmul.f32 0.5, %v4644
    %v4646 = vsub.f32 1.5, %v4645
    %v4647 = vmul.f32 %v4642, %v4646
    %vm4648 = vweird.f32 %v4611
    %vm4649 = vweird.f32 %v4642
    %vm4650 = vmor %vm4648, %vm4649
    %v4651 = vsel %vm4650, %v4642, %v4647
    %v4652 = vmul.f32 %v4584, %v4621
    %v4653 = vmul.f32 %v4585, %v4631
    %v4654 = vmul.f32 %v4586, %v4641
    %v4655 = vmul.f32 %v4587, %v4651
    %v4657 = vperm.slane %v4565, 0
    %v4659 = vmul.f32 %v4652, %v4657
    %v4660 = vmul.f32 %v4653, %v4657
    %v4661 = vmul.f32 %v4654, %v4657
    %v4662 = vmul.f32 %v4655, %v4657
    %v4664 = vperm.slane %v4567, 0
    %v4666 = vadd.f32 %v4659, %v4664
    %v4667 = vadd.f32 %v4660, %v4664
    %v4668 = vadd.f32 %v4661, %v4664
    %v4669 = vadd.f32 %v4662, %v4664
    %s4670 = scalar_lea.vmem %s45, 64
    %v4671 = vld [vmem:[%s4670] sm:$0xff]
    %v4672 = vld [vmem:[%s4670 + $0x8] sm:$0xff]
    %v4673 = vld [vmem:[%s4670 + $0x10] sm:$0xff]
    %v4674 = vld [vmem:[%s4670 + $0x18] sm:$0xff]
    %v4675 = vld [vmem:[%s4670 + $0x20] sm:$0xff]
    %v4676 = vld [vmem:[%s4670 + $0x28] sm:$0xff]
    %v4677 = vld [vmem:[%s4670 + $0x30] sm:$0xff]
    %v4678 = vld [vmem:[%s4670 + $0x38] sm:$0xff]
    %s4679 = scalar_lea.vmem %s47, 4
    %v4680 = vld [vmem:[%s4679] sm:$0xf]
    %v4681 = vpack.c.bf16 %v4667, %v4666
    %v4682 = vpack.c.bf16 %v4669, %v4668
    %v4684 = vperm.slane %v4680, 0
    %v4685 = vperm.slane %v4680, 1
    %v4686 = vperm.slane %v4680, 2
    %v4687 = vperm.slane %v4680, 3
    %v4700 = vunpack.c.l.b16 %v4671
    %v4701 = vunpack.c.h.b16 %v4671
    %v4702 = vunpack.c.l.b16 %v4672
    %v4703 = vunpack.c.h.b16 %v4672
    %v4704 = vunpack.c.l.b16 %v4673
    %v4705 = vunpack.c.h.b16 %v4673
    %v4706 = vunpack.c.l.b16 %v4674
    %v4707 = vunpack.c.h.b16 %v4674
    %v4708 = vunpack.c.l.b16 %v4675
    %v4709 = vunpack.c.h.b16 %v4675
    %v4710 = vunpack.c.l.b16 %v4676
    %v4711 = vunpack.c.h.b16 %v4676
    %v4712 = vunpack.c.l.b16 %v4677
    %v4713 = vunpack.c.h.b16 %v4677
    %v4714 = vunpack.c.l.b16 %v4678
    %v4715 = vunpack.c.h.b16 %v4678
    %v4716 = vpack.c.b16 %v4704, %v4700
    %v4717 = vpack.c.b16 %v4705, %v4701
    %v4718 = vpack.c.b16 %v4706, %v4702
    %v4719 = vpack.c.b16 %v4707, %v4703
    %v4720 = vpack.c.b16 %v4712, %v4708
    %v4721 = vpack.c.b16 %v4713, %v4709
    %v4722 = vpack.c.b16 %v4714, %v4710
    %v4723 = vpack.c.b16 %v4715, %v4711
    %v4733 = vsel %vm300, %v4681, 0
    %v4736 = vsel %vm300, %v4682, 0
    %4738 = vmatpush.bf16.msra.mxu0 0
    %4739 = vmatpush.bf16.msra.mxu0 0
    %4740 = vmatpush.bf16.msra.mxu0 0
    %4741 = vmatpush.bf16.msra.mxu0 0
    %4742 = vmatpush.bf16.msra.mxu0 0
    %4743 = vmatpush.bf16.msra.mxu0 0
    %4744 = vmatpush.bf16.msra.mxu0 %v4720
    %4745 = vmatpush.bf16.msra.mxu0 %v4716
    %4746 = vmatmul.bf16.gmra.mxu0 %v4733
    %v4747 = vpop.f32.mrf.mxu0
    %v4748 = vadd.f32 %v4684, %v4747
    %v4749 = vpop.f32.mrf.mxu0
    %v4750 = vadd.f32 %v4684, %v4749
    %4751 = vmatmul.bf16.gmra.mxu0 %v4736
    %v4752 = vpop.f32.mrf.mxu0
    %v4753 = vadd.f32 %v4684, %v4752
    %v4754 = vpop.f32.mrf.mxu0
    %v4755 = vadd.f32 %v4684, %v4754
    %4756 = vdwg.mxu0
    %4757 = vmatpush.bf16.msra.mxu0 0
    %4758 = vmatpush.bf16.msra.mxu0 0
    %4759 = vmatpush.bf16.msra.mxu0 0
    %4760 = vmatpush.bf16.msra.mxu0 0
    %4761 = vmatpush.bf16.msra.mxu0 0
    %4762 = vmatpush.bf16.msra.mxu0 0
    %4763 = vmatpush.bf16.msra.mxu0 %v4721
    %4764 = vmatpush.bf16.msra.mxu0 %v4717
    %4765 = vmatmul.bf16.gmra.mxu0 %v4733
    %v4766 = vpop.f32.mrf.mxu0
    %v4767 = vadd.f32 %v4685, %v4766
    %v4768 = vpop.f32.mrf.mxu0
    %v4769 = vadd.f32 %v4685, %v4768
    %4770 = vmatmul.bf16.gmra.mxu0 %v4736
    %v4771 = vpop.f32.mrf.mxu0
    %v4772 = vadd.f32 %v4685, %v4771
    %v4773 = vpop.f32.mrf.mxu0
    %v4774 = vadd.f32 %v4685, %v4773
    %4775 = vdwg.mxu0
    %4776 = vmatpush.bf16.msra.mxu0 0
    %4777 = vmatpush.bf16.msra.mxu0 0
    %4778 = vmatpush.bf16.msra.mxu0 0
    %4779 = vmatpush.bf16.msra.mxu0 0
    %4780 = vmatpush.bf16.msra.mxu0 0
    %4781 = vmatpush.bf16.msra.mxu0 0
    %4782 = vmatpush.bf16.msra.mxu0 %v4722
    %4783 = vmatpush.bf16.msra.mxu0 %v4718
    %4784 = vmatmul.bf16.gmra.mxu0 %v4733
    %v4785 = vpop.f32.mrf.mxu0
    %v4786 = vadd.f32 %v4686, %v4785
    %v4787 = vpop.f32.mrf.mxu0
    %v4788 = vadd.f32 %v4686, %v4787
    %4789 = vmatmul.bf16.gmra.mxu0 %v4736
    %v4790 = vpop.f32.mrf.mxu0
    %v4791 = vadd.f32 %v4686, %v4790
    %v4792 = vpop.f32.mrf.mxu0
    %v4793 = vadd.f32 %v4686, %v4792
    %4794 = vdwg.mxu0
    %4795 = vmatpush.bf16.msra.mxu0 0
    %4796 = vmatpush.bf16.msra.mxu0 0
    %4797 = vmatpush.bf16.msra.mxu0 0
    %4798 = vmatpush.bf16.msra.mxu0 0
    %4799 = vmatpush.bf16.msra.mxu0 0
    %4800 = vmatpush.bf16.msra.mxu0 0
    %4801 = vmatpush.bf16.msra.mxu0 %v4723
    %4802 = vmatpush.bf16.msra.mxu0 %v4719
    %4803 = vmatmul.bf16.gmra.mxu0 %v4733
    %v4804 = vpop.f32.mrf.mxu0
    %v4805 = vadd.f32 %v4687, %v4804
    %v4806 = vpop.f32.mrf.mxu0
    %v4807 = vadd.f32 %v4687, %v4806
    %4808 = vmatmul.bf16.gmra.mxu0 %v4736
    %v4809 = vpop.f32.mrf.mxu0
    %v4810 = vadd.f32 %v4687, %v4809
    %v4811 = vpop.f32.mrf.mxu0
    %v4812 = vadd.f32 %v4687, %v4811
    %4813 = vdwg.mxu0
    %v4814 = vmax.f32 %v4748, 0.0
    %v4815 = vmax.f32 %v4767, 0.0
    %v4816 = vmax.f32 %v4786, 0.0
    %v4817 = vmax.f32 %v4805, 0.0
    %v4818 = vmax.f32 %v4750, 0.0
    %v4819 = vmax.f32 %v4769, 0.0
    %v4820 = vmax.f32 %v4788, 0.0
    %v4821 = vmax.f32 %v4807, 0.0
    %v4822 = vmax.f32 %v4753, 0.0
    %v4823 = vmax.f32 %v4772, 0.0
    %v4824 = vmax.f32 %v4791, 0.0
    %v4825 = vmax.f32 %v4810, 0.0
    %v4826 = vmax.f32 %v4755, 0.0
    %v4827 = vmax.f32 %v4774, 0.0
    %v4828 = vmax.f32 %v4793, 0.0
    %v4829 = vmax.f32 %v4812, 0.0
    %s4830 = scalar_lea.vmem %s49, 256
    %v4831 = vld [vmem:[%s4830] sm:$0xf]
    %v4832 = vld [vmem:[%s4830 + $0x4] sm:$0xf]
    %v4833 = vld [vmem:[%s4830 + $0x8] sm:$0xf]
    %v4834 = vld [vmem:[%s4830 + $0xc] sm:$0xf]
    %v4835 = vld [vmem:[%s4830 + $0x10] sm:$0xf]
    %v4836 = vld [vmem:[%s4830 + $0x14] sm:$0xf]
    %v4837 = vld [vmem:[%s4830 + $0x18] sm:$0xf]
    %v4838 = vld [vmem:[%s4830 + $0x1c] sm:$0xf]
    %v4839 = vld [vmem:[%s4830 + $0x20] sm:$0xf]
    %v4840 = vld [vmem:[%s4830 + $0x24] sm:$0xf]
    %v4841 = vld [vmem:[%s4830 + $0x28] sm:$0xf]
    %v4842 = vld [vmem:[%s4830 + $0x2c] sm:$0xf]
    %v4843 = vld [vmem:[%s4830 + $0x30] sm:$0xf]
    %v4844 = vld [vmem:[%s4830 + $0x34] sm:$0xf]
    %v4845 = vld [vmem:[%s4830 + $0x38] sm:$0xf]
    %v4846 = vld [vmem:[%s4830 + $0x3c] sm:$0xf]
    %v4847 = vld [vmem:[%s4830 + $0x40] sm:$0xf]
    %v4848 = vld [vmem:[%s4830 + $0x44] sm:$0xf]
    %v4849 = vld [vmem:[%s4830 + $0x48] sm:$0xf]
    %v4850 = vld [vmem:[%s4830 + $0x4c] sm:$0xf]
    %v4851 = vld [vmem:[%s4830 + $0x50] sm:$0xf]
    %v4852 = vld [vmem:[%s4830 + $0x54] sm:$0xf]
    %v4853 = vld [vmem:[%s4830 + $0x58] sm:$0xf]
    %v4854 = vld [vmem:[%s4830 + $0x5c] sm:$0xf]
    %v4855 = vld [vmem:[%s4830 + $0x60] sm:$0xf]
    %v4856 = vld [vmem:[%s4830 + $0x64] sm:$0xf]
    %v4857 = vld [vmem:[%s4830 + $0x68] sm:$0xf]
    %v4858 = vld [vmem:[%s4830 + $0x6c] sm:$0xf]
    %v4859 = vld [vmem:[%s4830 + $0x70] sm:$0xf]
    %v4860 = vld [vmem:[%s4830 + $0x74] sm:$0xf]
    %v4861 = vld [vmem:[%s4830 + $0x78] sm:$0xf]
    %v4862 = vld [vmem:[%s4830 + $0x7c] sm:$0xf]
    %v4863 = vld [vmem:[%s4830 + $0x80] sm:$0xf]
    %v4864 = vld [vmem:[%s4830 + $0x84] sm:$0xf]
    %v4865 = vld [vmem:[%s4830 + $0x88] sm:$0xf]
    %v4866 = vld [vmem:[%s4830 + $0x8c] sm:$0xf]
    %v4867 = vld [vmem:[%s4830 + $0x90] sm:$0xf]
    %v4868 = vld [vmem:[%s4830 + $0x94] sm:$0xf]
    %v4869 = vld [vmem:[%s4830 + $0x98] sm:$0xf]
    %v4870 = vld [vmem:[%s4830 + $0x9c] sm:$0xf]
    %v4871 = vld [vmem:[%s4830 + $0xa0] sm:$0xf]
    %v4872 = vld [vmem:[%s4830 + $0xa4] sm:$0xf]
    %v4873 = vld [vmem:[%s4830 + $0xa8] sm:$0xf]
    %v4874 = vld [vmem:[%s4830 + $0xac] sm:$0xf]
    %v4875 = vld [vmem:[%s4830 + $0xb0] sm:$0xf]
    %v4876 = vld [vmem:[%s4830 + $0xb4] sm:$0xf]
    %v4877 = vld [vmem:[%s4830 + $0xb8] sm:$0xf]
    %v4878 = vld [vmem:[%s4830 + $0xbc] sm:$0xf]
    %v4879 = vld [vmem:[%s4830 + $0xc0] sm:$0xf]
    %v4880 = vld [vmem:[%s4830 + $0xc4] sm:$0xf]
    %v4881 = vld [vmem:[%s4830 + $0xc8] sm:$0xf]
    %v4882 = vld [vmem:[%s4830 + $0xcc] sm:$0xf]
    %v4883 = vld [vmem:[%s4830 + $0xd0] sm:$0xf]
    %v4884 = vld [vmem:[%s4830 + $0xd4] sm:$0xf]
    %v4885 = vld [vmem:[%s4830 + $0xd8] sm:$0xf]
    %v4886 = vld [vmem:[%s4830 + $0xdc] sm:$0xf]
    %v4887 = vld [vmem:[%s4830 + $0xe0] sm:$0xf]
    %v4888 = vld [vmem:[%s4830 + $0xe4] sm:$0xf]
    %v4889 = vld [vmem:[%s4830 + $0xe8] sm:$0xf]
    %v4890 = vld [vmem:[%s4830 + $0xec] sm:$0xf]
    %v4891 = vld [vmem:[%s4830 + $0xf0] sm:$0xf]
    %v4892 = vld [vmem:[%s4830 + $0xf4] sm:$0xf]
    %v4893 = vld [vmem:[%s4830 + $0xf8] sm:$0xf]
    %v4894 = vld [vmem:[%s4830 + $0xfc] sm:$0xf]
    %s4895 = scalar_lea.vmem %s51, 1
    %v4896 = vld [vmem:[%s4895] sm:$0x1]
    %v4897 = vpack.c.bf16 %v4818, %v4814
    %v4898 = vpack.c.bf16 %v4819, %v4815
    %v4899 = vpack.c.bf16 %v4820, %v4816
    %v4900 = vpack.c.bf16 %v4821, %v4817
    %v4901 = vpack.c.bf16 %v4826, %v4822
    %v4902 = vpack.c.bf16 %v4827, %v4823
    %v4903 = vpack.c.bf16 %v4828, %v4824
    %v4904 = vpack.c.bf16 %v4829, %v4825
    %v4906 = vperm.slane %v4896, 0
    %v4972 = vunpack.c.l.b16 %v4831
    %v4973 = vunpack.c.l.b16 %v4832
    %v4974 = vunpack.c.l.b16 %v4833
    %v4975 = vunpack.c.l.b16 %v4834
    %v4976 = vunpack.c.l.b16 %v4835
    %v4977 = vunpack.c.l.b16 %v4836
    %v4978 = vunpack.c.l.b16 %v4837
    %v4979 = vunpack.c.l.b16 %v4838
    %v4980 = vunpack.c.l.b16 %v4839
    %v4981 = vunpack.c.l.b16 %v4840
    %v4982 = vunpack.c.l.b16 %v4841
    %v4983 = vunpack.c.l.b16 %v4842
    %v4984 = vunpack.c.l.b16 %v4843
    %v4985 = vunpack.c.l.b16 %v4844
    %v4986 = vunpack.c.l.b16 %v4845
    %v4987 = vunpack.c.l.b16 %v4846
    %v4988 = vunpack.c.l.b16 %v4847
    %v4989 = vunpack.c.l.b16 %v4848
    %v4990 = vunpack.c.l.b16 %v4849
    %v4991 = vunpack.c.l.b16 %v4850
    %v4992 = vunpack.c.l.b16 %v4851
    %v4993 = vunpack.c.l.b16 %v4852
    %v4994 = vunpack.c.l.b16 %v4853
    %v4995 = vunpack.c.l.b16 %v4854
    %v4996 = vunpack.c.l.b16 %v4855
    %v4997 = vunpack.c.l.b16 %v4856
    %v4998 = vunpack.c.l.b16 %v4857
    %v4999 = vunpack.c.l.b16 %v4858
    %v5000 = vunpack.c.l.b16 %v4859
    %v5001 = vunpack.c.l.b16 %v4860
    %v5002 = vunpack.c.l.b16 %v4861
    %v5003 = vunpack.c.l.b16 %v4862
    %v5004 = vunpack.c.l.b16 %v4863
    %v5005 = vunpack.c.l.b16 %v4864
    %v5006 = vunpack.c.l.b16 %v4865
    %v5007 = vunpack.c.l.b16 %v4866
    %v5008 = vunpack.c.l.b16 %v4867
    %v5009 = vunpack.c.l.b16 %v4868
    %v5010 = vunpack.c.l.b16 %v4869
    %v5011 = vunpack.c.l.b16 %v4870
    %v5012 = vunpack.c.l.b16 %v4871
    %v5013 = vunpack.c.l.b16 %v4872
    %v5014 = vunpack.c.l.b16 %v4873
    %v5015 = vunpack.c.l.b16 %v4874
    %v5016 = vunpack.c.l.b16 %v4875
    %v5017 = vunpack.c.l.b16 %v4876
    %v5018 = vunpack.c.l.b16 %v4877
    %v5019 = vunpack.c.l.b16 %v4878
    %v5020 = vunpack.c.l.b16 %v4879
    %v5021 = vunpack.c.l.b16 %v4880
    %v5022 = vunpack.c.l.b16 %v4881
    %v5023 = vunpack.c.l.b16 %v4882
    %v5024 = vunpack.c.l.b16 %v4883
    %v5025 = vunpack.c.l.b16 %v4884
    %v5026 = vunpack.c.l.b16 %v4885
    %v5027 = vunpack.c.l.b16 %v4886
    %v5028 = vunpack.c.l.b16 %v4887
    %v5029 = vunpack.c.l.b16 %v4888
    %v5030 = vunpack.c.l.b16 %v4889
    %v5031 = vunpack.c.l.b16 %v4890
    %v5032 = vunpack.c.l.b16 %v4891
    %v5033 = vunpack.c.l.b16 %v4892
    %v5034 = vunpack.c.l.b16 %v4893
    %v5035 = vunpack.c.l.b16 %v4894
    %v5036 = vpack.c.b16 %v4973, %v4972
    %v5037 = vpack.c.b16 %v4975, %v4974
    %v5038 = vpack.c.b16 %v4977, %v4976
    %v5039 = vpack.c.b16 %v4979, %v4978
    %v5040 = vpack.c.b16 %v4981, %v4980
    %v5041 = vpack.c.b16 %v4983, %v4982
    %v5042 = vpack.c.b16 %v4985, %v4984
    %v5043 = vpack.c.b16 %v4987, %v4986
    %v5044 = vpack.c.b16 %v4989, %v4988
    %v5045 = vpack.c.b16 %v4991, %v4990
    %v5046 = vpack.c.b16 %v4993, %v4992
    %v5047 = vpack.c.b16 %v4995, %v4994
    %v5048 = vpack.c.b16 %v4997, %v4996
    %v5049 = vpack.c.b16 %v4999, %v4998
    %v5050 = vpack.c.b16 %v5001, %v5000
    %v5051 = vpack.c.b16 %v5003, %v5002
    %v5052 = vpack.c.b16 %v5005, %v5004
    %v5053 = vpack.c.b16 %v5007, %v5006
    %v5054 = vpack.c.b16 %v5009, %v5008
    %v5055 = vpack.c.b16 %v5011, %v5010
    %v5056 = vpack.c.b16 %v5013, %v5012
    %v5057 = vpack.c.b16 %v5015, %v5014
    %v5058 = vpack.c.b16 %v5017, %v5016
    %v5059 = vpack.c.b16 %v5019, %v5018
    %v5060 = vpack.c.b16 %v5021, %v5020
    %v5061 = vpack.c.b16 %v5023, %v5022
    %v5062 = vpack.c.b16 %v5025, %v5024
    %v5063 = vpack.c.b16 %v5027, %v5026
    %v5064 = vpack.c.b16 %v5029, %v5028
    %v5065 = vpack.c.b16 %v5031, %v5030
    %v5066 = vpack.c.b16 %v5033, %v5032
    %v5067 = vpack.c.b16 %v5035, %v5034
    %5100 = vmatpush.bf16.msra.mxu0 %v5043
    %5101 = vmatpush.bf16.msra.mxu0 %v5042
    %5102 = vmatpush.bf16.msra.mxu0 %v5041
    %5103 = vmatpush.bf16.msra.mxu0 %v5040
    %5104 = vmatpush.bf16.msra.mxu0 %v5039
    %5105 = vmatpush.bf16.msra.mxu0 %v5038
    %5106 = vmatpush.bf16.msra.mxu0 %v5037
    %5107 = vmatpush.bf16.msra.mxu0 %v5036
    %5108 = vmatmul.bf16.gmra.mxu0 %v4897
    %v5109 = vpop.f32.mrf.mxu0
    %v5110 = vadd.f32 %v4906, %v5109
    %v5111 = vpop.f32.mrf.mxu0
    %v5112 = vadd.f32 %v4906, %v5111
    %5113 = vmatmul.bf16.gmra.mxu0 %v4901
    %v5114 = vpop.f32.mrf.mxu0
    %v5115 = vadd.f32 %v4906, %v5114
    %v5116 = vpop.f32.mrf.mxu0
    %v5117 = vadd.f32 %v4906, %v5116
    %5118 = vdwg.mxu0
    %5119 = vmatpush.bf16.msra.mxu0 %v5051
    %5120 = vmatpush.bf16.msra.mxu0 %v5050
    %5121 = vmatpush.bf16.msra.mxu0 %v5049
    %5122 = vmatpush.bf16.msra.mxu0 %v5048
    %5123 = vmatpush.bf16.msra.mxu0 %v5047
    %5124 = vmatpush.bf16.msra.mxu0 %v5046
    %5125 = vmatpush.bf16.msra.mxu0 %v5045
    %5126 = vmatpush.bf16.msra.mxu0 %v5044
    %5127 = vmatmul.bf16.gmra.mxu0 %v4898
    %v5128 = vpop.f32.mrf.mxu0
    %v5129 = vadd.f32 %v5110, %v5128
    %v5130 = vpop.f32.mrf.mxu0
    %v5131 = vadd.f32 %v5112, %v5130
    %5132 = vmatmul.bf16.gmra.mxu0 %v4902
    %v5133 = vpop.f32.mrf.mxu0
    %v5134 = vadd.f32 %v5115, %v5133
    %v5135 = vpop.f32.mrf.mxu0
    %v5136 = vadd.f32 %v5117, %v5135
    %5137 = vdwg.mxu0
    %5138 = vmatpush.bf16.msra.mxu0 %v5059
    %5139 = vmatpush.bf16.msra.mxu0 %v5058
    %5140 = vmatpush.bf16.msra.mxu0 %v5057
    %5141 = vmatpush.bf16.msra.mxu0 %v5056
    %5142 = vmatpush.bf16.msra.mxu0 %v5055
    %5143 = vmatpush.bf16.msra.mxu0 %v5054
    %5144 = vmatpush.bf16.msra.mxu0 %v5053
    %5145 = vmatpush.bf16.msra.mxu0 %v5052
    %5146 = vmatmul.bf16.gmra.mxu0 %v4899
    %v5147 = vpop.f32.mrf.mxu0
    %v5148 = vadd.f32 %v5129, %v5147
    %v5149 = vpop.f32.mrf.mxu0
    %v5150 = vadd.f32 %v5131, %v5149
    %5151 = vmatmul.bf16.gmra.mxu0 %v4903
    %v5152 = vpop.f32.mrf.mxu0
    %v5153 = vadd.f32 %v5134, %v5152
    %v5154 = vpop.f32.mrf.mxu0
    %v5155 = vadd.f32 %v5136, %v5154
    %5156 = vdwg.mxu0
    %5157 = vmatpush.bf16.msra.mxu0 %v5067
    %5158 = vmatpush.bf16.msra.mxu0 %v5066
    %5159 = vmatpush.bf16.msra.mxu0 %v5065
    %5160 = vmatpush.bf16.msra.mxu0 %v5064
    %5161 = vmatpush.bf16.msra.mxu0 %v5063
    %5162 = vmatpush.bf16.msra.mxu0 %v5062
    %5163 = vmatpush.bf16.msra.mxu0 %v5061
    %5164 = vmatpush.bf16.msra.mxu0 %v5060
    %5165 = vmatmul.bf16.gmra.mxu0 %v4900
    %v5166 = vpop.f32.mrf.mxu0
    %v5167 = vadd.f32 %v5148, %v5166
    %v5168 = vpop.f32.mrf.mxu0
    %v5169 = vadd.f32 %v5150, %v5168
    %5170 = vmatmul.bf16.gmra.mxu0 %v4904
    %v5171 = vpop.f32.mrf.mxu0
    %v5172 = vadd.f32 %v5153, %v5171
    %v5173 = vpop.f32.mrf.mxu0
    %v5174 = vadd.f32 %v5155, %v5173
    %5175 = vdwg.mxu0
    %v5176 = vadd.f32 %v4666, %v5167
    %v5177 = vadd.f32 %v4667, %v5169
    %v5178 = vadd.f32 %v4668, %v5172
    %v5179 = vadd.f32 %v4669, %v5174
    %s5180 = scalar_lea.vmem %s53, 1
    %v5181 = vld [vmem:[%s5180] sm:$0x1]
    %s5182 = scalar_lea.vmem %s55, 1
    %v5183 = vld [vmem:[%s5182] sm:$0x1]
    %v5184 = vsel %vm300, %v5176, 0.0
    %5185 = vadd.xlane.f32.xlu0 %v5184
    %v5186 = vpop.xlane.xlu0 %5185
    %v5187 = vsel %vm300, %v5177, 0.0
    %5188 = vadd.xlane.f32.xlu0 %v5187
    %v5189 = vpop.xlane.xlu0 %5188
    %v5190 = vsel %vm300, %v5178, 0.0
    %5191 = vadd.xlane.f32.xlu0 %v5190
    %v5192 = vpop.xlane.xlu0 %5191
    %v5193 = vsel %vm300, %v5179, 0.0
    %5194 = vadd.xlane.f32.xlu0 %v5193
    %v5195 = vpop.xlane.xlu0 %5194
    %v5196 = vmul.f32 %v5186, %v2797
    %v5197 = vmul.f32 %v5189, %v2797
    %v5198 = vmul.f32 %v5192, %v2797
    %v5199 = vmul.f32 %v5195, %v2797
    %v5200 = vsub.f32 %v5176, %v5196
    %v5201 = vsub.f32 %v5177, %v5197
    %v5202 = vsub.f32 %v5178, %v5198
    %v5203 = vsub.f32 %v5179, %v5199
    %v5204 = vmul.f32 %v5200, %v5200
    %v5205 = vmul.f32 %v5201, %v5201
    %v5206 = vmul.f32 %v5202, %v5202
    %v5207 = vmul.f32 %v5203, %v5203
    %v5208 = vsel %vm300, %v5204, 0.0
    %5209 = vadd.xlane.f32.xlu0 %v5208
    %v5210 = vpop.xlane.xlu0 %5209
    %v5211 = vsel %vm300, %v5205, 0.0
    %5212 = vadd.xlane.f32.xlu0 %v5211
    %v5213 = vpop.xlane.xlu0 %5212
    %v5214 = vsel %vm300, %v5206, 0.0
    %5215 = vadd.xlane.f32.xlu0 %v5214
    %v5216 = vpop.xlane.xlu0 %5215
    %v5217 = vsel %vm300, %v5207, 0.0
    %5218 = vadd.xlane.f32.xlu0 %v5217
    %v5219 = vpop.xlane.xlu0 %5218
    %v5220 = vmul.f32 %v5210, %v2797
    %v5221 = vmul.f32 %v5213, %v2797
    %v5222 = vmul.f32 %v5216, %v2797
    %v5223 = vmul.f32 %v5219, %v2797
    %v5224 = vadd.f32 %v5220, 1e-05
    %v5225 = vadd.f32 %v5221, 1e-05
    %v5226 = vadd.f32 %v5222, 1e-05
    %v5227 = vadd.f32 %v5223, 1e-05
    %v5228 = vrsqrt.pop %v5224
    %v5229 = vmul.f32 %v5228, %v5224
    %v5230 = vmul.f32 %v5229, %v5228
    %v5231 = vmul.f32 0.5, %v5230
    %v5232 = vsub.f32 1.5, %v5231
    %v5233 = vmul.f32 %v5228, %v5232
    %vm5234 = vweird.f32 %v5224
    %vm5235 = vweird.f32 %v5228
    %vm5236 = vmor %vm5234, %vm5235
    %v5237 = vsel %vm5236, %v5228, %v5233
    %v5238 = vrsqrt.pop %v5225
    %v5239 = vmul.f32 %v5238, %v5225
    %v5240 = vmul.f32 %v5239, %v5238
    %v5241 = vmul.f32 0.5, %v5240
    %v5242 = vsub.f32 1.5, %v5241
    %v5243 = vmul.f32 %v5238, %v5242
    %vm5244 = vweird.f32 %v5225
    %vm5245 = vweird.f32 %v5238
    %vm5246 = vmor %vm5244, %vm5245
    %v5247 = vsel %vm5246, %v5238, %v5243
    %v5248 = vrsqrt.pop %v5226
    %v5249 = vmul.f32 %v5248, %v5226
    %v5250 = vmul.f32 %v5249, %v5248
    %v5251 = vmul.f32 0.5, %v5250
    %v5252 = vsub.f32 1.5, %v5251
    %v5253 = vmul.f32 %v5248, %v5252
    %vm5254 = vweird.f32 %v5226
    %vm5255 = vweird.f32 %v5248
    %vm5256 = vmor %vm5254, %vm5255
    %v5257 = vsel %vm5256, %v5248, %v5253
    %v5258 = vrsqrt.pop %v5227
    %v5259 = vmul.f32 %v5258, %v5227
    %v5260 = vmul.f32 %v5259, %v5258
    %v5261 = vmul.f32 0.5, %v5260
    %v5262 = vsub.f32 1.5, %v5261
    %v5263 = vmul.f32 %v5258, %v5262
    %vm5264 = vweird.f32 %v5227
    %vm5265 = vweird.f32 %v5258
    %vm5266 = vmor %vm5264, %vm5265
    %v5267 = vsel %vm5266, %v5258, %v5263
    %v5268 = vmul.f32 %v5200, %v5237
    %v5269 = vmul.f32 %v5201, %v5247
    %v5270 = vmul.f32 %v5202, %v5257
    %v5271 = vmul.f32 %v5203, %v5267
    %v5273 = vperm.slane %v5181, 0
    %v5275 = vmul.f32 %v5268, %v5273
    %v5276 = vmul.f32 %v5269, %v5273
    %v5277 = vmul.f32 %v5270, %v5273
    %v5278 = vmul.f32 %v5271, %v5273
    %v5280 = vperm.slane %v5183, 0
    %v5282 = vadd.f32 %v5275, %v5280
    %v5283 = vadd.f32 %v5276, %v5280
    %v5284 = vadd.f32 %v5277, %v5280
    %v5285 = vadd.f32 %v5278, %v5280
    %v5286 = vpack.c.bf16 %v5282, %v5282
    %v5287 = vpack.c.bf16 %v5283, %v5283
    %v5288 = vpack.c.bf16 %v5284, %v5284
    %v5289 = vpack.c.bf16 %v5285, %v5285
    %v5290 = vld [vmem:[#allocation2] sm:$0xff]
    %v5291 = vld [vmem:[#allocation2 + $0x8] sm:$0xff]
    %v5292 = vld [vmem:[#allocation2 + $0x10] sm:$0xff]
    %v5293 = vld [vmem:[#allocation2 + $0x18] sm:$0xff]
    %v5294 = vld [vmem:[#allocation2 + $0x20] sm:$0xff]
    %v5295 = vld [vmem:[#allocation2 + $0x28] sm:$0xff]
    %v5296 = vld [vmem:[#allocation2 + $0x30] sm:$0xff]
    %v5297 = vld [vmem:[#allocation2 + $0x38] sm:$0xff]
    %v5298 = vld [vmem:[#allocation2 + $0x200] sm:$0xff]
    %v5299 = vld [vmem:[#allocation2 + $0x208] sm:$0xff]
    %v5300 = vld [vmem:[#allocation2 + $0x210] sm:$0xff]
    %v5301 = vld [vmem:[#allocation2 + $0x218] sm:$0xff]
    %v5302 = vld [vmem:[#allocation2 + $0x220] sm:$0xff]
    %v5303 = vld [vmem:[#allocation2 + $0x228] sm:$0xff]
    %v5304 = vld [vmem:[#allocation2 + $0x230] sm:$0xff]
    %v5305 = vld [vmem:[#allocation2 + $0x238] sm:$0xff]
    %s5306 = scalar_lea.vmem [#allocation2], 64
    %v5307 = vld [vmem:[%s5306] sm:$0xff]
    %v5308 = vld [vmem:[%s5306 + $0x8] sm:$0xff]
    %v5309 = vld [vmem:[%s5306 + $0x10] sm:$0xff]
    %v5310 = vld [vmem:[%s5306 + $0x18] sm:$0xff]
    %v5311 = vld [vmem:[%s5306 + $0x20] sm:$0xff]
    %v5312 = vld [vmem:[%s5306 + $0x28] sm:$0xff]
    %v5313 = vld [vmem:[%s5306 + $0x30] sm:$0xff]
    %v5314 = vld [vmem:[%s5306 + $0x38] sm:$0xff]
    %v5315 = vld [vmem:[%s5306 + $0x200] sm:$0xff]
    %v5316 = vld [vmem:[%s5306 + $0x208] sm:$0xff]
    %v5317 = vld [vmem:[%s5306 + $0x210] sm:$0xff]
    %v5318 = vld [vmem:[%s5306 + $0x218] sm:$0xff]
    %v5319 = vld [vmem:[%s5306 + $0x220] sm:$0xff]
    %v5320 = vld [vmem:[%s5306 + $0x228] sm:$0xff]
    %v5321 = vld [vmem:[%s5306 + $0x230] sm:$0xff]
    %v5322 = vld [vmem:[%s5306 + $0x238] sm:$0xff]
    %v5325 = vunpack.c.l.b16 %v5286
    %v5326 = vunpack.c.l.b16 %v5287
    %v5327 = vpack.c.b16 %v5325, %v5325
    %v5328 = vpack.c.b16 %v5326, %v5326
    %v5329 = vunpack.c.l.b16 %v5327
    %v5330 = vunpack.c.l.b16 %v5328
    %v5331 = vrot.slane %v5329, 1
    %vm5332 = vcmask 1041409
    %v5333 = vsel %vm5332, %v5330, %v5331
    %v5334 = vpack.c.b16 %v5333, %v5333
    %v5343 = vunpack.c.l.b16 %v5307
    %v5344 = vunpack.c.h.b16 %v5307
    %v5345 = vunpack.c.l.b16 %v5308
    %v5346 = vunpack.c.h.b16 %v5308
    %v5347 = vunpack.c.l.b16 %v5309
    %v5348 = vunpack.c.h.b16 %v5309
    %v5349 = vunpack.c.l.b16 %v5310
    %v5350 = vunpack.c.h.b16 %v5310
    %v5351 = vunpack.c.l.b16 %v5311
    %v5352 = vunpack.c.h.b16 %v5311
    %v5353 = vunpack.c.l.b16 %v5312
    %v5354 = vunpack.c.h.b16 %v5312
    %v5355 = vunpack.c.l.b16 %v5313
    %v5356 = vunpack.c.h.b16 %v5313
    %v5357 = vunpack.c.l.b16 %v5314
    %v5358 = vunpack.c.h.b16 %v5314
    %v5359 = vpack.c.b16 %v5347, %v5343
    %v5360 = vpack.c.b16 %v5348, %v5344
    %v5361 = vpack.c.b16 %v5349, %v5345
    %v5362 = vpack.c.b16 %v5350, %v5346
    %v5363 = vpack.c.b16 %v5355, %v5351
    %v5364 = vpack.c.b16 %v5356, %v5352
    %v5365 = vpack.c.b16 %v5357, %v5353
    %v5366 = vpack.c.b16 %v5358, %v5354
    %v5376 = vsel %vm300, %v5334, 0
    %5378 = vmatpush.bf16.msra.mxu0 0
    %5379 = vmatpush.bf16.msra.mxu0 0
    %5380 = vmatpush.bf16.msra.mxu0 0
    %5381 = vmatpush.bf16.msra.mxu0 0
    %5382 = vmatpush.bf16.msra.mxu0 0
    %5383 = vmatpush.bf16.msra.mxu0 0
    %5384 = vmatpush.bf16.msra.mxu0 %v5363
    %5385 = vmatpush.bf16.msra.mxu0 %v5359
    %5386 = vmatmul.bf16.gmra.mxu0 %v5376
    %v5387 = vpop.f32.mrf.mxu0
    %v5388 = vadd.f32 0.0, %v5387
    %v5389 = vpop.f32.mrf.mxu0
    %5390 = vdwg.mxu0
    %5391 = vmatpush.bf16.msra.mxu0 0
    %5392 = vmatpush.bf16.msra.mxu0 0
    %5393 = vmatpush.bf16.msra.mxu0 0
    %5394 = vmatpush.bf16.msra.mxu0 0
    %5395 = vmatpush.bf16.msra.mxu0 0
    %5396 = vmatpush.bf16.msra.mxu0 0
    %5397 = vmatpush.bf16.msra.mxu0 %v5364
    %5398 = vmatpush.bf16.msra.mxu0 %v5360
    %5399 = vmatmul.bf16.gmra.mxu0 %v5376
    %v5400 = vpop.f32.mrf.mxu0
    %v5401 = vadd.f32 0.0, %v5400
    %v5402 = vpop.f32.mrf.mxu0
    %5403 = vdwg.mxu0
    %5404 = vmatpush.bf16.msra.mxu0 0
    %5405 = vmatpush.bf16.msra.mxu0 0
    %5406 = vmatpush.bf16.msra.mxu0 0
    %5407 = vmatpush.bf16.msra.mxu0 0
    %5408 = vmatpush.bf16.msra.mxu0 0
    %5409 = vmatpush.bf16.msra.mxu0 0
    %5410 = vmatpush.bf16.msra.mxu0 %v5365
    %5411 = vmatpush.bf16.msra.mxu0 %v5361
    %5412 = vmatmul.bf16.gmra.mxu0 %v5376
    %v5413 = vpop.f32.mrf.mxu0
    %v5414 = vadd.f32 0.0, %v5413
    %v5415 = vpop.f32.mrf.mxu0
    %5416 = vdwg.mxu0
    %5417 = vmatpush.bf16.msra.mxu0 0
    %5418 = vmatpush.bf16.msra.mxu0 0
    %5419 = vmatpush.bf16.msra.mxu0 0
    %5420 = vmatpush.bf16.msra.mxu0 0
    %5421 = vmatpush.bf16.msra.mxu0 0
    %5422 = vmatpush.bf16.msra.mxu0 0
    %5423 = vmatpush.bf16.msra.mxu0 %v5366
    %5424 = vmatpush.bf16.msra.mxu0 %v5362
    %5425 = vmatmul.bf16.gmra.mxu0 %v5376
    %v5426 = vpop.f32.mrf.mxu0
    %v5427 = vadd.f32 0.0, %v5426
    %v5428 = vpop.f32.mrf.mxu0
    %5429 = vdwg.mxu0
    %v5432 = vunpack.c.l.b16 %v5288
    %v5433 = vunpack.c.l.b16 %v5289
    %v5434 = vpack.c.b16 %v5432, %v5432
    %v5435 = vpack.c.b16 %v5433, %v5433
    %v5436 = vunpack.c.l.b16 %v5434
    %v5437 = vunpack.c.l.b16 %v5435
    %v5438 = vrot.slane %v5436, 1
    %v5439 = vsel %vm5332, %v5437, %v5438
    %v5440 = vpack.c.b16 %v5439, %v5439
    %v5449 = vunpack.c.l.b16 %v5315
    %v5450 = vunpack.c.h.b16 %v5315
    %v5451 = vunpack.c.l.b16 %v5316
    %v5452 = vunpack.c.h.b16 %v5316
    %v5453 = vunpack.c.l.b16 %v5317
    %v5454 = vunpack.c.h.b16 %v5317
    %v5455 = vunpack.c.l.b16 %v5318
    %v5456 = vunpack.c.h.b16 %v5318
    %v5457 = vunpack.c.l.b16 %v5319
    %v5458 = vunpack.c.h.b16 %v5319
    %v5459 = vunpack.c.l.b16 %v5320
    %v5460 = vunpack.c.h.b16 %v5320
    %v5461 = vunpack.c.l.b16 %v5321
    %v5462 = vunpack.c.h.b16 %v5321
    %v5463 = vunpack.c.l.b16 %v5322
    %v5464 = vunpack.c.h.b16 %v5322
    %v5465 = vpack.c.b16 %v5453, %v5449
    %v5466 = vpack.c.b16 %v5454, %v5450
    %v5467 = vpack.c.b16 %v5455, %v5451
    %v5468 = vpack.c.b16 %v5456, %v5452
    %v5469 = vpack.c.b16 %v5461, %v5457
    %v5470 = vpack.c.b16 %v5462, %v5458
    %v5471 = vpack.c.b16 %v5463, %v5459
    %v5472 = vpack.c.b16 %v5464, %v5460
    %v5482 = vsel %vm300, %v5440, 0
    %5484 = vmatpush.bf16.msra.mxu0 0
    %5485 = vmatpush.bf16.msra.mxu0 0
    %5486 = vmatpush.bf16.msra.mxu0 0
    %5487 = vmatpush.bf16.msra.mxu0 0
    %5488 = vmatpush.bf16.msra.mxu0 0
    %5489 = vmatpush.bf16.msra.mxu0 0
    %5490 = vmatpush.bf16.msra.mxu0 %v5469
    %5491 = vmatpush.bf16.msra.mxu0 %v5465
    %5492 = vmatmul.bf16.gmra.mxu0 %v5482
    %v5493 = vpop.f32.mrf.mxu0
    %v5494 = vadd.f32 0.0, %v5493
    %v5495 = vpop.f32.mrf.mxu0
    %5496 = vdwg.mxu0
    %5497 = vmatpush.bf16.msra.mxu0 0
    %5498 = vmatpush.bf16.msra.mxu0 0
    %5499 = vmatpush.bf16.msra.mxu0 0
    %5500 = vmatpush.bf16.msra.mxu0 0
    %5501 = vmatpush.bf16.msra.mxu0 0
    %5502 = vmatpush.bf16.msra.mxu0 0
    %5503 = vmatpush.bf16.msra.mxu0 %v5470
    %5504 = vmatpush.bf16.msra.mxu0 %v5466
    %5505 = vmatmul.bf16.gmra.mxu0 %v5482
    %v5506 = vpop.f32.mrf.mxu0
    %v5507 = vadd.f32 0.0, %v5506
    %v5508 = vpop.f32.mrf.mxu0
    %5509 = vdwg.mxu0
    %5510 = vmatpush.bf16.msra.mxu0 0
    %5511 = vmatpush.bf16.msra.mxu0 0
    %5512 = vmatpush.bf16.msra.mxu0 0
    %5513 = vmatpush.bf16.msra.mxu0 0
    %5514 = vmatpush.bf16.msra.mxu0 0
    %5515 = vmatpush.bf16.msra.mxu0 0
    %5516 = vmatpush.bf16.msra.mxu0 %v5471
    %5517 = vmatpush.bf16.msra.mxu0 %v5467
    %5518 = vmatmul.bf16.gmra.mxu0 %v5482
    %v5519 = vpop.f32.mrf.mxu0
    %v5520 = vadd.f32 0.0, %v5519
    %v5521 = vpop.f32.mrf.mxu0
    %5522 = vdwg.mxu0
    %5523 = vmatpush.bf16.msra.mxu0 0
    %5524 = vmatpush.bf16.msra.mxu0 0
    %5525 = vmatpush.bf16.msra.mxu0 0
    %5526 = vmatpush.bf16.msra.mxu0 0
    %5527 = vmatpush.bf16.msra.mxu0 0
    %5528 = vmatpush.bf16.msra.mxu0 0
    %5529 = vmatpush.bf16.msra.mxu0 %v5472
    %5530 = vmatpush.bf16.msra.mxu0 %v5468
    %5531 = vmatmul.bf16.gmra.mxu0 %v5482
    %v5532 = vpop.f32.mrf.mxu0
    %v5533 = vadd.f32 0.0, %v5532
    %v5534 = vpop.f32.mrf.mxu0
    %5535 = vdwg.mxu0
    %v5536 = vrot.slane %v5330, 7
    %v5537 = vsel %vm5332, %v5536, %v5329
    %v5538 = vpack.c.b16 %v5537, %v5537
    %v5547 = vunpack.c.l.b16 %v5290
    %v5548 = vunpack.c.h.b16 %v5290
    %v5549 = vunpack.c.l.b16 %v5291
    %v5550 = vunpack.c.h.b16 %v5291
    %v5551 = vunpack.c.l.b16 %v5292
    %v5552 = vunpack.c.h.b16 %v5292
    %v5553 = vunpack.c.l.b16 %v5293
    %v5554 = vunpack.c.h.b16 %v5293
    %v5555 = vunpack.c.l.b16 %v5294
    %v5556 = vunpack.c.h.b16 %v5294
    %v5557 = vunpack.c.l.b16 %v5295
    %v5558 = vunpack.c.h.b16 %v5295
    %v5559 = vunpack.c.l.b16 %v5296
    %v5560 = vunpack.c.h.b16 %v5296
    %v5561 = vunpack.c.l.b16 %v5297
    %v5562 = vunpack.c.h.b16 %v5297
    %v5563 = vpack.c.b16 %v5551, %v5547
    %v5564 = vpack.c.b16 %v5552, %v5548
    %v5565 = vpack.c.b16 %v5553, %v5549
    %v5566 = vpack.c.b16 %v5554, %v5550
    %v5567 = vpack.c.b16 %v5559, %v5555
    %v5568 = vpack.c.b16 %v5560, %v5556
    %v5569 = vpack.c.b16 %v5561, %v5557
    %v5570 = vpack.c.b16 %v5562, %v5558
    %v5580 = vsel %vm300, %v5538, 0
    %5582 = vmatpush.bf16.msra.mxu0 0
    %5583 = vmatpush.bf16.msra.mxu0 0
    %5584 = vmatpush.bf16.msra.mxu0 0
    %5585 = vmatpush.bf16.msra.mxu0 0
    %5586 = vmatpush.bf16.msra.mxu0 0
    %5587 = vmatpush.bf16.msra.mxu0 0
    %5588 = vmatpush.bf16.msra.mxu0 %v5567
    %5589 = vmatpush.bf16.msra.mxu0 %v5563
    %5590 = vmatmul.bf16.gmra.mxu0 %v5580
    %v5591 = vpop.f32.mrf.mxu0
    %v5592 = vadd.f32 %v5388, %v5591
    %v5593 = vpop.f32.mrf.mxu0
    %5594 = vdwg.mxu0
    %5595 = vmatpush.bf16.msra.mxu0 0
    %5596 = vmatpush.bf16.msra.mxu0 0
    %5597 = vmatpush.bf16.msra.mxu0 0
    %5598 = vmatpush.bf16.msra.mxu0 0
    %5599 = vmatpush.bf16.msra.mxu0 0
    %5600 = vmatpush.bf16.msra.mxu0 0
    %5601 = vmatpush.bf16.msra.mxu0 %v5568
    %5602 = vmatpush.bf16.msra.mxu0 %v5564
    %5603 = vmatmul.bf16.gmra.mxu0 %v5580
    %v5604 = vpop.f32.mrf.mxu0
    %v5605 = vadd.f32 %v5401, %v5604
    %v5606 = vpop.f32.mrf.mxu0
    %5607 = vdwg.mxu0
    %5608 = vmatpush.bf16.msra.mxu0 0
    %5609 = vmatpush.bf16.msra.mxu0 0
    %5610 = vmatpush.bf16.msra.mxu0 0
    %5611 = vmatpush.bf16.msra.mxu0 0
    %5612 = vmatpush.bf16.msra.mxu0 0
    %5613 = vmatpush.bf16.msra.mxu0 0
    %5614 = vmatpush.bf16.msra.mxu0 %v5569
    %5615 = vmatpush.bf16.msra.mxu0 %v5565
    %5616 = vmatmul.bf16.gmra.mxu0 %v5580
    %v5617 = vpop.f32.mrf.mxu0
    %v5618 = vadd.f32 %v5414, %v5617
    %v5619 = vpop.f32.mrf.mxu0
    %5620 = vdwg.mxu0
    %5621 = vmatpush.bf16.msra.mxu0 0
    %5622 = vmatpush.bf16.msra.mxu0 0
    %5623 = vmatpush.bf16.msra.mxu0 0
    %5624 = vmatpush.bf16.msra.mxu0 0
    %5625 = vmatpush.bf16.msra.mxu0 0
    %5626 = vmatpush.bf16.msra.mxu0 0
    %5627 = vmatpush.bf16.msra.mxu0 %v5570
    %5628 = vmatpush.bf16.msra.mxu0 %v5566
    %5629 = vmatmul.bf16.gmra.mxu0 %v5580
    %v5630 = vpop.f32.mrf.mxu0
    %v5631 = vadd.f32 %v5427, %v5630
    %v5632 = vpop.f32.mrf.mxu0
    %5633 = vdwg.mxu0
    %v5634 = vrot.slane %v5437, 7
    %v5635 = vsel %vm5332, %v5634, %v5436
    %v5636 = vpack.c.b16 %v5635, %v5635
    %v5645 = vunpack.c.l.b16 %v5298
    %v5646 = vunpack.c.h.b16 %v5298
    %v5647 = vunpack.c.l.b16 %v5299
    %v5648 = vunpack.c.h.b16 %v5299
    %v5649 = vunpack.c.l.b16 %v5300
    %v5650 = vunpack.c.h.b16 %v5300
    %v5651 = vunpack.c.l.b16 %v5301
    %v5652 = vunpack.c.h.b16 %v5301
    %v5653 = vunpack.c.l.b16 %v5302
    %v5654 = vunpack.c.h.b16 %v5302
    %v5655 = vunpack.c.l.b16 %v5303
    %v5656 = vunpack.c.h.b16 %v5303
    %v5657 = vunpack.c.l.b16 %v5304
    %v5658 = vunpack.c.h.b16 %v5304
    %v5659 = vunpack.c.l.b16 %v5305
    %v5660 = vunpack.c.h.b16 %v5305
    %v5661 = vpack.c.b16 %v5649, %v5645
    %v5662 = vpack.c.b16 %v5650, %v5646
    %v5663 = vpack.c.b16 %v5651, %v5647
    %v5664 = vpack.c.b16 %v5652, %v5648
    %v5665 = vpack.c.b16 %v5657, %v5653
    %v5666 = vpack.c.b16 %v5658, %v5654
    %v5667 = vpack.c.b16 %v5659, %v5655
    %v5668 = vpack.c.b16 %v5660, %v5656
    %v5678 = vsel %vm300, %v5636, 0
    %5680 = vmatpush.bf16.msra.mxu0 0
    %5681 = vmatpush.bf16.msra.mxu0 0
    %5682 = vmatpush.bf16.msra.mxu0 0
    %5683 = vmatpush.bf16.msra.mxu0 0
    %5684 = vmatpush.bf16.msra.mxu0 0
    %5685 = vmatpush.bf16.msra.mxu0 0
    %5686 = vmatpush.bf16.msra.mxu0 %v5665
    %5687 = vmatpush.bf16.msra.mxu0 %v5661
    %5688 = vmatmul.bf16.gmra.mxu0 %v5678
    %v5689 = vpop.f32.mrf.mxu0
    %v5690 = vadd.f32 %v5494, %v5689
    %v5691 = vpop.f32.mrf.mxu0
    %5692 = vdwg.mxu0
    %5693 = vmatpush.bf16.msra.mxu0 0
    %5694 = vmatpush.bf16.msra.mxu0 0
    %5695 = vmatpush.bf16.msra.mxu0 0
    %5696 = vmatpush.bf16.msra.mxu0 0
    %5697 = vmatpush.bf16.msra.mxu0 0
    %5698 = vmatpush.bf16.msra.mxu0 0
    %5699 = vmatpush.bf16.msra.mxu0 %v5666
    %5700 = vmatpush.bf16.msra.mxu0 %v5662
    %5701 = vmatmul.bf16.gmra.mxu0 %v5678
    %v5702 = vpop.f32.mrf.mxu0
    %v5703 = vadd.f32 %v5507, %v5702
    %v5704 = vpop.f32.mrf.mxu0
    %5705 = vdwg.mxu0
    %5706 = vmatpush.bf16.msra.mxu0 0
    %5707 = vmatpush.bf16.msra.mxu0 0
    %5708 = vmatpush.bf16.msra.mxu0 0
    %5709 = vmatpush.bf16.msra.mxu0 0
    %5710 = vmatpush.bf16.msra.mxu0 0
    %5711 = vmatpush.bf16.msra.mxu0 0
    %5712 = vmatpush.bf16.msra.mxu0 %v5667
    %5713 = vmatpush.bf16.msra.mxu0 %v5663
    %5714 = vmatmul.bf16.gmra.mxu0 %v5678
    %v5715 = vpop.f32.mrf.mxu0
    %v5716 = vadd.f32 %v5520, %v5715
    %v5717 = vpop.f32.mrf.mxu0
    %5718 = vdwg.mxu0
    %5719 = vmatpush.bf16.msra.mxu0 0
    %5720 = vmatpush.bf16.msra.mxu0 0
    %5721 = vmatpush.bf16.msra.mxu0 0
    %5722 = vmatpush.bf16.msra.mxu0 0
    %5723 = vmatpush.bf16.msra.mxu0 0
    %5724 = vmatpush.bf16.msra.mxu0 0
    %5725 = vmatpush.bf16.msra.mxu0 %v5668
    %5726 = vmatpush.bf16.msra.mxu0 %v5664
    %5727 = vmatmul.bf16.gmra.mxu0 %v5678
    %v5728 = vpop.f32.mrf.mxu0
    %v5729 = vadd.f32 %v5533, %v5728
    %v5730 = vpop.f32.mrf.mxu0
    %5731 = vdwg.mxu0
    %s5732 = scalar_lea.vmem [#allocation2], 128
    %v5733 = vld [vmem:[%s5732] sm:$0xff]
    %v5734 = vld [vmem:[%s5732 + $0x8] sm:$0xff]
    %v5735 = vld [vmem:[%s5732 + $0x10] sm:$0xff]
    %v5736 = vld [vmem:[%s5732 + $0x18] sm:$0xff]
    %v5737 = vld [vmem:[%s5732 + $0x20] sm:$0xff]
    %v5738 = vld [vmem:[%s5732 + $0x28] sm:$0xff]
    %v5739 = vld [vmem:[%s5732 + $0x30] sm:$0xff]
    %v5740 = vld [vmem:[%s5732 + $0x38] sm:$0xff]
    %v5741 = vld [vmem:[%s5732 + $0x200] sm:$0xff]
    %v5742 = vld [vmem:[%s5732 + $0x208] sm:$0xff]
    %v5743 = vld [vmem:[%s5732 + $0x210] sm:$0xff]
    %v5744 = vld [vmem:[%s5732 + $0x218] sm:$0xff]
    %v5745 = vld [vmem:[%s5732 + $0x220] sm:$0xff]
    %v5746 = vld [vmem:[%s5732 + $0x228] sm:$0xff]
    %v5747 = vld [vmem:[%s5732 + $0x230] sm:$0xff]
    %v5748 = vld [vmem:[%s5732 + $0x238] sm:$0xff]
    %v5749 = vrot.slane %v5329, 2
    %v5750 = vrot.slane %v5330, 1
    %v5751 = vsel %vm5332, %v5750, %v5749
    %v5752 = vpack.c.b16 %v5751, %v5751
    %v5761 = vunpack.c.l.b16 %v5733
    %v5762 = vunpack.c.h.b16 %v5733
    %v5763 = vunpack.c.l.b16 %v5734
    %v5764 = vunpack.c.h.b16 %v5734
    %v5765 = vunpack.c.l.b16 %v5735
    %v5766 = vunpack.c.h.b16 %v5735
    %v5767 = vunpack.c.l.b16 %v5736
    %v5768 = vunpack.c.h.b16 %v5736
    %v5769 = vunpack.c.l.b16 %v5737
    %v5770 = vunpack.c.h.b16 %v5737
    %v5771 = vunpack.c.l.b16 %v5738
    %v5772 = vunpack.c.h.b16 %v5738
    %v5773 = vunpack.c.l.b16 %v5739
    %v5774 = vunpack.c.h.b16 %v5739
    %v5775 = vunpack.c.l.b16 %v5740
    %v5776 = vunpack.c.h.b16 %v5740
    %v5777 = vpack.c.b16 %v5765, %v5761
    %v5778 = vpack.c.b16 %v5766, %v5762
    %v5779 = vpack.c.b16 %v5767, %v5763
    %v5780 = vpack.c.b16 %v5768, %v5764
    %v5781 = vpack.c.b16 %v5773, %v5769
    %v5782 = vpack.c.b16 %v5774, %v5770
    %v5783 = vpack.c.b16 %v5775, %v5771
    %v5784 = vpack.c.b16 %v5776, %v5772
    %v5794 = vsel %vm300, %v5752, 0
    %5796 = vmatpush.bf16.msra.mxu0 0
    %5797 = vmatpush.bf16.msra.mxu0 0
    %5798 = vmatpush.bf16.msra.mxu0 0
    %5799 = vmatpush.bf16.msra.mxu0 0
    %5800 = vmatpush.bf16.msra.mxu0 0
    %5801 = vmatpush.bf16.msra.mxu0 0
    %5802 = vmatpush.bf16.msra.mxu0 %v5781
    %5803 = vmatpush.bf16.msra.mxu0 %v5777
    %5804 = vmatmul.bf16.gmra.mxu0 %v5794
    %v5805 = vpop.f32.mrf.mxu0
    %v5806 = vadd.f32 0.0, %v5805
    %v5807 = vpop.f32.mrf.mxu0
    %5808 = vdwg.mxu0
    %5809 = vmatpush.bf16.msra.mxu0 0
    %5810 = vmatpush.bf16.msra.mxu0 0
    %5811 = vmatpush.bf16.msra.mxu0 0
    %5812 = vmatpush.bf16.msra.mxu0 0
    %5813 = vmatpush.bf16.msra.mxu0 0
    %5814 = vmatpush.bf16.msra.mxu0 0
    %5815 = vmatpush.bf16.msra.mxu0 %v5782
    %5816 = vmatpush.bf16.msra.mxu0 %v5778
    %5817 = vmatmul.bf16.gmra.mxu0 %v5794
    %v5818 = vpop.f32.mrf.mxu0
    %v5819 = vadd.f32 0.0, %v5818
    %v5820 = vpop.f32.mrf.mxu0
    %5821 = vdwg.mxu0
    %5822 = vmatpush.bf16.msra.mxu0 0
    %5823 = vmatpush.bf16.msra.mxu0 0
    %5824 = vmatpush.bf16.msra.mxu0 0
    %5825 = vmatpush.bf16.msra.mxu0 0
    %5826 = vmatpush.bf16.msra.mxu0 0
    %5827 = vmatpush.bf16.msra.mxu0 0
    %5828 = vmatpush.bf16.msra.mxu0 %v5783
    %5829 = vmatpush.bf16.msra.mxu0 %v5779
    %5830 = vmatmul.bf16.gmra.mxu0 %v5794
    %v5831 = vpop.f32.mrf.mxu0
    %v5832 = vadd.f32 0.0, %v5831
    %v5833 = vpop.f32.mrf.mxu0
    %5834 = vdwg.mxu0
    %5835 = vmatpush.bf16.msra.mxu0 0
    %5836 = vmatpush.bf16.msra.mxu0 0
    %5837 = vmatpush.bf16.msra.mxu0 0
    %5838 = vmatpush.bf16.msra.mxu0 0
    %5839 = vmatpush.bf16.msra.mxu0 0
    %5840 = vmatpush.bf16.msra.mxu0 0
    %5841 = vmatpush.bf16.msra.mxu0 %v5784
    %5842 = vmatpush.bf16.msra.mxu0 %v5780
    %5843 = vmatmul.bf16.gmra.mxu0 %v5794
    %v5844 = vpop.f32.mrf.mxu0
    %v5845 = vadd.f32 0.0, %v5844
    %v5846 = vpop.f32.mrf.mxu0
    %5847 = vdwg.mxu0
    %v5848 = vrot.slane %v5436, 2
    %v5849 = vrot.slane %v5437, 1
    %v5850 = vsel %vm5332, %v5849, %v5848
    %v5851 = vpack.c.b16 %v5850, %v5850
    %v5860 = vunpack.c.l.b16 %v5741
    %v5861 = vunpack.c.h.b16 %v5741
    %v5862 = vunpack.c.l.b16 %v5742
    %v5863 = vunpack.c.h.b16 %v5742
    %v5864 = vunpack.c.l.b16 %v5743
    %v5865 = vunpack.c.h.b16 %v5743
    %v5866 = vunpack.c.l.b16 %v5744
    %v5867 = vunpack.c.h.b16 %v5744
    %v5868 = vunpack.c.l.b16 %v5745
    %v5869 = vunpack.c.h.b16 %v5745
    %v5870 = vunpack.c.l.b16 %v5746
    %v5871 = vunpack.c.h.b16 %v5746
    %v5872 = vunpack.c.l.b16 %v5747
    %v5873 = vunpack.c.h.b16 %v5747
    %v5874 = vunpack.c.l.b16 %v5748
    %v5875 = vunpack.c.h.b16 %v5748
    %v5876 = vpack.c.b16 %v5864, %v5860
    %v5877 = vpack.c.b16 %v5865, %v5861
    %v5878 = vpack.c.b16 %v5866, %v5862
    %v5879 = vpack.c.b16 %v5867, %v5863
    %v5880 = vpack.c.b16 %v5872, %v5868
    %v5881 = vpack.c.b16 %v5873, %v5869
    %v5882 = vpack.c.b16 %v5874, %v5870
    %v5883 = vpack.c.b16 %v5875, %v5871
    %v5893 = vsel %vm300, %v5851, 0
    %5895 = vmatpush.bf16.msra.mxu0 0
    %5896 = vmatpush.bf16.msra.mxu0 0
    %5897 = vmatpush.bf16.msra.mxu0 0
    %5898 = vmatpush.bf16.msra.mxu0 0
    %5899 = vmatpush.bf16.msra.mxu0 0
    %5900 = vmatpush.bf16.msra.mxu0 0
    %5901 = vmatpush.bf16.msra.mxu0 %v5880
    %5902 = vmatpush.bf16.msra.mxu0 %v5876
    %5903 = vmatmul.bf16.gmra.mxu0 %v5893
    %v5904 = vpop.f32.mrf.mxu0
    %v5905 = vadd.f32 0.0, %v5904
    %v5906 = vpop.f32.mrf.mxu0
    %5907 = vdwg.mxu0
    %5908 = vmatpush.bf16.msra.mxu0 0
    %5909 = vmatpush.bf16.msra.mxu0 0
    %5910 = vmatpush.bf16.msra.mxu0 0
    %5911 = vmatpush.bf16.msra.mxu0 0
    %5912 = vmatpush.bf16.msra.mxu0 0
    %5913 = vmatpush.bf16.msra.mxu0 0
    %5914 = vmatpush.bf16.msra.mxu0 %v5881
    %5915 = vmatpush.bf16.msra.mxu0 %v5877
    %5916 = vmatmul.bf16.gmra.mxu0 %v5893
    %v5917 = vpop.f32.mrf.mxu0
    %v5918 = vadd.f32 0.0, %v5917
    %v5919 = vpop.f32.mrf.mxu0
    %5920 = vdwg.mxu0
    %5921 = vmatpush.bf16.msra.mxu0 0
    %5922 = vmatpush.bf16.msra.mxu0 0
    %5923 = vmatpush.bf16.msra.mxu0 0
    %5924 = vmatpush.bf16.msra.mxu0 0
    %5925 = vmatpush.bf16.msra.mxu0 0
    %5926 = vmatpush.bf16.msra.mxu0 0
    %5927 = vmatpush.bf16.msra.mxu0 %v5882
    %5928 = vmatpush.bf16.msra.mxu0 %v5878
    %5929 = vmatmul.bf16.gmra.mxu0 %v5893
    %v5930 = vpop.f32.mrf.mxu0
    %v5931 = vadd.f32 0.0, %v5930
    %v5932 = vpop.f32.mrf.mxu0
    %5933 = vdwg.mxu0
    %5934 = vmatpush.bf16.msra.mxu0 0
    %5935 = vmatpush.bf16.msra.mxu0 0
    %5936 = vmatpush.bf16.msra.mxu0 0
    %5937 = vmatpush.bf16.msra.mxu0 0
    %5938 = vmatpush.bf16.msra.mxu0 0
    %5939 = vmatpush.bf16.msra.mxu0 0
    %5940 = vmatpush.bf16.msra.mxu0 %v5883
    %5941 = vmatpush.bf16.msra.mxu0 %v5879
    %5942 = vmatmul.bf16.gmra.mxu0 %v5893
    %v5943 = vpop.f32.mrf.mxu0
    %v5944 = vadd.f32 0.0, %v5943
    %v5945 = vpop.f32.mrf.mxu0
    %5946 = vdwg.mxu0
    %v5947 = vadd.f32 %v5592, %v5806
    %v5948 = vadd.f32 %v5605, %v5819
    %v5949 = vadd.f32 %v5618, %v5832
    %v5950 = vadd.f32 %v5631, %v5845
    %v5951 = vadd.f32 %v5690, %v5905
    %v5952 = vadd.f32 %v5703, %v5918
    %v5953 = vadd.f32 %v5716, %v5931
    %v5954 = vadd.f32 %v5729, %v5944
    %s5955 = scalar_lea.vmem [#allocation2], 192
    %v5956 = vld [vmem:[%s5955] sm:$0xff]
    %v5957 = vld [vmem:[%s5955 + $0x8] sm:$0xff]
    %v5958 = vld [vmem:[%s5955 + $0x10] sm:$0xff]
    %v5959 = vld [vmem:[%s5955 + $0x18] sm:$0xff]
    %v5960 = vld [vmem:[%s5955 + $0x20] sm:$0xff]
    %v5961 = vld [vmem:[%s5955 + $0x28] sm:$0xff]
    %v5962 = vld [vmem:[%s5955 + $0x30] sm:$0xff]
    %v5963 = vld [vmem:[%s5955 + $0x38] sm:$0xff]
    %v5964 = vld [vmem:[%s5955 + $0x200] sm:$0xff]
    %v5965 = vld [vmem:[%s5955 + $0x208] sm:$0xff]
    %v5966 = vld [vmem:[%s5955 + $0x210] sm:$0xff]
    %v5967 = vld [vmem:[%s5955 + $0x218] sm:$0xff]
    %v5968 = vld [vmem:[%s5955 + $0x220] sm:$0xff]
    %v5969 = vld [vmem:[%s5955 + $0x228] sm:$0xff]
    %v5970 = vld [vmem:[%s5955 + $0x230] sm:$0xff]
    %v5971 = vld [vmem:[%s5955 + $0x238] sm:$0xff]
    %v5972 = vrot.slane %v5329, 3
    %v5973 = vrot.slane %v5330, 2
    %v5974 = vsel %vm5332, %v5973, %v5972
    %v5975 = vpack.c.b16 %v5974, %v5974
    %v5984 = vunpack.c.l.b16 %v5956
    %v5985 = vunpack.c.h.b16 %v5956
    %v5986 = vunpack.c.l.b16 %v5957
    %v5987 = vunpack.c.h.b16 %v5957
    %v5988 = vunpack.c.l.b16 %v5958
    %v5989 = vunpack.c.h.b16 %v5958
    %v5990 = vunpack.c.l.b16 %v5959
    %v5991 = vunpack.c.h.b16 %v5959
    %v5992 = vunpack.c.l.b16 %v5960
    %v5993 = vunpack.c.h.b16 %v5960
    %v5994 = vunpack.c.l.b16 %v5961
    %v5995 = vunpack.c.h.b16 %v5961
    %v5996 = vunpack.c.l.b16 %v5962
    %v5997 = vunpack.c.h.b16 %v5962
    %v5998 = vunpack.c.l.b16 %v5963
    %v5999 = vunpack.c.h.b16 %v5963
    %v6000 = vpack.c.b16 %v5988, %v5984
    %v6001 = vpack.c.b16 %v5989, %v5985
    %v6002 = vpack.c.b16 %v5990, %v5986
    %v6003 = vpack.c.b16 %v5991, %v5987
    %v6004 = vpack.c.b16 %v5996, %v5992
    %v6005 = vpack.c.b16 %v5997, %v5993
    %v6006 = vpack.c.b16 %v5998, %v5994
    %v6007 = vpack.c.b16 %v5999, %v5995
    %v6017 = vsel %vm300, %v5975, 0
    %6019 = vmatpush.bf16.msra.mxu0 0
    %6020 = vmatpush.bf16.msra.mxu0 0
    %6021 = vmatpush.bf16.msra.mxu0 0
    %6022 = vmatpush.bf16.msra.mxu0 0
    %6023 = vmatpush.bf16.msra.mxu0 0
    %6024 = vmatpush.bf16.msra.mxu0 0
    %6025 = vmatpush.bf16.msra.mxu0 %v6004
    %6026 = vmatpush.bf16.msra.mxu0 %v6000
    %6027 = vmatmul.bf16.gmra.mxu0 %v6017
    %v6028 = vpop.f32.mrf.mxu0
    %v6029 = vadd.f32 0.0, %v6028
    %v6030 = vpop.f32.mrf.mxu0
    %6031 = vdwg.mxu0
    %6032 = vmatpush.bf16.msra.mxu0 0
    %6033 = vmatpush.bf16.msra.mxu0 0
    %6034 = vmatpush.bf16.msra.mxu0 0
    %6035 = vmatpush.bf16.msra.mxu0 0
    %6036 = vmatpush.bf16.msra.mxu0 0
    %6037 = vmatpush.bf16.msra.mxu0 0
    %6038 = vmatpush.bf16.msra.mxu0 %v6005
    %6039 = vmatpush.bf16.msra.mxu0 %v6001
    %6040 = vmatmul.bf16.gmra.mxu0 %v6017
    %v6041 = vpop.f32.mrf.mxu0
    %v6042 = vadd.f32 0.0, %v6041
    %v6043 = vpop.f32.mrf.mxu0
    %6044 = vdwg.mxu0
    %6045 = vmatpush.bf16.msra.mxu0 0
    %6046 = vmatpush.bf16.msra.mxu0 0
    %6047 = vmatpush.bf16.msra.mxu0 0
    %6048 = vmatpush.bf16.msra.mxu0 0
    %6049 = vmatpush.bf16.msra.mxu0 0
    %6050 = vmatpush.bf16.msra.mxu0 0
    %6051 = vmatpush.bf16.msra.mxu0 %v6006
    %6052 = vmatpush.bf16.msra.mxu0 %v6002
    %6053 = vmatmul.bf16.gmra.mxu0 %v6017
    %v6054 = vpop.f32.mrf.mxu0
    %v6055 = vadd.f32 0.0, %v6054
    %v6056 = vpop.f32.mrf.mxu0
    %6057 = vdwg.mxu0
    %6058 = vmatpush.bf16.msra.mxu0 0
    %6059 = vmatpush.bf16.msra.mxu0 0
    %6060 = vmatpush.bf16.msra.mxu0 0
    %6061 = vmatpush.bf16.msra.mxu0 0
    %6062 = vmatpush.bf16.msra.mxu0 0
    %6063 = vmatpush.bf16.msra.mxu0 0
    %6064 = vmatpush.bf16.msra.mxu0 %v6007
    %6065 = vmatpush.bf16.msra.mxu0 %v6003
    %6066 = vmatmul.bf16.gmra.mxu0 %v6017
    %v6067 = vpop.f32.mrf.mxu0
    %v6068 = vadd.f32 0.0, %v6067
    %v6069 = vpop.f32.mrf.mxu0
    %6070 = vdwg.mxu0
    %v6071 = vrot.slane %v5436, 3
    %v6072 = vrot.slane %v5437, 2
    %v6073 = vsel %vm5332, %v6072, %v6071
    %v6074 = vpack.c.b16 %v6073, %v6073
    %v6083 = vunpack.c.l.b16 %v5964
    %v6084 = vunpack.c.h.b16 %v5964
    %v6085 = vunpack.c.l.b16 %v5965
    %v6086 = vunpack.c.h.b16 %v5965
    %v6087 = vunpack.c.l.b16 %v5966
    %v6088 = vunpack.c.h.b16 %v5966
    %v6089 = vunpack.c.l.b16 %v5967
    %v6090 = vunpack.c.h.b16 %v5967
    %v6091 = vunpack.c.l.b16 %v5968
    %v6092 = vunpack.c.h.b16 %v5968
    %v6093 = vunpack.c.l.b16 %v5969
    %v6094 = vunpack.c.h.b16 %v5969
    %v6095 = vunpack.c.l.b16 %v5970
    %v6096 = vunpack.c.h.b16 %v5970
    %v6097 = vunpack.c.l.b16 %v5971
    %v6098 = vunpack.c.h.b16 %v5971
    %v6099 = vpack.c.b16 %v6087, %v6083
    %v6100 = vpack.c.b16 %v6088, %v6084
    %v6101 = vpack.c.b16 %v6089, %v6085
    %v6102 = vpack.c.b16 %v6090, %v6086
    %v6103 = vpack.c.b16 %v6095, %v6091
    %v6104 = vpack.c.b16 %v6096, %v6092
    %v6105 = vpack.c.b16 %v6097, %v6093
    %v6106 = vpack.c.b16 %v6098, %v6094
    %v6116 = vsel %vm300, %v6074, 0
    %6118 = vmatpush.bf16.msra.mxu0 0
    %6119 = vmatpush.bf16.msra.mxu0 0
    %6120 = vmatpush.bf16.msra.mxu0 0
    %6121 = vmatpush.bf16.msra.mxu0 0
    %6122 = vmatpush.bf16.msra.mxu0 0
    %6123 = vmatpush.bf16.msra.mxu0 0
    %6124 = vmatpush.bf16.msra.mxu0 %v6103
    %6125 = vmatpush.bf16.msra.mxu0 %v6099
    %6126 = vmatmul.bf16.gmra.mxu0 %v6116
    %v6127 = vpop.f32.mrf.mxu0
    %v6128 = vadd.f32 0.0, %v6127
    %v6129 = vpop.f32.mrf.mxu0
    %6130 = vdwg.mxu0
    %6131 = vmatpush.bf16.msra.mxu0 0
    %6132 = vmatpush.bf16.msra.mxu0 0
    %6133 = vmatpush.bf16.msra.mxu0 0
    %6134 = vmatpush.bf16.msra.mxu0 0
    %6135 = vmatpush.bf16.msra.mxu0 0
    %6136 = vmatpush.bf16.msra.mxu0 0
    %6137 = vmatpush.bf16.msra.mxu0 %v6104
    %6138 = vmatpush.bf16.msra.mxu0 %v6100
    %6139 = vmatmul.bf16.gmra.mxu0 %v6116
    %v6140 = vpop.f32.mrf.mxu0
    %v6141 = vadd.f32 0.0, %v6140
    %v6142 = vpop.f32.mrf.mxu0
    %6143 = vdwg.mxu0
    %6144 = vmatpush.bf16.msra.mxu0 0
    %6145 = vmatpush.bf16.msra.mxu0 0
    %6146 = vmatpush.bf16.msra.mxu0 0
    %6147 = vmatpush.bf16.msra.mxu0 0
    %6148 = vmatpush.bf16.msra.mxu0 0
    %6149 = vmatpush.bf16.msra.mxu0 0
    %6150 = vmatpush.bf16.msra.mxu0 %v6105
    %6151 = vmatpush.bf16.msra.mxu0 %v6101
    %6152 = vmatmul.bf16.gmra.mxu0 %v6116
    %v6153 = vpop.f32.mrf.mxu0
    %v6154 = vadd.f32 0.0, %v6153
    %v6155 = vpop.f32.mrf.mxu0
    %6156 = vdwg.mxu0
    %6157 = vmatpush.bf16.msra.mxu0 0
    %6158 = vmatpush.bf16.msra.mxu0 0
    %6159 = vmatpush.bf16.msra.mxu0 0
    %6160 = vmatpush.bf16.msra.mxu0 0
    %6161 = vmatpush.bf16.msra.mxu0 0
    %6162 = vmatpush.bf16.msra.mxu0 0
    %6163 = vmatpush.bf16.msra.mxu0 %v6106
    %6164 = vmatpush.bf16.msra.mxu0 %v6102
    %6165 = vmatmul.bf16.gmra.mxu0 %v6116
    %v6166 = vpop.f32.mrf.mxu0
    %v6167 = vadd.f32 0.0, %v6166
    %v6168 = vpop.f32.mrf.mxu0
    %6169 = vdwg.mxu0
    %v6170 = vadd.f32 %v5947, %v6029
    %v6171 = vadd.f32 %v5948, %v6042
    %v6172 = vadd.f32 %v5949, %v6055
    %v6173 = vadd.f32 %v5950, %v6068
    %v6174 = vadd.f32 %v5951, %v6128
    %v6175 = vadd.f32 %v5952, %v6141
    %v6176 = vadd.f32 %v5953, %v6154
    %v6177 = vadd.f32 %v5954, %v6167
    %s6178 = scalar_lea.vmem [#allocation2], 256
    %v6179 = vld [vmem:[%s6178] sm:$0xff]
    %v6180 = vld [vmem:[%s6178 + $0x8] sm:$0xff]
    %v6181 = vld [vmem:[%s6178 + $0x10] sm:$0xff]
    %v6182 = vld [vmem:[%s6178 + $0x18] sm:$0xff]
    %v6183 = vld [vmem:[%s6178 + $0x20] sm:$0xff]
    %v6184 = vld [vmem:[%s6178 + $0x28] sm:$0xff]
    %v6185 = vld [vmem:[%s6178 + $0x30] sm:$0xff]
    %v6186 = vld [vmem:[%s6178 + $0x38] sm:$0xff]
    %v6187 = vld [vmem:[%s6178 + $0x200] sm:$0xff]
    %v6188 = vld [vmem:[%s6178 + $0x208] sm:$0xff]
    %v6189 = vld [vmem:[%s6178 + $0x210] sm:$0xff]
    %v6190 = vld [vmem:[%s6178 + $0x218] sm:$0xff]
    %v6191 = vld [vmem:[%s6178 + $0x220] sm:$0xff]
    %v6192 = vld [vmem:[%s6178 + $0x228] sm:$0xff]
    %v6193 = vld [vmem:[%s6178 + $0x230] sm:$0xff]
    %v6194 = vld [vmem:[%s6178 + $0x238] sm:$0xff]
    %v6195 = vrot.slane %v5329, 4
    %v6196 = vrot.slane %v5330, 3
    %v6197 = vsel %vm5332, %v6196, %v6195
    %v6198 = vpack.c.b16 %v6197, %v6197
    %v6207 = vunpack.c.l.b16 %v6179
    %v6208 = vunpack.c.h.b16 %v6179
    %v6209 = vunpack.c.l.b16 %v6180
    %v6210 = vunpack.c.h.b16 %v6180
    %v6211 = vunpack.c.l.b16 %v6181
    %v6212 = vunpack.c.h.b16 %v6181
    %v6213 = vunpack.c.l.b16 %v6182
    %v6214 = vunpack.c.h.b16 %v6182
    %v6215 = vunpack.c.l.b16 %v6183
    %v6216 = vunpack.c.h.b16 %v6183
    %v6217 = vunpack.c.l.b16 %v6184
    %v6218 = vunpack.c.h.b16 %v6184
    %v6219 = vunpack.c.l.b16 %v6185
    %v6220 = vunpack.c.h.b16 %v6185
    %v6221 = vunpack.c.l.b16 %v6186
    %v6222 = vunpack.c.h.b16 %v6186
    %v6223 = vpack.c.b16 %v6211, %v6207
    %v6224 = vpack.c.b16 %v6212, %v6208
    %v6225 = vpack.c.b16 %v6213, %v6209
    %v6226 = vpack.c.b16 %v6214, %v6210
    %v6227 = vpack.c.b16 %v6219, %v6215
    %v6228 = vpack.c.b16 %v6220, %v6216
    %v6229 = vpack.c.b16 %v6221, %v6217
    %v6230 = vpack.c.b16 %v6222, %v6218
    %v6240 = vsel %vm300, %v6198, 0
    %6242 = vmatpush.bf16.msra.mxu0 0
    %6243 = vmatpush.bf16.msra.mxu0 0
    %6244 = vmatpush.bf16.msra.mxu0 0
    %6245 = vmatpush.bf16.msra.mxu0 0
    %6246 = vmatpush.bf16.msra.mxu0 0
    %6247 = vmatpush.bf16.msra.mxu0 0
    %6248 = vmatpush.bf16.msra.mxu0 %v6227
    %6249 = vmatpush.bf16.msra.mxu0 %v6223
    %6250 = vmatmul.bf16.gmra.mxu0 %v6240
    %v6251 = vpop.f32.mrf.mxu0
    %v6252 = vadd.f32 0.0, %v6251
    %v6253 = vpop.f32.mrf.mxu0
    %6254 = vdwg.mxu0
    %6255 = vmatpush.bf16.msra.mxu0 0
    %6256 = vmatpush.bf16.msra.mxu0 0
    %6257 = vmatpush.bf16.msra.mxu0 0
    %6258 = vmatpush.bf16.msra.mxu0 0
    %6259 = vmatpush.bf16.msra.mxu0 0
    %6260 = vmatpush.bf16.msra.mxu0 0
    %6261 = vmatpush.bf16.msra.mxu0 %v6228
    %6262 = vmatpush.bf16.msra.mxu0 %v6224
    %6263 = vmatmul.bf16.gmra.mxu0 %v6240
    %v6264 = vpop.f32.mrf.mxu0
    %v6265 = vadd.f32 0.0, %v6264
    %v6266 = vpop.f32.mrf.mxu0
    %6267 = vdwg.mxu0
    %6268 = vmatpush.bf16.msra.mxu0 0
    %6269 = vmatpush.bf16.msra.mxu0 0
    %6270 = vmatpush.bf16.msra.mxu0 0
    %6271 = vmatpush.bf16.msra.mxu0 0
    %6272 = vmatpush.bf16.msra.mxu0 0
    %6273 = vmatpush.bf16.msra.mxu0 0
    %6274 = vmatpush.bf16.msra.mxu0 %v6229
    %6275 = vmatpush.bf16.msra.mxu0 %v6225
    %6276 = vmatmul.bf16.gmra.mxu0 %v6240
    %v6277 = vpop.f32.mrf.mxu0
    %v6278 = vadd.f32 0.0, %v6277
    %v6279 = vpop.f32.mrf.mxu0
    %6280 = vdwg.mxu0
    %6281 = vmatpush.bf16.msra.mxu0 0
    %6282 = vmatpush.bf16.msra.mxu0 0
    %6283 = vmatpush.bf16.msra.mxu0 0
    %6284 = vmatpush.bf16.msra.mxu0 0
    %6285 = vmatpush.bf16.msra.mxu0 0
    %6286 = vmatpush.bf16.msra.mxu0 0
    %6287 = vmatpush.bf16.msra.mxu0 %v6230
    %6288 = vmatpush.bf16.msra.mxu0 %v6226
    %6289 = vmatmul.bf16.gmra.mxu0 %v6240
    %v6290 = vpop.f32.mrf.mxu0
    %v6291 = vadd.f32 0.0, %v6290
    %v6292 = vpop.f32.mrf.mxu0
    %6293 = vdwg.mxu0
    %v6294 = vrot.slane %v5436, 4
    %v6295 = vrot.slane %v5437, 3
    %v6296 = vsel %vm5332, %v6295, %v6294
    %v6297 = vpack.c.b16 %v6296, %v6296
    %v6306 = vunpack.c.l.b16 %v6187
    %v6307 = vunpack.c.h.b16 %v6187
    %v6308 = vunpack.c.l.b16 %v6188
    %v6309 = vunpack.c.h.b16 %v6188
    %v6310 = vunpack.c.l.b16 %v6189
    %v6311 = vunpack.c.h.b16 %v6189
    %v6312 = vunpack.c.l.b16 %v6190
    %v6313 = vunpack.c.h.b16 %v6190
    %v6314 = vunpack.c.l.b16 %v6191
    %v6315 = vunpack.c.h.b16 %v6191
    %v6316 = vunpack.c.l.b16 %v6192
    %v6317 = vunpack.c.h.b16 %v6192
    %v6318 = vunpack.c.l.b16 %v6193
    %v6319 = vunpack.c.h.b16 %v6193
    %v6320 = vunpack.c.l.b16 %v6194
    %v6321 = vunpack.c.h.b16 %v6194
    %v6322 = vpack.c.b16 %v6310, %v6306
    %v6323 = vpack.c.b16 %v6311, %v6307
    %v6324 = vpack.c.b16 %v6312, %v6308
    %v6325 = vpack.c.b16 %v6313, %v6309
    %v6326 = vpack.c.b16 %v6318, %v6314
    %v6327 = vpack.c.b16 %v6319, %v6315
    %v6328 = vpack.c.b16 %v6320, %v6316
    %v6329 = vpack.c.b16 %v6321, %v6317
    %v6339 = vsel %vm300, %v6297, 0
    %6341 = vmatpush.bf16.msra.mxu0 0
    %6342 = vmatpush.bf16.msra.mxu0 0
    %6343 = vmatpush.bf16.msra.mxu0 0
    %6344 = vmatpush.bf16.msra.mxu0 0
    %6345 = vmatpush.bf16.msra.mxu0 0
    %6346 = vmatpush.bf16.msra.mxu0 0
    %6347 = vmatpush.bf16.msra.mxu0 %v6326
    %6348 = vmatpush.bf16.msra.mxu0 %v6322
    %6349 = vmatmul.bf16.gmra.mxu0 %v6339
    %v6350 = vpop.f32.mrf.mxu0
    %v6351 = vadd.f32 0.0, %v6350
    %v6352 = vpop.f32.mrf.mxu0
    %6353 = vdwg.mxu0
    %6354 = vmatpush.bf16.msra.mxu0 0
    %6355 = vmatpush.bf16.msra.mxu0 0
    %6356 = vmatpush.bf16.msra.mxu0 0
    %6357 = vmatpush.bf16.msra.mxu0 0
    %6358 = vmatpush.bf16.msra.mxu0 0
    %6359 = vmatpush.bf16.msra.mxu0 0
    %6360 = vmatpush.bf16.msra.mxu0 %v6327
    %6361 = vmatpush.bf16.msra.mxu0 %v6323
    %6362 = vmatmul.bf16.gmra.mxu0 %v6339
    %v6363 = vpop.f32.mrf.mxu0
    %v6364 = vadd.f32 0.0, %v6363
    %v6365 = vpop.f32.mrf.mxu0
    %6366 = vdwg.mxu0
    %6367 = vmatpush.bf16.msra.mxu0 0
    %6368 = vmatpush.bf16.msra.mxu0 0
    %6369 = vmatpush.bf16.msra.mxu0 0
    %6370 = vmatpush.bf16.msra.mxu0 0
    %6371 = vmatpush.bf16.msra.mxu0 0
    %6372 = vmatpush.bf16.msra.mxu0 0
    %6373 = vmatpush.bf16.msra.mxu0 %v6328
    %6374 = vmatpush.bf16.msra.mxu0 %v6324
    %6375 = vmatmul.bf16.gmra.mxu0 %v6339
    %v6376 = vpop.f32.mrf.mxu0
    %v6377 = vadd.f32 0.0, %v6376
    %v6378 = vpop.f32.mrf.mxu0
    %6379 = vdwg.mxu0
    %6380 = vmatpush.bf16.msra.mxu0 0
    %6381 = vmatpush.bf16.msra.mxu0 0
    %6382 = vmatpush.bf16.msra.mxu0 0
    %6383 = vmatpush.bf16.msra.mxu0 0
    %6384 = vmatpush.bf16.msra.mxu0 0
    %6385 = vmatpush.bf16.msra.mxu0 0
    %6386 = vmatpush.bf16.msra.mxu0 %v6329
    %6387 = vmatpush.bf16.msra.mxu0 %v6325
    %6388 = vmatmul.bf16.gmra.mxu0 %v6339
    %v6389 = vpop.f32.mrf.mxu0
    %v6390 = vadd.f32 0.0, %v6389
    %v6391 = vpop.f32.mrf.mxu0
    %6392 = vdwg.mxu0
    %v6393 = vadd.f32 %v6170, %v6252
    %v6394 = vadd.f32 %v6171, %v6265
    %v6395 = vadd.f32 %v6172, %v6278
    %v6396 = vadd.f32 %v6173, %v6291
    %v6397 = vadd.f32 %v6174, %v6351
    %v6398 = vadd.f32 %v6175, %v6364
    %v6399 = vadd.f32 %v6176, %v6377
    %v6400 = vadd.f32 %v6177, %v6390
    %s6401 = scalar_lea.vmem [#allocation2], 320
    %v6402 = vld [vmem:[%s6401] sm:$0xff]
    %v6403 = vld [vmem:[%s6401 + $0x8] sm:$0xff]
    %v6404 = vld [vmem:[%s6401 + $0x10] sm:$0xff]
    %v6405 = vld [vmem:[%s6401 + $0x18] sm:$0xff]
    %v6406 = vld [vmem:[%s6401 + $0x20] sm:$0xff]
    %v6407 = vld [vmem:[%s6401 + $0x28] sm:$0xff]
    %v6408 = vld [vmem:[%s6401 + $0x30] sm:$0xff]
    %v6409 = vld [vmem:[%s6401 + $0x38] sm:$0xff]
    %v6410 = vld [vmem:[%s6401 + $0x200] sm:$0xff]
    %v6411 = vld [vmem:[%s6401 + $0x208] sm:$0xff]
    %v6412 = vld [vmem:[%s6401 + $0x210] sm:$0xff]
    %v6413 = vld [vmem:[%s6401 + $0x218] sm:$0xff]
    %v6414 = vld [vmem:[%s6401 + $0x220] sm:$0xff]
    %v6415 = vld [vmem:[%s6401 + $0x228] sm:$0xff]
    %v6416 = vld [vmem:[%s6401 + $0x230] sm:$0xff]
    %v6417 = vld [vmem:[%s6401 + $0x238] sm:$0xff]
    %v6418 = vrot.slane %v5329, 5
    %v6419 = vrot.slane %v5330, 4
    %v6420 = vsel %vm5332, %v6419, %v6418
    %v6421 = vpack.c.b16 %v6420, %v6420
    %v6430 = vunpack.c.l.b16 %v6402
    %v6431 = vunpack.c.h.b16 %v6402
    %v6432 = vunpack.c.l.b16 %v6403
    %v6433 = vunpack.c.h.b16 %v6403
    %v6434 = vunpack.c.l.b16 %v6404
    %v6435 = vunpack.c.h.b16 %v6404
    %v6436 = vunpack.c.l.b16 %v6405
    %v6437 = vunpack.c.h.b16 %v6405
    %v6438 = vunpack.c.l.b16 %v6406
    %v6439 = vunpack.c.h.b16 %v6406
    %v6440 = vunpack.c.l.b16 %v6407
    %v6441 = vunpack.c.h.b16 %v6407
    %v6442 = vunpack.c.l.b16 %v6408
    %v6443 = vunpack.c.h.b16 %v6408
    %v6444 = vunpack.c.l.b16 %v6409
    %v6445 = vunpack.c.h.b16 %v6409
    %v6446 = vpack.c.b16 %v6434, %v6430
    %v6447 = vpack.c.b16 %v6435, %v6431
    %v6448 = vpack.c.b16 %v6436, %v6432
    %v6449 = vpack.c.b16 %v6437, %v6433
    %v6450 = vpack.c.b16 %v6442, %v6438
    %v6451 = vpack.c.b16 %v6443, %v6439
    %v6452 = vpack.c.b16 %v6444, %v6440
    %v6453 = vpack.c.b16 %v6445, %v6441
    %v6463 = vsel %vm300, %v6421, 0
    %6465 = vmatpush.bf16.msra.mxu0 0
    %6466 = vmatpush.bf16.msra.mxu0 0
    %6467 = vmatpush.bf16.msra.mxu0 0
    %6468 = vmatpush.bf16.msra.mxu0 0
    %6469 = vmatpush.bf16.msra.mxu0 0
    %6470 = vmatpush.bf16.msra.mxu0 0
    %6471 = vmatpush.bf16.msra.mxu0 %v6450
    %6472 = vmatpush.bf16.msra.mxu0 %v6446
    %6473 = vmatmul.bf16.gmra.mxu0 %v6463
    %v6474 = vpop.f32.mrf.mxu0
    %v6475 = vadd.f32 0.0, %v6474
    %v6476 = vpop.f32.mrf.mxu0
    %6477 = vdwg.mxu0
    %6478 = vmatpush.bf16.msra.mxu0 0
    %6479 = vmatpush.bf16.msra.mxu0 0
    %6480 = vmatpush.bf16.msra.mxu0 0
    %6481 = vmatpush.bf16.msra.mxu0 0
    %6482 = vmatpush.bf16.msra.mxu0 0
    %6483 = vmatpush.bf16.msra.mxu0 0
    %6484 = vmatpush.bf16.msra.mxu0 %v6451
    %6485 = vmatpush.bf16.msra.mxu0 %v6447
    %6486 = vmatmul.bf16.gmra.mxu0 %v6463
    %v6487 = vpop.f32.mrf.mxu0
    %v6488 = vadd.f32 0.0, %v6487
    %v6489 = vpop.f32.mrf.mxu0
    %6490 = vdwg.mxu0
    %6491 = vmatpush.bf16.msra.mxu0 0
    %6492 = vmatpush.bf16.msra.mxu0 0
    %6493 = vmatpush.bf16.msra.mxu0 0
    %6494 = vmatpush.bf16.msra.mxu0 0
    %6495 = vmatpush.bf16.msra.mxu0 0
    %6496 = vmatpush.bf16.msra.mxu0 0
    %6497 = vmatpush.bf16.msra.mxu0 %v6452
    %6498 = vmatpush.bf16.msra.mxu0 %v6448
    %6499 = vmatmul.bf16.gmra.mxu0 %v6463
    %v6500 = vpop.f32.mrf.mxu0
    %v6501 = vadd.f32 0.0, %v6500
    %v6502 = vpop.f32.mrf.mxu0
    %6503 = vdwg.mxu0
    %6504 = vmatpush.bf16.msra.mxu0 0
    %6505 = vmatpush.bf16.msra.mxu0 0
    %6506 = vmatpush.bf16.msra.mxu0 0
    %6507 = vmatpush.bf16.msra.mxu0 0
    %6508 = vmatpush.bf16.msra.mxu0 0
    %6509 = vmatpush.bf16.msra.mxu0 0
    %6510 = vmatpush.bf16.msra.mxu0 %v6453
    %6511 = vmatpush.bf16.msra.mxu0 %v6449
    %6512 = vmatmul.bf16.gmra.mxu0 %v6463
    %v6513 = vpop.f32.mrf.mxu0
    %v6514 = vadd.f32 0.0, %v6513
    %v6515 = vpop.f32.mrf.mxu0
    %6516 = vdwg.mxu0
    %v6517 = vrot.slane %v5436, 5
    %v6518 = vrot.slane %v5437, 4
    %v6519 = vsel %vm5332, %v6518, %v6517
    %v6520 = vpack.c.b16 %v6519, %v6519
    %v6529 = vunpack.c.l.b16 %v6410
    %v6530 = vunpack.c.h.b16 %v6410
    %v6531 = vunpack.c.l.b16 %v6411
    %v6532 = vunpack.c.h.b16 %v6411
    %v6533 = vunpack.c.l.b16 %v6412
    %v6534 = vunpack.c.h.b16 %v6412
    %v6535 = vunpack.c.l.b16 %v6413
    %v6536 = vunpack.c.h.b16 %v6413
    %v6537 = vunpack.c.l.b16 %v6414
    %v6538 = vunpack.c.h.b16 %v6414
    %v6539 = vunpack.c.l.b16 %v6415
    %v6540 = vunpack.c.h.b16 %v6415
    %v6541 = vunpack.c.l.b16 %v6416
    %v6542 = vunpack.c.h.b16 %v6416
    %v6543 = vunpack.c.l.b16 %v6417
    %v6544 = vunpack.c.h.b16 %v6417
    %v6545 = vpack.c.b16 %v6533, %v6529
    %v6546 = vpack.c.b16 %v6534, %v6530
    %v6547 = vpack.c.b16 %v6535, %v6531
    %v6548 = vpack.c.b16 %v6536, %v6532
    %v6549 = vpack.c.b16 %v6541, %v6537
    %v6550 = vpack.c.b16 %v6542, %v6538
    %v6551 = vpack.c.b16 %v6543, %v6539
    %v6552 = vpack.c.b16 %v6544, %v6540
    %v6562 = vsel %vm300, %v6520, 0
    %6564 = vmatpush.bf16.msra.mxu0 0
    %6565 = vmatpush.bf16.msra.mxu0 0
    %6566 = vmatpush.bf16.msra.mxu0 0
    %6567 = vmatpush.bf16.msra.mxu0 0
    %6568 = vmatpush.bf16.msra.mxu0 0
    %6569 = vmatpush.bf16.msra.mxu0 0
    %6570 = vmatpush.bf16.msra.mxu0 %v6549
    %6571 = vmatpush.bf16.msra.mxu0 %v6545
    %6572 = vmatmul.bf16.gmra.mxu0 %v6562
    %v6573 = vpop.f32.mrf.mxu0
    %v6574 = vadd.f32 0.0, %v6573
    %v6575 = vpop.f32.mrf.mxu0
    %6576 = vdwg.mxu0
    %6577 = vmatpush.bf16.msra.mxu0 0
    %6578 = vmatpush.bf16.msra.mxu0 0
    %6579 = vmatpush.bf16.msra.mxu0 0
    %6580 = vmatpush.bf16.msra.mxu0 0
    %6581 = vmatpush.bf16.msra.mxu0 0
    %6582 = vmatpush.bf16.msra.mxu0 0
    %6583 = vmatpush.bf16.msra.mxu0 %v6550
    %6584 = vmatpush.bf16.msra.mxu0 %v6546
    %6585 = vmatmul.bf16.gmra.mxu0 %v6562
    %v6586 = vpop.f32.mrf.mxu0
    %v6587 = vadd.f32 0.0, %v6586
    %v6588 = vpop.f32.mrf.mxu0
    %6589 = vdwg.mxu0
    %6590 = vmatpush.bf16.msra.mxu0 0
    %6591 = vmatpush.bf16.msra.mxu0 0
    %6592 = vmatpush.bf16.msra.mxu0 0
    %6593 = vmatpush.bf16.msra.mxu0 0
    %6594 = vmatpush.bf16.msra.mxu0 0
    %6595 = vmatpush.bf16.msra.mxu0 0
    %6596 = vmatpush.bf16.msra.mxu0 %v6551
    %6597 = vmatpush.bf16.msra.mxu0 %v6547
    %6598 = vmatmul.bf16.gmra.mxu0 %v6562
    %v6599 = vpop.f32.mrf.mxu0
    %v6600 = vadd.f32 0.0, %v6599
    %v6601 = vpop.f32.mrf.mxu0
    %6602 = vdwg.mxu0
    %6603 = vmatpush.bf16.msra.mxu0 0
    %6604 = vmatpush.bf16.msra.mxu0 0
    %6605 = vmatpush.bf16.msra.mxu0 0
    %6606 = vmatpush.bf16.msra.mxu0 0
    %6607 = vmatpush.bf16.msra.mxu0 0
    %6608 = vmatpush.bf16.msra.mxu0 0
    %6609 = vmatpush.bf16.msra.mxu0 %v6552
    %6610 = vmatpush.bf16.msra.mxu0 %v6548
    %6611 = vmatmul.bf16.gmra.mxu0 %v6562
    %v6612 = vpop.f32.mrf.mxu0
    %v6613 = vadd.f32 0.0, %v6612
    %v6614 = vpop.f32.mrf.mxu0
    %6615 = vdwg.mxu0
    %v6616 = vadd.f32 %v6393, %v6475
    %v6617 = vadd.f32 %v6394, %v6488
    %v6618 = vadd.f32 %v6395, %v6501
    %v6619 = vadd.f32 %v6396, %v6514
    %v6620 = vadd.f32 %v6397, %v6574
    %v6621 = vadd.f32 %v6398, %v6587
    %v6622 = vadd.f32 %v6399, %v6600
    %v6623 = vadd.f32 %v6400, %v6613
    %s6624 = scalar_lea.vmem [#allocation2], 384
    %v6625 = vld [vmem:[%s6624] sm:$0xff]
    %v6626 = vld [vmem:[%s6624 + $0x8] sm:$0xff]
    %v6627 = vld [vmem:[%s6624 + $0x10] sm:$0xff]
    %v6628 = vld [vmem:[%s6624 + $0x18] sm:$0xff]
    %v6629 = vld [vmem:[%s6624 + $0x20] sm:$0xff]
    %v6630 = vld [vmem:[%s6624 + $0x28] sm:$0xff]
    %v6631 = vld [vmem:[%s6624 + $0x30] sm:$0xff]
    %v6632 = vld [vmem:[%s6624 + $0x38] sm:$0xff]
    %v6633 = vld [vmem:[%s6624 + $0x200] sm:$0xff]
    %v6634 = vld [vmem:[%s6624 + $0x208] sm:$0xff]
    %v6635 = vld [vmem:[%s6624 + $0x210] sm:$0xff]
    %v6636 = vld [vmem:[%s6624 + $0x218] sm:$0xff]
    %v6637 = vld [vmem:[%s6624 + $0x220] sm:$0xff]
    %v6638 = vld [vmem:[%s6624 + $0x228] sm:$0xff]
    %v6639 = vld [vmem:[%s6624 + $0x230] sm:$0xff]
    %v6640 = vld [vmem:[%s6624 + $0x238] sm:$0xff]
    %v6641 = vrot.slane %v5329, 6
    %v6642 = vrot.slane %v5330, 5
    %v6643 = vsel %vm5332, %v6642, %v6641
    %v6644 = vpack.c.b16 %v6643, %v6643
    %v6653 = vunpack.c.l.b16 %v6625
    %v6654 = vunpack.c.h.b16 %v6625
    %v6655 = vunpack.c.l.b16 %v6626
    %v6656 = vunpack.c.h.b16 %v6626
    %v6657 = vunpack.c.l.b16 %v6627
    %v6658 = vunpack.c.h.b16 %v6627
    %v6659 = vunpack.c.l.b16 %v6628
    %v6660 = vunpack.c.h.b16 %v6628
    %v6661 = vunpack.c.l.b16 %v6629
    %v6662 = vunpack.c.h.b16 %v6629
    %v6663 = vunpack.c.l.b16 %v6630
    %v6664 = vunpack.c.h.b16 %v6630
    %v6665 = vunpack.c.l.b16 %v6631
    %v6666 = vunpack.c.h.b16 %v6631
    %v6667 = vunpack.c.l.b16 %v6632
    %v6668 = vunpack.c.h.b16 %v6632
    %v6669 = vpack.c.b16 %v6657, %v6653
    %v6670 = vpack.c.b16 %v6658, %v6654
    %v6671 = vpack.c.b16 %v6659, %v6655
    %v6672 = vpack.c.b16 %v6660, %v6656
    %v6673 = vpack.c.b16 %v6665, %v6661
    %v6674 = vpack.c.b16 %v6666, %v6662
    %v6675 = vpack.c.b16 %v6667, %v6663
    %v6676 = vpack.c.b16 %v6668, %v6664
    %v6686 = vsel %vm300, %v6644, 0
    %6688 = vmatpush.bf16.msra.mxu0 0
    %6689 = vmatpush.bf16.msra.mxu0 0
    %6690 = vmatpush.bf16.msra.mxu0 0
    %6691 = vmatpush.bf16.msra.mxu0 0
    %6692 = vmatpush.bf16.msra.mxu0 0
    %6693 = vmatpush.bf16.msra.mxu0 0
    %6694 = vmatpush.bf16.msra.mxu0 %v6673
    %6695 = vmatpush.bf16.msra.mxu0 %v6669
    %6696 = vmatmul.bf16.gmra.mxu0 %v6686
    %v6697 = vpop.f32.mrf.mxu0
    %v6698 = vadd.f32 0.0, %v6697
    %v6699 = vpop.f32.mrf.mxu0
    %6700 = vdwg.mxu0
    %6701 = vmatpush.bf16.msra.mxu0 0
    %6702 = vmatpush.bf16.msra.mxu0 0
    %6703 = vmatpush.bf16.msra.mxu0 0
    %6704 = vmatpush.bf16.msra.mxu0 0
    %6705 = vmatpush.bf16.msra.mxu0 0
    %6706 = vmatpush.bf16.msra.mxu0 0
    %6707 = vmatpush.bf16.msra.mxu0 %v6674
    %6708 = vmatpush.bf16.msra.mxu0 %v6670
    %6709 = vmatmul.bf16.gmra.mxu0 %v6686
    %v6710 = vpop.f32.mrf.mxu0
    %v6711 = vadd.f32 0.0, %v6710
    %v6712 = vpop.f32.mrf.mxu0
    %6713 = vdwg.mxu0
    %6714 = vmatpush.bf16.msra.mxu0 0
    %6715 = vmatpush.bf16.msra.mxu0 0
    %6716 = vmatpush.bf16.msra.mxu0 0
    %6717 = vmatpush.bf16.msra.mxu0 0
    %6718 = vmatpush.bf16.msra.mxu0 0
    %6719 = vmatpush.bf16.msra.mxu0 0
    %6720 = vmatpush.bf16.msra.mxu0 %v6675
    %6721 = vmatpush.bf16.msra.mxu0 %v6671
    %6722 = vmatmul.bf16.gmra.mxu0 %v6686
    %v6723 = vpop.f32.mrf.mxu0
    %v6724 = vadd.f32 0.0, %v6723
    %v6725 = vpop.f32.mrf.mxu0
    %6726 = vdwg.mxu0
    %6727 = vmatpush.bf16.msra.mxu0 0
    %6728 = vmatpush.bf16.msra.mxu0 0
    %6729 = vmatpush.bf16.msra.mxu0 0
    %6730 = vmatpush.bf16.msra.mxu0 0
    %6731 = vmatpush.bf16.msra.mxu0 0
    %6732 = vmatpush.bf16.msra.mxu0 0
    %6733 = vmatpush.bf16.msra.mxu0 %v6676
    %6734 = vmatpush.bf16.msra.mxu0 %v6672
    %6735 = vmatmul.bf16.gmra.mxu0 %v6686
    %v6736 = vpop.f32.mrf.mxu0
    %v6737 = vadd.f32 0.0, %v6736
    %v6738 = vpop.f32.mrf.mxu0
    %6739 = vdwg.mxu0
    %v6740 = vrot.slane %v5436, 6
    %v6741 = vrot.slane %v5437, 5
    %v6742 = vsel %vm5332, %v6741, %v6740
    %v6743 = vpack.c.b16 %v6742, %v6742
    %v6752 = vunpack.c.l.b16 %v6633
    %v6753 = vunpack.c.h.b16 %v6633
    %v6754 = vunpack.c.l.b16 %v6634
    %v6755 = vunpack.c.h.b16 %v6634
    %v6756 = vunpack.c.l.b16 %v6635
    %v6757 = vunpack.c.h.b16 %v6635
    %v6758 = vunpack.c.l.b16 %v6636
    %v6759 = vunpack.c.h.b16 %v6636
    %v6760 = vunpack.c.l.b16 %v6637
    %v6761 = vunpack.c.h.b16 %v6637
    %v6762 = vunpack.c.l.b16 %v6638
    %v6763 = vunpack.c.h.b16 %v6638
    %v6764 = vunpack.c.l.b16 %v6639
    %v6765 = vunpack.c.h.b16 %v6639
    %v6766 = vunpack.c.l.b16 %v6640
    %v6767 = vunpack.c.h.b16 %v6640
    %v6768 = vpack.c.b16 %v6756, %v6752
    %v6769 = vpack.c.b16 %v6757, %v6753
    %v6770 = vpack.c.b16 %v6758, %v6754
    %v6771 = vpack.c.b16 %v6759, %v6755
    %v6772 = vpack.c.b16 %v6764, %v6760
    %v6773 = vpack.c.b16 %v6765, %v6761
    %v6774 = vpack.c.b16 %v6766, %v6762
    %v6775 = vpack.c.b16 %v6767, %v6763
    %v6785 = vsel %vm300, %v6743, 0
    %6787 = vmatpush.bf16.msra.mxu0 0
    %6788 = vmatpush.bf16.msra.mxu0 0
    %6789 = vmatpush.bf16.msra.mxu0 0
    %6790 = vmatpush.bf16.msra.mxu0 0
    %6791 = vmatpush.bf16.msra.mxu0 0
    %6792 = vmatpush.bf16.msra.mxu0 0
    %6793 = vmatpush.bf16.msra.mxu0 %v6772
    %6794 = vmatpush.bf16.msra.mxu0 %v6768
    %6795 = vmatmul.bf16.gmra.mxu0 %v6785
    %v6796 = vpop.f32.mrf.mxu0
    %v6797 = vadd.f32 0.0, %v6796
    %v6798 = vpop.f32.mrf.mxu0
    %6799 = vdwg.mxu0
    %6800 = vmatpush.bf16.msra.mxu0 0
    %6801 = vmatpush.bf16.msra.mxu0 0
    %6802 = vmatpush.bf16.msra.mxu0 0
    %6803 = vmatpush.bf16.msra.mxu0 0
    %6804 = vmatpush.bf16.msra.mxu0 0
    %6805 = vmatpush.bf16.msra.mxu0 0
    %6806 = vmatpush.bf16.msra.mxu0 %v6773
    %6807 = vmatpush.bf16.msra.mxu0 %v6769
    %6808 = vmatmul.bf16.gmra.mxu0 %v6785
    %v6809 = vpop.f32.mrf.mxu0
    %v6810 = vadd.f32 0.0, %v6809
    %v6811 = vpop.f32.mrf.mxu0
    %6812 = vdwg.mxu0
    %6813 = vmatpush.bf16.msra.mxu0 0
    %6814 = vmatpush.bf16.msra.mxu0 0
    %6815 = vmatpush.bf16.msra.mxu0 0
    %6816 = vmatpush.bf16.msra.mxu0 0
    %6817 = vmatpush.bf16.msra.mxu0 0
    %6818 = vmatpush.bf16.msra.mxu0 0
    %6819 = vmatpush.bf16.msra.mxu0 %v6774
    %6820 = vmatpush.bf16.msra.mxu0 %v6770
    %6821 = vmatmul.bf16.gmra.mxu0 %v6785
    %v6822 = vpop.f32.mrf.mxu0
    %v6823 = vadd.f32 0.0, %v6822
    %v6824 = vpop.f32.mrf.mxu0
    %6825 = vdwg.mxu0
    %6826 = vmatpush.bf16.msra.mxu0 0
    %6827 = vmatpush.bf16.msra.mxu0 0
    %6828 = vmatpush.bf16.msra.mxu0 0
    %6829 = vmatpush.bf16.msra.mxu0 0
    %6830 = vmatpush.bf16.msra.mxu0 0
    %6831 = vmatpush.bf16.msra.mxu0 0
    %6832 = vmatpush.bf16.msra.mxu0 %v6775
    %6833 = vmatpush.bf16.msra.mxu0 %v6771
    %6834 = vmatmul.bf16.gmra.mxu0 %v6785
    %v6835 = vpop.f32.mrf.mxu0
    %v6836 = vadd.f32 0.0, %v6835
    %v6837 = vpop.f32.mrf.mxu0
    %6838 = vdwg.mxu0
    %v6839 = vadd.f32 %v6616, %v6698
    %v6840 = vadd.f32 %v6617, %v6711
    %v6841 = vadd.f32 %v6618, %v6724
    %v6842 = vadd.f32 %v6619, %v6737
    %v6843 = vadd.f32 %v6620, %v6797
    %v6844 = vadd.f32 %v6621, %v6810
    %v6845 = vadd.f32 %v6622, %v6823
    %v6846 = vadd.f32 %v6623, %v6836
    %s6847 = scalar_lea.vmem [#allocation2], 448
    %v6848 = vld [vmem:[%s6847] sm:$0xff]
    %v6849 = vld [vmem:[%s6847 + $0x8] sm:$0xff]
    %v6850 = vld [vmem:[%s6847 + $0x10] sm:$0xff]
    %v6851 = vld [vmem:[%s6847 + $0x18] sm:$0xff]
    %v6852 = vld [vmem:[%s6847 + $0x20] sm:$0xff]
    %v6853 = vld [vmem:[%s6847 + $0x28] sm:$0xff]
    %v6854 = vld [vmem:[%s6847 + $0x30] sm:$0xff]
    %v6855 = vld [vmem:[%s6847 + $0x38] sm:$0xff]
    %v6856 = vld [vmem:[%s6847 + $0x200] sm:$0xff]
    %v6857 = vld [vmem:[%s6847 + $0x208] sm:$0xff]
    %v6858 = vld [vmem:[%s6847 + $0x210] sm:$0xff]
    %v6859 = vld [vmem:[%s6847 + $0x218] sm:$0xff]
    %v6860 = vld [vmem:[%s6847 + $0x220] sm:$0xff]
    %v6861 = vld [vmem:[%s6847 + $0x228] sm:$0xff]
    %v6862 = vld [vmem:[%s6847 + $0x230] sm:$0xff]
    %v6863 = vld [vmem:[%s6847 + $0x238] sm:$0xff]
    %v6864 = vrot.slane %v5329, 7
    %v6865 = vrot.slane %v5330, 6
    %v6866 = vsel %vm5332, %v6865, %v6864
    %v6867 = vpack.c.b16 %v6866, %v6866
    %v6876 = vunpack.c.l.b16 %v6848
    %v6877 = vunpack.c.h.b16 %v6848
    %v6878 = vunpack.c.l.b16 %v6849
    %v6879 = vunpack.c.h.b16 %v6849
    %v6880 = vunpack.c.l.b16 %v6850
    %v6881 = vunpack.c.h.b16 %v6850
    %v6882 = vunpack.c.l.b16 %v6851
    %v6883 = vunpack.c.h.b16 %v6851
    %v6884 = vunpack.c.l.b16 %v6852
    %v6885 = vunpack.c.h.b16 %v6852
    %v6886 = vunpack.c.l.b16 %v6853
    %v6887 = vunpack.c.h.b16 %v6853
    %v6888 = vunpack.c.l.b16 %v6854
    %v6889 = vunpack.c.h.b16 %v6854
    %v6890 = vunpack.c.l.b16 %v6855
    %v6891 = vunpack.c.h.b16 %v6855
    %v6892 = vpack.c.b16 %v6880, %v6876
    %v6893 = vpack.c.b16 %v6881, %v6877
    %v6894 = vpack.c.b16 %v6882, %v6878
    %v6895 = vpack.c.b16 %v6883, %v6879
    %v6896 = vpack.c.b16 %v6888, %v6884
    %v6897 = vpack.c.b16 %v6889, %v6885
    %v6898 = vpack.c.b16 %v6890, %v6886
    %v6899 = vpack.c.b16 %v6891, %v6887
    %v6909 = vsel %vm300, %v6867, 0
    %6911 = vmatpush.bf16.msra.mxu0 0
    %6912 = vmatpush.bf16.msra.mxu0 0
    %6913 = vmatpush.bf16.msra.mxu0 0
    %6914 = vmatpush.bf16.msra.mxu0 0
    %6915 = vmatpush.bf16.msra.mxu0 0
    %6916 = vmatpush.bf16.msra.mxu0 0
    %6917 = vmatpush.bf16.msra.mxu0 %v6896
    %6918 = vmatpush.bf16.msra.mxu0 %v6892
    %6919 = vmatmul.bf16.gmra.mxu0 %v6909
    %v6920 = vpop.f32.mrf.mxu0
    %v6921 = vadd.f32 0.0, %v6920
    %v6922 = vpop.f32.mrf.mxu0
    %6923 = vdwg.mxu0
    %6924 = vmatpush.bf16.msra.mxu0 0
    %6925 = vmatpush.bf16.msra.mxu0 0
    %6926 = vmatpush.bf16.msra.mxu0 0
    %6927 = vmatpush.bf16.msra.mxu0 0
    %6928 = vmatpush.bf16.msra.mxu0 0
    %6929 = vmatpush.bf16.msra.mxu0 0
    %6930 = vmatpush.bf16.msra.mxu0 %v6897
    %6931 = vmatpush.bf16.msra.mxu0 %v6893
    %6932 = vmatmul.bf16.gmra.mxu0 %v6909
    %v6933 = vpop.f32.mrf.mxu0
    %v6934 = vadd.f32 0.0, %v6933
    %v6935 = vpop.f32.mrf.mxu0
    %6936 = vdwg.mxu0
    %6937 = vmatpush.bf16.msra.mxu0 0
    %6938 = vmatpush.bf16.msra.mxu0 0
    %6939 = vmatpush.bf16.msra.mxu0 0
    %6940 = vmatpush.bf16.msra.mxu0 0
    %6941 = vmatpush.bf16.msra.mxu0 0
    %6942 = vmatpush.bf16.msra.mxu0 0
    %6943 = vmatpush.bf16.msra.mxu0 %v6898
    %6944 = vmatpush.bf16.msra.mxu0 %v6894
    %6945 = vmatmul.bf16.gmra.mxu0 %v6909
    %v6946 = vpop.f32.mrf.mxu0
    %v6947 = vadd.f32 0.0, %v6946
    %v6948 = vpop.f32.mrf.mxu0
    %6949 = vdwg.mxu0
    %6950 = vmatpush.bf16.msra.mxu0 0
    %6951 = vmatpush.bf16.msra.mxu0 0
    %6952 = vmatpush.bf16.msra.mxu0 0
    %6953 = vmatpush.bf16.msra.mxu0 0
    %6954 = vmatpush.bf16.msra.mxu0 0
    %6955 = vmatpush.bf16.msra.mxu0 0
    %6956 = vmatpush.bf16.msra.mxu0 %v6899
    %6957 = vmatpush.bf16.msra.mxu0 %v6895
    %6958 = vmatmul.bf16.gmra.mxu0 %v6909
    %v6959 = vpop.f32.mrf.mxu0
    %v6960 = vadd.f32 0.0, %v6959
    %v6961 = vpop.f32.mrf.mxu0
    %6962 = vdwg.mxu0
    %v6963 = vrot.slane %v5436, 7
    %v6964 = vrot.slane %v5437, 6
    %v6965 = vsel %vm5332, %v6964, %v6963
    %v6966 = vpack.c.b16 %v6965, %v6965
    %v6975 = vunpack.c.l.b16 %v6856
    %v6976 = vunpack.c.h.b16 %v6856
    %v6977 = vunpack.c.l.b16 %v6857
    %v6978 = vunpack.c.h.b16 %v6857
    %v6979 = vunpack.c.l.b16 %v6858
    %v6980 = vunpack.c.h.b16 %v6858
    %v6981 = vunpack.c.l.b16 %v6859
    %v6982 = vunpack.c.h.b16 %v6859
    %v6983 = vunpack.c.l.b16 %v6860
    %v6984 = vunpack.c.h.b16 %v6860
    %v6985 = vunpack.c.l.b16 %v6861
    %v6986 = vunpack.c.h.b16 %v6861
    %v6987 = vunpack.c.l.b16 %v6862
    %v6988 = vunpack.c.h.b16 %v6862
    %v6989 = vunpack.c.l.b16 %v6863
    %v6990 = vunpack.c.h.b16 %v6863
    %v6991 = vpack.c.b16 %v6979, %v6975
    %v6992 = vpack.c.b16 %v6980, %v6976
    %v6993 = vpack.c.b16 %v6981, %v6977
    %v6994 = vpack.c.b16 %v6982, %v6978
    %v6995 = vpack.c.b16 %v6987, %v6983
    %v6996 = vpack.c.b16 %v6988, %v6984
    %v6997 = vpack.c.b16 %v6989, %v6985
    %v6998 = vpack.c.b16 %v6990, %v6986
    %v7008 = vsel %vm300, %v6966, 0
    %7010 = vmatpush.bf16.msra.mxu0 0
    %7011 = vmatpush.bf16.msra.mxu0 0
    %7012 = vmatpush.bf16.msra.mxu0 0
    %7013 = vmatpush.bf16.msra.mxu0 0
    %7014 = vmatpush.bf16.msra.mxu0 0
    %7015 = vmatpush.bf16.msra.mxu0 0
    %7016 = vmatpush.bf16.msra.mxu0 %v6995
    %7017 = vmatpush.bf16.msra.mxu0 %v6991
    %7018 = vmatmul.bf16.gmra.mxu0 %v7008
    %v7019 = vpop.f32.mrf.mxu0
    %v7020 = vadd.f32 0.0, %v7019
    %v7021 = vpop.f32.mrf.mxu0
    %7022 = vdwg.mxu0
    %7023 = vmatpush.bf16.msra.mxu0 0
    %7024 = vmatpush.bf16.msra.mxu0 0
    %7025 = vmatpush.bf16.msra.mxu0 0
    %7026 = vmatpush.bf16.msra.mxu0 0
    %7027 = vmatpush.bf16.msra.mxu0 0
    %7028 = vmatpush.bf16.msra.mxu0 0
    %7029 = vmatpush.bf16.msra.mxu0 %v6996
    %7030 = vmatpush.bf16.msra.mxu0 %v6992
    %7031 = vmatmul.bf16.gmra.mxu0 %v7008
    %v7032 = vpop.f32.mrf.mxu0
    %v7033 = vadd.f32 0.0, %v7032
    %v7034 = vpop.f32.mrf.mxu0
    %7035 = vdwg.mxu0
    %7036 = vmatpush.bf16.msra.mxu0 0
    %7037 = vmatpush.bf16.msra.mxu0 0
    %7038 = vmatpush.bf16.msra.mxu0 0
    %7039 = vmatpush.bf16.msra.mxu0 0
    %7040 = vmatpush.bf16.msra.mxu0 0
    %7041 = vmatpush.bf16.msra.mxu0 0
    %7042 = vmatpush.bf16.msra.mxu0 %v6997
    %7043 = vmatpush.bf16.msra.mxu0 %v6993
    %7044 = vmatmul.bf16.gmra.mxu0 %v7008
    %v7045 = vpop.f32.mrf.mxu0
    %v7046 = vadd.f32 0.0, %v7045
    %v7047 = vpop.f32.mrf.mxu0
    %7048 = vdwg.mxu0
    %7049 = vmatpush.bf16.msra.mxu0 0
    %7050 = vmatpush.bf16.msra.mxu0 0
    %7051 = vmatpush.bf16.msra.mxu0 0
    %7052 = vmatpush.bf16.msra.mxu0 0
    %7053 = vmatpush.bf16.msra.mxu0 0
    %7054 = vmatpush.bf16.msra.mxu0 0
    %7055 = vmatpush.bf16.msra.mxu0 %v6998
    %7056 = vmatpush.bf16.msra.mxu0 %v6994
    %7057 = vmatmul.bf16.gmra.mxu0 %v7008
    %v7058 = vpop.f32.mrf.mxu0
    %v7059 = vadd.f32 0.0, %v7058
    %v7060 = vpop.f32.mrf.mxu0
    %7061 = vdwg.mxu0
    %v7062 = vadd.f32 %v6839, %v6921
    %v7063 = vadd.f32 %v6840, %v6934
    %v7064 = vadd.f32 %v6841, %v6947
    %v7065 = vadd.f32 %v6842, %v6960
    %v7066 = vadd.f32 %v6843, %v7020
    %v7067 = vadd.f32 %v6844, %v7033
    %v7068 = vadd.f32 %v6845, %v7046
    %v7069 = vadd.f32 %v6846, %v7059
    %v7070 = vld [vmem:[%s59] sm:$0xf]
    %v7071 = vld [vmem:[%s59 + $0x4] sm:$0xf]
    %v7074 = vperm.slane %v7070, 0
    %v7075 = vperm.slane %v7070, 1
    %v7076 = vperm.slane %v7070, 2
    %v7077 = vperm.slane %v7070, 3
    %v7078 = vperm.slane %v7071, 0
    %v7079 = vperm.slane %v7071, 1
    %v7080 = vperm.slane %v7071, 2
    %v7081 = vperm.slane %v7071, 3
    %v7090 = vadd.f32 %v7062, %v7074
    %v7091 = vadd.f32 %v7063, %v7075
    %v7092 = vadd.f32 %v7064, %v7076
    %v7093 = vadd.f32 %v7065, %v7077
    %v7094 = vadd.f32 %v7066, %v7078
    %v7095 = vadd.f32 %v7067, %v7079
    %v7096 = vadd.f32 %v7068, %v7080
    %v7097 = vadd.f32 %v7069, %v7081
    %v7098 = vmax.f32 %v7090, 0.0
    %v7099 = vmax.f32 %v7091, 0.0
    %v7100 = vmax.f32 %v7092, 0.0
    %v7101 = vmax.f32 %v7093, 0.0
    %v7102 = vmax.f32 %v7094, 0.0
    %v7103 = vmax.f32 %v7095, 0.0
    %v7104 = vmax.f32 %v7096, 0.0
    %v7105 = vmax.f32 %v7097, 0.0
    %v7106 = vpack.c.bf16 %v7099, %v7098
    %v7107 = vpack.c.bf16 %v7101, %v7100
    %v7108 = vpack.c.bf16 %v7103, %v7102
    %v7109 = vpack.c.bf16 %v7105, %v7104
    %v7110 = vld [vmem:[#allocation5] sm:$0xff]
    %v7111 = vld [vmem:[#allocation5 + $0x8] sm:$0xff]
    %v7112 = vld [vmem:[#allocation5 + $0x10] sm:$0xff]
    %v7113 = vld [vmem:[#allocation5 + $0x18] sm:$0xff]
    %v7114 = vld [vmem:[#allocation5 + $0x20] sm:$0xff]
    %v7115 = vld [vmem:[#allocation5 + $0x28] sm:$0xff]
    %v7116 = vld [vmem:[#allocation5 + $0x30] sm:$0xff]
    %v7117 = vld [vmem:[#allocation5 + $0x38] sm:$0xff]
    %v7118 = vld [vmem:[#allocation5 + $0x40] sm:$0xff]
    %v7119 = vld [vmem:[#allocation5 + $0x48] sm:$0xff]
    %v7120 = vld [vmem:[#allocation5 + $0x50] sm:$0xff]
    %v7121 = vld [vmem:[#allocation5 + $0x58] sm:$0xff]
    %v7122 = vld [vmem:[#allocation5 + $0x60] sm:$0xff]
    %v7123 = vld [vmem:[#allocation5 + $0x68] sm:$0xff]
    %v7124 = vld [vmem:[#allocation5 + $0x70] sm:$0xff]
    %v7125 = vld [vmem:[#allocation5 + $0x78] sm:$0xff]
    %v7126 = vld [vmem:[#allocation5 + $0x80] sm:$0xff]
    %v7127 = vld [vmem:[#allocation5 + $0x88] sm:$0xff]
    %v7128 = vld [vmem:[#allocation5 + $0x90] sm:$0xff]
    %v7129 = vld [vmem:[#allocation5 + $0x98] sm:$0xff]
    %v7130 = vld [vmem:[#allocation5 + $0xa0] sm:$0xff]
    %v7131 = vld [vmem:[#allocation5 + $0xa8] sm:$0xff]
    %v7132 = vld [vmem:[#allocation5 + $0xb0] sm:$0xff]
    %v7133 = vld [vmem:[#allocation5 + $0xb8] sm:$0xff]
    %v7134 = vld [vmem:[#allocation5 + $0xc0] sm:$0xff]
    %v7135 = vld [vmem:[#allocation5 + $0xc8] sm:$0xff]
    %v7136 = vld [vmem:[#allocation5 + $0xd0] sm:$0xff]
    %v7137 = vld [vmem:[#allocation5 + $0xd8] sm:$0xff]
    %v7138 = vld [vmem:[#allocation5 + $0xe0] sm:$0xff]
    %v7139 = vld [vmem:[#allocation5 + $0xe8] sm:$0xff]
    %v7140 = vld [vmem:[#allocation5 + $0xf0] sm:$0xff]
    %v7141 = vld [vmem:[#allocation5 + $0xf8] sm:$0xff]
    %v7142 = vld [vmem:[#allocation5 + $0x100] sm:$0xff]
    %v7143 = vld [vmem:[#allocation5 + $0x108] sm:$0xff]
    %v7144 = vld [vmem:[#allocation5 + $0x110] sm:$0xff]
    %v7145 = vld [vmem:[#allocation5 + $0x118] sm:$0xff]
    %v7146 = vld [vmem:[#allocation5 + $0x120] sm:$0xff]
    %v7147 = vld [vmem:[#allocation5 + $0x128] sm:$0xff]
    %v7148 = vld [vmem:[#allocation5 + $0x130] sm:$0xff]
    %v7149 = vld [vmem:[#allocation5 + $0x138] sm:$0xff]
    %v7150 = vld [vmem:[#allocation5 + $0x140] sm:$0xff]
    %v7151 = vld [vmem:[#allocation5 + $0x148] sm:$0xff]
    %v7152 = vld [vmem:[#allocation5 + $0x150] sm:$0xff]
    %v7153 = vld [vmem:[#allocation5 + $0x158] sm:$0xff]
    %v7154 = vld [vmem:[#allocation5 + $0x160] sm:$0xff]
    %v7155 = vld [vmem:[#allocation5 + $0x168] sm:$0xff]
    %v7156 = vld [vmem:[#allocation5 + $0x170] sm:$0xff]
    %v7157 = vld [vmem:[#allocation5 + $0x178] sm:$0xff]
    %v7158 = vld [vmem:[#allocation5 + $0x180] sm:$0xff]
    %v7159 = vld [vmem:[#allocation5 + $0x188] sm:$0xff]
    %v7160 = vld [vmem:[#allocation5 + $0x190] sm:$0xff]
    %v7161 = vld [vmem:[#allocation5 + $0x198] sm:$0xff]
    %v7162 = vld [vmem:[#allocation5 + $0x1a0] sm:$0xff]
    %v7163 = vld [vmem:[#allocation5 + $0x1a8] sm:$0xff]
    %v7164 = vld [vmem:[#allocation5 + $0x1b0] sm:$0xff]
    %v7165 = vld [vmem:[#allocation5 + $0x1b8] sm:$0xff]
    %v7166 = vld [vmem:[#allocation5 + $0x1c0] sm:$0xff]
    %v7167 = vld [vmem:[#allocation5 + $0x1c8] sm:$0xff]
    %v7168 = vld [vmem:[#allocation5 + $0x1d0] sm:$0xff]
    %v7169 = vld [vmem:[#allocation5 + $0x1d8] sm:$0xff]
    %v7170 = vld [vmem:[#allocation5 + $0x1e0] sm:$0xff]
    %v7171 = vld [vmem:[#allocation5 + $0x1e8] sm:$0xff]
    %v7172 = vld [vmem:[#allocation5 + $0x1f0] sm:$0xff]
    %v7173 = vld [vmem:[#allocation5 + $0x1f8] sm:$0xff]
    %v7174 = vld [vmem:[#allocation5 + $0x200] sm:$0xff]
    %v7175 = vld [vmem:[#allocation5 + $0x208] sm:$0xff]
    %v7176 = vld [vmem:[#allocation5 + $0x210] sm:$0xff]
    %v7177 = vld [vmem:[#allocation5 + $0x218] sm:$0xff]
    %v7178 = vld [vmem:[#allocation5 + $0x220] sm:$0xff]
    %v7179 = vld [vmem:[#allocation5 + $0x228] sm:$0xff]
    %v7180 = vld [vmem:[#allocation5 + $0x230] sm:$0xff]
    %v7181 = vld [vmem:[#allocation5 + $0x238] sm:$0xff]
    %v7182 = vld [vmem:[#allocation5 + $0x240] sm:$0xff]
    %v7183 = vld [vmem:[#allocation5 + $0x248] sm:$0xff]
    %v7184 = vld [vmem:[#allocation5 + $0x250] sm:$0xff]
    %v7185 = vld [vmem:[#allocation5 + $0x258] sm:$0xff]
    %v7186 = vld [vmem:[#allocation5 + $0x260] sm:$0xff]
    %v7187 = vld [vmem:[#allocation5 + $0x268] sm:$0xff]
    %v7188 = vld [vmem:[#allocation5 + $0x270] sm:$0xff]
    %v7189 = vld [vmem:[#allocation5 + $0x278] sm:$0xff]
    %v7190 = vld [vmem:[#allocation5 + $0x280] sm:$0xff]
    %v7191 = vld [vmem:[#allocation5 + $0x288] sm:$0xff]
    %v7192 = vld [vmem:[#allocation5 + $0x290] sm:$0xff]
    %v7193 = vld [vmem:[#allocation5 + $0x298] sm:$0xff]
    %v7194 = vld [vmem:[#allocation5 + $0x2a0] sm:$0xff]
    %v7195 = vld [vmem:[#allocation5 + $0x2a8] sm:$0xff]
    %v7196 = vld [vmem:[#allocation5 + $0x2b0] sm:$0xff]
    %v7197 = vld [vmem:[#allocation5 + $0x2b8] sm:$0xff]
    %v7198 = vld [vmem:[#allocation5 + $0x2c0] sm:$0xff]
    %v7199 = vld [vmem:[#allocation5 + $0x2c8] sm:$0xff]
    %v7200 = vld [vmem:[#allocation5 + $0x2d0] sm:$0xff]
    %v7201 = vld [vmem:[#allocation5 + $0x2d8] sm:$0xff]
    %v7202 = vld [vmem:[#allocation5 + $0x2e0] sm:$0xff]
    %v7203 = vld [vmem:[#allocation5 + $0x2e8] sm:$0xff]
    %v7204 = vld [vmem:[#allocation5 + $0x2f0] sm:$0xff]
    %v7205 = vld [vmem:[#allocation5 + $0x2f8] sm:$0xff]
    %v7206 = vld [vmem:[#allocation5 + $0x300] sm:$0xff]
    %v7207 = vld [vmem:[#allocation5 + $0x308] sm:$0xff]
    %v7208 = vld [vmem:[#allocation5 + $0x310] sm:$0xff]
    %v7209 = vld [vmem:[#allocation5 + $0x318] sm:$0xff]
    %v7210 = vld [vmem:[#allocation5 + $0x320] sm:$0xff]
    %v7211 = vld [vmem:[#allocation5 + $0x328] sm:$0xff]
    %v7212 = vld [vmem:[#allocation5 + $0x330] sm:$0xff]
    %v7213 = vld [vmem:[#allocation5 + $0x338] sm:$0xff]
    %v7214 = vld [vmem:[#allocation5 + $0x340] sm:$0xff]
    %v7215 = vld [vmem:[#allocation5 + $0x348] sm:$0xff]
    %v7216 = vld [vmem:[#allocation5 + $0x350] sm:$0xff]
    %v7217 = vld [vmem:[#allocation5 + $0x358] sm:$0xff]
    %v7218 = vld [vmem:[#allocation5 + $0x360] sm:$0xff]
    %v7219 = vld [vmem:[#allocation5 + $0x368] sm:$0xff]
    %v7220 = vld [vmem:[#allocation5 + $0x370] sm:$0xff]
    %v7221 = vld [vmem:[#allocation5 + $0x378] sm:$0xff]
    %v7222 = vld [vmem:[#allocation5 + $0x380] sm:$0xff]
    %v7223 = vld [vmem:[#allocation5 + $0x388] sm:$0xff]
    %v7224 = vld [vmem:[#allocation5 + $0x390] sm:$0xff]
    %v7225 = vld [vmem:[#allocation5 + $0x398] sm:$0xff]
    %v7226 = vld [vmem:[#allocation5 + $0x3a0] sm:$0xff]
    %v7227 = vld [vmem:[#allocation5 + $0x3a8] sm:$0xff]
    %v7228 = vld [vmem:[#allocation5 + $0x3b0] sm:$0xff]
    %v7229 = vld [vmem:[#allocation5 + $0x3b8] sm:$0xff]
    %v7230 = vld [vmem:[#allocation5 + $0x3c0] sm:$0xff]
    %v7231 = vld [vmem:[#allocation5 + $0x3c8] sm:$0xff]
    %v7232 = vld [vmem:[#allocation5 + $0x3d0] sm:$0xff]
    %v7233 = vld [vmem:[#allocation5 + $0x3d8] sm:$0xff]
    %v7234 = vld [vmem:[#allocation5 + $0x3e0] sm:$0xff]
    %v7235 = vld [vmem:[#allocation5 + $0x3e8] sm:$0xff]
    %v7236 = vld [vmem:[#allocation5 + $0x3f0] sm:$0xff]
    %v7237 = vld [vmem:[#allocation5 + $0x3f8] sm:$0xff]
    %v7238 = vld [vmem:[%s63] sm:$0x3]
    %v7239 = vld [vmem:[%s63 + $0x2] sm:$0x3]
    %v7242 = vperm.slane %v7238, 0
    %v7243 = vperm.slane %v7238, 1
    %v7244 = vperm.slane %v7239, 0
    %v7245 = vperm.slane %v7239, 1
    %v7252 = vunpack.c.l.b16 %v7106
    %v7253 = vunpack.c.h.b16 %v7106
    %v7254 = vunpack.c.l.b16 %v7107
    %v7255 = vunpack.c.h.b16 %v7107
    %v7256 = vpack.c.b16 %v7252, %v7252
    %v7257 = vpack.c.b16 %v7253, %v7253
    %v7258 = vpack.c.b16 %v7254, %v7254
    %v7259 = vpack.c.b16 %v7255, %v7255
    %v7328 = vunpack.c.l.b16 %v7110
    %v7329 = vunpack.c.h.b16 %v7110
    %v7330 = vunpack.c.l.b16 %v7111
    %v7331 = vunpack.c.h.b16 %v7111
    %v7332 = vunpack.c.l.b16 %v7112
    %v7333 = vunpack.c.h.b16 %v7112
    %v7334 = vunpack.c.l.b16 %v7113
    %v7335 = vunpack.c.h.b16 %v7113
    %v7336 = vunpack.c.l.b16 %v7114
    %v7337 = vunpack.c.h.b16 %v7114
    %v7338 = vunpack.c.l.b16 %v7115
    %v7339 = vunpack.c.h.b16 %v7115
    %v7340 = vunpack.c.l.b16 %v7116
    %v7341 = vunpack.c.h.b16 %v7116
    %v7342 = vunpack.c.l.b16 %v7117
    %v7343 = vunpack.c.h.b16 %v7117
    %v7344 = vunpack.c.l.b16 %v7118
    %v7345 = vunpack.c.h.b16 %v7118
    %v7346 = vunpack.c.l.b16 %v7119
    %v7347 = vunpack.c.h.b16 %v7119
    %v7348 = vunpack.c.l.b16 %v7120
    %v7349 = vunpack.c.h.b16 %v7120
    %v7350 = vunpack.c.l.b16 %v7121
    %v7351 = vunpack.c.h.b16 %v7121
    %v7352 = vunpack.c.l.b16 %v7122
    %v7353 = vunpack.c.h.b16 %v7122
    %v7354 = vunpack.c.l.b16 %v7123
    %v7355 = vunpack.c.h.b16 %v7123
    %v7356 = vunpack.c.l.b16 %v7124
    %v7357 = vunpack.c.h.b16 %v7124
    %v7358 = vunpack.c.l.b16 %v7125
    %v7359 = vunpack.c.h.b16 %v7125
    %v7360 = vunpack.c.l.b16 %v7126
    %v7361 = vunpack.c.h.b16 %v7126
    %v7362 = vunpack.c.l.b16 %v7127
    %v7363 = vunpack.c.h.b16 %v7127
    %v7364 = vunpack.c.l.b16 %v7128
    %v7365 = vunpack.c.h.b16 %v7128
    %v7366 = vunpack.c.l.b16 %v7129
    %v7367 = vunpack.c.h.b16 %v7129
    %v7368 = vunpack.c.l.b16 %v7130
    %v7369 = vunpack.c.h.b16 %v7130
    %v7370 = vunpack.c.l.b16 %v7131
    %v7371 = vunpack.c.h.b16 %v7131
    %v7372 = vunpack.c.l.b16 %v7132
    %v7373 = vunpack.c.h.b16 %v7132
    %v7374 = vunpack.c.l.b16 %v7133
    %v7375 = vunpack.c.h.b16 %v7133
    %v7376 = vunpack.c.l.b16 %v7134
    %v7377 = vunpack.c.h.b16 %v7134
    %v7378 = vunpack.c.l.b16 %v7135
    %v7379 = vunpack.c.h.b16 %v7135
    %v7380 = vunpack.c.l.b16 %v7136
    %v7381 = vunpack.c.h.b16 %v7136
    %v7382 = vunpack.c.l.b16 %v7137
    %v7383 = vunpack.c.h.b16 %v7137
    %v7384 = vunpack.c.l.b16 %v7138
    %v7385 = vunpack.c.h.b16 %v7138
    %v7386 = vunpack.c.l.b16 %v7139
    %v7387 = vunpack.c.h.b16 %v7139
    %v7388 = vunpack.c.l.b16 %v7140
    %v7389 = vunpack.c.h.b16 %v7140
    %v7390 = vunpack.c.l.b16 %v7141
    %v7391 = vunpack.c.h.b16 %v7141
    %v7392 = vunpack.c.l.b16 %v7142
    %v7393 = vunpack.c.h.b16 %v7142
    %v7394 = vunpack.c.l.b16 %v7143
    %v7395 = vunpack.c.h.b16 %v7143
    %v7396 = vunpack.c.l.b16 %v7144
    %v7397 = vunpack.c.h.b16 %v7144
    %v7398 = vunpack.c.l.b16 %v7145
    %v7399 = vunpack.c.h.b16 %v7145
    %v7400 = vunpack.c.l.b16 %v7146
    %v7401 = vunpack.c.h.b16 %v7146
    %v7402 = vunpack.c.l.b16 %v7147
    %v7403 = vunpack.c.h.b16 %v7147
    %v7404 = vunpack.c.l.b16 %v7148
    %v7405 = vunpack.c.h.b16 %v7148
    %v7406 = vunpack.c.l.b16 %v7149
    %v7407 = vunpack.c.h.b16 %v7149
    %v7408 = vunpack.c.l.b16 %v7150
    %v7409 = vunpack.c.h.b16 %v7150
    %v7410 = vunpack.c.l.b16 %v7151
    %v7411 = vunpack.c.h.b16 %v7151
    %v7412 = vunpack.c.l.b16 %v7152
    %v7413 = vunpack.c.h.b16 %v7152
    %v7414 = vunpack.c.l.b16 %v7153
    %v7415 = vunpack.c.h.b16 %v7153
    %v7416 = vunpack.c.l.b16 %v7154
    %v7417 = vunpack.c.h.b16 %v7154
    %v7418 = vunpack.c.l.b16 %v7155
    %v7419 = vunpack.c.h.b16 %v7155
    %v7420 = vunpack.c.l.b16 %v7156
    %v7421 = vunpack.c.h.b16 %v7156
    %v7422 = vunpack.c.l.b16 %v7157
    %v7423 = vunpack.c.h.b16 %v7157
    %v7424 = vunpack.c.l.b16 %v7158
    %v7425 = vunpack.c.h.b16 %v7158
    %v7426 = vunpack.c.l.b16 %v7159
    %v7427 = vunpack.c.h.b16 %v7159
    %v7428 = vunpack.c.l.b16 %v7160
    %v7429 = vunpack.c.h.b16 %v7160
    %v7430 = vunpack.c.l.b16 %v7161
    %v7431 = vunpack.c.h.b16 %v7161
    %v7432 = vunpack.c.l.b16 %v7162
    %v7433 = vunpack.c.h.b16 %v7162
    %v7434 = vunpack.c.l.b16 %v7163
    %v7435 = vunpack.c.h.b16 %v7163
    %v7436 = vunpack.c.l.b16 %v7164
    %v7437 = vunpack.c.h.b16 %v7164
    %v7438 = vunpack.c.l.b16 %v7165
    %v7439 = vunpack.c.h.b16 %v7165
    %v7440 = vunpack.c.l.b16 %v7166
    %v7441 = vunpack.c.h.b16 %v7166
    %v7442 = vunpack.c.l.b16 %v7167
    %v7443 = vunpack.c.h.b16 %v7167
    %v7444 = vunpack.c.l.b16 %v7168
    %v7445 = vunpack.c.h.b16 %v7168
    %v7446 = vunpack.c.l.b16 %v7169
    %v7447 = vunpack.c.h.b16 %v7169
    %v7448 = vunpack.c.l.b16 %v7170
    %v7449 = vunpack.c.h.b16 %v7170
    %v7450 = vunpack.c.l.b16 %v7171
    %v7451 = vunpack.c.h.b16 %v7171
    %v7452 = vunpack.c.l.b16 %v7172
    %v7453 = vunpack.c.h.b16 %v7172
    %v7454 = vunpack.c.l.b16 %v7173
    %v7455 = vunpack.c.h.b16 %v7173
    %v7456 = vpack.c.b16 %v7330, %v7328
    %v7457 = vpack.c.b16 %v7331, %v7329
    %v7458 = vpack.c.b16 %v7334, %v7332
    %v7459 = vpack.c.b16 %v7335, %v7333
    %v7460 = vpack.c.b16 %v7338, %v7336
    %v7461 = vpack.c.b16 %v7339, %v7337
    %v7462 = vpack.c.b16 %v7342, %v7340
    %v7463 = vpack.c.b16 %v7343, %v7341
    %v7464 = vpack.c.b16 %v7346, %v7344
    %v7465 = vpack.c.b16 %v7347, %v7345
    %v7466 = vpack.c.b16 %v7350, %v7348
    %v7467 = vpack.c.b16 %v7351, %v7349
    %v7468 = vpack.c.b16 %v7354, %v7352
    %v7469 = vpack.c.b16 %v7355, %v7353
    %v7470 = vpack.c.b16 %v7358, %v7356
    %v7471 = vpack.c.b16 %v7359, %v7357
    %v7472 = vpack.c.b16 %v7362, %v7360
    %v7473 = vpack.c.b16 %v7363, %v7361
    %v7474 = vpack.c.b16 %v7366, %v7364
    %v7475 = vpack.c.b16 %v7367, %v7365
    %v7476 = vpack.c.b16 %v7370, %v7368
    %v7477 = vpack.c.b16 %v7371, %v7369
    %v7478 = vpack.c.b16 %v7374, %v7372
    %v7479 = vpack.c.b16 %v7375, %v7373
    %v7480 = vpack.c.b16 %v7378, %v7376
    %v7481 = vpack.c.b16 %v7379, %v7377
    %v7482 = vpack.c.b16 %v7382, %v7380
    %v7483 = vpack.c.b16 %v7383, %v7381
    %v7484 = vpack.c.b16 %v7386, %v7384
    %v7485 = vpack.c.b16 %v7387, %v7385
    %v7486 = vpack.c.b16 %v7390, %v7388
    %v7487 = vpack.c.b16 %v7391, %v7389
    %v7488 = vpack.c.b16 %v7394, %v7392
    %v7489 = vpack.c.b16 %v7395, %v7393
    %v7490 = vpack.c.b16 %v7398, %v7396
    %v7491 = vpack.c.b16 %v7399, %v7397
    %v7492 = vpack.c.b16 %v7402, %v7400
    %v7493 = vpack.c.b16 %v7403, %v7401
    %v7494 = vpack.c.b16 %v7406, %v7404
    %v7495 = vpack.c.b16 %v7407, %v7405
    %v7496 = vpack.c.b16 %v7410, %v7408
    %v7497 = vpack.c.b16 %v7411, %v7409
    %v7498 = vpack.c.b16 %v7414, %v7412
    %v7499 = vpack.c.b16 %v7415, %v7413
    %v7500 = vpack.c.b16 %v7418, %v7416
    %v7501 = vpack.c.b16 %v7419, %v7417
    %v7502 = vpack.c.b16 %v7422, %v7420
    %v7503 = vpack.c.b16 %v7423, %v7421
    %v7504 = vpack.c.b16 %v7426, %v7424
    %v7505 = vpack.c.b16 %v7427, %v7425
    %v7506 = vpack.c.b16 %v7430, %v7428
    %v7507 = vpack.c.b16 %v7431, %v7429
    %v7508 = vpack.c.b16 %v7434, %v7432
    %v7509 = vpack.c.b16 %v7435, %v7433
    %v7510 = vpack.c.b16 %v7438, %v7436
    %v7511 = vpack.c.b16 %v7439, %v7437
    %v7512 = vpack.c.b16 %v7442, %v7440
    %v7513 = vpack.c.b16 %v7443, %v7441
    %v7514 = vpack.c.b16 %v7446, %v7444
    %v7515 = vpack.c.b16 %v7447, %v7445
    %v7516 = vpack.c.b16 %v7450, %v7448
    %v7517 = vpack.c.b16 %v7451, %v7449
    %v7518 = vpack.c.b16 %v7454, %v7452
    %v7519 = vpack.c.b16 %v7455, %v7453
    %7584 = vmatpush.bf16.msra.mxu0 %v7470
    %7585 = vmatpush.bf16.msra.mxu0 %v7468
    %7586 = vmatpush.bf16.msra.mxu0 %v7466
    %7587 = vmatpush.bf16.msra.mxu0 %v7464
    %7588 = vmatpush.bf16.msra.mxu0 %v7462
    %7589 = vmatpush.bf16.msra.mxu0 %v7460
    %7590 = vmatpush.bf16.msra.mxu0 %v7458
    %7591 = vmatpush.bf16.msra.mxu0 %v7456
    %7592 = vmatmul.bf16.gmra.mxu0 %v7256
    %v7593 = vpop.f32.mrf.mxu0
    %v7594 = vadd.f32 %v7242, %v7593
    %v7595 = vpop.f32.mrf.mxu0
    %7596 = vdwg.mxu0
    %7597 = vmatpush.bf16.msra.mxu0 %v7486
    %7598 = vmatpush.bf16.msra.mxu0 %v7484
    %7599 = vmatpush.bf16.msra.mxu0 %v7482
    %7600 = vmatpush.bf16.msra.mxu0 %v7480
    %7601 = vmatpush.bf16.msra.mxu0 %v7478
    %7602 = vmatpush.bf16.msra.mxu0 %v7476
    %7603 = vmatpush.bf16.msra.mxu0 %v7474
    %7604 = vmatpush.bf16.msra.mxu0 %v7472
    %7605 = vmatmul.bf16.gmra.mxu0 %v7257
    %v7606 = vpop.f32.mrf.mxu0
    %v7607 = vadd.f32 %v7594, %v7606
    %v7608 = vpop.f32.mrf.mxu0
    %7609 = vdwg.mxu0
    %7610 = vmatpush.bf16.msra.mxu0 %v7502
    %7611 = vmatpush.bf16.msra.mxu0 %v7500
    %7612 = vmatpush.bf16.msra.mxu0 %v7498
    %7613 = vmatpush.bf16.msra.mxu0 %v7496
    %7614 = vmatpush.bf16.msra.mxu0 %v7494
    %7615 = vmatpush.bf16.msra.mxu0 %v7492
    %7616 = vmatpush.bf16.msra.mxu0 %v7490
    %7617 = vmatpush.bf16.msra.mxu0 %v7488
    %7618 = vmatmul.bf16.gmra.mxu0 %v7258
    %v7619 = vpop.f32.mrf.mxu0
    %v7620 = vadd.f32 %v7607, %v7619
    %v7621 = vpop.f32.mrf.mxu0
    %7622 = vdwg.mxu0
    %7623 = vmatpush.bf16.msra.mxu0 %v7518
    %7624 = vmatpush.bf16.msra.mxu0 %v7516
    %7625 = vmatpush.bf16.msra.mxu0 %v7514
    %7626 = vmatpush.bf16.msra.mxu0 %v7512
    %7627 = vmatpush.bf16.msra.mxu0 %v7510
    %7628 = vmatpush.bf16.msra.mxu0 %v7508
    %7629 = vmatpush.bf16.msra.mxu0 %v7506
    %7630 = vmatpush.bf16.msra.mxu0 %v7504
    %7631 = vmatmul.bf16.gmra.mxu0 %v7259
    %v7632 = vpop.f32.mrf.mxu0
    %v7633 = vadd.f32 %v7620, %v7632
    %v7634 = vpop.f32.mrf.mxu0
    %7635 = vdwg.mxu0
    %7636 = vmatpush.bf16.msra.mxu0 %v7471
    %7637 = vmatpush.bf16.msra.mxu0 %v7469
    %7638 = vmatpush.bf16.msra.mxu0 %v7467
    %7639 = vmatpush.bf16.msra.mxu0 %v7465
    %7640 = vmatpush.bf16.msra.mxu0 %v7463
    %7641 = vmatpush.bf16.msra.mxu0 %v7461
    %7642 = vmatpush.bf16.msra.mxu0 %v7459
    %7643 = vmatpush.bf16.msra.mxu0 %v7457
    %7644 = vmatmul.bf16.gmra.mxu0 %v7256
    %v7645 = vpop.f32.mrf.mxu0
    %v7646 = vadd.f32 %v7243, %v7645
    %v7647 = vpop.f32.mrf.mxu0
    %7648 = vdwg.mxu0
    %7649 = vmatpush.bf16.msra.mxu0 %v7487
    %7650 = vmatpush.bf16.msra.mxu0 %v7485
    %7651 = vmatpush.bf16.msra.mxu0 %v7483
    %7652 = vmatpush.bf16.msra.mxu0 %v7481
    %7653 = vmatpush.bf16.msra.mxu0 %v7479
    %7654 = vmatpush.bf16.msra.mxu0 %v7477
    %7655 = vmatpush.bf16.msra.mxu0 %v7475
    %7656 = vmatpush.bf16.msra.mxu0 %v7473
    %7657 = vmatmul.bf16.gmra.mxu0 %v7257
    %v7658 = vpop.f32.mrf.mxu0
    %v7659 = vadd.f32 %v7646, %v7658
    %v7660 = vpop.f32.mrf.mxu0
    %7661 = vdwg.mxu0
    %7662 = vmatpush.bf16.msra.mxu0 %v7503
    %7663 = vmatpush.bf16.msra.mxu0 %v7501
    %7664 = vmatpush.bf16.msra.mxu0 %v7499
    %7665 = vmatpush.bf16.msra.mxu0 %v7497
    %7666 = vmatpush.bf16.msra.mxu0 %v7495
    %7667 = vmatpush.bf16.msra.mxu0 %v7493
    %7668 = vmatpush.bf16.msra.mxu0 %v7491
    %7669 = vmatpush.bf16.msra.mxu0 %v7489
    %7670 = vmatmul.bf16.gmra.mxu0 %v7258
    %v7671 = vpop.f32.mrf.mxu0
    %v7672 = vadd.f32 %v7659, %v7671
    %v7673 = vpop.f32.mrf.mxu0
    %7674 = vdwg.mxu0
    %7675 = vmatpush.bf16.msra.mxu0 %v7519
    %7676 = vmatpush.bf16.msra.mxu0 %v7517
    %7677 = vmatpush.bf16.msra.mxu0 %v7515
    %7678 = vmatpush.bf16.msra.mxu0 %v7513
    %7679 = vmatpush.bf16.msra.mxu0 %v7511
    %7680 = vmatpush.bf16.msra.mxu0 %v7509
    %7681 = vmatpush.bf16.msra.mxu0 %v7507
    %7682 = vmatpush.bf16.msra.mxu0 %v7505
    %7683 = vmatmul.bf16.gmra.mxu0 %v7259
    %v7684 = vpop.f32.mrf.mxu0
    %v7685 = vadd.f32 %v7672, %v7684
    %v7686 = vpop.f32.mrf.mxu0
    %7687 = vdwg.mxu0
    %v7690 = vunpack.c.l.b16 %v7108
    %v7691 = vunpack.c.h.b16 %v7108
    %v7692 = vunpack.c.l.b16 %v7109
    %v7693 = vunpack.c.h.b16 %v7109
    %v7694 = vpack.c.b16 %v7690, %v7690
    %v7695 = vpack.c.b16 %v7691, %v7691
    %v7696 = vpack.c.b16 %v7692, %v7692
    %v7697 = vpack.c.b16 %v7693, %v7693
    %v7766 = vunpack.c.l.b16 %v7174
    %v7767 = vunpack.c.h.b16 %v7174
    %v7768 = vunpack.c.l.b16 %v7175
    %v7769 = vunpack.c.h.b16 %v7175
    %v7770 = vunpack.c.l.b16 %v7176
    %v7771 = vunpack.c.h.b16 %v7176
    %v7772 = vunpack.c.l.b16 %v7177
    %v7773 = vunpack.c.h.b16 %v7177
    %v7774 = vunpack.c.l.b16 %v7178
    %v7775 = vunpack.c.h.b16 %v7178
    %v7776 = vunpack.c.l.b16 %v7179
    %v7777 = vunpack.c.h.b16 %v7179
    %v7778 = vunpack.c.l.b16 %v7180
    %v7779 = vunpack.c.h.b16 %v7180
    %v7780 = vunpack.c.l.b16 %v7181
    %v7781 = vunpack.c.h.b16 %v7181
    %v7782 = vunpack.c.l.b16 %v7182
    %v7783 = vunpack.c.h.b16 %v7182
    %v7784 = vunpack.c.l.b16 %v7183
    %v7785 = vunpack.c.h.b16 %v7183
    %v7786 = vunpack.c.l.b16 %v7184
    %v7787 = vunpack.c.h.b16 %v7184
    %v7788 = vunpack.c.l.b16 %v7185
    %v7789 = vunpack.c.h.b16 %v7185
    %v7790 = vunpack.c.l.b16 %v7186
    %v7791 = vunpack.c.h.b16 %v7186
    %v7792 = vunpack.c.l.b16 %v7187
    %v7793 = vunpack.c.h.b16 %v7187
    %v7794 = vunpack.c.l.b16 %v7188
    %v7795 = vunpack.c.h.b16 %v7188
    %v7796 = vunpack.c.l.b16 %v7189
    %v7797 = vunpack.c.h.b16 %v7189
    %v7798 = vunpack.c.l.b16 %v7190
    %v7799 = vunpack.c.h.b16 %v7190
    %v7800 = vunpack.c.l.b16 %v7191
    %v7801 = vunpack.c.h.b16 %v7191
    %v7802 = vunpack.c.l.b16 %v7192
    %v7803 = vunpack.c.h.b16 %v7192
    %v7804 = vunpack.c.l.b16 %v7193
    %v7805 = vunpack.c.h.b16 %v7193
    %v7806 = vunpack.c.l.b16 %v7194
    %v7807 = vunpack.c.h.b16 %v7194
    %v7808 = vunpack.c.l.b16 %v7195
    %v7809 = vunpack.c.h.b16 %v7195
    %v7810 = vunpack.c.l.b16 %v7196
    %v7811 = vunpack.c.h.b16 %v7196
    %v7812 = vunpack.c.l.b16 %v7197
    %v7813 = vunpack.c.h.b16 %v7197
    %v7814 = vunpack.c.l.b16 %v7198
    %v7815 = vunpack.c.h.b16 %v7198
    %v7816 = vunpack.c.l.b16 %v7199
    %v7817 = vunpack.c.h.b16 %v7199
    %v7818 = vunpack.c.l.b16 %v7200
    %v7819 = vunpack.c.h.b16 %v7200
    %v7820 = vunpack.c.l.b16 %v7201
    %v7821 = vunpack.c.h.b16 %v7201
    %v7822 = vunpack.c.l.b16 %v7202
    %v7823 = vunpack.c.h.b16 %v7202
    %v7824 = vunpack.c.l.b16 %v7203
    %v7825 = vunpack.c.h.b16 %v7203
    %v7826 = vunpack.c.l.b16 %v7204
    %v7827 = vunpack.c.h.b16 %v7204
    %v7828 = vunpack.c.l.b16 %v7205
    %v7829 = vunpack.c.h.b16 %v7205
    %v7830 = vunpack.c.l.b16 %v7206
    %v7831 = vunpack.c.h.b16 %v7206
    %v7832 = vunpack.c.l.b16 %v7207
    %v7833 = vunpack.c.h.b16 %v7207
    %v7834 = vunpack.c.l.b16 %v7208
    %v7835 = vunpack.c.h.b16 %v7208
    %v7836 = vunpack.c.l.b16 %v7209
    %v7837 = vunpack.c.h.b16 %v7209
    %v7838 = vunpack.c.l.b16 %v7210
    %v7839 = vunpack.c.h.b16 %v7210
    %v7840 = vunpack.c.l.b16 %v7211
    %v7841 = vunpack.c.h.b16 %v7211
    %v7842 = vunpack.c.l.b16 %v7212
    %v7843 = vunpack.c.h.b16 %v7212
    %v7844 = vunpack.c.l.b16 %v7213
    %v7845 = vunpack.c.h.b16 %v7213
    %v7846 = vunpack.c.l.b16 %v7214
    %v7847 = vunpack.c.h.b16 %v7214
    %v7848 = vunpack.c.l.b16 %v7215
    %v7849 = vunpack.c.h.b16 %v7215
    %v7850 = vunpack.c.l.b16 %v7216
    %v7851 = vunpack.c.h.b16 %v7216
    %v7852 = vunpack.c.l.b16 %v7217
    %v7853 = vunpack.c.h.b16 %v7217
    %v7854 = vunpack.c.l.b16 %v7218
    %v7855 = vunpack.c.h.b16 %v7218
    %v7856 = vunpack.c.l.b16 %v7219
    %v7857 = vunpack.c.h.b16 %v7219
    %v7858 = vunpack.c.l.b16 %v7220
    %v7859 = vunpack.c.h.b16 %v7220
    %v7860 = vunpack.c.l.b16 %v7221
    %v7861 = vunpack.c.h.b16 %v7221
    %v7862 = vunpack.c.l.b16 %v7222
    %v7863 = vunpack.c.h.b16 %v7222
    %v7864 = vunpack.c.l.b16 %v7223
    %v7865 = vunpack.c.h.b16 %v7223
    %v7866 = vunpack.c.l.b16 %v7224
    %v7867 = vunpack.c.h.b16 %v7224
    %v7868 = vunpack.c.l.b16 %v7225
    %v7869 = vunpack.c.h.b16 %v7225
    %v7870 = vunpack.c.l.b16 %v7226
    %v7871 = vunpack.c.h.b16 %v7226
    %v7872 = vunpack.c.l.b16 %v7227
    %v7873 = vunpack.c.h.b16 %v7227
    %v7874 = vunpack.c.l.b16 %v7228
    %v7875 = vunpack.c.h.b16 %v7228
    %v7876 = vunpack.c.l.b16 %v7229
    %v7877 = vunpack.c.h.b16 %v7229
    %v7878 = vunpack.c.l.b16 %v7230
    %v7879 = vunpack.c.h.b16 %v7230
    %v7880 = vunpack.c.l.b16 %v7231
    %v7881 = vunpack.c.h.b16 %v7231
    %v7882 = vunpack.c.l.b16 %v7232
    %v7883 = vunpack.c.h.b16 %v7232
    %v7884 = vunpack.c.l.b16 %v7233
    %v7885 = vunpack.c.h.b16 %v7233
    %v7886 = vunpack.c.l.b16 %v7234
    %v7887 = vunpack.c.h.b16 %v7234
    %v7888 = vunpack.c.l.b16 %v7235
    %v7889 = vunpack.c.h.b16 %v7235
    %v7890 = vunpack.c.l.b16 %v7236
    %v7891 = vunpack.c.h.b16 %v7236
    %v7892 = vunpack.c.l.b16 %v7237
    %v7893 = vunpack.c.h.b16 %v7237
    %v7894 = vpack.c.b16 %v7768, %v7766
    %v7895 = vpack.c.b16 %v7769, %v7767
    %v7896 = vpack.c.b16 %v7772, %v7770
    %v7897 = vpack.c.b16 %v7773, %v7771
    %v7898 = vpack.c.b16 %v7776, %v7774
    %v7899 = vpack.c.b16 %v7777, %v7775
    %v7900 = vpack.c.b16 %v7780, %v7778
    %v7901 = vpack.c.b16 %v7781, %v7779
    %v7902 = vpack.c.b16 %v7784, %v7782
    %v7903 = vpack.c.b16 %v7785, %v7783
    %v7904 = vpack.c.b16 %v7788, %v7786
    %v7905 = vpack.c.b16 %v7789, %v7787
    %v7906 = vpack.c.b16 %v7792, %v7790
    %v7907 = vpack.c.b16 %v7793, %v7791
    %v7908 = vpack.c.b16 %v7796, %v7794
    %v7909 = vpack.c.b16 %v7797, %v7795
    %v7910 = vpack.c.b16 %v7800, %v7798
    %v7911 = vpack.c.b16 %v7801, %v7799
    %v7912 = vpack.c.b16 %v7804, %v7802
    %v7913 = vpack.c.b16 %v7805, %v7803
    %v7914 = vpack.c.b16 %v7808, %v7806
    %v7915 = vpack.c.b16 %v7809, %v7807
    %v7916 = vpack.c.b16 %v7812, %v7810
    %v7917 = vpack.c.b16 %v7813, %v7811
    %v7918 = vpack.c.b16 %v7816, %v7814
    %v7919 = vpack.c.b16 %v7817, %v7815
    %v7920 = vpack.c.b16 %v7820, %v7818
    %v7921 = vpack.c.b16 %v7821, %v7819
    %v7922 = vpack.c.b16 %v7824, %v7822
    %v7923 = vpack.c.b16 %v7825, %v7823
    %v7924 = vpack.c.b16 %v7828, %v7826
    %v7925 = vpack.c.b16 %v7829, %v7827
    %v7926 = vpack.c.b16 %v7832, %v7830
    %v7927 = vpack.c.b16 %v7833, %v7831
    %v7928 = vpack.c.b16 %v7836, %v7834
    %v7929 = vpack.c.b16 %v7837, %v7835
    %v7930 = vpack.c.b16 %v7840, %v7838
    %v7931 = vpack.c.b16 %v7841, %v7839
    %v7932 = vpack.c.b16 %v7844, %v7842
    %v7933 = vpack.c.b16 %v7845, %v7843
    %v7934 = vpack.c.b16 %v7848, %v7846
    %v7935 = vpack.c.b16 %v7849, %v7847
    %v7936 = vpack.c.b16 %v7852, %v7850
    %v7937 = vpack.c.b16 %v7853, %v7851
    %v7938 = vpack.c.b16 %v7856, %v7854
    %v7939 = vpack.c.b16 %v7857, %v7855
    %v7940 = vpack.c.b16 %v7860, %v7858
    %v7941 = vpack.c.b16 %v7861, %v7859
    %v7942 = vpack.c.b16 %v7864, %v7862
    %v7943 = vpack.c.b16 %v7865, %v7863
    %v7944 = vpack.c.b16 %v7868, %v7866
    %v7945 = vpack.c.b16 %v7869, %v7867
    %v7946 = vpack.c.b16 %v7872, %v7870
    %v7947 = vpack.c.b16 %v7873, %v7871
    %v7948 = vpack.c.b16 %v7876, %v7874
    %v7949 = vpack.c.b16 %v7877, %v7875
    %v7950 = vpack.c.b16 %v7880, %v7878
    %v7951 = vpack.c.b16 %v7881, %v7879
    %v7952 = vpack.c.b16 %v7884, %v7882
    %v7953 = vpack.c.b16 %v7885, %v7883
    %v7954 = vpack.c.b16 %v7888, %v7886
    %v7955 = vpack.c.b16 %v7889, %v7887
    %v7956 = vpack.c.b16 %v7892, %v7890
    %v7957 = vpack.c.b16 %v7893, %v7891
    %8022 = vmatpush.bf16.msra.mxu0 %v7908
    %8023 = vmatpush.bf16.msra.mxu0 %v7906
    %8024 = vmatpush.bf16.msra.mxu0 %v7904
    %8025 = vmatpush.bf16.msra.mxu0 %v7902
    %8026 = vmatpush.bf16.msra.mxu0 %v7900
    %8027 = vmatpush.bf16.msra.mxu0 %v7898
    %8028 = vmatpush.bf16.msra.mxu0 %v7896
    %8029 = vmatpush.bf16.msra.mxu0 %v7894
    %8030 = vmatmul.bf16.gmra.mxu0 %v7694
    %v8031 = vpop.f32.mrf.mxu0
    %v8032 = vadd.f32 %v7244, %v8031
    %v8033 = vpop.f32.mrf.mxu0
    %8034 = vdwg.mxu0
    %8035 = vmatpush.bf16.msra.mxu0 %v7924
    %8036 = vmatpush.bf16.msra.mxu0 %v7922
    %8037 = vmatpush.bf16.msra.mxu0 %v7920
    %8038 = vmatpush.bf16.msra.mxu0 %v7918
    %8039 = vmatpush.bf16.msra.mxu0 %v7916
    %8040 = vmatpush.bf16.msra.mxu0 %v7914
    %8041 = vmatpush.bf16.msra.mxu0 %v7912
    %8042 = vmatpush.bf16.msra.mxu0 %v7910
    %8043 = vmatmul.bf16.gmra.mxu0 %v7695
    %v8044 = vpop.f32.mrf.mxu0
    %v8045 = vadd.f32 %v8032, %v8044
    %v8046 = vpop.f32.mrf.mxu0
    %8047 = vdwg.mxu0
    %8048 = vmatpush.bf16.msra.mxu0 %v7940
    %8049 = vmatpush.bf16.msra.mxu0 %v7938
    %8050 = vmatpush.bf16.msra.mxu0 %v7936
    %8051 = vmatpush.bf16.msra.mxu0 %v7934
    %8052 = vmatpush.bf16.msra.mxu0 %v7932
    %8053 = vmatpush.bf16.msra.mxu0 %v7930
    %8054 = vmatpush.bf16.msra.mxu0 %v7928
    %8055 = vmatpush.bf16.msra.mxu0 %v7926
    %8056 = vmatmul.bf16.gmra.mxu0 %v7696
    %v8057 = vpop.f32.mrf.mxu0
    %v8058 = vadd.f32 %v8045, %v8057
    %v8059 = vpop.f32.mrf.mxu0
    %8060 = vdwg.mxu0
    %8061 = vmatpush.bf16.msra.mxu0 %v7956
    %8062 = vmatpush.bf16.msra.mxu0 %v7954
    %8063 = vmatpush.bf16.msra.mxu0 %v7952
    %8064 = vmatpush.bf16.msra.mxu0 %v7950
    %8065 = vmatpush.bf16.msra.mxu0 %v7948
    %8066 = vmatpush.bf16.msra.mxu0 %v7946
    %8067 = vmatpush.bf16.msra.mxu0 %v7944
    %8068 = vmatpush.bf16.msra.mxu0 %v7942
    %8069 = vmatmul.bf16.gmra.mxu0 %v7697
    %v8070 = vpop.f32.mrf.mxu0
    %v8071 = vadd.f32 %v8058, %v8070
    %v8072 = vpop.f32.mrf.mxu0
    %8073 = vdwg.mxu0
    %8074 = vmatpush.bf16.msra.mxu0 %v7909
    %8075 = vmatpush.bf16.msra.mxu0 %v7907
    %8076 = vmatpush.bf16.msra.mxu0 %v7905
    %8077 = vmatpush.bf16.msra.mxu0 %v7903
    %8078 = vmatpush.bf16.msra.mxu0 %v7901
    %8079 = vmatpush.bf16.msra.mxu0 %v7899
    %8080 = vmatpush.bf16.msra.mxu0 %v7897
    %8081 = vmatpush.bf16.msra.mxu0 %v7895
    %8082 = vmatmul.bf16.gmra.mxu0 %v7694
    %v8083 = vpop.f32.mrf.mxu0
    %v8084 = vadd.f32 %v7245, %v8083
    %v8085 = vpop.f32.mrf.mxu0
    %8086 = vdwg.mxu0
    %8087 = vmatpush.bf16.msra.mxu0 %v7925
    %8088 = vmatpush.bf16.msra.mxu0 %v7923
    %8089 = vmatpush.bf16.msra.mxu0 %v7921
    %8090 = vmatpush.bf16.msra.mxu0 %v7919
    %8091 = vmatpush.bf16.msra.mxu0 %v7917
    %8092 = vmatpush.bf16.msra.mxu0 %v7915
    %8093 = vmatpush.bf16.msra.mxu0 %v7913
    %8094 = vmatpush.bf16.msra.mxu0 %v7911
    %8095 = vmatmul.bf16.gmra.mxu0 %v7695
    %v8096 = vpop.f32.mrf.mxu0
    %v8097 = vadd.f32 %v8084, %v8096
    %v8098 = vpop.f32.mrf.mxu0
    %8099 = vdwg.mxu0
    %8100 = vmatpush.bf16.msra.mxu0 %v7941
    %8101 = vmatpush.bf16.msra.mxu0 %v7939
    %8102 = vmatpush.bf16.msra.mxu0 %v7937
    %8103 = vmatpush.bf16.msra.mxu0 %v7935
    %8104 = vmatpush.bf16.msra.mxu0 %v7933
    %8105 = vmatpush.bf16.msra.mxu0 %v7931
    %8106 = vmatpush.bf16.msra.mxu0 %v7929
    %8107 = vmatpush.bf16.msra.mxu0 %v7927
    %8108 = vmatmul.bf16.gmra.mxu0 %v7696
    %v8109 = vpop.f32.mrf.mxu0
    %v8110 = vadd.f32 %v8097, %v8109
    %v8111 = vpop.f32.mrf.mxu0
    %8112 = vdwg.mxu0
    %8113 = vmatpush.bf16.msra.mxu0 %v7957
    %8114 = vmatpush.bf16.msra.mxu0 %v7955
    %8115 = vmatpush.bf16.msra.mxu0 %v7953
    %8116 = vmatpush.bf16.msra.mxu0 %v7951
    %8117 = vmatpush.bf16.msra.mxu0 %v7949
    %8118 = vmatpush.bf16.msra.mxu0 %v7947
    %8119 = vmatpush.bf16.msra.mxu0 %v7945
    %8120 = vmatpush.bf16.msra.mxu0 %v7943
    %8121 = vmatmul.bf16.gmra.mxu0 %v7697
    %v8122 = vpop.f32.mrf.mxu0
    %v8123 = vadd.f32 %v8110, %v8122
    %v8124 = vpop.f32.mrf.mxu0
    %8125 = vdwg.mxu0
    %v8126 = vmax.f32 %v7633, 0.0
    %v8127 = vmax.f32 %v7685, 0.0
    %v8128 = vmax.f32 %v8071, 0.0
    %v8129 = vmax.f32 %v8123, 0.0
    %v8130 = vpack.c.bf16 %v8127, %v8126
    %v8131 = vpack.c.bf16 %v8129, %v8128
    %v8132 = vld [vmem:[%s65] sm:$0xf]
    %v8133 = vld [vmem:[%s65 + $0x4] sm:$0xf]
    %v8134 = vld [vmem:[%s65 + $0x8] sm:$0xf]
    %v8135 = vld [vmem:[%s65 + $0xc] sm:$0xf]
    %v8136 = vld [vmem:[%s65 + $0x10] sm:$0xf]
    %v8137 = vld [vmem:[%s65 + $0x14] sm:$0xf]
    %v8138 = vld [vmem:[%s65 + $0x18] sm:$0xf]
    %v8139 = vld [vmem:[%s65 + $0x1c] sm:$0xf]
    %v8140 = vld [vmem:[%s65 + $0x20] sm:$0xf]
    %v8141 = vld [vmem:[%s65 + $0x24] sm:$0xf]
    %v8142 = vld [vmem:[%s65 + $0x28] sm:$0xf]
    %v8143 = vld [vmem:[%s65 + $0x2c] sm:$0xf]
    %v8144 = vld [vmem:[%s65 + $0x30] sm:$0xf]
    %v8145 = vld [vmem:[%s65 + $0x34] sm:$0xf]
    %v8146 = vld [vmem:[%s65 + $0x38] sm:$0xf]
    %v8147 = vld [vmem:[%s65 + $0x3c] sm:$0xf]
    %v8148 = vld [vmem:[%s65 + $0x40] sm:$0xf]
    %v8149 = vld [vmem:[%s65 + $0x44] sm:$0xf]
    %v8150 = vld [vmem:[%s65 + $0x48] sm:$0xf]
    %v8151 = vld [vmem:[%s65 + $0x4c] sm:$0xf]
    %v8152 = vld [vmem:[%s65 + $0x50] sm:$0xf]
    %v8153 = vld [vmem:[%s65 + $0x54] sm:$0xf]
    %v8154 = vld [vmem:[%s65 + $0x58] sm:$0xf]
    %v8155 = vld [vmem:[%s65 + $0x5c] sm:$0xf]
    %v8156 = vld [vmem:[%s65 + $0x60] sm:$0xf]
    %v8157 = vld [vmem:[%s65 + $0x64] sm:$0xf]
    %v8158 = vld [vmem:[%s65 + $0x68] sm:$0xf]
    %v8159 = vld [vmem:[%s65 + $0x6c] sm:$0xf]
    %v8160 = vld [vmem:[%s65 + $0x70] sm:$0xf]
    %v8161 = vld [vmem:[%s65 + $0x74] sm:$0xf]
    %v8162 = vld [vmem:[%s65 + $0x78] sm:$0xf]
    %v8163 = vld [vmem:[%s65 + $0x7c] sm:$0xf]
    %v8164 = vld [vmem:[%s65 + $0x80] sm:$0xf]
    %v8165 = vld [vmem:[%s65 + $0x84] sm:$0xf]
    %v8166 = vld [vmem:[%s65 + $0x88] sm:$0xf]
    %v8167 = vld [vmem:[%s65 + $0x8c] sm:$0xf]
    %v8168 = vld [vmem:[%s65 + $0x90] sm:$0xf]
    %v8169 = vld [vmem:[%s65 + $0x94] sm:$0xf]
    %v8170 = vld [vmem:[%s65 + $0x98] sm:$0xf]
    %v8171 = vld [vmem:[%s65 + $0x9c] sm:$0xf]
    %v8172 = vld [vmem:[%s65 + $0xa0] sm:$0xf]
    %v8173 = vld [vmem:[%s65 + $0xa4] sm:$0xf]
    %v8174 = vld [vmem:[%s65 + $0xa8] sm:$0xf]
    %v8175 = vld [vmem:[%s65 + $0xac] sm:$0xf]
    %v8176 = vld [vmem:[%s65 + $0xb0] sm:$0xf]
    %v8177 = vld [vmem:[%s65 + $0xb4] sm:$0xf]
    %v8178 = vld [vmem:[%s65 + $0xb8] sm:$0xf]
    %v8179 = vld [vmem:[%s65 + $0xbc] sm:$0xf]
    %v8180 = vld [vmem:[%s65 + $0xc0] sm:$0xf]
    %v8181 = vld [vmem:[%s65 + $0xc4] sm:$0xf]
    %v8182 = vld [vmem:[%s65 + $0xc8] sm:$0xf]
    %v8183 = vld [vmem:[%s65 + $0xcc] sm:$0xf]
    %v8184 = vld [vmem:[%s65 + $0xd0] sm:$0xf]
    %v8185 = vld [vmem:[%s65 + $0xd4] sm:$0xf]
    %v8186 = vld [vmem:[%s65 + $0xd8] sm:$0xf]
    %v8187 = vld [vmem:[%s65 + $0xdc] sm:$0xf]
    %v8188 = vld [vmem:[%s65 + $0xe0] sm:$0xf]
    %v8189 = vld [vmem:[%s65 + $0xe4] sm:$0xf]
    %v8190 = vld [vmem:[%s65 + $0xe8] sm:$0xf]
    %v8191 = vld [vmem:[%s65 + $0xec] sm:$0xf]
    %v8192 = vld [vmem:[%s65 + $0xf0] sm:$0xf]
    %v8193 = vld [vmem:[%s65 + $0xf4] sm:$0xf]
    %v8194 = vld [vmem:[%s65 + $0xf8] sm:$0xf]
    %v8195 = vld [vmem:[%s65 + $0xfc] sm:$0xf]
    %v8196 = vld [vmem:[%s67] sm:$0x1]
    %v8197 = vld [vmem:[%s67 + $0x1] sm:$0x1]
    %v8200 = vperm.slane %v8196, 0
    %v8201 = vperm.slane %v8197, 0
    %v8205 = vunpack.c.l.b16 %v8130
    %v8206 = vunpack.c.h.b16 %v8130
    %v8207 = vpack.c.b16 %v8205, %v8205
    %v8208 = vpack.c.b16 %v8206, %v8206
    %v8243 = vunpack.c.l.b16 %v8132
    %v8244 = vunpack.c.l.b16 %v8133
    %v8245 = vunpack.c.l.b16 %v8134
    %v8246 = vunpack.c.l.b16 %v8135
    %v8247 = vunpack.c.l.b16 %v8136
    %v8248 = vunpack.c.l.b16 %v8137
    %v8249 = vunpack.c.l.b16 %v8138
    %v8250 = vunpack.c.l.b16 %v8139
    %v8251 = vunpack.c.l.b16 %v8140
    %v8252 = vunpack.c.l.b16 %v8141
    %v8253 = vunpack.c.l.b16 %v8142
    %v8254 = vunpack.c.l.b16 %v8143
    %v8255 = vunpack.c.l.b16 %v8144
    %v8256 = vunpack.c.l.b16 %v8145
    %v8257 = vunpack.c.l.b16 %v8146
    %v8258 = vunpack.c.l.b16 %v8147
    %v8259 = vunpack.c.l.b16 %v8148
    %v8260 = vunpack.c.l.b16 %v8149
    %v8261 = vunpack.c.l.b16 %v8150
    %v8262 = vunpack.c.l.b16 %v8151
    %v8263 = vunpack.c.l.b16 %v8152
    %v8264 = vunpack.c.l.b16 %v8153
    %v8265 = vunpack.c.l.b16 %v8154
    %v8266 = vunpack.c.l.b16 %v8155
    %v8267 = vunpack.c.l.b16 %v8156
    %v8268 = vunpack.c.l.b16 %v8157
    %v8269 = vunpack.c.l.b16 %v8158
    %v8270 = vunpack.c.l.b16 %v8159
    %v8271 = vunpack.c.l.b16 %v8160
    %v8272 = vunpack.c.l.b16 %v8161
    %v8273 = vunpack.c.l.b16 %v8162
    %v8274 = vunpack.c.l.b16 %v8163
    %v8275 = vpack.c.b16 %v8244, %v8243
    %v8276 = vpack.c.b16 %v8246, %v8245
    %v8277 = vpack.c.b16 %v8248, %v8247
    %v8278 = vpack.c.b16 %v8250, %v8249
    %v8279 = vpack.c.b16 %v8252, %v8251
    %v8280 = vpack.c.b16 %v8254, %v8253
    %v8281 = vpack.c.b16 %v8256, %v8255
    %v8282 = vpack.c.b16 %v8258, %v8257
    %v8283 = vpack.c.b16 %v8260, %v8259
    %v8284 = vpack.c.b16 %v8262, %v8261
    %v8285 = vpack.c.b16 %v8264, %v8263
    %v8286 = vpack.c.b16 %v8266, %v8265
    %v8287 = vpack.c.b16 %v8268, %v8267
    %v8288 = vpack.c.b16 %v8270, %v8269
    %v8289 = vpack.c.b16 %v8272, %v8271
    %v8290 = vpack.c.b16 %v8274, %v8273
    %8307 = vmatpush.bf16.msra.mxu0 %v8282
    %8308 = vmatpush.bf16.msra.mxu0 %v8281
    %8309 = vmatpush.bf16.msra.mxu0 %v8280
    %8310 = vmatpush.bf16.msra.mxu0 %v8279
    %8311 = vmatpush.bf16.msra.mxu0 %v8278
    %8312 = vmatpush.bf16.msra.mxu0 %v8277
    %8313 = vmatpush.bf16.msra.mxu0 %v8276
    %8314 = vmatpush.bf16.msra.mxu0 %v8275
    %8315 = vmatmul.bf16.gmra.mxu0 %v8207
    %v8316 = vpop.f32.mrf.mxu0
    %v8317 = vadd.f32 %v8200, %v8316
    %v8318 = vpop.f32.mrf.mxu0
    %8319 = vdwg.mxu0
    %8320 = vmatpush.bf16.msra.mxu0 %v8290
    %8321 = vmatpush.bf16.msra.mxu0 %v8289
    %8322 = vmatpush.bf16.msra.mxu0 %v8288
    %8323 = vmatpush.bf16.msra.mxu0 %v8287
    %8324 = vmatpush.bf16.msra.mxu0 %v8286
    %8325 = vmatpush.bf16.msra.mxu0 %v8285
    %8326 = vmatpush.bf16.msra.mxu0 %v8284
    %8327 = vmatpush.bf16.msra.mxu0 %v8283
    %8328 = vmatmul.bf16.gmra.mxu0 %v8208
    %v8329 = vpop.f32.mrf.mxu0
    %v8330 = vadd.f32 %v8317, %v8329
    %v8331 = vpop.f32.mrf.mxu0
    %8332 = vdwg.mxu0
    %v8334 = vunpack.c.l.b16 %v8131
    %v8335 = vunpack.c.h.b16 %v8131
    %v8336 = vpack.c.b16 %v8334, %v8334
    %v8337 = vpack.c.b16 %v8335, %v8335
    %v8372 = vunpack.c.l.b16 %v8164
    %v8373 = vunpack.c.l.b16 %v8165
    %v8374 = vunpack.c.l.b16 %v8166
    %v8375 = vunpack.c.l.b16 %v8167
    %v8376 = vunpack.c.l.b16 %v8168
    %v8377 = vunpack.c.l.b16 %v8169
    %v8378 = vunpack.c.l.b16 %v8170
    %v8379 = vunpack.c.l.b16 %v8171
    %v8380 = vunpack.c.l.b16 %v8172
    %v8381 = vunpack.c.l.b16 %v8173
    %v8382 = vunpack.c.l.b16 %v8174
    %v8383 = vunpack.c.l.b16 %v8175
    %v8384 = vunpack.c.l.b16 %v8176
    %v8385 = vunpack.c.l.b16 %v8177
    %v8386 = vunpack.c.l.b16 %v8178
    %v8387 = vunpack.c.l.b16 %v8179
    %v8388 = vunpack.c.l.b16 %v8180
    %v8389 = vunpack.c.l.b16 %v8181
    %v8390 = vunpack.c.l.b16 %v8182
    %v8391 = vunpack.c.l.b16 %v8183
    %v8392 = vunpack.c.l.b16 %v8184
    %v8393 = vunpack.c.l.b16 %v8185
    %v8394 = vunpack.c.l.b16 %v8186
    %v8395 = vunpack.c.l.b16 %v8187
    %v8396 = vunpack.c.l.b16 %v8188
    %v8397 = vunpack.c.l.b16 %v8189
    %v8398 = vunpack.c.l.b16 %v8190
    %v8399 = vunpack.c.l.b16 %v8191
    %v8400 = vunpack.c.l.b16 %v8192
    %v8401 = vunpack.c.l.b16 %v8193
    %v8402 = vunpack.c.l.b16 %v8194
    %v8403 = vunpack.c.l.b16 %v8195
    %v8404 = vpack.c.b16 %v8373, %v8372
    %v8405 = vpack.c.b16 %v8375, %v8374
    %v8406 = vpack.c.b16 %v8377, %v8376
    %v8407 = vpack.c.b16 %v8379, %v8378
    %v8408 = vpack.c.b16 %v8381, %v8380
    %v8409 = vpack.c.b16 %v8383, %v8382
    %v8410 = vpack.c.b16 %v8385, %v8384
    %v8411 = vpack.c.b16 %v8387, %v8386
    %v8412 = vpack.c.b16 %v8389, %v8388
    %v8413 = vpack.c.b16 %v8391, %v8390
    %v8414 = vpack.c.b16 %v8393, %v8392
    %v8415 = vpack.c.b16 %v8395, %v8394
    %v8416 = vpack.c.b16 %v8397, %v8396
    %v8417 = vpack.c.b16 %v8399, %v8398
    %v8418 = vpack.c.b16 %v8401, %v8400
    %v8419 = vpack.c.b16 %v8403, %v8402
    %8436 = vmatpush.bf16.msra.mxu0 %v8411
    %8437 = vmatpush.bf16.msra.mxu0 %v8410
    %8438 = vmatpush.bf16.msra.mxu0 %v8409
    %8439 = vmatpush.bf16.msra.mxu0 %v8408
    %8440 = vmatpush.bf16.msra.mxu0 %v8407
    %8441 = vmatpush.bf16.msra.mxu0 %v8406
    %8442 = vmatpush.bf16.msra.mxu0 %v8405
    %8443 = vmatpush.bf16.msra.mxu0 %v8404
    %8444 = vmatmul.bf16.gmra.mxu0 %v8336
    %v8445 = vpop.f32.mrf.mxu0
    %v8446 = vadd.f32 %v8201, %v8445
    %v8447 = vpop.f32.mrf.mxu0
    %8448 = vdwg.mxu0
    %8449 = vmatpush.bf16.msra.mxu0 %v8419
    %8450 = vmatpush.bf16.msra.mxu0 %v8418
    %8451 = vmatpush.bf16.msra.mxu0 %v8417
    %8452 = vmatpush.bf16.msra.mxu0 %v8416
    %8453 = vmatpush.bf16.msra.mxu0 %v8415
    %8454 = vmatpush.bf16.msra.mxu0 %v8414
    %8455 = vmatpush.bf16.msra.mxu0 %v8413
    %8456 = vmatpush.bf16.msra.mxu0 %v8412
    %8457 = vmatmul.bf16.gmra.mxu0 %v8337
    %v8458 = vpop.f32.mrf.mxu0
    %v8459 = vadd.f32 %v8446, %v8458
    %v8460 = vpop.f32.mrf.mxu0
    %8461 = vdwg.mxu0
    %v8462 = vadd.f32 %v8330, %v8459
    %vm8463 = vcmask 58368
    %8464 = vst.msk [vmem:[#allocation7] sm:$0x3] %vm8463, %v8462
    %vm8465 = vcmask 254976
    %8466 = vst.msk [vmem:[%s71] sm:$0x3] %vm8465, %v1462
    %vm8467 = vcmask 123904
    %8468 = vst.msk [vmem:[#allocation8] sm:$0x3] %vm8467, %v729
    %8469 = vst.msk [vmem:[#allocation10] sm:$0x3] %vm8467, %v1045
    // Predicated region
    $region146: #{forward.1} parent=1 // pred_check
      _
    $region147: #{forward.1} parent=1 // pred_check_branch
      %8471 = sbr.rel (0) target = $region149
    $region148: #{forward.1} parent=1 // pred_region
      %8473 = vsyncadd [#allocation4], 0
      %s8475 = sshll.u32 [#allocation7], 4
      %s8476 = int_to_ptr.vmem [resolvable:$true] %s8475
      %s8477 = sshll.u32 %s69, 4
      %s8478 = int_to_ptr.hbm [resolvable:$true] %s8477
      %8480 = dma.vmem_to_hbm [thread:$0]  %s8476, 32, %s8478, [#allocation4]
    $region149: #{forward.1} parent=1 // pred_fallthru
      _
    // Predicated region
    $region150: #{forward.1} parent=1 // pred_check
      _
    $region151: #{forward.1} parent=1 // pred_check_branch
      %8482 = sbr.rel (0) target = $region153
    $region152: #{forward.1} parent=1 // pred_region
      _
    $region153: #{forward.1} parent=1 // pred_fallthru
      _
    // Predicated region
    $region154: #{forward.1} parent=1 // pred_check
      _
    $region155: #{forward.1} parent=1 // pred_check_branch
      %8484 = sbr.rel (0) target = $region157
    $region156: #{forward.1} parent=1 // pred_region
      %8486 = vsyncadd [#allocation9], 0
      %s8488 = sshll.u32 [#allocation8], 4
      %s8489 = int_to_ptr.vmem [resolvable:$true] %s8488
      %s8490 = sshll.u32 %s73, 4
      %s8491 = int_to_ptr.hbm [resolvable:$true] %s8490
      %8493 = dma.vmem_to_hbm [thread:$0]  %s8489, 32, %s8491, [#allocation9]
    $region157: #{forward.1} parent=1 // pred_fallthru
      _
    // Predicated region
    $region158: #{forward.1} parent=1 // pred_check
      _
    $region159: #{forward.1} parent=1 // pred_check_branch
      %8495 = sbr.rel (0) target = $region161
    $region160: #{forward.1} parent=1 // pred_region
      %8497 = vsyncadd [#allocation9], 0
      %s8499 = sshll.u32 [#allocation10], 4
      %s8500 = int_to_ptr.vmem [resolvable:$true] %s8499
      %s8501 = sshll.u32 %s75, 4
      %s8502 = int_to_ptr.hbm [resolvable:$true] %s8501
      %8504 = dma.vmem_to_hbm [thread:$0]  %s8500, 32, %s8502, [#allocation9]
    $region161: #{forward.1} parent=1 // pred_fallthru
      _
    // Predicated region
    $region162: #{forward.1} parent=1 // pred_check
      _
    $region163: #{forward.1} parent=1 // pred_check_branch
      %8506 = sbr.rel (0) target = $region165
    $region164: #{forward.1} parent=1 // pred_region
      %8508 = dma.done [#allocation4], 32
    $region165: #{forward.1} parent=1 // pred_fallthru
      _
    // Predicated region
    $region166: #{forward.1} parent=1 // pred_check
      _
    $region167: #{forward.1} parent=1 // pred_check_branch
      %8510 = sbr.rel (0) target = $region169
    $region168: #{forward.1} parent=1 // pred_region
      _
    $region169: #{forward.1} parent=1 // pred_fallthru
      _
    // Predicated region
    $region170: #{forward.1} parent=1 // pred_check
      _
    $region171: #{forward.1} parent=1 // pred_check_branch
      %8512 = sbr.rel (0) target = $region173
    $region172: #{forward.1} parent=1 // pred_region
      %8514 = dma.done [#allocation9], 32
    $region173: #{forward.1} parent=1 // pred_fallthru
      _
    // Predicated region
    $region174: #{forward.1} parent=1 // pred_check
      _
    $region175: #{forward.1} parent=1 // pred_check_branch
      %8516 = sbr.rel (0) target = $region177
    $region176: #{forward.1} parent=1 // pred_region
      %8518 = dma.done [#allocation9], 32
    $region177: #{forward.1} parent=1 // pred_fallthru
      _
    %8519 = vsyncpa [#allocation3], 1
    %8520 = vsyncpa [#allocation6], 1
    %8521 = vsyncpa [#allocation4], 1
    %8522 = vsyncpa [#allocation9], 1

</llo_original>
